<compile_context>
chip_gen: v7x
topology: tpu7x:2x2x1
jax: 0.10.0
libtpu: 0.0.40
codegen_flags: <defaults>
</compile_context>

<pallas_src>
import functools

import jax
import jax.numpy as jnp
from jax import lax
from jax.experimental import pallas as pl
from jax.experimental.pallas import tpu as pltpu

C_IN, C_OUT = 256, 128
K, STRIDE, PAD, OUT_PAD = 5, 2, 2, 1
BN_EPS = 1e-5

# row/col offsets contributing to each output phase (0 = even, 1 = odd)
_OFFS = {0: (-1, 0, 1), 1: (0, 1)}


def _tap_list():
    taps = []
    for ph in range(2):
        for pw in range(2):
            for dh in _OFFS[ph]:
                for dw in _OFFS[pw]:
                    kh = ph + 2 - 2 * dh        # original (un-flipped) weight index
                    kw = pw + 2 - 2 * dw
                    taps.append((ph, pw, dh, dw, kh, kw))
    return taps


_TAPS = _tap_list()                                             # 9 + 6 + 6 + 4 = 25 taps
_TAP_IDX = {(ph, pw, dh, dw): t for t, (ph, pw, dh, dw, _, _) in enumerate(_TAPS)}


# ---------------------------------------------------------------------------
# Kernel 1: phase-decomposed transposed conv + fused BN-statistics epilogue
# ---------------------------------------------------------------------------
def _convt_kernel(x_ref, w_ref, o_ref, sum_ref, sumsq_ref, xs_ref, acc_ref, *, h, w):
    # x_ref    : (1, h+2, w+2, C_IN) f32   zero-padded input, one batch element
    # w_ref    : (25, C_IN, C_OUT)   bf16  tap-ordered weights (VMEM resident)
    # o_ref    : (1, 2, 2, h*w, C_OUT) f32 phase-separated conv output
    # sum_ref  : (1, 8, C_OUT) f32         per-batch channel sums (row 0 valid)
    # sumsq_ref: (1, 8, C_OUT) f32         per-batch channel sum-of-squares (row 0 valid)
    # xs_ref   : (3, (h+2)*w, C_IN) bf16   scratch: column-shifted, flattened views
    # acc_ref  : (h*w, C_OUT) f32          scratch accumulator

    # Hoist the sublane-axis (width) shifts: 3 relayout copies instead of 25.
    for s in range(3):
        xs_ref[s] = (
            x_ref[0, :, s:s + w, :].astype(jnp.bfloat16).reshape((h + 2) * w, C_IN)
        )

    s_tot = jnp.zeros((1, C_OUT), jnp.float32)
    ss_tot = jnp.zeros((1, C_OUT), jnp.float32)

    for ph in range(2):
        for pw in range(2):
            first = True
            for dh in _OFFS[ph]:
                row0 = (dh + 1) * w                      # static, multiple of w
                for dw in _OFFS[pw]:
                    t = _TAP_IDX[(ph, pw, dh, dw)]
                    patch = xs_ref[dw + 1, row0:row0 + h * w, :]     # (h*w, C_IN) bf16
                    contrib = jnp.dot(patch, w_ref[t],
                                      preferred_element_type=jnp.float32)
                    if first:
                        acc_ref[...] = contrib
                        first = False
                    else:
                        acc_ref[...] += contrib
            res = acc_ref[...]                           # (h*w, C_OUT) f32
            o_ref[0, ph, pw] = res
            s_tot = s_tot + jnp.sum(res, axis=0, keepdims=True)
            ss_tot = ss_tot + jnp.sum(res * res, axis=0, keepdims=True)

    sum_ref[0] = jnp.broadcast_to(s_tot, (8, C_OUT))
    sumsq_ref[0] = jnp.broadcast_to(ss_tot, (8, C_OUT))


# ---------------------------------------------------------------------------
# Kernel 2: BatchNorm normalize (precomputed per-channel scale/shift) + ReLU
# ---------------------------------------------------------------------------
def _bn_relu_kernel(y_ref, scale_ref, shift_ref, o_ref):
    # y_ref: (1, 1, 1, h*w, C_OUT); scale/shift: (1, C_OUT)
    y = y_ref[...]
    o_ref[...] = jnp.maximum(y * scale_ref[...] + shift_ref[...], 0.0)


# ---------------------------------------------------------------------------
# Wrapper
# ---------------------------------------------------------------------------
def group12_forward(x_nchw, weight, bias, gamma, beta):
    # bias is mathematically cancelled by training-mode BatchNorm mean subtraction.
    del bias

    x = jnp.transpose(x_nchw, (0, 2, 3, 1)).astype(jnp.float32)      # NHWC
    n, h, w, _ = x.shape
    x_pad = jnp.pad(x, ((0, 0), (1, 1), (1, 1), (0, 0)))             # 1-pixel halo

    # Tap-ordered weights (25, C_IN, C_OUT) in bf16.
    w_taps = jnp.stack(
        [weight[:, :, kh, kw] for (_, _, _, _, kh, kw) in _TAPS], axis=0
    ).astype(jnp.bfloat16)

    conv_kernel = functools.partial(_convt_kernel, h=h, w=w)
    conv_sep, sums, sumsq = pl.pallas_call(
        conv_kernel,
        out_shape=(
            jax.ShapeDtypeStruct((n, 2, 2, h * w, C_OUT), jnp.float32),
            jax.ShapeDtypeStruct((n, 8, C_OUT), jnp.float32),
            jax.ShapeDtypeStruct((n, 8, C_OUT), jnp.float32),
        ),
        grid_spec=pltpu.PrefetchScalarGridSpec(
            num_scalar_prefetch=0,
            grid=(n,),
            in_specs=[
                pl.BlockSpec((1, h + 2, w + 2, C_IN), lambda b: (b, 0, 0, 0)),
                pl.BlockSpec((K * K, C_IN, C_OUT), lambda b: (0, 0, 0)),  # resident
            ],
            out_specs=(
                pl.BlockSpec((1, 2, 2, h * w, C_OUT), lambda b: (b, 0, 0, 0, 0)),
                pl.BlockSpec((1, 8, C_OUT), lambda b: (b, 0, 0)),
                pl.BlockSpec((1, 8, C_OUT), lambda b: (b, 0, 0)),
            ),
            scratch_shapes=[
                pltpu.VMEM((3, (h + 2) * w, C_IN), jnp.bfloat16),
                pltpu.VMEM((h * w, C_OUT), jnp.float32),
            ],
        ),
        compiler_params=pltpu.CompilerParams(dimension_semantics=("parallel",)),
    )(x_pad, w_taps)

    # Tiny per-channel reduction (N x 128 elements) -> scale/shift in plain JAX.
    cnt = jnp.float32(n * 4 * h * w)
    ch_sum = jnp.sum(sums[:, 0, :], axis=0)
    ch_sumsq = jnp.sum(sumsq[:, 0, :], axis=0)
    mean = ch_sum / cnt
    var = jnp.maximum(ch_sumsq / cnt - mean * mean, 0.0)             # biased variance
    inv = lax.rsqrt(var + BN_EPS)
    scale = (gamma * inv).reshape(1, C_OUT).astype(jnp.float32)
    shift = (beta - mean * gamma * inv).reshape(1, C_OUT).astype(jnp.float32)

    out_sep = pl.pallas_call(
        _bn_relu_kernel,
        out_shape=jax.ShapeDtypeStruct((n, 2, 2, h * w, C_OUT), jnp.float32),
        grid_spec=pltpu.PrefetchScalarGridSpec(
            num_scalar_prefetch=0,
            grid=(n, 2, 2),
            in_specs=[
                pl.BlockSpec((1, 1, 1, h * w, C_OUT), lambda b, p, q: (b, p, q, 0, 0)),
                pl.BlockSpec((1, C_OUT), lambda b, p, q: (0, 0)),
                pl.BlockSpec((1, C_OUT), lambda b, p, q: (0, 0)),
            ],
            out_specs=pl.BlockSpec((1, 1, 1, h * w, C_OUT),
                                   lambda b, p, q: (b, p, q, 0, 0)),
        ),
        compiler_params=pltpu.CompilerParams(
            dimension_semantics=("parallel", "parallel", "parallel")),
    )(conv_sep, scale, shift)

    # Phase-separated -> NCHW (depth-to-space folded into the final transpose).
    y = out_sep.reshape(n, 2, 2, h, w, C_OUT)
    y = jnp.transpose(y, (0, 5, 3, 1, 4, 2)).reshape(n, C_OUT, 2 * h, 2 * w)
    return y


# ---------------------------------------------------------------------------
# Pure-JAX reference (for correctness check)
# ---------------------------------------------------------------------------
def group12_reference(x_nchw, weight, bias, gamma, beta):
    x = jnp.transpose(x_nchw, (0, 2, 3, 1)).astype(jnp.float32)
    w_flip = weight[:, :, ::-1, ::-1]
    w_hwio = jnp.transpose(w_flip, (2, 3, 0, 1))                     # (5,5,Cin,Cout)
    pb = K - 1 - PAD
    conv = lax.conv_general_dilated(
        x, w_hwio, window_strides=(1, 1),
        padding=[(pb, pb + OUT_PAD), (pb, pb + OUT_PAD)],
        lhs_dilation=(STRIDE, STRIDE),
        dimension_numbers=("NHWC", "HWIO", "NHWC"),
        precision=lax.Precision.HIGHEST) + bias
    nelem = conv.shape[0] * conv.shape[1] * conv.shape[2]
    mean = jnp.sum(conv, axis=(0, 1, 2), keepdims=True) / nelem
    var = jnp.sum((conv - mean) ** 2, axis=(0, 1, 2), keepdims=True) / nelem
    out = (conv - mean) * lax.rsqrt(var + BN_EPS) * gamma + beta
    out = jnp.maximum(out, 0.0)
    return jnp.transpose(out, (0, 3, 1, 2))


if __name__ == "__main__":
    key = jax.random.PRNGKey(0)
    k_x, k_w, k_b, k_g, k_bt = jax.random.split(key, 5)

    N, H, W = 2, 8, 8
    x = jax.random.normal(k_x, (N, C_IN, H, W), jnp.float32)

    # Deterministic synthetic parameters (shapes follow nn.ConvTranspose2d / BatchNorm2d).
    weight = jax.random.normal(k_w, (C_IN, C_OUT, K, K), jnp.float32) * 0.02
    bias = jax.random.normal(k_b, (C_OUT,), jnp.float32) * 0.02
    gamma = 1.0 + 0.1 * jax.random.normal(k_g, (C_OUT,), jnp.float32)
    beta = 0.1 * jax.random.normal(k_bt, (C_OUT,), jnp.float32)

    out = group12_forward(x, weight, bias, gamma, beta)
    out = jax.block_until_ready(out)

    ref = group12_reference(x, weight, bias, gamma, beta)
    max_err = float(jnp.max(jnp.abs(out - ref)))
    assert out.shape == (N, C_OUT, 2 * H, 2 * W), out.shape
    assert bool(jnp.all(jnp.isfinite(out))), "non-finite output"
    assert max_err < 5e-2, f"mismatch vs reference: {max_err}"

    print("KERNEL_OK")
</pallas_src>

<mosaic_0001>
module attributes {stable_mosaic.version = 11 : i64} {
  func.func @_convt_kernel(%arg0: i32, %arg1: memref<1x10x10x256xf32, #tpu.memory_space<vmem>>, %arg2: memref<25x256x128xbf16, #tpu.memory_space<vmem>>, %arg3: memref<1x2x2x64x128xf32, #tpu.memory_space<vmem>>, %arg4: memref<1x8x128xf32, #tpu.memory_space<vmem>>, %arg5: memref<1x8x128xf32, #tpu.memory_space<vmem>>, %arg6: memref<3x80x256xbf16, #tpu.memory_space<vmem>>, %arg7: memref<64x128xf32, #tpu.memory_space<vmem>>) attributes {dimension_semantics = [#tpu.dimension_semantics<parallel>], iteration_bounds = array<i64: 2>, scalar_prefetch = 0 : i64, scratch_operands = 2 : i64, tpu.core_type = #tpu.core_type<tc>, window_params = [{transform_indices = @transform_0, window_bounds = array<i64: 1, 10, 10, 256>}, {pipeline_mode = #tpu.pipeline_mode<synchronous>, transform_indices = @transform_1, window_bounds = array<i64: 25, 256, 128>}, {transform_indices = @transform_2, window_bounds = array<i64: 1, 2, 2, 64, 128>}, {transform_indices = @transform_3, window_bounds = array<i64: 1, 8, 128>}, {transform_indices = @transform_4, window_bounds = array<i64: 1, 8, 128>}]} {
    %c0 = arith.constant 0 : index
    %c0_0 = arith.constant 0 : index
    %c0_1 = arith.constant 0 : index
    %c0_2 = arith.constant 0 : index
    %0 = vector.load %arg1[%c0, %c0_0, %c0_1, %c0_2] : memref<1x10x10x256xf32, #tpu.memory_space<vmem>>, vector<1x10x8x256xf32>
    %1 = vector.shape_cast %0 : vector<1x10x8x256xf32> to vector<10x8x256xf32>
    %2 = arith.truncf %1 : vector<10x8x256xf32> to vector<10x8x256xbf16>
    %3 = vector.shape_cast %2 : vector<10x8x256xbf16> to vector<80x256xbf16>
    %c0_3 = arith.constant 0 : index
    %c0_4 = arith.constant 0 : index
    %c0_5 = arith.constant 0 : index
    %4 = vector.load %arg6[%c0_3, %c0_4, %c0_5] : memref<3x80x256xbf16, #tpu.memory_space<vmem>>, vector<1x80x256xbf16>
    %5 = vector.shape_cast %4 : vector<1x80x256xbf16> to vector<80x256xbf16>
    %6 = vector.shape_cast %3 : vector<80x256xbf16> to vector<1x80x256xbf16>
    tpu.vector_store %arg6[%c0_3, %c0_4, %c0_5], %6 {strides = array<i32>} : memref<3x80x256xbf16, #tpu.memory_space<vmem>>, vector<1x80x256xbf16>,
    %c0_6 = arith.constant 0 : index
    %c0_7 = arith.constant 0 : index
    %c1 = arith.constant 1 : index
    %c0_8 = arith.constant 0 : index
    %7 = vector.load %arg1[%c0_6, %c0_7, %c1, %c0_8] : memref<1x10x10x256xf32, #tpu.memory_space<vmem>>, vector<1x10x8x256xf32>
    %8 = vector.shape_cast %7 : vector<1x10x8x256xf32> to vector<10x8x256xf32>
    %9 = arith.truncf %8 : vector<10x8x256xf32> to vector<10x8x256xbf16>
    %10 = vector.shape_cast %9 : vector<10x8x256xbf16> to vector<80x256xbf16>
    %c1_9 = arith.constant 1 : index
    %c0_10 = arith.constant 0 : index
    %c0_11 = arith.constant 0 : index
    %11 = vector.load %arg6[%c1_9, %c0_10, %c0_11] : memref<3x80x256xbf16, #tpu.memory_space<vmem>>, vector<1x80x256xbf16>
    %12 = vector.shape_cast %11 : vector<1x80x256xbf16> to vector<80x256xbf16>
    %13 = vector.shape_cast %10 : vector<80x256xbf16> to vector<1x80x256xbf16>
    tpu.vector_store %arg6[%c1_9, %c0_10, %c0_11], %13 {strides = array<i32>} : memref<3x80x256xbf16, #tpu.memory_space<vmem>>, vector<1x80x256xbf16>,
    %c0_12 = arith.constant 0 : index
    %c0_13 = arith.constant 0 : index
    %c2 = arith.constant 2 : index
    %c0_14 = arith.constant 0 : index
    %14 = vector.load %arg1[%c0_12, %c0_13, %c2, %c0_14] : memref<1x10x10x256xf32, #tpu.memory_space<vmem>>, vector<1x10x8x256xf32>
    %15 = vector.shape_cast %14 : vector<1x10x8x256xf32> to vector<10x8x256xf32>
    %16 = arith.truncf %15 : vector<10x8x256xf32> to vector<10x8x256xbf16>
    %17 = vector.shape_cast %16 : vector<10x8x256xbf16> to vector<80x256xbf16>
    %c2_15 = arith.constant 2 : index
    %c0_16 = arith.constant 0 : index
    %c0_17 = arith.constant 0 : index
    %18 = vector.load %arg6[%c2_15, %c0_16, %c0_17] : memref<3x80x256xbf16, #tpu.memory_space<vmem>>, vector<1x80x256xbf16>
    %19 = vector.shape_cast %18 : vector<1x80x256xbf16> to vector<80x256xbf16>
    %20 = vector.shape_cast %17 : vector<80x256xbf16> to vector<1x80x256xbf16>
    tpu.vector_store %arg6[%c2_15, %c0_16, %c0_17], %20 {strides = array<i32>} : memref<3x80x256xbf16, #tpu.memory_space<vmem>>, vector<1x80x256xbf16>,
    %cst = arith.constant 0.000000e+00 : f32
    %21 = vector.broadcast %cst : f32 to vector<1x128xf32>
    %cst_18 = arith.constant 0.000000e+00 : f32
    %22 = vector.broadcast %cst_18 : f32 to vector<1x128xf32>
    %c0_19 = arith.constant 0 : index
    %c0_20 = arith.constant 0 : index
    %c0_21 = arith.constant 0 : index
    %23 = vector.load %arg6[%c0_19, %c0_20, %c0_21] : memref<3x80x256xbf16, #tpu.memory_space<vmem>>, vector<1x64x256xbf16>
    %24 = vector.shape_cast %23 : vector<1x64x256xbf16> to vector<64x256xbf16>
    %c0_22 = arith.constant 0 : index
    %c0_23 = arith.constant 0 : index
    %c0_24 = arith.constant 0 : index
    %25 = vector.load %arg2[%c0_22, %c0_23, %c0_24] : memref<25x256x128xbf16, #tpu.memory_space<vmem>>, vector<1x256x128xbf16>
    %26 = vector.shape_cast %25 : vector<1x256x128xbf16> to vector<256x128xbf16>
    %cst_25 = arith.constant dense<0.000000e+00> : vector<64x128xf32>
    %27 = tpu.matmul %24, %26, %cst_25 {dimension_numbers = #tpu.dot_dimension_numbers<[1], [0], [0], [1], [0, 0, 1, 1], [], []>} : vector<64x256xbf16>, vector<256x128xbf16>, vector<64x128xf32> -> vector<64x128xf32>
    %c0_26 = arith.constant 0 : index
    %c0_27 = arith.constant 0 : index
    %28 = vector.load %arg7[%c0_26, %c0_27] : memref<64x128xf32, #tpu.memory_space<vmem>>, vector<64x128xf32>
    tpu.vector_store %arg7[%c0_26, %c0_27], %27 {strides = array<i32>} : memref<64x128xf32, #tpu.memory_space<vmem>>, vector<64x128xf32>,
    %c1_28 = arith.constant 1 : index
    %c0_29 = arith.constant 0 : index
    %c0_30 = arith.constant 0 : index
    %29 = vector.load %arg6[%c1_28, %c0_29, %c0_30] : memref<3x80x256xbf16, #tpu.memory_space<vmem>>, vector<1x64x256xbf16>
    %30 = vector.shape_cast %29 : vector<1x64x256xbf16> to vector<64x256xbf16>
    %c1_31 = arith.constant 1 : index
    %c0_32 = arith.constant 0 : index
    %c0_33 = arith.constant 0 : index
    %31 = vector.load %arg2[%c1_31, %c0_32, %c0_33] : memref<25x256x128xbf16, #tpu.memory_space<vmem>>, vector<1x256x128xbf16>
    %32 = vector.shape_cast %31 : vector<1x256x128xbf16> to vector<256x128xbf16>
    %cst_34 = arith.constant dense<0.000000e+00> : vector<64x128xf32>
    %33 = tpu.matmul %30, %32, %cst_34 {dimension_numbers = #tpu.dot_dimension_numbers<[1], [0], [0], [1], [0, 0, 1, 1], [], []>} : vector<64x256xbf16>, vector<256x128xbf16>, vector<64x128xf32> -> vector<64x128xf32>
    %c0_35 = arith.constant 0 : index
    %c0_36 = arith.constant 0 : index
    %34 = vector.load %arg7[%c0_35, %c0_36] : memref<64x128xf32, #tpu.memory_space<vmem>>, vector<64x128xf32>
    %35 = arith.addf %34, %33 : vector<64x128xf32>
    %c0_37 = arith.constant 0 : index
    %c0_38 = arith.constant 0 : index
    %36 = vector.load %arg7[%c0_37, %c0_38] : memref<64x128xf32, #tpu.memory_space<vmem>>, vector<64x128xf32>
    tpu.vector_store %arg7[%c0_37, %c0_38], %35 {strides = array<i32>} : memref<64x128xf32, #tpu.memory_space<vmem>>, vector<64x128xf32>,
    %c2_39 = arith.constant 2 : index
    %c0_40 = arith.constant 0 : index
    %c0_41 = arith.constant 0 : index
    %37 = vector.load %arg6[%c2_39, %c0_40, %c0_41] : memref<3x80x256xbf16, #tpu.memory_space<vmem>>, vector<1x64x256xbf16>
    %38 = vector.shape_cast %37 : vector<1x64x256xbf16> to vector<64x256xbf16>
    %c2_42 = arith.constant 2 : index
    %c0_43 = arith.constant 0 : index
    %c0_44 = arith.constant 0 : index
    %39 = vector.load %arg2[%c2_42, %c0_43, %c0_44] : memref<25x256x128xbf16, #tpu.memory_space<vmem>>, vector<1x256x128xbf16>
    %40 = vector.shape_cast %39 : vector<1x256x128xbf16> to vector<256x128xbf16>
    %cst_45 = arith.constant dense<0.000000e+00> : vector<64x128xf32>
    %41 = tpu.matmul %38, %40, %cst_45 {dimension_numbers = #tpu.dot_dimension_numbers<[1], [0], [0], [1], [0, 0, 1, 1], [], []>} : vector<64x256xbf16>, vector<256x128xbf16>, vector<64x128xf32> -> vector<64x128xf32>
    %c0_46 = arith.constant 0 : index
    %c0_47 = arith.constant 0 : index
    %42 = vector.load %arg7[%c0_46, %c0_47] : memref<64x128xf32, #tpu.memory_space<vmem>>, vector<64x128xf32>
    %43 = arith.addf %42, %41 : vector<64x128xf32>
    %c0_48 = arith.constant 0 : index
    %c0_49 = arith.constant 0 : index
    %44 = vector.load %arg7[%c0_48, %c0_49] : memref<64x128xf32, #tpu.memory_space<vmem>>, vector<64x128xf32>
    tpu.vector_store %arg7[%c0_48, %c0_49], %43 {strides = array<i32>} : memref<64x128xf32, #tpu.memory_space<vmem>>, vector<64x128xf32>,
    %c0_50 = arith.constant 0 : index
    %c8 = arith.constant 8 : index
    %c0_51 = arith.constant 0 : index
    %45 = vector.load %arg6[%c0_50, %c8, %c0_51] : memref<3x80x256xbf16, #tpu.memory_space<vmem>>, vector<1x64x256xbf16>
    %46 = vector.shape_cast %45 : vector<1x64x256xbf16> to vector<64x256xbf16>
    %c3 = arith.constant 3 : index
    %c0_52 = arith.constant 0 : index
    %c0_53 = arith.constant 0 : index
    %47 = vector.load %arg2[%c3, %c0_52, %c0_53] : memref<25x256x128xbf16, #tpu.memory_space<vmem>>, vector<1x256x128xbf16>
    %48 = vector.shape_cast %47 : vector<1x256x128xbf16> to vector<256x128xbf16>
    %cst_54 = arith.constant dense<0.000000e+00> : vector<64x128xf32>
    %49 = tpu.matmul %46, %48, %cst_54 {dimension_numbers = #tpu.dot_dimension_numbers<[1], [0], [0], [1], [0, 0, 1, 1], [], []>} : vector<64x256xbf16>, vector<256x128xbf16>, vector<64x128xf32> -> vector<64x128xf32>
    %c0_55 = arith.constant 0 : index
    %c0_56 = arith.constant 0 : index
    %50 = vector.load %arg7[%c0_55, %c0_56] : memref<64x128xf32, #tpu.memory_space<vmem>>, vector<64x128xf32>
    %51 = arith.addf %50, %49 : vector<64x128xf32>
    %c0_57 = arith.constant 0 : index
    %c0_58 = arith.constant 0 : index
    %52 = vector.load %arg7[%c0_57, %c0_58] : memref<64x128xf32, #tpu.memory_space<vmem>>, vector<64x128xf32>
    tpu.vector_store %arg7[%c0_57, %c0_58], %51 {strides = array<i32>} : memref<64x128xf32, #tpu.memory_space<vmem>>, vector<64x128xf32>,
    %c1_59 = arith.constant 1 : index
    %c8_60 = arith.constant 8 : index
    %c0_61 = arith.constant 0 : index
    %53 = vector.load %arg6[%c1_59, %c8_60, %c0_61] : memref<3x80x256xbf16, #tpu.memory_space<vmem>>, vector<1x64x256xbf16>
    %54 = vector.shape_cast %53 : vector<1x64x256xbf16> to vector<64x256xbf16>
    %c4 = arith.constant 4 : index
    %c0_62 = arith.constant 0 : index
    %c0_63 = arith.constant 0 : index
    %55 = vector.load %arg2[%c4, %c0_62, %c0_63] : memref<25x256x128xbf16, #tpu.memory_space<vmem>>, vector<1x256x128xbf16>
    %56 = vector.shape_cast %55 : vector<1x256x128xbf16> to vector<256x128xbf16>
    %cst_64 = arith.constant dense<0.000000e+00> : vector<64x128xf32>
    %57 = tpu.matmul %54, %56, %cst_64 {dimension_numbers = #tpu.dot_dimension_numbers<[1], [0], [0], [1], [0, 0, 1, 1], [], []>} : vector<64x256xbf16>, vector<256x128xbf16>, vector<64x128xf32> -> vector<64x128xf32>
    %c0_65 = arith.constant 0 : index
    %c0_66 = arith.constant 0 : index
    %58 = vector.load %arg7[%c0_65, %c0_66] : memref<64x128xf32, #tpu.memory_space<vmem>>, vector<64x128xf32>
    %59 = arith.addf %58, %57 : vector<64x128xf32>
    %c0_67 = arith.constant 0 : index
    %c0_68 = arith.constant 0 : index
    %60 = vector.load %arg7[%c0_67, %c0_68] : memref<64x128xf32, #tpu.memory_space<vmem>>, vector<64x128xf32>
    tpu.vector_store %arg7[%c0_67, %c0_68], %59 {strides = array<i32>} : memref<64x128xf32, #tpu.memory_space<vmem>>, vector<64x128xf32>,
    %c2_69 = arith.constant 2 : index
    %c8_70 = arith.constant 8 : index
    %c0_71 = arith.constant 0 : index
    %61 = vector.load %arg6[%c2_69, %c8_70, %c0_71] : memref<3x80x256xbf16, #tpu.memory_space<vmem>>, vector<1x64x256xbf16>
    %62 = vector.shape_cast %61 : vector<1x64x256xbf16> to vector<64x256xbf16>
    %c5 = arith.constant 5 : index
    %c0_72 = arith.constant 0 : index
    %c0_73 = arith.constant 0 : index
    %63 = vector.load %arg2[%c5, %c0_72, %c0_73] : memref<25x256x128xbf16, #tpu.memory_space<vmem>>, vector<1x256x128xbf16>
    %64 = vector.shape_cast %63 : vector<1x256x128xbf16> to vector<256x128xbf16>
    %cst_74 = arith.constant dense<0.000000e+00> : vector<64x128xf32>
    %65 = tpu.matmul %62, %64, %cst_74 {dimension_numbers = #tpu.dot_dimension_numbers<[1], [0], [0], [1], [0, 0, 1, 1], [], []>} : vector<64x256xbf16>, vector<256x128xbf16>, vector<64x128xf32> -> vector<64x128xf32>
    %c0_75 = arith.constant 0 : index
    %c0_76 = arith.constant 0 : index
    %66 = vector.load %arg7[%c0_75, %c0_76] : memref<64x128xf32, #tpu.memory_space<vmem>>, vector<64x128xf32>
    %67 = arith.addf %66, %65 : vector<64x128xf32>
    %c0_77 = arith.constant 0 : index
    %c0_78 = arith.constant 0 : index
    %68 = vector.load %arg7[%c0_77, %c0_78] : memref<64x128xf32, #tpu.memory_space<vmem>>, vector<64x128xf32>
    tpu.vector_store %arg7[%c0_77, %c0_78], %67 {strides = array<i32>} : memref<64x128xf32, #tpu.memory_space<vmem>>, vector<64x128xf32>,
    %c0_79 = arith.constant 0 : index
    %c16 = arith.constant 16 : index
    %c0_80 = arith.constant 0 : index
    %69 = vector.load %arg6[%c0_79, %c16, %c0_80] : memref<3x80x256xbf16, #tpu.memory_space<vmem>>, vector<1x64x256xbf16>
    %70 = vector.shape_cast %69 : vector<1x64x256xbf16> to vector<64x256xbf16>
    %c6 = arith.constant 6 : index
    %c0_81 = arith.constant 0 : index
    %c0_82 = arith.constant 0 : index
    %71 = vector.load %arg2[%c6, %c0_81, %c0_82] : memref<25x256x128xbf16, #tpu.memory_space<vmem>>, vector<1x256x128xbf16>
    %72 = vector.shape_cast %71 : vector<1x256x128xbf16> to vector<256x128xbf16>
    %cst_83 = arith.constant dense<0.000000e+00> : vector<64x128xf32>
    %73 = tpu.matmul %70, %72, %cst_83 {dimension_numbers = #tpu.dot_dimension_numbers<[1], [0], [0], [1], [0, 0, 1, 1], [], []>} : vector<64x256xbf16>, vector<256x128xbf16>, vector<64x128xf32> -> vector<64x128xf32>
    %c0_84 = arith.constant 0 : index
    %c0_85 = arith.constant 0 : index
    %74 = vector.load %arg7[%c0_84, %c0_85] : memref<64x128xf32, #tpu.memory_space<vmem>>, vector<64x128xf32>
    %75 = arith.addf %74, %73 : vector<64x128xf32>
    %c0_86 = arith.constant 0 : index
    %c0_87 = arith.constant 0 : index
    %76 = vector.load %arg7[%c0_86, %c0_87] : memref<64x128xf32, #tpu.memory_space<vmem>>, vector<64x128xf32>
    tpu.vector_store %arg7[%c0_86, %c0_87], %75 {strides = array<i32>} : memref<64x128xf32, #tpu.memory_space<vmem>>, vector<64x128xf32>,
    %c1_88 = arith.constant 1 : index
    %c16_89 = arith.constant 16 : index
    %c0_90 = arith.constant 0 : index
    %77 = vector.load %arg6[%c1_88, %c16_89, %c0_90] : memref<3x80x256xbf16, #tpu.memory_space<vmem>>, vector<1x64x256xbf16>
    %78 = vector.shape_cast %77 : vector<1x64x256xbf16> to vector<64x256xbf16>
    %c7 = arith.constant 7 : index
    %c0_91 = arith.constant 0 : index
    %c0_92 = arith.constant 0 : index
    %79 = vector.load %arg2[%c7, %c0_91, %c0_92] : memref<25x256x128xbf16, #tpu.memory_space<vmem>>, vector<1x256x128xbf16>
    %80 = vector.shape_cast %79 : vector<1x256x128xbf16> to vector<256x128xbf16>
    %cst_93 = arith.constant dense<0.000000e+00> : vector<64x128xf32>
    %81 = tpu.matmul %78, %80, %cst_93 {dimension_numbers = #tpu.dot_dimension_numbers<[1], [0], [0], [1], [0, 0, 1, 1], [], []>} : vector<64x256xbf16>, vector<256x128xbf16>, vector<64x128xf32> -> vector<64x128xf32>
    %c0_94 = arith.constant 0 : index
    %c0_95 = arith.constant 0 : index
    %82 = vector.load %arg7[%c0_94, %c0_95] : memref<64x128xf32, #tpu.memory_space<vmem>>, vector<64x128xf32>
    %83 = arith.addf %82, %81 : vector<64x128xf32>
    %c0_96 = arith.constant 0 : index
    %c0_97 = arith.constant 0 : index
    %84 = vector.load %arg7[%c0_96, %c0_97] : memref<64x128xf32, #tpu.memory_space<vmem>>, vector<64x128xf32>
    tpu.vector_store %arg7[%c0_96, %c0_97], %83 {strides = array<i32>} : memref<64x128xf32, #tpu.memory_space<vmem>>, vector<64x128xf32>,
    %c2_98 = arith.constant 2 : index
    %c16_99 = arith.constant 16 : index
    %c0_100 = arith.constant 0 : index
    %85 = vector.load %arg6[%c2_98, %c16_99, %c0_100] : memref<3x80x256xbf16, #tpu.memory_space<vmem>>, vector<1x64x256xbf16>
    %86 = vector.shape_cast %85 : vector<1x64x256xbf16> to vector<64x256xbf16>
    %c8_101 = arith.constant 8 : index
    %c0_102 = arith.constant 0 : index
    %c0_103 = arith.constant 0 : index
    %87 = vector.load %arg2[%c8_101, %c0_102, %c0_103] : memref<25x256x128xbf16, #tpu.memory_space<vmem>>, vector<1x256x128xbf16>
    %88 = vector.shape_cast %87 : vector<1x256x128xbf16> to vector<256x128xbf16>
    %cst_104 = arith.constant dense<0.000000e+00> : vector<64x128xf32>
    %89 = tpu.matmul %86, %88, %cst_104 {dimension_numbers = #tpu.dot_dimension_numbers<[1], [0], [0], [1], [0, 0, 1, 1], [], []>} : vector<64x256xbf16>, vector<256x128xbf16>, vector<64x128xf32> -> vector<64x128xf32>
    %c0_105 = arith.constant 0 : index
    %c0_106 = arith.constant 0 : index
    %90 = vector.load %arg7[%c0_105, %c0_106] : memref<64x128xf32, #tpu.memory_space<vmem>>, vector<64x128xf32>
    %91 = arith.addf %90, %89 : vector<64x128xf32>
    %c0_107 = arith.constant 0 : index
    %c0_108 = arith.constant 0 : index
    %92 = vector.load %arg7[%c0_107, %c0_108] : memref<64x128xf32, #tpu.memory_space<vmem>>, vector<64x128xf32>
    tpu.vector_store %arg7[%c0_107, %c0_108], %91 {strides = array<i32>} : memref<64x128xf32, #tpu.memory_space<vmem>>, vector<64x128xf32>,
    %c0_109 = arith.constant 0 : index
    %c0_110 = arith.constant 0 : index
    %93 = vector.load %arg7[%c0_109, %c0_110] : memref<64x128xf32, #tpu.memory_space<vmem>>, vector<64x128xf32>
    %c0_111 = arith.constant 0 : index
    %c0_112 = arith.constant 0 : index
    %c0_113 = arith.constant 0 : index
    %c0_114 = arith.constant 0 : index
    %c0_115 = arith.constant 0 : index
    %94 = vector.load %arg3[%c0_111, %c0_112, %c0_113, %c0_114, %c0_115] : memref<1x2x2x64x128xf32, #tpu.memory_space<vmem>>, vector<1x1x1x64x128xf32>
    %95 = vector.shape_cast %94 : vector<1x1x1x64x128xf32> to vector<64x128xf32>
    %96 = vector.shape_cast %93 : vector<64x128xf32> to vector<1x1x1x64x128xf32>
    tpu.vector_store %arg3[%c0_111, %c0_112, %c0_113, %c0_114, %c0_115], %96 {strides = array<i32>} : memref<1x2x2x64x128xf32, #tpu.memory_space<vmem>>, vector<1x1x1x64x128xf32>,
    %cst_116 = arith.constant dense<0.000000e+00> : vector<128xf32>
    %97 = vector.multi_reduction <add>, %93, %cst_116 [0] : vector<64x128xf32> to vector<128xf32>
    %98 = vector.shape_cast %97 : vector<128xf32> to vector<1x128xf32>
    %99 = arith.addf %21, %98 : vector<1x128xf32>
    %100 = arith.mulf %93, %93 : vector<64x128xf32>
    %cst_117 = arith.constant dense<0.000000e+00> : vector<128xf32>
    %101 = vector.multi_reduction <add>, %100, %cst_117 [0] : vector<64x128xf32> to vector<128xf32>
    %102 = vector.shape_cast %101 : vector<128xf32> to vector<1x128xf32>
    %103 = arith.addf %22, %102 : vector<1x128xf32>
    %c1_118 = arith.constant 1 : index
    %c0_119 = arith.constant 0 : index
    %c0_120 = arith.constant 0 : index
    %104 = vector.load %arg6[%c1_118, %c0_119, %c0_120] : memref<3x80x256xbf16, #tpu.memory_space<vmem>>, vector<1x64x256xbf16>
    %105 = vector.shape_cast %104 : vector<1x64x256xbf16> to vector<64x256xbf16>
    %c9 = arith.constant 9 : index
    %c0_121 = arith.constant 0 : index
    %c0_122 = arith.constant 0 : index
    %106 = vector.load %arg2[%c9, %c0_121, %c0_122] : memref<25x256x128xbf16, #tpu.memory_space<vmem>>, vector<1x256x128xbf16>
    %107 = vector.shape_cast %106 : vector<1x256x128xbf16> to vector<256x128xbf16>
    %cst_123 = arith.constant dense<0.000000e+00> : vector<64x128xf32>
    %108 = tpu.matmul %105, %107, %cst_123 {dimension_numbers = #tpu.dot_dimension_numbers<[1], [0], [0], [1], [0, 0, 1, 1], [], []>} : vector<64x256xbf16>, vector<256x128xbf16>, vector<64x128xf32> -> vector<64x128xf32>
    %c0_124 = arith.constant 0 : index
    %c0_125 = arith.constant 0 : index
    %109 = vector.load %arg7[%c0_124, %c0_125] : memref<64x128xf32, #tpu.memory_space<vmem>>, vector<64x128xf32>
    tpu.vector_store %arg7[%c0_124, %c0_125], %108 {strides = array<i32>} : memref<64x128xf32, #tpu.memory_space<vmem>>, vector<64x128xf32>,
    %c2_126 = arith.constant 2 : index
    %c0_127 = arith.constant 0 : index
    %c0_128 = arith.constant 0 : index
    %110 = vector.load %arg6[%c2_126, %c0_127, %c0_128] : memref<3x80x256xbf16, #tpu.memory_space<vmem>>, vector<1x64x256xbf16>
    %111 = vector.shape_cast %110 : vector<1x64x256xbf16> to vector<64x256xbf16>
    %c10 = arith.constant 10 : index
    %c0_129 = arith.constant 0 : index
    %c0_130 = arith.constant 0 : index
    %112 = vector.load %arg2[%c10, %c0_129, %c0_130] : memref<25x256x128xbf16, #tpu.memory_space<vmem>>, vector<1x256x128xbf16>
    %113 = vector.shape_cast %112 : vector<1x256x128xbf16> to vector<256x128xbf16>
    %cst_131 = arith.constant dense<0.000000e+00> : vector<64x128xf32>
    %114 = tpu.matmul %111, %113, %cst_131 {dimension_numbers = #tpu.dot_dimension_numbers<[1], [0], [0], [1], [0, 0, 1, 1], [], []>} : vector<64x256xbf16>, vector<256x128xbf16>, vector<64x128xf32> -> vector<64x128xf32>
    %c0_132 = arith.constant 0 : index
    %c0_133 = arith.constant 0 : index
    %115 = vector.load %arg7[%c0_132, %c0_133] : memref<64x128xf32, #tpu.memory_space<vmem>>, vector<64x128xf32>
    %116 = arith.addf %115, %114 : vector<64x128xf32>
    %c0_134 = arith.constant 0 : index
    %c0_135 = arith.constant 0 : index
    %117 = vector.load %arg7[%c0_134, %c0_135] : memref<64x128xf32, #tpu.memory_space<vmem>>, vector<64x128xf32>
    tpu.vector_store %arg7[%c0_134, %c0_135], %116 {strides = array<i32>} : memref<64x128xf32, #tpu.memory_space<vmem>>, vector<64x128xf32>,
    %c1_136 = arith.constant 1 : index
    %c8_137 = arith.constant 8 : index
    %c0_138 = arith.constant 0 : index
    %118 = vector.load %arg6[%c1_136, %c8_137, %c0_138] : memref<3x80x256xbf16, #tpu.memory_space<vmem>>, vector<1x64x256xbf16>
    %119 = vector.shape_cast %118 : vector<1x64x256xbf16> to vector<64x256xbf16>
    %c11 = arith.constant 11 : index
    %c0_139 = arith.constant 0 : index
    %c0_140 = arith.constant 0 : index
    %120 = vector.load %arg2[%c11, %c0_139, %c0_140] : memref<25x256x128xbf16, #tpu.memory_space<vmem>>, vector<1x256x128xbf16>
    %121 = vector.shape_cast %120 : vector<1x256x128xbf16> to vector<256x128xbf16>
    %cst_141 = arith.constant dense<0.000000e+00> : vector<64x128xf32>
    %122 = tpu.matmul %119, %121, %cst_141 {dimension_numbers = #tpu.dot_dimension_numbers<[1], [0], [0], [1], [0, 0, 1, 1], [], []>} : vector<64x256xbf16>, vector<256x128xbf16>, vector<64x128xf32> -> vector<64x128xf32>
    %c0_142 = arith.constant 0 : index
    %c0_143 = arith.constant 0 : index
    %123 = vector.load %arg7[%c0_142, %c0_143] : memref<64x128xf32, #tpu.memory_space<vmem>>, vector<64x128xf32>
    %124 = arith.addf %123, %122 : vector<64x128xf32>
    %c0_144 = arith.constant 0 : index
    %c0_145 = arith.constant 0 : index
    %125 = vector.load %arg7[%c0_144, %c0_145] : memref<64x128xf32, #tpu.memory_space<vmem>>, vector<64x128xf32>
    tpu.vector_store %arg7[%c0_144, %c0_145], %124 {strides = array<i32>} : memref<64x128xf32, #tpu.memory_space<vmem>>, vector<64x128xf32>,
    %c2_146 = arith.constant 2 : index
    %c8_147 = arith.constant 8 : index
    %c0_148 = arith.constant 0 : index
    %126 = vector.load %arg6[%c2_146, %c8_147, %c0_148] : memref<3x80x256xbf16, #tpu.memory_space<vmem>>, vector<1x64x256xbf16>
    %127 = vector.shape_cast %126 : vector<1x64x256xbf16> to vector<64x256xbf16>
    %c12 = arith.constant 12 : index
    %c0_149 = arith.constant 0 : index
    %c0_150 = arith.constant 0 : index
    %128 = vector.load %arg2[%c12, %c0_149, %c0_150] : memref<25x256x128xbf16, #tpu.memory_space<vmem>>, vector<1x256x128xbf16>
    %129 = vector.shape_cast %128 : vector<1x256x128xbf16> to vector<256x128xbf16>
    %cst_151 = arith.constant dense<0.000000e+00> : vector<64x128xf32>
    %130 = tpu.matmul %127, %129, %cst_151 {dimension_numbers = #tpu.dot_dimension_numbers<[1], [0], [0], [1], [0, 0, 1, 1], [], []>} : vector<64x256xbf16>, vector<256x128xbf16>, vector<64x128xf32> -> vector<64x128xf32>
    %c0_152 = arith.constant 0 : index
    %c0_153 = arith.constant 0 : index
    %131 = vector.load %arg7[%c0_152, %c0_153] : memref<64x128xf32, #tpu.memory_space<vmem>>, vector<64x128xf32>
    %132 = arith.addf %131, %130 : vector<64x128xf32>
    %c0_154 = arith.constant 0 : index
    %c0_155 = arith.constant 0 : index
    %133 = vector.load %arg7[%c0_154, %c0_155] : memref<64x128xf32, #tpu.memory_space<vmem>>, vector<64x128xf32>
    tpu.vector_store %arg7[%c0_154, %c0_155], %132 {strides = array<i32>} : memref<64x128xf32, #tpu.memory_space<vmem>>, vector<64x128xf32>,
    %c1_156 = arith.constant 1 : index
    %c16_157 = arith.constant 16 : index
    %c0_158 = arith.constant 0 : index
    %134 = vector.load %arg6[%c1_156, %c16_157, %c0_158] : memref<3x80x256xbf16, #tpu.memory_space<vmem>>, vector<1x64x256xbf16>
    %135 = vector.shape_cast %134 : vector<1x64x256xbf16> to vector<64x256xbf16>
    %c13 = arith.constant 13 : index
    %c0_159 = arith.constant 0 : index
    %c0_160 = arith.constant 0 : index
    %136 = vector.load %arg2[%c13, %c0_159, %c0_160] : memref<25x256x128xbf16, #tpu.memory_space<vmem>>, vector<1x256x128xbf16>
    %137 = vector.shape_cast %136 : vector<1x256x128xbf16> to vector<256x128xbf16>
    %cst_161 = arith.constant dense<0.000000e+00> : vector<64x128xf32>
    %138 = tpu.matmul %135, %137, %cst_161 {dimension_numbers = #tpu.dot_dimension_numbers<[1], [0], [0], [1], [0, 0, 1, 1], [], []>} : vector<64x256xbf16>, vector<256x128xbf16>, vector<64x128xf32> -> vector<64x128xf32>
    %c0_162 = arith.constant 0 : index
    %c0_163 = arith.constant 0 : index
    %139 = vector.load %arg7[%c0_162, %c0_163] : memref<64x128xf32, #tpu.memory_space<vmem>>, vector<64x128xf32>
    %140 = arith.addf %139, %138 : vector<64x128xf32>
    %c0_164 = arith.constant 0 : index
    %c0_165 = arith.constant 0 : index
    %141 = vector.load %arg7[%c0_164, %c0_165] : memref<64x128xf32, #tpu.memory_space<vmem>>, vector<64x128xf32>
    tpu.vector_store %arg7[%c0_164, %c0_165], %140 {strides = array<i32>} : memref<64x128xf32, #tpu.memory_space<vmem>>, vector<64x128xf32>,
    %c2_166 = arith.constant 2 : index
    %c16_167 = arith.constant 16 : index
    %c0_168 = arith.constant 0 : index
    %142 = vector.load %arg6[%c2_166, %c16_167, %c0_168] : memref<3x80x256xbf16, #tpu.memory_space<vmem>>, vector<1x64x256xbf16>
    %143 = vector.shape_cast %142 : vector<1x64x256xbf16> to vector<64x256xbf16>
    %c14 = arith.constant 14 : index
    %c0_169 = arith.constant 0 : index
    %c0_170 = arith.constant 0 : index
    %144 = vector.load %arg2[%c14, %c0_169, %c0_170] : memref<25x256x128xbf16, #tpu.memory_space<vmem>>, vector<1x256x128xbf16>
    %145 = vector.shape_cast %144 : vector<1x256x128xbf16> to vector<256x128xbf16>
    %cst_171 = arith.constant dense<0.000000e+00> : vector<64x128xf32>
    %146 = tpu.matmul %143, %145, %cst_171 {dimension_numbers = #tpu.dot_dimension_numbers<[1], [0], [0], [1], [0, 0, 1, 1], [], []>} : vector<64x256xbf16>, vector<256x128xbf16>, vector<64x128xf32> -> vector<64x128xf32>
    %c0_172 = arith.constant 0 : index
    %c0_173 = arith.constant 0 : index
    %147 = vector.load %arg7[%c0_172, %c0_173] : memref<64x128xf32, #tpu.memory_space<vmem>>, vector<64x128xf32>
    %148 = arith.addf %147, %146 : vector<64x128xf32>
    %c0_174 = arith.constant 0 : index
    %c0_175 = arith.constant 0 : index
    %149 = vector.load %arg7[%c0_174, %c0_175] : memref<64x128xf32, #tpu.memory_space<vmem>>, vector<64x128xf32>
    tpu.vector_store %arg7[%c0_174, %c0_175], %148 {strides = array<i32>} : memref<64x128xf32, #tpu.memory_space<vmem>>, vector<64x128xf32>,
    %c0_176 = arith.constant 0 : index
    %c0_177 = arith.constant 0 : index
    %150 = vector.load %arg7[%c0_176, %c0_177] : memref<64x128xf32, #tpu.memory_space<vmem>>, vector<64x128xf32>
    %c0_178 = arith.constant 0 : index
    %c0_179 = arith.constant 0 : index
    %c1_180 = arith.constant 1 : index
    %c0_181 = arith.constant 0 : index
    %c0_182 = arith.constant 0 : index
    %151 = vector.load %arg3[%c0_178, %c0_179, %c1_180, %c0_181, %c0_182] : memref<1x2x2x64x128xf32, #tpu.memory_space<vmem>>, vector<1x1x1x64x128xf32>
    %152 = vector.shape_cast %151 : vector<1x1x1x64x128xf32> to vector<64x128xf32>
    %153 = vector.shape_cast %150 : vector<64x128xf32> to vector<1x1x1x64x128xf32>
    tpu.vector_store %arg3[%c0_178, %c0_179, %c1_180, %c0_181, %c0_182], %153 {strides = array<i32>} : memref<1x2x2x64x128xf32, #tpu.memory_space<vmem>>, vector<1x1x1x64x128xf32>,
    %cst_183 = arith.constant dense<0.000000e+00> : vector<128xf32>
    %154 = vector.multi_reduction <add>, %150, %cst_183 [0] : vector<64x128xf32> to vector<128xf32>
    %155 = vector.shape_cast %154 : vector<128xf32> to vector<1x128xf32>
    %156 = arith.addf %99, %155 : vector<1x128xf32>
    %157 = arith.mulf %150, %150 : vector<64x128xf32>
    %cst_184 = arith.constant dense<0.000000e+00> : vector<128xf32>
    %158 = vector.multi_reduction <add>, %157, %cst_184 [0] : vector<64x128xf32> to vector<128xf32>
    %159 = vector.shape_cast %158 : vector<128xf32> to vector<1x128xf32>
    %160 = arith.addf %103, %159 : vector<1x128xf32>
    %c0_185 = arith.constant 0 : index
    %c8_186 = arith.constant 8 : index
    %c0_187 = arith.constant 0 : index
    %161 = vector.load %arg6[%c0_185, %c8_186, %c0_187] : memref<3x80x256xbf16, #tpu.memory_space<vmem>>, vector<1x64x256xbf16>
    %162 = vector.shape_cast %161 : vector<1x64x256xbf16> to vector<64x256xbf16>
    %c15 = arith.constant 15 : index
    %c0_188 = arith.constant 0 : index
    %c0_189 = arith.constant 0 : index
    %163 = vector.load %arg2[%c15, %c0_188, %c0_189] : memref<25x256x128xbf16, #tpu.memory_space<vmem>>, vector<1x256x128xbf16>
    %164 = vector.shape_cast %163 : vector<1x256x128xbf16> to vector<256x128xbf16>
    %cst_190 = arith.constant dense<0.000000e+00> : vector<64x128xf32>
    %165 = tpu.matmul %162, %164, %cst_190 {dimension_numbers = #tpu.dot_dimension_numbers<[1], [0], [0], [1], [0, 0, 1, 1], [], []>} : vector<64x256xbf16>, vector<256x128xbf16>, vector<64x128xf32> -> vector<64x128xf32>
    %c0_191 = arith.constant 0 : index
    %c0_192 = arith.constant 0 : index
    %166 = vector.load %arg7[%c0_191, %c0_192] : memref<64x128xf32, #tpu.memory_space<vmem>>, vector<64x128xf32>
    tpu.vector_store %arg7[%c0_191, %c0_192], %165 {strides = array<i32>} : memref<64x128xf32, #tpu.memory_space<vmem>>, vector<64x128xf32>,
    %c1_193 = arith.constant 1 : index
    %c8_194 = arith.constant 8 : index
    %c0_195 = arith.constant 0 : index
    %167 = vector.load %arg6[%c1_193, %c8_194, %c0_195] : memref<3x80x256xbf16, #tpu.memory_space<vmem>>, vector<1x64x256xbf16>
    %168 = vector.shape_cast %167 : vector<1x64x256xbf16> to vector<64x256xbf16>
    %c16_196 = arith.constant 16 : index
    %c0_197 = arith.constant 0 : index
    %c0_198 = arith.constant 0 : index
    %169 = vector.load %arg2[%c16_196, %c0_197, %c0_198] : memref<25x256x128xbf16, #tpu.memory_space<vmem>>, vector<1x256x128xbf16>
    %170 = vector.shape_cast %169 : vector<1x256x128xbf16> to vector<256x128xbf16>
    %cst_199 = arith.constant dense<0.000000e+00> : vector<64x128xf32>
    %171 = tpu.matmul %168, %170, %cst_199 {dimension_numbers = #tpu.dot_dimension_numbers<[1], [0], [0], [1], [0, 0, 1, 1], [], []>} : vector<64x256xbf16>, vector<256x128xbf16>, vector<64x128xf32> -> vector<64x128xf32>
    %c0_200 = arith.constant 0 : index
    %c0_201 = arith.constant 0 : index
    %172 = vector.load %arg7[%c0_200, %c0_201] : memref<64x128xf32, #tpu.memory_space<vmem>>, vector<64x128xf32>
    %173 = arith.addf %172, %171 : vector<64x128xf32>
    %c0_202 = arith.constant 0 : index
    %c0_203 = arith.constant 0 : index
    %174 = vector.load %arg7[%c0_202, %c0_203] : memref<64x128xf32, #tpu.memory_space<vmem>>, vector<64x128xf32>
    tpu.vector_store %arg7[%c0_202, %c0_203], %173 {strides = array<i32>} : memref<64x128xf32, #tpu.memory_space<vmem>>, vector<64x128xf32>,
    %c2_204 = arith.constant 2 : index
    %c8_205 = arith.constant 8 : index
    %c0_206 = arith.constant 0 : index
    %175 = vector.load %arg6[%c2_204, %c8_205, %c0_206] : memref<3x80x256xbf16, #tpu.memory_space<vmem>>, vector<1x64x256xbf16>
    %176 = vector.shape_cast %175 : vector<1x64x256xbf16> to vector<64x256xbf16>
    %c17 = arith.constant 17 : index
    %c0_207 = arith.constant 0 : index
    %c0_208 = arith.constant 0 : index
    %177 = vector.load %arg2[%c17, %c0_207, %c0_208] : memref<25x256x128xbf16, #tpu.memory_space<vmem>>, vector<1x256x128xbf16>
    %178 = vector.shape_cast %177 : vector<1x256x128xbf16> to vector<256x128xbf16>
    %cst_209 = arith.constant dense<0.000000e+00> : vector<64x128xf32>
    %179 = tpu.matmul %176, %178, %cst_209 {dimension_numbers = #tpu.dot_dimension_numbers<[1], [0], [0], [1], [0, 0, 1, 1], [], []>} : vector<64x256xbf16>, vector<256x128xbf16>, vector<64x128xf32> -> vector<64x128xf32>
    %c0_210 = arith.constant 0 : index
    %c0_211 = arith.constant 0 : index
    %180 = vector.load %arg7[%c0_210, %c0_211] : memref<64x128xf32, #tpu.memory_space<vmem>>, vector<64x128xf32>
    %181 = arith.addf %180, %179 : vector<64x128xf32>
    %c0_212 = arith.constant 0 : index
    %c0_213 = arith.constant 0 : index
    %182 = vector.load %arg7[%c0_212, %c0_213] : memref<64x128xf32, #tpu.memory_space<vmem>>, vector<64x128xf32>
    tpu.vector_store %arg7[%c0_212, %c0_213], %181 {strides = array<i32>} : memref<64x128xf32, #tpu.memory_space<vmem>>, vector<64x128xf32>,
    %c0_214 = arith.constant 0 : index
    %c16_215 = arith.constant 16 : index
    %c0_216 = arith.constant 0 : index
    %183 = vector.load %arg6[%c0_214, %c16_215, %c0_216] : memref<3x80x256xbf16, #tpu.memory_space<vmem>>, vector<1x64x256xbf16>
    %184 = vector.shape_cast %183 : vector<1x64x256xbf16> to vector<64x256xbf16>
    %c18 = arith.constant 18 : index
    %c0_217 = arith.constant 0 : index
    %c0_218 = arith.constant 0 : index
    %185 = vector.load %arg2[%c18, %c0_217, %c0_218] : memref<25x256x128xbf16, #tpu.memory_space<vmem>>, vector<1x256x128xbf16>
    %186 = vector.shape_cast %185 : vector<1x256x128xbf16> to vector<256x128xbf16>
    %cst_219 = arith.constant dense<0.000000e+00> : vector<64x128xf32>
    %187 = tpu.matmul %184, %186, %cst_219 {dimension_numbers = #tpu.dot_dimension_numbers<[1], [0], [0], [1], [0, 0, 1, 1], [], []>} : vector<64x256xbf16>, vector<256x128xbf16>, vector<64x128xf32> -> vector<64x128xf32>
    %c0_220 = arith.constant 0 : index
    %c0_221 = arith.constant 0 : index
    %188 = vector.load %arg7[%c0_220, %c0_221] : memref<64x128xf32, #tpu.memory_space<vmem>>, vector<64x128xf32>
    %189 = arith.addf %188, %187 : vector<64x128xf32>
    %c0_222 = arith.constant 0 : index
    %c0_223 = arith.constant 0 : index
    %190 = vector.load %arg7[%c0_222, %c0_223] : memref<64x128xf32, #tpu.memory_space<vmem>>, vector<64x128xf32>
    tpu.vector_store %arg7[%c0_222, %c0_223], %189 {strides = array<i32>} : memref<64x128xf32, #tpu.memory_space<vmem>>, vector<64x128xf32>,
    %c1_224 = arith.constant 1 : index
    %c16_225 = arith.constant 16 : index
    %c0_226 = arith.constant 0 : index
    %191 = vector.load %arg6[%c1_224, %c16_225, %c0_226] : memref<3x80x256xbf16, #tpu.memory_space<vmem>>, vector<1x64x256xbf16>
    %192 = vector.shape_cast %191 : vector<1x64x256xbf16> to vector<64x256xbf16>
    %c19 = arith.constant 19 : index
    %c0_227 = arith.constant 0 : index
    %c0_228 = arith.constant 0 : index
    %193 = vector.load %arg2[%c19, %c0_227, %c0_228] : memref<25x256x128xbf16, #tpu.memory_space<vmem>>, vector<1x256x128xbf16>
    %194 = vector.shape_cast %193 : vector<1x256x128xbf16> to vector<256x128xbf16>
    %cst_229 = arith.constant dense<0.000000e+00> : vector<64x128xf32>
    %195 = tpu.matmul %192, %194, %cst_229 {dimension_numbers = #tpu.dot_dimension_numbers<[1], [0], [0], [1], [0, 0, 1, 1], [], []>} : vector<64x256xbf16>, vector<256x128xbf16>, vector<64x128xf32> -> vector<64x128xf32>
    %c0_230 = arith.constant 0 : index
    %c0_231 = arith.constant 0 : index
    %196 = vector.load %arg7[%c0_230, %c0_231] : memref<64x128xf32, #tpu.memory_space<vmem>>, vector<64x128xf32>
    %197 = arith.addf %196, %195 : vector<64x128xf32>
    %c0_232 = arith.constant 0 : index
    %c0_233 = arith.constant 0 : index
    %198 = vector.load %arg7[%c0_232, %c0_233] : memref<64x128xf32, #tpu.memory_space<vmem>>, vector<64x128xf32>
    tpu.vector_store %arg7[%c0_232, %c0_233], %197 {strides = array<i32>} : memref<64x128xf32, #tpu.memory_space<vmem>>, vector<64x128xf32>,
    %c2_234 = arith.constant 2 : index
    %c16_235 = arith.constant 16 : index
    %c0_236 = arith.constant 0 : index
    %199 = vector.load %arg6[%c2_234, %c16_235, %c0_236] : memref<3x80x256xbf16, #tpu.memory_space<vmem>>, vector<1x64x256xbf16>
    %200 = vector.shape_cast %199 : vector<1x64x256xbf16> to vector<64x256xbf16>
    %c20 = arith.constant 20 : index
    %c0_237 = arith.constant 0 : index
    %c0_238 = arith.constant 0 : index
    %201 = vector.load %arg2[%c20, %c0_237, %c0_238] : memref<25x256x128xbf16, #tpu.memory_space<vmem>>, vector<1x256x128xbf16>
    %202 = vector.shape_cast %201 : vector<1x256x128xbf16> to vector<256x128xbf16>
    %cst_239 = arith.constant dense<0.000000e+00> : vector<64x128xf32>
    %203 = tpu.matmul %200, %202, %cst_239 {dimension_numbers = #tpu.dot_dimension_numbers<[1], [0], [0], [1], [0, 0, 1, 1], [], []>} : vector<64x256xbf16>, vector<256x128xbf16>, vector<64x128xf32> -> vector<64x128xf32>
    %c0_240 = arith.constant 0 : index
    %c0_241 = arith.constant 0 : index
    %204 = vector.load %arg7[%c0_240, %c0_241] : memref<64x128xf32, #tpu.memory_space<vmem>>, vector<64x128xf32>
    %205 = arith.addf %204, %203 : vector<64x128xf32>
    %c0_242 = arith.constant 0 : index
    %c0_243 = arith.constant 0 : index
    %206 = vector.load %arg7[%c0_242, %c0_243] : memref<64x128xf32, #tpu.memory_space<vmem>>, vector<64x128xf32>
    tpu.vector_store %arg7[%c0_242, %c0_243], %205 {strides = array<i32>} : memref<64x128xf32, #tpu.memory_space<vmem>>, vector<64x128xf32>,
    %c0_244 = arith.constant 0 : index
    %c0_245 = arith.constant 0 : index
    %207 = vector.load %arg7[%c0_244, %c0_245] : memref<64x128xf32, #tpu.memory_space<vmem>>, vector<64x128xf32>
    %c0_246 = arith.constant 0 : index
    %c1_247 = arith.constant 1 : index
    %c0_248 = arith.constant 0 : index
    %c0_249 = arith.constant 0 : index
    %c0_250 = arith.constant 0 : index
    %208 = vector.load %arg3[%c0_246, %c1_247, %c0_248, %c0_249, %c0_250] : memref<1x2x2x64x128xf32, #tpu.memory_space<vmem>>, vector<1x1x1x64x128xf32>
    %209 = vector.shape_cast %208 : vector<1x1x1x64x128xf32> to vector<64x128xf32>
    %210 = vector.shape_cast %207 : vector<64x128xf32> to vector<1x1x1x64x128xf32>
    tpu.vector_store %arg3[%c0_246, %c1_247, %c0_248, %c0_249, %c0_250], %210 {strides = array<i32>} : memref<1x2x2x64x128xf32, #tpu.memory_space<vmem>>, vector<1x1x1x64x128xf32>,
    %cst_251 = arith.constant dense<0.000000e+00> : vector<128xf32>
    %211 = vector.multi_reduction <add>, %207, %cst_251 [0] : vector<64x128xf32> to vector<128xf32>
    %212 = vector.shape_cast %211 : vector<128xf32> to vector<1x128xf32>
    %213 = arith.addf %156, %212 : vector<1x128xf32>
    %214 = arith.mulf %207, %207 : vector<64x128xf32>
    %cst_252 = arith.constant dense<0.000000e+00> : vector<128xf32>
    %215 = vector.multi_reduction <add>, %214, %cst_252 [0] : vector<64x128xf32> to vector<128xf32>
    %216 = vector.shape_cast %215 : vector<128xf32> to vector<1x128xf32>
    %217 = arith.addf %160, %216 : vector<1x128xf32>
    %c1_253 = arith.constant 1 : index
    %c8_254 = arith.constant 8 : index
    %c0_255 = arith.constant 0 : index
    %218 = vector.load %arg6[%c1_253, %c8_254, %c0_255] : memref<3x80x256xbf16, #tpu.memory_space<vmem>>, vector<1x64x256xbf16>
    %219 = vector.shape_cast %218 : vector<1x64x256xbf16> to vector<64x256xbf16>
    %c21 = arith.constant 21 : index
    %c0_256 = arith.constant 0 : index
    %c0_257 = arith.constant 0 : index
    %220 = vector.load %arg2[%c21, %c0_256, %c0_257] : memref<25x256x128xbf16, #tpu.memory_space<vmem>>, vector<1x256x128xbf16>
    %221 = vector.shape_cast %220 : vector<1x256x128xbf16> to vector<256x128xbf16>
    %cst_258 = arith.constant dense<0.000000e+00> : vector<64x128xf32>
    %222 = tpu.matmul %219, %221, %cst_258 {dimension_numbers = #tpu.dot_dimension_numbers<[1], [0], [0], [1], [0, 0, 1, 1], [], []>} : vector<64x256xbf16>, vector<256x128xbf16>, vector<64x128xf32> -> vector<64x128xf32>
    %c0_259 = arith.constant 0 : index
    %c0_260 = arith.constant 0 : index
    %223 = vector.load %arg7[%c0_259, %c0_260] : memref<64x128xf32, #tpu.memory_space<vmem>>, vector<64x128xf32>
    tpu.vector_store %arg7[%c0_259, %c0_260], %222 {strides = array<i32>} : memref<64x128xf32, #tpu.memory_space<vmem>>, vector<64x128xf32>,
    %c2_261 = arith.constant 2 : index
    %c8_262 = arith.constant 8 : index
    %c0_263 = arith.constant 0 : index
    %224 = vector.load %arg6[%c2_261, %c8_262, %c0_263] : memref<3x80x256xbf16, #tpu.memory_space<vmem>>, vector<1x64x256xbf16>
    %225 = vector.shape_cast %224 : vector<1x64x256xbf16> to vector<64x256xbf16>
    %c22 = arith.constant 22 : index
    %c0_264 = arith.constant 0 : index
    %c0_265 = arith.constant 0 : index
    %226 = vector.load %arg2[%c22, %c0_264, %c0_265] : memref<25x256x128xbf16, #tpu.memory_space<vmem>>, vector<1x256x128xbf16>
    %227 = vector.shape_cast %226 : vector<1x256x128xbf16> to vector<256x128xbf16>
    %cst_266 = arith.constant dense<0.000000e+00> : vector<64x128xf32>
    %228 = tpu.matmul %225, %227, %cst_266 {dimension_numbers = #tpu.dot_dimension_numbers<[1], [0], [0], [1], [0, 0, 1, 1], [], []>} : vector<64x256xbf16>, vector<256x128xbf16>, vector<64x128xf32> -> vector<64x128xf32>
    %c0_267 = arith.constant 0 : index
    %c0_268 = arith.constant 0 : index
    %229 = vector.load %arg7[%c0_267, %c0_268] : memref<64x128xf32, #tpu.memory_space<vmem>>, vector<64x128xf32>
    %230 = arith.addf %229, %228 : vector<64x128xf32>
    %c0_269 = arith.constant 0 : index
    %c0_270 = arith.constant 0 : index
    %231 = vector.load %arg7[%c0_269, %c0_270] : memref<64x128xf32, #tpu.memory_space<vmem>>, vector<64x128xf32>
    tpu.vector_store %arg7[%c0_269, %c0_270], %230 {strides = array<i32>} : memref<64x128xf32, #tpu.memory_space<vmem>>, vector<64x128xf32>,
    %c1_271 = arith.constant 1 : index
    %c16_272 = arith.constant 16 : index
    %c0_273 = arith.constant 0 : index
    %232 = vector.load %arg6[%c1_271, %c16_272, %c0_273] : memref<3x80x256xbf16, #tpu.memory_space<vmem>>, vector<1x64x256xbf16>
    %233 = vector.shape_cast %232 : vector<1x64x256xbf16> to vector<64x256xbf16>
    %c23 = arith.constant 23 : index
    %c0_274 = arith.constant 0 : index
    %c0_275 = arith.constant 0 : index
    %234 = vector.load %arg2[%c23, %c0_274, %c0_275] : memref<25x256x128xbf16, #tpu.memory_space<vmem>>, vector<1x256x128xbf16>
    %235 = vector.shape_cast %234 : vector<1x256x128xbf16> to vector<256x128xbf16>
    %cst_276 = arith.constant dense<0.000000e+00> : vector<64x128xf32>
    %236 = tpu.matmul %233, %235, %cst_276 {dimension_numbers = #tpu.dot_dimension_numbers<[1], [0], [0], [1], [0, 0, 1, 1], [], []>} : vector<64x256xbf16>, vector<256x128xbf16>, vector<64x128xf32> -> vector<64x128xf32>
    %c0_277 = arith.constant 0 : index
    %c0_278 = arith.constant 0 : index
    %237 = vector.load %arg7[%c0_277, %c0_278] : memref<64x128xf32, #tpu.memory_space<vmem>>, vector<64x128xf32>
    %238 = arith.addf %237, %236 : vector<64x128xf32>
    %c0_279 = arith.constant 0 : index
    %c0_280 = arith.constant 0 : index
    %239 = vector.load %arg7[%c0_279, %c0_280] : memref<64x128xf32, #tpu.memory_space<vmem>>, vector<64x128xf32>
    tpu.vector_store %arg7[%c0_279, %c0_280], %238 {strides = array<i32>} : memref<64x128xf32, #tpu.memory_space<vmem>>, vector<64x128xf32>,
    %c2_281 = arith.constant 2 : index
    %c16_282 = arith.constant 16 : index
    %c0_283 = arith.constant 0 : index
    %240 = vector.load %arg6[%c2_281, %c16_282, %c0_283] : memref<3x80x256xbf16, #tpu.memory_space<vmem>>, vector<1x64x256xbf16>
    %241 = vector.shape_cast %240 : vector<1x64x256xbf16> to vector<64x256xbf16>
    %c24 = arith.constant 24 : index
    %c0_284 = arith.constant 0 : index
    %c0_285 = arith.constant 0 : index
    %242 = vector.load %arg2[%c24, %c0_284, %c0_285] : memref<25x256x128xbf16, #tpu.memory_space<vmem>>, vector<1x256x128xbf16>
    %243 = vector.shape_cast %242 : vector<1x256x128xbf16> to vector<256x128xbf16>
    %cst_286 = arith.constant dense<0.000000e+00> : vector<64x128xf32>
    %244 = tpu.matmul %241, %243, %cst_286 {dimension_numbers = #tpu.dot_dimension_numbers<[1], [0], [0], [1], [0, 0, 1, 1], [], []>} : vector<64x256xbf16>, vector<256x128xbf16>, vector<64x128xf32> -> vector<64x128xf32>
    %c0_287 = arith.constant 0 : index
    %c0_288 = arith.constant 0 : index
    %245 = vector.load %arg7[%c0_287, %c0_288] : memref<64x128xf32, #tpu.memory_space<vmem>>, vector<64x128xf32>
    %246 = arith.addf %245, %244 : vector<64x128xf32>
    %c0_289 = arith.constant 0 : index
    %c0_290 = arith.constant 0 : index
    %247 = vector.load %arg7[%c0_289, %c0_290] : memref<64x128xf32, #tpu.memory_space<vmem>>, vector<64x128xf32>
    tpu.vector_store %arg7[%c0_289, %c0_290], %246 {strides = array<i32>} : memref<64x128xf32, #tpu.memory_space<vmem>>, vector<64x128xf32>,
    %c0_291 = arith.constant 0 : index
    %c0_292 = arith.constant 0 : index
    %248 = vector.load %arg7[%c0_291, %c0_292] : memref<64x128xf32, #tpu.memory_space<vmem>>, vector<64x128xf32>
    %c0_293 = arith.constant 0 : index
    %c1_294 = arith.constant 1 : index
    %c1_295 = arith.constant 1 : index
    %c0_296 = arith.constant 0 : index
    %c0_297 = arith.constant 0 : index
    %249 = vector.load %arg3[%c0_293, %c1_294, %c1_295, %c0_296, %c0_297] : memref<1x2x2x64x128xf32, #tpu.memory_space<vmem>>, vector<1x1x1x64x128xf32>
    %250 = vector.shape_cast %249 : vector<1x1x1x64x128xf32> to vector<64x128xf32>
    %251 = vector.shape_cast %248 : vector<64x128xf32> to vector<1x1x1x64x128xf32>
    tpu.vector_store %arg3[%c0_293, %c1_294, %c1_295, %c0_296, %c0_297], %251 {strides = array<i32>} : memref<1x2x2x64x128xf32, #tpu.memory_space<vmem>>, vector<1x1x1x64x128xf32>,
    %cst_298 = arith.constant dense<0.000000e+00> : vector<128xf32>
    %252 = vector.multi_reduction <add>, %248, %cst_298 [0] : vector<64x128xf32> to vector<128xf32>
    %253 = vector.shape_cast %252 : vector<128xf32> to vector<1x128xf32>
    %254 = arith.addf %213, %253 : vector<1x128xf32>
    %255 = arith.mulf %248, %248 : vector<64x128xf32>
    %cst_299 = arith.constant dense<0.000000e+00> : vector<128xf32>
    %256 = vector.multi_reduction <add>, %255, %cst_299 [0] : vector<64x128xf32> to vector<128xf32>
    %257 = vector.shape_cast %256 : vector<128xf32> to vector<1x128xf32>
    %258 = arith.addf %217, %257 : vector<1x128xf32>
    %259 = vector.shape_cast %254 : vector<1x128xf32> to vector<1x128xf32>
    %260 = vector.broadcast %259 : vector<1x128xf32> to vector<8x128xf32>
    %c0_300 = arith.constant 0 : index
    %c0_301 = arith.constant 0 : index
    %c0_302 = arith.constant 0 : index
    %261 = vector.load %arg4[%c0_300, %c0_301, %c0_302] : memref<1x8x128xf32, #tpu.memory_space<vmem>>, vector<1x8x128xf32>
    %262 = vector.shape_cast %261 : vector<1x8x128xf32> to vector<8x128xf32>
    %263 = vector.shape_cast %260 : vector<8x128xf32> to vector<1x8x128xf32>
    tpu.vector_store %arg4[%c0_300, %c0_301, %c0_302], %263 {strides = array<i32>} : memref<1x8x128xf32, #tpu.memory_space<vmem>>, vector<1x8x128xf32>,
    %264 = vector.shape_cast %258 : vector<1x128xf32> to vector<1x128xf32>
    %265 = vector.broadcast %264 : vector<1x128xf32> to vector<8x128xf32>
    %c0_303 = arith.constant 0 : index
    %c0_304 = arith.constant 0 : index
    %c0_305 = arith.constant 0 : index
    %266 = vector.load %arg5[%c0_303, %c0_304, %c0_305] : memref<1x8x128xf32, #tpu.memory_space<vmem>>, vector<1x8x128xf32>
    %267 = vector.shape_cast %266 : vector<1x8x128xf32> to vector<8x128xf32>
    %268 = vector.shape_cast %265 : vector<8x128xf32> to vector<1x8x128xf32>
    tpu.vector_store %arg5[%c0_303, %c0_304, %c0_305], %268 {strides = array<i32>} : memref<1x8x128xf32, #tpu.memory_space<vmem>>, vector<1x8x128xf32>,
    return
  }
  func.func @transform_0(%arg0: i32) -> (i32, i32, i32, i32) {
    %c0_i32 = arith.constant 0 : i32
    %c0_i32_0 = arith.constant 0 : i32
    %c0_i32_1 = arith.constant 0 : i32
    %c0_i32_2 = arith.constant 0 : i32
    return %arg0, %c0_i32, %c0_i32_0, %c0_i32_1 : i32, i32, i32, i32
  }
  func.func @transform_1(%arg0: i32) -> (i32, i32, i32) {
    %c0_i32 = arith.constant 0 : i32
    %c0_i32_0 = arith.constant 0 : i32
    %c0_i32_1 = arith.constant 0 : i32
    %c0_i32_2 = arith.constant 0 : i32
    return %c0_i32, %c0_i32_0, %c0_i32_1 : i32, i32, i32
  }
  func.func @transform_2(%arg0: i32) -> (i32, i32, i32, i32, i32) {
    %c0_i32 = arith.constant 0 : i32
    %c0_i32_0 = arith.constant 0 : i32
    %c0_i32_1 = arith.constant 0 : i32
    %c0_i32_2 = arith.constant 0 : i32
    %c0_i32_3 = arith.constant 0 : i32
    return %arg0, %c0_i32, %c0_i32_0, %c0_i32_1, %c0_i32_2 : i32, i32, i32, i32, i32
  }
  func.func @transform_3(%arg0: i32) -> (i32, i32, i32) {
    %c0_i32 = arith.constant 0 : i32
    %c0_i32_0 = arith.constant 0 : i32
    %c0_i32_1 = arith.constant 0 : i32
    return %arg0, %c0_i32, %c0_i32_0 : i32, i32, i32
  }
  func.func @transform_4(%arg0: i32) -> (i32, i32, i32) {
    %c0_i32 = arith.constant 0 : i32
    %c0_i32_0 = arith.constant 0 : i32
    %c0_i32_1 = arith.constant 0 : i32
    return %arg0, %c0_i32, %c0_i32_0 : i32, i32, i32
  }
}

</mosaic_0001>

<llo_original>
// kernel: tpu_custom_call.1
$region0: #{tpu_custom_call.1}
  #allocation0 [shape = 'u32[]', space=smem, size = 0x4, offset = 0x4, fixed_abs, tag = 'smem constant byte address 0x4 - core index']
  #allocation1 [shape = 'u32[144,128]{1,0:T(1,128)}', space=vmem, size = 0x12000, scoped, tag = 'internal scratch']
  #allocation2 [shape = 'bf16[3,80,256]{2,1,0:T(16,128)(2,1)}', space=vmem, size = 0x1e000, scoped, tag = 'scratch operand']
  #allocation3 [shape = 'f32[64,128]{1,0:T(8,128)}', space=vmem, size = 0x8000, scoped, tag = 'scratch operand']
  %s0 = inlined_call_operand.vmem [shape: f32[2,10,10,256], index: 0, kind: input, shape index: {}]
  %s1 = inlined_call_operand.hbm [shape: bf16[25,256,128], index: 1, kind: input, shape index: {}]
  %s2 = inlined_call_operand.hbm [shape: f32[2,2,2,64,128], index: 2, kind: output, shape index: {0}]
  %s3 = inlined_call_operand.hbm [shape: f32[2,8,128], index: 3, kind: output, shape index: {1}]
  %s4 = inlined_call_operand.hbm [shape: f32[2,8,128], index: 4, kind: output, shape index: {2}]
  %5 = xla_tuple %s2, %s3, %s4
  %s6 = sld [smem:[#allocation0]]
  $region61: #{tpu_custom_call.1} parent=0
    _
  %s8 = ssub.s32 1, %s6
  %s9 = scalar_select 0, %s8, %s6
  $region1: #{tpu_custom_call.1} parent=0
    #allocation4 [shape = 'u8[1638400]{0}', space=vmem, size = 0x190000, scoped, tag = 'input window, operand 1, single buffered']
    #allocation5 [shape = 's32[2]{0}', space=sflag, size = 0x8, scoped, tag = 'scoped memory for tpu_custom_call.1']
    #allocation6 [shape = 's32[2]{0}', space=sflag, size = 0x8, scoped, tag = 'scoped memory for tpu_custom_call.1']
    #allocation7 [shape = 'u8[262144]{0}', space=vmem, size = 0x40000, scoped, tag = 'output window, operand 0']
    #allocation8 [shape = 'u8[8192]{0}', space=vmem, size = 0x2000, scoped, tag = 'output window, operand 1']
    #allocation9 [shape = 's32[2]{0}', space=sflag, size = 0x8, scoped, tag = 'scoped memory for tpu_custom_call.1']
    #allocation10 [shape = 'u8[8192]{0}', space=vmem, size = 0x2000, scoped, tag = 'output window, operand 2']
    %10 = vsyncpa [#allocation5], 0
    %11 = vsyncpa [#allocation6], 0
    %s12 = scalar_lea.sflag [#allocation6], 1
    %13 = vsyncpa %s12, 0
    %14 = vsyncpa [#allocation9], 0
    %s15 = scalar_lea.sflag [#allocation9], 1
    %16 = vsyncpa %s15, 0
    loop: start=0, step=1, limit=4
    $region2: #{tpu_custom_call.1} parent=1 // loop_pre_header
      _
    $region3: #{tpu_custom_call.1} parent=1 // loop_header
      %s18 = sphi 0, %s22
      %p19 = scmp.ge.s32.totalorder %s18, 4
      %s28 = sphi 0, %s30
      %s31 = sphi 0, %s28
      %s32 = sphi 0, %s31
      %s48 = sphi 0, %s32
      %s52 = sphi 0, %s52
      %s54 = sphi 0, %s52
      %s55 = sphi 0, %s54
      %s69 = sphi 0, %s55
      %s75 = sphi 0, %s77
      %s78 = sphi 0, %s75
      %s79 = sphi 0, %s78
      %s95 = sphi 0, %s79
      %s101 = sphi 0, %s103
      %s104 = sphi 0, %s101
      %s105 = sphi 0, %s104
      %s121 = sphi 0, %s105
      %s127 = sphi 0, %s129
      %s130 = sphi 0, %s127
      %s131 = sphi 0, %s130
      %s147 = sphi 0, %s131
    $region4: #{tpu_custom_call.1} parent=1 // loop_header_branch
      %21 = sbr.rel (%p19) target = $region8
    $region5: #{tpu_custom_call.1} parent=1 // loop_body
      %s23 = ssub.s32 %s18, 1
      %s24 = ssub.s32 %s18, 2
      %s25 = sadd.s32 %s18, 1
      %s26 = ssub.s32 %s18, %s25
      %p27 = scmp.eq.s32.totalorder %s26, 0
      %s29 = sadd.s32 %s28, 1
      %s30 = scalar_select %p27, %s28, %s29
      %p33 = pneg %p27
      %p34 = scmp.eq.s32.totalorder %s18, 1
      %p35 = por %p33, %p34
      %p36 = scmp.ne.s32.totalorder %s28, %s31
      %p37 = scmp.eq.s32.totalorder %s18, 0
      %p38 = por %p36, %p37
      %p39 = scmp.ne.s32.totalorder %s28, %s31
      %p40 = scmp.eq.s32.totalorder %s23, 1
      %p41 = por %p39, %p40
      %p42 = scmp.ne.s32.totalorder %s31, %s32
      %p43 = scmp.eq.s32.totalorder %s23, 0
      %p44 = por %p42, %p43
      %p45 = scmp.ne.s32.totalorder %s31, %s32
      %p46 = scmp.eq.s32.totalorder %s24, 1
      %p47 = por %p45, %p46
      %p49 = scmp.ne.s32.totalorder %s32, %s48
      %p50 = scmp.eq.s32.totalorder %s24, 0
      %p51 = por %p49, %p50
      %s53 = sadd.s32 %s52, 1
      %p56 = scmp.eq.s32.totalorder %s18, 1
      %p57 = scmp.ne.s32.totalorder %s52, %s54
      %p58 = scmp.eq.s32.totalorder %s18, 0
      %p59 = por %p57, %p58
      %p60 = scmp.ne.s32.totalorder %s52, %s54
      %p61 = scmp.eq.s32.totalorder %s23, 1
      %p62 = por %p60, %p61
      %p63 = scmp.ne.s32.totalorder %s54, %s55
      %p64 = scmp.eq.s32.totalorder %s23, 0
      %p65 = por %p63, %p64
      %p66 = scmp.ne.s32.totalorder %s54, %s55
      %p67 = scmp.eq.s32.totalorder %s24, 1
      %p68 = por %p66, %p67
      %p70 = scmp.ne.s32.totalorder %s55, %s69
      %p71 = scmp.eq.s32.totalorder %s24, 0
      %p72 = por %p70, %p71
      %s73 = ssub.s32 %s18, %s25
      %p74 = scmp.eq.s32.totalorder %s73, 0
      %s76 = sadd.s32 %s75, 1
      %s77 = scalar_select %p74, %s75, %s76
      %p80 = pneg %p74
      %p81 = scmp.eq.s32.totalorder %s18, 1
      %p82 = por %p80, %p81
      %p83 = scmp.ne.s32.totalorder %s75, %s78
      %p84 = scmp.eq.s32.totalorder %s18, 0
      %p85 = por %p83, %p84
      %p86 = scmp.ne.s32.totalorder %s75, %s78
      %p87 = scmp.eq.s32.totalorder %s23, 1
      %p88 = por %p86, %p87
      %p89 = scmp.ne.s32.totalorder %s78, %s79
      %p90 = scmp.eq.s32.totalorder %s23, 0
      %p91 = por %p89, %p90
      %p92 = scmp.ne.s32.totalorder %s78, %s79
      %p93 = scmp.eq.s32.totalorder %s24, 1
      %p94 = por %p92, %p93
      %p96 = scmp.ne.s32.totalorder %s79, %s95
      %p97 = scmp.eq.s32.totalorder %s24, 0
      %p98 = por %p96, %p97
      %s99 = ssub.s32 %s18, %s25
      %p100 = scmp.eq.s32.totalorder %s99, 0
      %s102 = sadd.s32 %s101, 1
      %s103 = scalar_select %p100, %s101, %s102
      %p106 = pneg %p100
      %p107 = scmp.eq.s32.totalorder %s18, 1
      %p108 = por %p106, %p107
      %p109 = scmp.ne.s32.totalorder %s101, %s104
      %p110 = scmp.eq.s32.totalorder %s18, 0
      %p111 = por %p109, %p110
      %p112 = scmp.ne.s32.totalorder %s101, %s104
      %p113 = scmp.eq.s32.totalorder %s23, 1
      %p114 = por %p112, %p113
      %p115 = scmp.ne.s32.totalorder %s104, %s105
      %p116 = scmp.eq.s32.totalorder %s23, 0
      %p117 = por %p115, %p116
      %p118 = scmp.ne.s32.totalorder %s104, %s105
      %p119 = scmp.eq.s32.totalorder %s24, 1
      %p120 = por %p118, %p119
      %p122 = scmp.ne.s32.totalorder %s105, %s121
      %p123 = scmp.eq.s32.totalorder %s24, 0
      %p124 = por %p122, %p123
      %s125 = ssub.s32 %s18, %s25
      %p126 = scmp.eq.s32.totalorder %s125, 0
      %s128 = sadd.s32 %s127, 1
      %s129 = scalar_select %p126, %s127, %s128
      %p132 = pneg %p126
      %p133 = scmp.eq.s32.totalorder %s18, 1
      %p134 = por %p132, %p133
      %p135 = scmp.ne.s32.totalorder %s127, %s130
      %p136 = scmp.eq.s32.totalorder %s18, 0
      %p137 = por %p135, %p136
      %p138 = scmp.ne.s32.totalorder %s127, %s130
      %p139 = scmp.eq.s32.totalorder %s23, 1
      %p140 = por %p138, %p139
      %p141 = scmp.ne.s32.totalorder %s130, %s131
      %p142 = scmp.eq.s32.totalorder %s23, 0
      %p143 = por %p141, %p142
      %p144 = scmp.ne.s32.totalorder %s130, %s131
      %p145 = scmp.eq.s32.totalorder %s24, 1
      %p146 = por %p144, %p145
      %p148 = scmp.ne.s32.totalorder %s131, %s147
      %p149 = scmp.eq.s32.totalorder %s24, 0
      %p150 = por %p148, %p149
      %p151 = scmp.le.s32.totalorder 1, %s18
      %p152 = scmp.lt.s32.totalorder %s18, 3
      %p153 = pnand %p151, %p152
      %p154 = pneg %p153
      // Predicated region
      $region9: #{tpu_custom_call.1} parent=5 // pred_check
        _
      $region10: #{tpu_custom_call.1} parent=5 // pred_check_branch
        %156 = sbr.rel (%p153) target = $region12
      $region11: #{tpu_custom_call.1} parent=5 // pred_region
        %s157 = ssub.s32 %s18, 1
        // Predicated region
        $region13: #{tpu_custom_call.1} parent=11 // pred_check
          %p158 = pneg %p65
        $region14: #{tpu_custom_call.1} parent=11 // pred_check_branch
          %160 = sbr.rel (%p158) target = $region16
        $region15: #{tpu_custom_call.1} parent=11 // pred_region
          %s162 = ssub.s32 51200, 51200
          %163 = vsyncadd [#allocation5], %s162
          %s164 = sshll.u32 [#allocation4], 4
          %s165 = int_to_ptr.vmem [resolvable:$true] %s164
          %170 = dma.hbm_to_vmem [thread:$0]  %s1, 51200, %s165, [#allocation5], 64, 64, 4
        $region16: #{tpu_custom_call.1} parent=11 // pred_fallthru
          _
      $region12: #{tpu_custom_call.1} parent=5 // pred_fallthru
        _
      %p171 = scmp.lt.s32.totalorder %s18, 2
      // Predicated region
      $region17: #{tpu_custom_call.1} parent=5 // pred_check
        %p172 = pneg %p171
      $region18: #{tpu_custom_call.1} parent=5 // pred_check_branch
        %174 = sbr.rel (%p172) target = $region20
      $region19: #{tpu_custom_call.1} parent=5 // pred_region
        // Predicated region
        $region21: #{tpu_custom_call.1} parent=19 // pred_check
          %p175 = pneg %p38
        $region22: #{tpu_custom_call.1} parent=19 // pred_check_branch
          %177 = sbr.rel (%p175) target = $region24
        $region23: #{tpu_custom_call.1} parent=19 // pred_region
          %p178 = scmp.lt.s32.totalorder %s18, 1
          %s179 = scalar_select %p178, %s18, 1
          %s180 = smul.addr %s179, 40
          %s181 = smul.addr %s180, 8
          %s182 = scalar_lea.vmem %s0, %s181
        $region24: #{tpu_custom_call.1} parent=19 // pred_fallthru
          _
      $region20: #{tpu_custom_call.1} parent=5 // pred_fallthru
        _
      %p183 = scmp.le.s32.totalorder 1, %s18
      %p184 = scmp.lt.s32.totalorder %s18, 3
      %p185 = pnand %p183, %p184
      %p186 = pneg %p185
      // Predicated region
      $region25: #{tpu_custom_call.1} parent=5 // pred_check
        _
      $region26: #{tpu_custom_call.1} parent=5 // pred_check_branch
        %188 = sbr.rel (%p185) target = $region28
      $region27: #{tpu_custom_call.1} parent=5 // pred_region
        %s189 = ssub.s32 %s18, 1
        // Predicated region
        $region29: #{tpu_custom_call.1} parent=27 // pred_check
          %p190 = pneg %p65
        $region30: #{tpu_custom_call.1} parent=27 // pred_check_branch
          %192 = sbr.rel (%p190) target = $region32
        $region31: #{tpu_custom_call.1} parent=27 // pred_region
          %193 = dma.done [#allocation5], 51200
        $region32: #{tpu_custom_call.1} parent=27 // pred_fallthru
          _
        %p194 = scmp.lt.s32.totalorder %s23, 1
        %s195 = scalar_select %p194, %s23, 1
        %s196 = smul.addr %s195, 40
        %s197 = smul.addr %s196, 8
        %s198 = scalar_lea.vmem %s0, %s197
        %p199 = pneg %p44
        %p200 = pneg %p41
        %p201 = pneg %p65
        %p202 = pneg %p62
        %p203 = pneg %p91
        %p204 = pneg %p88
        %s205 = sand.u32 %s78, 1
        %s206 = scalar_lea.sflag [#allocation6], %s205
        %s207 = sand.u32 %s78, 1
        %s208 = smul.addr %s207, 256
        %s209 = scalar_lea.vmem [#allocation7], %s208
        %p210 = pneg %p117
        %p211 = pneg %p114
        %s212 = sand.u32 %s23, 1
        %s213 = scalar_lea.sflag [#allocation9], %s212
        %s214 = sand.u32 %s104, 1
        %s215 = smul.addr %s214, 8
        %s216 = scalar_lea.vmem [#allocation8], %s215
        %p217 = pneg %p143
        %p218 = pneg %p140
        %s219 = sand.u32 %s23, 1
        %s220 = scalar_lea.sflag [#allocation9], %s219
        %s221 = sand.u32 %s130, 1
        %s222 = smul.addr %s221, 8
        %s223 = scalar_lea.vmem [#allocation10], %s222
        %p224 = scmp.lt.s32.totalorder %s23, 1
        %s225 = scalar_select %p224, %s23, 1
        %s226 = smul.addr %s225, 40
        %s227 = smul.addr %s226, 8
        %s228 = scalar_lea.vmem %s0, %s227
        %v230 = vld [vmem:[%s228] sm:$0xff]
        %v231 = vld [vmem:[%s228 + $0x8] sm:$0xff]
        %v232 = vld [vmem:[%s228 + $0x20] sm:$0xff]
        %v233 = vld [vmem:[%s228 + $0x28] sm:$0xff]
        %v234 = vld [vmem:[%s228 + $0x40] sm:$0xff]
        %v235 = vld [vmem:[%s228 + $0x48] sm:$0xff]
        %v236 = vld [vmem:[%s228 + $0x60] sm:$0xff]
        %v237 = vld [vmem:[%s228 + $0x68] sm:$0xff]
        %v238 = vld [vmem:[%s228 + $0x80] sm:$0xff]
        %v239 = vld [vmem:[%s228 + $0x88] sm:$0xff]
        %v240 = vld [vmem:[%s228 + $0xa0] sm:$0xff]
        %v241 = vld [vmem:[%s228 + $0xa8] sm:$0xff]
        %v242 = vld [vmem:[%s228 + $0xc0] sm:$0xff]
        %v243 = vld [vmem:[%s228 + $0xc8] sm:$0xff]
        %v244 = vld [vmem:[%s228 + $0xe0] sm:$0xff]
        %v245 = vld [vmem:[%s228 + $0xe8] sm:$0xff]
        %v246 = vld [vmem:[%s228 + $0x100] sm:$0xff]
        %v247 = vld [vmem:[%s228 + $0x108] sm:$0xff]
        %v248 = vld [vmem:[%s228 + $0x120] sm:$0xff]
        %v249 = vld [vmem:[%s228 + $0x128] sm:$0xff]
        %v250 = vpack.c.bf16 %v230, %v230
        %v251 = vpack.c.bf16 %v231, %v231
        %v252 = vpack.c.bf16 %v232, %v232
        %v253 = vpack.c.bf16 %v233, %v233
        %v254 = vpack.c.bf16 %v234, %v234
        %v255 = vpack.c.bf16 %v235, %v235
        %v256 = vpack.c.bf16 %v236, %v236
        %v257 = vpack.c.bf16 %v237, %v237
        %v258 = vpack.c.bf16 %v238, %v238
        %v259 = vpack.c.bf16 %v239, %v239
        %v260 = vpack.c.bf16 %v240, %v240
        %v261 = vpack.c.bf16 %v241, %v241
        %v262 = vpack.c.bf16 %v242, %v242
        %v263 = vpack.c.bf16 %v243, %v243
        %v264 = vpack.c.bf16 %v244, %v244
        %v265 = vpack.c.bf16 %v245, %v245
        %v266 = vpack.c.bf16 %v246, %v246
        %v267 = vpack.c.bf16 %v247, %v247
        %v268 = vpack.c.bf16 %v248, %v248
        %v269 = vpack.c.bf16 %v249, %v249
        %v290 = vunpack.c.l.b16 %v250
        %v291 = vunpack.c.l.b16 %v251
        %v292 = vunpack.c.l.b16 %v252
        %v293 = vunpack.c.l.b16 %v253
        %v294 = vunpack.c.l.b16 %v254
        %v295 = vunpack.c.l.b16 %v255
        %v296 = vunpack.c.l.b16 %v256
        %v297 = vunpack.c.l.b16 %v257
        %v298 = vunpack.c.l.b16 %v258
        %v299 = vunpack.c.l.b16 %v259
        %v300 = vunpack.c.l.b16 %v260
        %v301 = vunpack.c.l.b16 %v261
        %v302 = vunpack.c.l.b16 %v262
        %v303 = vunpack.c.l.b16 %v263
        %v304 = vunpack.c.l.b16 %v264
        %v305 = vunpack.c.l.b16 %v265
        %v306 = vunpack.c.l.b16 %v266
        %v307 = vunpack.c.l.b16 %v267
        %v308 = vunpack.c.l.b16 %v268
        %v309 = vunpack.c.l.b16 %v269
        %v310 = vpack.c.b16 %v292, %v290
        %v311 = vpack.c.b16 %v293, %v291
        %v312 = vpack.c.b16 %v296, %v294
        %v313 = vpack.c.b16 %v297, %v295
        %v314 = vpack.c.b16 %v300, %v298
        %v315 = vpack.c.b16 %v301, %v299
        %v316 = vpack.c.b16 %v304, %v302
        %v317 = vpack.c.b16 %v305, %v303
        %v318 = vpack.c.b16 %v308, %v306
        %v319 = vpack.c.b16 %v309, %v307
        %330 = vst [vmem:[#allocation2] sm:$0xff] %v310
        %331 = vst [vmem:[#allocation2 + $0x8] sm:$0xff] %v311
        %332 = vst [vmem:[#allocation2 + $0x10] sm:$0xff] %v312
        %333 = vst [vmem:[#allocation2 + $0x18] sm:$0xff] %v313
        %334 = vst [vmem:[#allocation2 + $0x20] sm:$0xff] %v314
        %335 = vst [vmem:[#allocation2 + $0x28] sm:$0xff] %v315
        %336 = vst [vmem:[#allocation2 + $0x30] sm:$0xff] %v316
        %337 = vst [vmem:[#allocation2 + $0x38] sm:$0xff] %v317
        %338 = vst [vmem:[#allocation2 + $0x40] sm:$0xff] %v318
        %339 = vst [vmem:[#allocation2 + $0x48] sm:$0xff] %v319
        %v340 = vld [vmem:[%s228] sm:$0xfe]
        %v341 = vld [vmem:[%s228 + $0x8] sm:$0xfe]
        %v342 = vld [vmem:[%s228 + $0x10] sm:$0x1]
        %v343 = vld [vmem:[%s228 + $0x18] sm:$0x1]
        %v344 = vld [vmem:[%s228 + $0x20] sm:$0xfe]
        %v345 = vld [vmem:[%s228 + $0x28] sm:$0xfe]
        %v346 = vld [vmem:[%s228 + $0x30] sm:$0x1]
        %v347 = vld [vmem:[%s228 + $0x38] sm:$0x1]
        %v348 = vld [vmem:[%s228 + $0x40] sm:$0xfe]
        %v349 = vld [vmem:[%s228 + $0x48] sm:$0xfe]
        %v350 = vld [vmem:[%s228 + $0x50] sm:$0x1]
        %v351 = vld [vmem:[%s228 + $0x58] sm:$0x1]
        %v352 = vld [vmem:[%s228 + $0x60] sm:$0xfe]
        %v353 = vld [vmem:[%s228 + $0x68] sm:$0xfe]
        %v354 = vld [vmem:[%s228 + $0x70] sm:$0x1]
        %v355 = vld [vmem:[%s228 + $0x78] sm:$0x1]
        %v356 = vld [vmem:[%s228 + $0x80] sm:$0xfe]
        %v357 = vld [vmem:[%s228 + $0x88] sm:$0xfe]
        %v358 = vld [vmem:[%s228 + $0x90] sm:$0x1]
        %v359 = vld [vmem:[%s228 + $0x98] sm:$0x1]
        %v360 = vld [vmem:[%s228 + $0xa0] sm:$0xfe]
        %v361 = vld [vmem:[%s228 + $0xa8] sm:$0xfe]
        %v362 = vld [vmem:[%s228 + $0xb0] sm:$0x1]
        %v363 = vld [vmem:[%s228 + $0xb8] sm:$0x1]
        %v364 = vld [vmem:[%s228 + $0xc0] sm:$0xfe]
        %v365 = vld [vmem:[%s228 + $0xc8] sm:$0xfe]
        %v366 = vld [vmem:[%s228 + $0xd0] sm:$0x1]
        %v367 = vld [vmem:[%s228 + $0xd8] sm:$0x1]
        %v368 = vld [vmem:[%s228 + $0xe0] sm:$0xfe]
        %v369 = vld [vmem:[%s228 + $0xe8] sm:$0xfe]
        %v370 = vld [vmem:[%s228 + $0xf0] sm:$0x1]
        %v371 = vld [vmem:[%s228 + $0xf8] sm:$0x1]
        %v372 = vld [vmem:[%s228 + $0x100] sm:$0xfe]
        %v373 = vld [vmem:[%s228 + $0x108] sm:$0xfe]
        %v374 = vld [vmem:[%s228 + $0x110] sm:$0x1]
        %v375 = vld [vmem:[%s228 + $0x118] sm:$0x1]
        %v376 = vld [vmem:[%s228 + $0x120] sm:$0xfe]
        %v377 = vld [vmem:[%s228 + $0x128] sm:$0xfe]
        %v378 = vld [vmem:[%s228 + $0x130] sm:$0x1]
        %v379 = vld [vmem:[%s228 + $0x138] sm:$0x1]
        %v380 = vpack.c.bf16 %v342, %v340
        %v381 = vpack.c.bf16 %v343, %v341
        %v382 = vpack.c.bf16 %v346, %v344
        %v383 = vpack.c.bf16 %v347, %v345
        %v384 = vpack.c.bf16 %v350, %v348
        %v385 = vpack.c.bf16 %v351, %v349
        %v386 = vpack.c.bf16 %v354, %v352
        %v387 = vpack.c.bf16 %v355, %v353
        %v388 = vpack.c.bf16 %v358, %v356
        %v389 = vpack.c.bf16 %v359, %v357
        %v390 = vpack.c.bf16 %v362, %v360
        %v391 = vpack.c.bf16 %v363, %v361
        %v392 = vpack.c.bf16 %v366, %v364
        %v393 = vpack.c.bf16 %v367, %v365
        %v394 = vpack.c.bf16 %v370, %v368
        %v395 = vpack.c.bf16 %v371, %v369
        %v396 = vpack.c.bf16 %v374, %v372
        %v397 = vpack.c.bf16 %v375, %v373
        %v398 = vpack.c.bf16 %v378, %v376
        %v399 = vpack.c.bf16 %v379, %v377
        %v420 = vunpack.c.l.b16 %v380
        %v421 = vunpack.c.l.b16 %v381
        %v422 = vunpack.c.h.b16 %v380
        %v423 = vunpack.c.h.b16 %v381
        %v424 = vunpack.c.l.b16 %v382
        %v425 = vunpack.c.l.b16 %v383
        %v426 = vunpack.c.h.b16 %v382
        %v427 = vunpack.c.h.b16 %v383
        %v428 = vunpack.c.l.b16 %v384
        %v429 = vunpack.c.l.b16 %v385
        %v430 = vunpack.c.h.b16 %v384
        %v431 = vunpack.c.h.b16 %v385
        %v432 = vunpack.c.l.b16 %v386
        %v433 = vunpack.c.l.b16 %v387
        %v434 = vunpack.c.h.b16 %v386
        %v435 = vunpack.c.h.b16 %v387
        %v436 = vunpack.c.l.b16 %v388
        %v437 = vunpack.c.l.b16 %v389
        %v438 = vunpack.c.h.b16 %v388
        %v439 = vunpack.c.h.b16 %v389
        %v440 = vunpack.c.l.b16 %v390
        %v441 = vunpack.c.l.b16 %v391
        %v442 = vunpack.c.h.b16 %v390
        %v443 = vunpack.c.h.b16 %v391
        %v444 = vunpack.c.l.b16 %v392
        %v445 = vunpack.c.l.b16 %v393
        %v446 = vunpack.c.h.b16 %v392
        %v447 = vunpack.c.h.b16 %v393
        %v448 = vunpack.c.l.b16 %v394
        %v449 = vunpack.c.l.b16 %v395
        %v450 = vunpack.c.h.b16 %v394
        %v451 = vunpack.c.h.b16 %v395
        %v452 = vunpack.c.l.b16 %v396
        %v453 = vunpack.c.l.b16 %v397
        %v454 = vunpack.c.h.b16 %v396
        %v455 = vunpack.c.h.b16 %v397
        %v456 = vunpack.c.l.b16 %v398
        %v457 = vunpack.c.l.b16 %v399
        %v458 = vunpack.c.h.b16 %v398
        %v459 = vunpack.c.h.b16 %v399
        %v460 = vpack.c.b16 %v421, %v420
        %v461 = vpack.c.b16 %v423, %v422
        %v462 = vpack.c.b16 %v425, %v424
        %v463 = vpack.c.b16 %v427, %v426
        %v464 = vpack.c.b16 %v429, %v428
        %v465 = vpack.c.b16 %v431, %v430
        %v466 = vpack.c.b16 %v433, %v432
        %v467 = vpack.c.b16 %v435, %v434
        %v468 = vpack.c.b16 %v437, %v436
        %v469 = vpack.c.b16 %v439, %v438
        %v470 = vpack.c.b16 %v441, %v440
        %v471 = vpack.c.b16 %v443, %v442
        %v472 = vpack.c.b16 %v445, %v444
        %v473 = vpack.c.b16 %v447, %v446
        %v474 = vpack.c.b16 %v449, %v448
        %v475 = vpack.c.b16 %v451, %v450
        %v476 = vpack.c.b16 %v453, %v452
        %v477 = vpack.c.b16 %v455, %v454
        %v478 = vpack.c.b16 %v457, %v456
        %v479 = vpack.c.b16 %v459, %v458
        %vm480 = vsmask.f32 3328
        %vm481 = vsmask.f32 7440
        %vm482 = vmor %vm480, %vm481
        %v484 = vshrl.u32 %v460, 16
        %v486 = vrot.slane %v484, 4
        %v487 = vshll.u32 %v460, 16
        %v489 = vrot.slane %v487, 5
        %v490 = vor.u32 %v486, %v489
        %v491 = vrot.slane %v490, 4
        %v493 = vshll.u32 %v461, 16
        %v495 = vrot.slane %v493, 5
        %v496 = vsel %vm482, %v491, %v495
        %v498 = vshrl.u32 %v462, 16
        %v500 = vrot.slane %v498, 4
        %v501 = vshll.u32 %v462, 16
        %v503 = vrot.slane %v501, 5
        %v504 = vor.u32 %v500, %v503
        %v505 = vrot.slane %v504, 4
        %v507 = vshll.u32 %v463, 16
        %v509 = vrot.slane %v507, 5
        %v510 = vsel %vm482, %v505, %v509
        %v512 = vshrl.u32 %v464, 16
        %v514 = vrot.slane %v512, 4
        %v515 = vshll.u32 %v464, 16
        %v517 = vrot.slane %v515, 5
        %v518 = vor.u32 %v514, %v517
        %v519 = vrot.slane %v518, 4
        %v521 = vshll.u32 %v465, 16
        %v523 = vrot.slane %v521, 5
        %v524 = vsel %vm482, %v519, %v523
        %v526 = vshrl.u32 %v466, 16
        %v528 = vrot.slane %v526, 4
        %v529 = vshll.u32 %v466, 16
        %v531 = vrot.slane %v529, 5
        %v532 = vor.u32 %v528, %v531
        %v533 = vrot.slane %v532, 4
        %v535 = vshll.u32 %v467, 16
        %v537 = vrot.slane %v535, 5
        %v538 = vsel %vm482, %v533, %v537
        %v540 = vshrl.u32 %v468, 16
        %v542 = vrot.slane %v540, 4
        %v543 = vshll.u32 %v468, 16
        %v545 = vrot.slane %v543, 5
        %v546 = vor.u32 %v542, %v545
        %v547 = vrot.slane %v546, 4
        %v549 = vshll.u32 %v469, 16
        %v551 = vrot.slane %v549, 5
        %v552 = vsel %vm482, %v547, %v551
        %v554 = vshrl.u32 %v470, 16
        %v556 = vrot.slane %v554, 4
        %v557 = vshll.u32 %v470, 16
        %v559 = vrot.slane %v557, 5
        %v560 = vor.u32 %v556, %v559
        %v561 = vrot.slane %v560, 4
        %v563 = vshll.u32 %v471, 16
        %v565 = vrot.slane %v563, 5
        %v566 = vsel %vm482, %v561, %v565
        %v568 = vshrl.u32 %v472, 16
        %v570 = vrot.slane %v568, 4
        %v571 = vshll.u32 %v472, 16
        %v573 = vrot.slane %v571, 5
        %v574 = vor.u32 %v570, %v573
        %v575 = vrot.slane %v574, 4
        %v577 = vshll.u32 %v473, 16
        %v579 = vrot.slane %v577, 5
        %v580 = vsel %vm482, %v575, %v579
        %v582 = vshrl.u32 %v474, 16
        %v584 = vrot.slane %v582, 4
        %v585 = vshll.u32 %v474, 16
        %v587 = vrot.slane %v585, 5
        %v588 = vor.u32 %v584, %v587
        %v589 = vrot.slane %v588, 4
        %v591 = vshll.u32 %v475, 16
        %v593 = vrot.slane %v591, 5
        %v594 = vsel %vm482, %v589, %v593
        %v596 = vshrl.u32 %v476, 16
        %v598 = vrot.slane %v596, 4
        %v599 = vshll.u32 %v476, 16
        %v601 = vrot.slane %v599, 5
        %v602 = vor.u32 %v598, %v601
        %v603 = vrot.slane %v602, 4
        %v605 = vshll.u32 %v477, 16
        %v607 = vrot.slane %v605, 5
        %v608 = vsel %vm482, %v603, %v607
        %v610 = vshrl.u32 %v478, 16
        %v612 = vrot.slane %v610, 4
        %v613 = vshll.u32 %v478, 16
        %v615 = vrot.slane %v613, 5
        %v616 = vor.u32 %v612, %v615
        %v617 = vrot.slane %v616, 4
        %v619 = vshll.u32 %v479, 16
        %v621 = vrot.slane %v619, 5
        %v622 = vsel %vm482, %v617, %v621
        %v623 = vunpack.c.l.b16 %v496
        %v624 = vunpack.c.h.b16 %v496
        %v625 = vunpack.c.l.b16 %v510
        %v626 = vunpack.c.h.b16 %v510
        %v627 = vunpack.c.l.b16 %v524
        %v628 = vunpack.c.h.b16 %v524
        %v629 = vunpack.c.l.b16 %v538
        %v630 = vunpack.c.h.b16 %v538
        %v631 = vunpack.c.l.b16 %v552
        %v632 = vunpack.c.h.b16 %v552
        %v633 = vunpack.c.l.b16 %v566
        %v634 = vunpack.c.h.b16 %v566
        %v635 = vunpack.c.l.b16 %v580
        %v636 = vunpack.c.h.b16 %v580
        %v637 = vunpack.c.l.b16 %v594
        %v638 = vunpack.c.h.b16 %v594
        %v639 = vunpack.c.l.b16 %v608
        %v640 = vunpack.c.h.b16 %v608
        %v641 = vunpack.c.l.b16 %v622
        %v642 = vunpack.c.h.b16 %v622
        %v643 = vpack.c.b16 %v625, %v623
        %v644 = vpack.c.b16 %v626, %v624
        %v645 = vpack.c.b16 %v629, %v627
        %v646 = vpack.c.b16 %v630, %v628
        %v647 = vpack.c.b16 %v633, %v631
        %v648 = vpack.c.b16 %v634, %v632
        %v649 = vpack.c.b16 %v637, %v635
        %v650 = vpack.c.b16 %v638, %v636
        %v651 = vpack.c.b16 %v641, %v639
        %v652 = vpack.c.b16 %v642, %v640
        %s663 = scalar_lea.vmem [#allocation2], 80
        %664 = vst [vmem:[%s663] sm:$0xff] %v643
        %665 = vst [vmem:[%s663 + $0x8] sm:$0xff] %v644
        %666 = vst [vmem:[%s663 + $0x10] sm:$0xff] %v645
        %667 = vst [vmem:[%s663 + $0x18] sm:$0xff] %v646
        %668 = vst [vmem:[%s663 + $0x20] sm:$0xff] %v647
        %669 = vst [vmem:[%s663 + $0x28] sm:$0xff] %v648
        %670 = vst [vmem:[%s663 + $0x30] sm:$0xff] %v649
        %671 = vst [vmem:[%s663 + $0x38] sm:$0xff] %v650
        %672 = vst [vmem:[%s663 + $0x40] sm:$0xff] %v651
        %673 = vst [vmem:[%s663 + $0x48] sm:$0xff] %v652
        %v674 = vld [vmem:[%s228] sm:$0xfc]
        %v675 = vld [vmem:[%s228 + $0x8] sm:$0xfc]
        %v676 = vld [vmem:[%s228 + $0x10] sm:$0x3]
        %v677 = vld [vmem:[%s228 + $0x18] sm:$0x3]
        %v678 = vld [vmem:[%s228 + $0x20] sm:$0xfc]
        %v679 = vld [vmem:[%s228 + $0x28] sm:$0xfc]
        %v680 = vld [vmem:[%s228 + $0x30] sm:$0x3]
        %v681 = vld [vmem:[%s228 + $0x38] sm:$0x3]
        %v682 = vld [vmem:[%s228 + $0x40] sm:$0xfc]
        %v683 = vld [vmem:[%s228 + $0x48] sm:$0xfc]
        %v684 = vld [vmem:[%s228 + $0x50] sm:$0x3]
        %v685 = vld [vmem:[%s228 + $0x58] sm:$0x3]
        %v686 = vld [vmem:[%s228 + $0x60] sm:$0xfc]
        %v687 = vld [vmem:[%s228 + $0x68] sm:$0xfc]
        %v688 = vld [vmem:[%s228 + $0x70] sm:$0x3]
        %v689 = vld [vmem:[%s228 + $0x78] sm:$0x3]
        %v690 = vld [vmem:[%s228 + $0x80] sm:$0xfc]
        %v691 = vld [vmem:[%s228 + $0x88] sm:$0xfc]
        %v692 = vld [vmem:[%s228 + $0x90] sm:$0x3]
        %v693 = vld [vmem:[%s228 + $0x98] sm:$0x3]
        %v694 = vld [vmem:[%s228 + $0xa0] sm:$0xfc]
        %v695 = vld [vmem:[%s228 + $0xa8] sm:$0xfc]
        %v696 = vld [vmem:[%s228 + $0xb0] sm:$0x3]
        %v697 = vld [vmem:[%s228 + $0xb8] sm:$0x3]
        %v698 = vld [vmem:[%s228 + $0xc0] sm:$0xfc]
        %v699 = vld [vmem:[%s228 + $0xc8] sm:$0xfc]
        %v700 = vld [vmem:[%s228 + $0xd0] sm:$0x3]
        %v701 = vld [vmem:[%s228 + $0xd8] sm:$0x3]
        %v702 = vld [vmem:[%s228 + $0xe0] sm:$0xfc]
        %v703 = vld [vmem:[%s228 + $0xe8] sm:$0xfc]
        %v704 = vld [vmem:[%s228 + $0xf0] sm:$0x3]
        %v705 = vld [vmem:[%s228 + $0xf8] sm:$0x3]
        %v706 = vld [vmem:[%s228 + $0x100] sm:$0xfc]
        %v707 = vld [vmem:[%s228 + $0x108] sm:$0xfc]
        %v708 = vld [vmem:[%s228 + $0x110] sm:$0x3]
        %v709 = vld [vmem:[%s228 + $0x118] sm:$0x3]
        %v710 = vld [vmem:[%s228 + $0x120] sm:$0xfc]
        %v711 = vld [vmem:[%s228 + $0x128] sm:$0xfc]
        %v712 = vld [vmem:[%s228 + $0x130] sm:$0x3]
        %v713 = vld [vmem:[%s228 + $0x138] sm:$0x3]
        %v714 = vpack.c.bf16 %v676, %v674
        %v715 = vpack.c.bf16 %v677, %v675
        %v716 = vpack.c.bf16 %v680, %v678
        %v717 = vpack.c.bf16 %v681, %v679
        %v718 = vpack.c.bf16 %v684, %v682
        %v719 = vpack.c.bf16 %v685, %v683
        %v720 = vpack.c.bf16 %v688, %v686
        %v721 = vpack.c.bf16 %v689, %v687
        %v722 = vpack.c.bf16 %v692, %v690
        %v723 = vpack.c.bf16 %v693, %v691
        %v724 = vpack.c.bf16 %v696, %v694
        %v725 = vpack.c.bf16 %v697, %v695
        %v726 = vpack.c.bf16 %v700, %v698
        %v727 = vpack.c.bf16 %v701, %v699
        %v728 = vpack.c.bf16 %v704, %v702
        %v729 = vpack.c.bf16 %v705, %v703
        %v730 = vpack.c.bf16 %v708, %v706
        %v731 = vpack.c.bf16 %v709, %v707
        %v732 = vpack.c.bf16 %v712, %v710
        %v733 = vpack.c.bf16 %v713, %v711
        %v754 = vunpack.c.l.b16 %v714
        %v755 = vunpack.c.l.b16 %v715
        %v756 = vunpack.c.h.b16 %v714
        %v757 = vunpack.c.h.b16 %v715
        %v758 = vunpack.c.l.b16 %v716
        %v759 = vunpack.c.l.b16 %v717
        %v760 = vunpack.c.h.b16 %v716
        %v761 = vunpack.c.h.b16 %v717
        %v762 = vunpack.c.l.b16 %v718
        %v763 = vunpack.c.l.b16 %v719
        %v764 = vunpack.c.h.b16 %v718
        %v765 = vunpack.c.h.b16 %v719
        %v766 = vunpack.c.l.b16 %v720
        %v767 = vunpack.c.l.b16 %v721
        %v768 = vunpack.c.h.b16 %v720
        %v769 = vunpack.c.h.b16 %v721
        %v770 = vunpack.c.l.b16 %v722
        %v771 = vunpack.c.l.b16 %v723
        %v772 = vunpack.c.h.b16 %v722
        %v773 = vunpack.c.h.b16 %v723
        %v774 = vunpack.c.l.b16 %v724
        %v775 = vunpack.c.l.b16 %v725
        %v776 = vunpack.c.h.b16 %v724
        %v777 = vunpack.c.h.b16 %v725
        %v778 = vunpack.c.l.b16 %v726
        %v779 = vunpack.c.l.b16 %v727
        %v780 = vunpack.c.h.b16 %v726
        %v781 = vunpack.c.h.b16 %v727
        %v782 = vunpack.c.l.b16 %v728
        %v783 = vunpack.c.l.b16 %v729
        %v784 = vunpack.c.h.b16 %v728
        %v785 = vunpack.c.h.b16 %v729
        %v786 = vunpack.c.l.b16 %v730
        %v787 = vunpack.c.l.b16 %v731
        %v788 = vunpack.c.h.b16 %v730
        %v789 = vunpack.c.h.b16 %v731
        %v790 = vunpack.c.l.b16 %v732
        %v791 = vunpack.c.l.b16 %v733
        %v792 = vunpack.c.h.b16 %v732
        %v793 = vunpack.c.h.b16 %v733
        %v794 = vpack.c.b16 %v755, %v754
        %v795 = vpack.c.b16 %v757, %v756
        %v796 = vpack.c.b16 %v759, %v758
        %v797 = vpack.c.b16 %v761, %v760
        %v798 = vpack.c.b16 %v763, %v762
        %v799 = vpack.c.b16 %v765, %v764
        %v800 = vpack.c.b16 %v767, %v766
        %v801 = vpack.c.b16 %v769, %v768
        %v802 = vpack.c.b16 %v771, %v770
        %v803 = vpack.c.b16 %v773, %v772
        %v804 = vpack.c.b16 %v775, %v774
        %v805 = vpack.c.b16 %v777, %v776
        %v806 = vpack.c.b16 %v779, %v778
        %v807 = vpack.c.b16 %v781, %v780
        %v808 = vpack.c.b16 %v783, %v782
        %v809 = vpack.c.b16 %v785, %v784
        %v810 = vpack.c.b16 %v787, %v786
        %v811 = vpack.c.b16 %v789, %v788
        %v812 = vpack.c.b16 %v791, %v790
        %v813 = vpack.c.b16 %v793, %v792
        %vm814 = vcmask 1042432
        %vm815 = vcmask 1046532
        %vm816 = vmor %vm814, %vm815
        %v817 = vrot.slane %v794, 5
        %v818 = vrot.slane %v817, 4
        %v819 = vrot.slane %v795, 5
        %v820 = vsel %vm816, %v818, %v819
        %v821 = vrot.slane %v796, 5
        %v822 = vrot.slane %v821, 4
        %v823 = vrot.slane %v797, 5
        %v824 = vsel %vm816, %v822, %v823
        %v825 = vrot.slane %v798, 5
        %v826 = vrot.slane %v825, 4
        %v827 = vrot.slane %v799, 5
        %v828 = vsel %vm816, %v826, %v827
        %v829 = vrot.slane %v800, 5
        %v830 = vrot.slane %v829, 4
        %v831 = vrot.slane %v801, 5
        %v832 = vsel %vm816, %v830, %v831
        %v833 = vrot.slane %v802, 5
        %v834 = vrot.slane %v833, 4
        %v835 = vrot.slane %v803, 5
        %v836 = vsel %vm816, %v834, %v835
        %v837 = vrot.slane %v804, 5
        %v838 = vrot.slane %v837, 4
        %v839 = vrot.slane %v805, 5
        %v840 = vsel %vm816, %v838, %v839
        %v841 = vrot.slane %v806, 5
        %v842 = vrot.slane %v841, 4
        %v843 = vrot.slane %v807, 5
        %v844 = vsel %vm816, %v842, %v843
        %v845 = vrot.slane %v808, 5
        %v846 = vrot.slane %v845, 4
        %v847 = vrot.slane %v809, 5
        %v848 = vsel %vm816, %v846, %v847
        %v849 = vrot.slane %v810, 5
        %v850 = vrot.slane %v849, 4
        %v851 = vrot.slane %v811, 5
        %v852 = vsel %vm816, %v850, %v851
        %v853 = vrot.slane %v812, 5
        %v854 = vrot.slane %v853, 4
        %v855 = vrot.slane %v813, 5
        %v856 = vsel %vm816, %v854, %v855
        %v857 = vunpack.c.l.b16 %v820
        %v858 = vunpack.c.h.b16 %v820
        %v859 = vunpack.c.l.b16 %v824
        %v860 = vunpack.c.h.b16 %v824
        %v861 = vunpack.c.l.b16 %v828
        %v862 = vunpack.c.h.b16 %v828
        %v863 = vunpack.c.l.b16 %v832
        %v864 = vunpack.c.h.b16 %v832
        %v865 = vunpack.c.l.b16 %v836
        %v866 = vunpack.c.h.b16 %v836
        %v867 = vunpack.c.l.b16 %v840
        %v868 = vunpack.c.h.b16 %v840
        %v869 = vunpack.c.l.b16 %v844
        %v870 = vunpack.c.h.b16 %v844
        %v871 = vunpack.c.l.b16 %v848
        %v872 = vunpack.c.h.b16 %v848
        %v873 = vunpack.c.l.b16 %v852
        %v874 = vunpack.c.h.b16 %v852
        %v875 = vunpack.c.l.b16 %v856
        %v876 = vunpack.c.h.b16 %v856
        %v877 = vpack.c.b16 %v859, %v857
        %v878 = vpack.c.b16 %v860, %v858
        %v879 = vpack.c.b16 %v863, %v861
        %v880 = vpack.c.b16 %v864, %v862
        %v881 = vpack.c.b16 %v867, %v865
        %v882 = vpack.c.b16 %v868, %v866
        %v883 = vpack.c.b16 %v871, %v869
        %v884 = vpack.c.b16 %v872, %v870
        %v885 = vpack.c.b16 %v875, %v873
        %v886 = vpack.c.b16 %v876, %v874
        %s897 = scalar_lea.vmem [#allocation2], 160
        %898 = vst [vmem:[%s897] sm:$0xff] %v877
        %899 = vst [vmem:[%s897 + $0x8] sm:$0xff] %v878
        %900 = vst [vmem:[%s897 + $0x10] sm:$0xff] %v879
        %901 = vst [vmem:[%s897 + $0x18] sm:$0xff] %v880
        %902 = vst [vmem:[%s897 + $0x20] sm:$0xff] %v881
        %903 = vst [vmem:[%s897 + $0x28] sm:$0xff] %v882
        %904 = vst [vmem:[%s897 + $0x30] sm:$0xff] %v883
        %905 = vst [vmem:[%s897 + $0x38] sm:$0xff] %v884
        %906 = vst [vmem:[%s897 + $0x40] sm:$0xff] %v885
        %907 = vst [vmem:[%s897 + $0x48] sm:$0xff] %v886
        %v908 = vld [vmem:[#allocation2] sm:$0xff]
        %v909 = vld [vmem:[#allocation2 + $0x8] sm:$0xff]
        %v910 = vld [vmem:[#allocation2 + $0x10] sm:$0xff]
        %v911 = vld [vmem:[#allocation2 + $0x18] sm:$0xff]
        %v912 = vld [vmem:[#allocation2 + $0x20] sm:$0xff]
        %v913 = vld [vmem:[#allocation2 + $0x28] sm:$0xff]
        %v914 = vld [vmem:[#allocation2 + $0x30] sm:$0xff]
        %v915 = vld [vmem:[#allocation2 + $0x38] sm:$0xff]
        %v916 = vld [vmem:[#allocation4] sm:$0xf]
        %v917 = vld [vmem:[#allocation4 + $0x4] sm:$0xf]
        %v918 = vld [vmem:[#allocation4 + $0x8] sm:$0xf]
        %v919 = vld [vmem:[#allocation4 + $0xc] sm:$0xf]
        %v920 = vld [vmem:[#allocation4 + $0x10] sm:$0xf]
        %v921 = vld [vmem:[#allocation4 + $0x14] sm:$0xf]
        %v922 = vld [vmem:[#allocation4 + $0x18] sm:$0xf]
        %v923 = vld [vmem:[#allocation4 + $0x1c] sm:$0xf]
        %v924 = vld [vmem:[#allocation4 + $0x20] sm:$0xf]
        %v925 = vld [vmem:[#allocation4 + $0x24] sm:$0xf]
        %v926 = vld [vmem:[#allocation4 + $0x28] sm:$0xf]
        %v927 = vld [vmem:[#allocation4 + $0x2c] sm:$0xf]
        %v928 = vld [vmem:[#allocation4 + $0x30] sm:$0xf]
        %v929 = vld [vmem:[#allocation4 + $0x34] sm:$0xf]
        %v930 = vld [vmem:[#allocation4 + $0x38] sm:$0xf]
        %v931 = vld [vmem:[#allocation4 + $0x3c] sm:$0xf]
        %v932 = vld [vmem:[#allocation4 + $0x40] sm:$0xf]
        %v933 = vld [vmem:[#allocation4 + $0x44] sm:$0xf]
        %v934 = vld [vmem:[#allocation4 + $0x48] sm:$0xf]
        %v935 = vld [vmem:[#allocation4 + $0x4c] sm:$0xf]
        %v936 = vld [vmem:[#allocation4 + $0x50] sm:$0xf]
        %v937 = vld [vmem:[#allocation4 + $0x54] sm:$0xf]
        %v938 = vld [vmem:[#allocation4 + $0x58] sm:$0xf]
        %v939 = vld [vmem:[#allocation4 + $0x5c] sm:$0xf]
        %v940 = vld [vmem:[#allocation4 + $0x60] sm:$0xf]
        %v941 = vld [vmem:[#allocation4 + $0x64] sm:$0xf]
        %v942 = vld [vmem:[#allocation4 + $0x68] sm:$0xf]
        %v943 = vld [vmem:[#allocation4 + $0x6c] sm:$0xf]
        %v944 = vld [vmem:[#allocation4 + $0x70] sm:$0xf]
        %v945 = vld [vmem:[#allocation4 + $0x74] sm:$0xf]
        %v946 = vld [vmem:[#allocation4 + $0x78] sm:$0xf]
        %v947 = vld [vmem:[#allocation4 + $0x7c] sm:$0xf]
        %v980 = vunpack.c.l.b16 %v916
        %v981 = vunpack.c.l.b16 %v917
        %v982 = vunpack.c.l.b16 %v918
        %v983 = vunpack.c.l.b16 %v919
        %v984 = vunpack.c.l.b16 %v920
        %v985 = vunpack.c.l.b16 %v921
        %v986 = vunpack.c.l.b16 %v922
        %v987 = vunpack.c.l.b16 %v923
        %v988 = vunpack.c.l.b16 %v924
        %v989 = vunpack.c.l.b16 %v925
        %v990 = vunpack.c.l.b16 %v926
        %v991 = vunpack.c.l.b16 %v927
        %v992 = vunpack.c.l.b16 %v928
        %v993 = vunpack.c.l.b16 %v929
        %v994 = vunpack.c.l.b16 %v930
        %v995 = vunpack.c.l.b16 %v931
        %v996 = vunpack.c.l.b16 %v932
        %v997 = vunpack.c.l.b16 %v933
        %v998 = vunpack.c.l.b16 %v934
        %v999 = vunpack.c.l.b16 %v935
        %v1000 = vunpack.c.l.b16 %v936
        %v1001 = vunpack.c.l.b16 %v937
        %v1002 = vunpack.c.l.b16 %v938
        %v1003 = vunpack.c.l.b16 %v939
        %v1004 = vunpack.c.l.b16 %v940
        %v1005 = vunpack.c.l.b16 %v941
        %v1006 = vunpack.c.l.b16 %v942
        %v1007 = vunpack.c.l.b16 %v943
        %v1008 = vunpack.c.l.b16 %v944
        %v1009 = vunpack.c.l.b16 %v945
        %v1010 = vunpack.c.l.b16 %v946
        %v1011 = vunpack.c.l.b16 %v947
        %v1012 = vpack.c.b16 %v981, %v980
        %v1013 = vpack.c.b16 %v983, %v982
        %v1014 = vpack.c.b16 %v985, %v984
        %v1015 = vpack.c.b16 %v987, %v986
        %v1016 = vpack.c.b16 %v989, %v988
        %v1017 = vpack.c.b16 %v991, %v990
        %v1018 = vpack.c.b16 %v993, %v992
        %v1019 = vpack.c.b16 %v995, %v994
        %v1020 = vpack.c.b16 %v997, %v996
        %v1021 = vpack.c.b16 %v999, %v998
        %v1022 = vpack.c.b16 %v1001, %v1000
        %v1023 = vpack.c.b16 %v1003, %v1002
        %v1024 = vpack.c.b16 %v1005, %v1004
        %v1025 = vpack.c.b16 %v1007, %v1006
        %v1026 = vpack.c.b16 %v1009, %v1008
        %v1027 = vpack.c.b16 %v1011, %v1010
        %1044 = vmatprep.subr.bf16.mxu0 0
        %1045 = vmatpush1.bf16.msra.mxu0 %v1012
        %1046 = vmatprep.subr.bf16.mxu0 0
        %1047 = vmatpush1.bf16.msra.mxu0 %v1013
        %1048 = vmatprep.subr.bf16.mxu0 0
        %1049 = vmatpush1.bf16.msra.mxu0 %v1014
        %1050 = vmatprep.subr.bf16.mxu0 0
        %1051 = vmatpush1.bf16.msra.mxu0 %v1015
        %1052 = vmatprep.subr.bf16.mxu0 0
        %1053 = vmatpush1.bf16.msra.mxu0 %v1016
        %1054 = vmatprep.subr.bf16.mxu0 0
        %1055 = vmatpush1.bf16.msra.mxu0 %v1017
        %1056 = vmatprep.subr.bf16.mxu0 0
        %1057 = vmatpush1.bf16.msra.mxu0 %v1018
        %1058 = vmatprep.subr.bf16.mxu0 0
        %1059 = vmatpush1.bf16.msra.mxu0 %v1019
        %1060 = vmatprep.subr.bf16.mxu0 0
        %1061 = vmatpush1.bf16.msra.mxu0 %v1020
        %1062 = vmatprep.subr.bf16.mxu0 0
        %1063 = vmatpush1.bf16.msra.mxu0 %v1021
        %1064 = vmatprep.subr.bf16.mxu0 0
        %1065 = vmatpush1.bf16.msra.mxu0 %v1022
        %1066 = vmatprep.subr.bf16.mxu0 0
        %1067 = vmatpush1.bf16.msra.mxu0 %v1023
        %1068 = vmatprep.subr.bf16.mxu0 0
        %1069 = vmatpush1.bf16.msra.mxu0 %v1024
        %1070 = vmatprep.subr.bf16.mxu0 0
        %1071 = vmatpush1.bf16.msra.mxu0 %v1025
        %1072 = vmatprep.subr.bf16.mxu0 0
        %1073 = vmatpush1.bf16.msra.mxu0 %v1026
        %1074 = vmatprep.subr.bf16.mxu0 0
        %1075 = vmatpush1.bf16.msra.mxu0 %v1027
        %1076 = vmatprep.mubr.bf16.mxu0 %v909
        %1077 = vmatmul.mubr.bf16.gmra.mrb[0].mxu0 %v908
        %v1078 = vpop.f32.mrb[0].mxu0
        %v1079 = vadd.f32 0.0, %v1078
        %v1080 = vpop.f32.mrb[0].mxu0
        %v1081 = vpop.f32.mrb[0].mxu0
        %v1082 = vadd.f32 0.0, %v1081
        %v1083 = vpop.f32.mrb[0].mxu0
        %1084 = vmatprep.mubr.bf16.mxu0 %v911
        %1085 = vmatmul.mubr.bf16.gmra.mrb[0].mxu0 %v910
        %v1086 = vpop.f32.mrb[0].mxu0
        %v1087 = vadd.f32 0.0, %v1086
        %v1088 = vpop.f32.mrb[0].mxu0
        %v1089 = vpop.f32.mrb[0].mxu0
        %v1090 = vadd.f32 0.0, %v1089
        %v1091 = vpop.f32.mrb[0].mxu0
        %1092 = vmatprep.mubr.bf16.mxu0 %v913
        %1093 = vmatmul.mubr.bf16.gmra.mrb[0].mxu0 %v912
        %v1094 = vpop.f32.mrb[0].mxu0
        %v1095 = vadd.f32 0.0, %v1094
        %v1096 = vpop.f32.mrb[0].mxu0
        %v1097 = vpop.f32.mrb[0].mxu0
        %v1098 = vadd.f32 0.0, %v1097
        %v1099 = vpop.f32.mrb[0].mxu0
        %1100 = vmatprep.mubr.bf16.mxu0 %v915
        %1101 = vmatmul.mubr.bf16.gmra.mrb[0].mxu0 %v914
        %v1102 = vpop.f32.mrb[0].mxu0
        %v1103 = vadd.f32 0.0, %v1102
        %v1104 = vpop.f32.mrb[0].mxu0
        %v1105 = vpop.f32.mrb[0].mxu0
        %v1106 = vadd.f32 0.0, %v1105
        %v1107 = vpop.f32.mrb[0].mxu0
        %1108 = vdwg.mxu0
        %1109 = vst [vmem:[#allocation3] sm:$0xff] %v1079
        %1110 = vst [vmem:[#allocation3 + $0x8] sm:$0xff] %v1082
        %1111 = vst [vmem:[#allocation3 + $0x10] sm:$0xff] %v1087
        %1112 = vst [vmem:[#allocation3 + $0x18] sm:$0xff] %v1090
        %1113 = vst [vmem:[#allocation3 + $0x20] sm:$0xff] %v1095
        %1114 = vst [vmem:[#allocation3 + $0x28] sm:$0xff] %v1098
        %1115 = vst [vmem:[#allocation3 + $0x30] sm:$0xff] %v1103
        %1116 = vst [vmem:[#allocation3 + $0x38] sm:$0xff] %v1106
        %v1117 = vld [vmem:[%s663] sm:$0xff]
        %v1118 = vld [vmem:[%s663 + $0x8] sm:$0xff]
        %v1119 = vld [vmem:[%s663 + $0x10] sm:$0xff]
        %v1120 = vld [vmem:[%s663 + $0x18] sm:$0xff]
        %v1121 = vld [vmem:[%s663 + $0x20] sm:$0xff]
        %v1122 = vld [vmem:[%s663 + $0x28] sm:$0xff]
        %v1123 = vld [vmem:[%s663 + $0x30] sm:$0xff]
        %v1124 = vld [vmem:[%s663 + $0x38] sm:$0xff]
        %s1125 = scalar_lea.vmem [#allocation4], 128
        %v1126 = vld [vmem:[%s1125] sm:$0xf]
        %v1127 = vld [vmem:[%s1125 + $0x4] sm:$0xf]
        %v1128 = vld [vmem:[%s1125 + $0x8] sm:$0xf]
        %v1129 = vld [vmem:[%s1125 + $0xc] sm:$0xf]
        %v1130 = vld [vmem:[%s1125 + $0x10] sm:$0xf]
        %v1131 = vld [vmem:[%s1125 + $0x14] sm:$0xf]
        %v1132 = vld [vmem:[%s1125 + $0x18] sm:$0xf]
        %v1133 = vld [vmem:[%s1125 + $0x1c] sm:$0xf]
        %v1134 = vld [vmem:[%s1125 + $0x20] sm:$0xf]
        %v1135 = vld [vmem:[%s1125 + $0x24] sm:$0xf]
        %v1136 = vld [vmem:[%s1125 + $0x28] sm:$0xf]
        %v1137 = vld [vmem:[%s1125 + $0x2c] sm:$0xf]
        %v1138 = vld [vmem:[%s1125 + $0x30] sm:$0xf]
        %v1139 = vld [vmem:[%s1125 + $0x34] sm:$0xf]
        %v1140 = vld [vmem:[%s1125 + $0x38] sm:$0xf]
        %v1141 = vld [vmem:[%s1125 + $0x3c] sm:$0xf]
        %v1142 = vld [vmem:[%s1125 + $0x40] sm:$0xf]
        %v1143 = vld [vmem:[%s1125 + $0x44] sm:$0xf]
        %v1144 = vld [vmem:[%s1125 + $0x48] sm:$0xf]
        %v1145 = vld [vmem:[%s1125 + $0x4c] sm:$0xf]
        %v1146 = vld [vmem:[%s1125 + $0x50] sm:$0xf]
        %v1147 = vld [vmem:[%s1125 + $0x54] sm:$0xf]
        %v1148 = vld [vmem:[%s1125 + $0x58] sm:$0xf]
        %v1149 = vld [vmem:[%s1125 + $0x5c] sm:$0xf]
        %v1150 = vld [vmem:[%s1125 + $0x60] sm:$0xf]
        %v1151 = vld [vmem:[%s1125 + $0x64] sm:$0xf]
        %v1152 = vld [vmem:[%s1125 + $0x68] sm:$0xf]
        %v1153 = vld [vmem:[%s1125 + $0x6c] sm:$0xf]
        %v1154 = vld [vmem:[%s1125 + $0x70] sm:$0xf]
        %v1155 = vld [vmem:[%s1125 + $0x74] sm:$0xf]
        %v1156 = vld [vmem:[%s1125 + $0x78] sm:$0xf]
        %v1157 = vld [vmem:[%s1125 + $0x7c] sm:$0xf]
        %v1190 = vunpack.c.l.b16 %v1126
        %v1191 = vunpack.c.l.b16 %v1127
        %v1192 = vunpack.c.l.b16 %v1128
        %v1193 = vunpack.c.l.b16 %v1129
        %v1194 = vunpack.c.l.b16 %v1130
        %v1195 = vunpack.c.l.b16 %v1131
        %v1196 = vunpack.c.l.b16 %v1132
        %v1197 = vunpack.c.l.b16 %v1133
        %v1198 = vunpack.c.l.b16 %v1134
        %v1199 = vunpack.c.l.b16 %v1135
        %v1200 = vunpack.c.l.b16 %v1136
        %v1201 = vunpack.c.l.b16 %v1137
        %v1202 = vunpack.c.l.b16 %v1138
        %v1203 = vunpack.c.l.b16 %v1139
        %v1204 = vunpack.c.l.b16 %v1140
        %v1205 = vunpack.c.l.b16 %v1141
        %v1206 = vunpack.c.l.b16 %v1142
        %v1207 = vunpack.c.l.b16 %v1143
        %v1208 = vunpack.c.l.b16 %v1144
        %v1209 = vunpack.c.l.b16 %v1145
        %v1210 = vunpack.c.l.b16 %v1146
        %v1211 = vunpack.c.l.b16 %v1147
        %v1212 = vunpack.c.l.b16 %v1148
        %v1213 = vunpack.c.l.b16 %v1149
        %v1214 = vunpack.c.l.b16 %v1150
        %v1215 = vunpack.c.l.b16 %v1151
        %v1216 = vunpack.c.l.b16 %v1152
        %v1217 = vunpack.c.l.b16 %v1153
        %v1218 = vunpack.c.l.b16 %v1154
        %v1219 = vunpack.c.l.b16 %v1155
        %v1220 = vunpack.c.l.b16 %v1156
        %v1221 = vunpack.c.l.b16 %v1157
        %v1222 = vpack.c.b16 %v1191, %v1190
        %v1223 = vpack.c.b16 %v1193, %v1192
        %v1224 = vpack.c.b16 %v1195, %v1194
        %v1225 = vpack.c.b16 %v1197, %v1196
        %v1226 = vpack.c.b16 %v1199, %v1198
        %v1227 = vpack.c.b16 %v1201, %v1200
        %v1228 = vpack.c.b16 %v1203, %v1202
        %v1229 = vpack.c.b16 %v1205, %v1204
        %v1230 = vpack.c.b16 %v1207, %v1206
        %v1231 = vpack.c.b16 %v1209, %v1208
        %v1232 = vpack.c.b16 %v1211, %v1210
        %v1233 = vpack.c.b16 %v1213, %v1212
        %v1234 = vpack.c.b16 %v1215, %v1214
        %v1235 = vpack.c.b16 %v1217, %v1216
        %v1236 = vpack.c.b16 %v1219, %v1218
        %v1237 = vpack.c.b16 %v1221, %v1220
        %1254 = vmatprep.subr.bf16.mxu0 0
        %1255 = vmatpush1.bf16.msra.mxu0 %v1222
        %1256 = vmatprep.subr.bf16.mxu0 0
        %1257 = vmatpush1.bf16.msra.mxu0 %v1223
        %1258 = vmatprep.subr.bf16.mxu0 0
        %1259 = vmatpush1.bf16.msra.mxu0 %v1224
        %1260 = vmatprep.subr.bf16.mxu0 0
        %1261 = vmatpush1.bf16.msra.mxu0 %v1225
        %1262 = vmatprep.subr.bf16.mxu0 0
        %1263 = vmatpush1.bf16.msra.mxu0 %v1226
        %1264 = vmatprep.subr.bf16.mxu0 0
        %1265 = vmatpush1.bf16.msra.mxu0 %v1227
        %1266 = vmatprep.subr.bf16.mxu0 0
        %1267 = vmatpush1.bf16.msra.mxu0 %v1228
        %1268 = vmatprep.subr.bf16.mxu0 0
        %1269 = vmatpush1.bf16.msra.mxu0 %v1229
        %1270 = vmatprep.subr.bf16.mxu0 0
        %1271 = vmatpush1.bf16.msra.mxu0 %v1230
        %1272 = vmatprep.subr.bf16.mxu0 0
        %1273 = vmatpush1.bf16.msra.mxu0 %v1231
        %1274 = vmatprep.subr.bf16.mxu0 0
        %1275 = vmatpush1.bf16.msra.mxu0 %v1232
        %1276 = vmatprep.subr.bf16.mxu0 0
        %1277 = vmatpush1.bf16.msra.mxu0 %v1233
        %1278 = vmatprep.subr.bf16.mxu0 0
        %1279 = vmatpush1.bf16.msra.mxu0 %v1234
        %1280 = vmatprep.subr.bf16.mxu0 0
        %1281 = vmatpush1.bf16.msra.mxu0 %v1235
        %1282 = vmatprep.subr.bf16.mxu0 0
        %1283 = vmatpush1.bf16.msra.mxu0 %v1236
        %1284 = vmatprep.subr.bf16.mxu0 0
        %1285 = vmatpush1.bf16.msra.mxu0 %v1237
        %1286 = vmatprep.mubr.bf16.mxu0 %v1118
        %1287 = vmatmul.mubr.bf16.gmra.mrb[0].mxu0 %v1117
        %v1288 = vpop.f32.mrb[0].mxu0
        %v1289 = vadd.f32 0.0, %v1288
        %v1290 = vpop.f32.mrb[0].mxu0
        %v1291 = vpop.f32.mrb[0].mxu0
        %v1292 = vadd.f32 0.0, %v1291
        %v1293 = vpop.f32.mrb[0].mxu0
        %1294 = vmatprep.mubr.bf16.mxu0 %v1120
        %1295 = vmatmul.mubr.bf16.gmra.mrb[0].mxu0 %v1119
        %v1296 = vpop.f32.mrb[0].mxu0
        %v1297 = vadd.f32 0.0, %v1296
        %v1298 = vpop.f32.mrb[0].mxu0
        %v1299 = vpop.f32.mrb[0].mxu0
        %v1300 = vadd.f32 0.0, %v1299
        %v1301 = vpop.f32.mrb[0].mxu0
        %1302 = vmatprep.mubr.bf16.mxu0 %v1122
        %1303 = vmatmul.mubr.bf16.gmra.mrb[0].mxu0 %v1121
        %v1304 = vpop.f32.mrb[0].mxu0
        %v1305 = vadd.f32 0.0, %v1304
        %v1306 = vpop.f32.mrb[0].mxu0
        %v1307 = vpop.f32.mrb[0].mxu0
        %v1308 = vadd.f32 0.0, %v1307
        %v1309 = vpop.f32.mrb[0].mxu0
        %1310 = vmatprep.mubr.bf16.mxu0 %v1124
        %1311 = vmatmul.mubr.bf16.gmra.mrb[0].mxu0 %v1123
        %v1312 = vpop.f32.mrb[0].mxu0
        %v1313 = vadd.f32 0.0, %v1312
        %v1314 = vpop.f32.mrb[0].mxu0
        %v1315 = vpop.f32.mrb[0].mxu0
        %v1316 = vadd.f32 0.0, %v1315
        %v1317 = vpop.f32.mrb[0].mxu0
        %1318 = vdwg.mxu0
        %v1319 = vld [vmem:[#allocation3] sm:$0xff]
        %v1320 = vld [vmem:[#allocation3 + $0x8] sm:$0xff]
        %v1321 = vld [vmem:[#allocation3 + $0x10] sm:$0xff]
        %v1322 = vld [vmem:[#allocation3 + $0x18] sm:$0xff]
        %v1323 = vld [vmem:[#allocation3 + $0x20] sm:$0xff]
        %v1324 = vld [vmem:[#allocation3 + $0x28] sm:$0xff]
        %v1325 = vld [vmem:[#allocation3 + $0x30] sm:$0xff]
        %v1326 = vld [vmem:[#allocation3 + $0x38] sm:$0xff]
        %v1327 = vadd.f32 %v1319, %v1289
        %v1328 = vadd.f32 %v1320, %v1292
        %v1329 = vadd.f32 %v1321, %v1297
        %v1330 = vadd.f32 %v1322, %v1300
        %v1331 = vadd.f32 %v1323, %v1305
        %v1332 = vadd.f32 %v1324, %v1308
        %v1333 = vadd.f32 %v1325, %v1313
        %v1334 = vadd.f32 %v1326, %v1316
        %1335 = vst [vmem:[#allocation3] sm:$0xff] %v1327
        %1336 = vst [vmem:[#allocation3 + $0x8] sm:$0xff] %v1328
        %1337 = vst [vmem:[#allocation3 + $0x10] sm:$0xff] %v1329
        %1338 = vst [vmem:[#allocation3 + $0x18] sm:$0xff] %v1330
        %1339 = vst [vmem:[#allocation3 + $0x20] sm:$0xff] %v1331
        %1340 = vst [vmem:[#allocation3 + $0x28] sm:$0xff] %v1332
        %1341 = vst [vmem:[#allocation3 + $0x30] sm:$0xff] %v1333
        %1342 = vst [vmem:[#allocation3 + $0x38] sm:$0xff] %v1334
        %v1343 = vld [vmem:[%s897] sm:$0xff]
        %v1344 = vld [vmem:[%s897 + $0x8] sm:$0xff]
        %v1345 = vld [vmem:[%s897 + $0x10] sm:$0xff]
        %v1346 = vld [vmem:[%s897 + $0x18] sm:$0xff]
        %v1347 = vld [vmem:[%s897 + $0x20] sm:$0xff]
        %v1348 = vld [vmem:[%s897 + $0x28] sm:$0xff]
        %v1349 = vld [vmem:[%s897 + $0x30] sm:$0xff]
        %v1350 = vld [vmem:[%s897 + $0x38] sm:$0xff]
        %s1351 = scalar_lea.vmem [#allocation4], 256
        %v1352 = vld [vmem:[%s1351] sm:$0xf]
        %v1353 = vld [vmem:[%s1351 + $0x4] sm:$0xf]
        %v1354 = vld [vmem:[%s1351 + $0x8] sm:$0xf]
        %v1355 = vld [vmem:[%s1351 + $0xc] sm:$0xf]
        %v1356 = vld [vmem:[%s1351 + $0x10] sm:$0xf]
        %v1357 = vld [vmem:[%s1351 + $0x14] sm:$0xf]
        %v1358 = vld [vmem:[%s1351 + $0x18] sm:$0xf]
        %v1359 = vld [vmem:[%s1351 + $0x1c] sm:$0xf]
        %v1360 = vld [vmem:[%s1351 + $0x20] sm:$0xf]
        %v1361 = vld [vmem:[%s1351 + $0x24] sm:$0xf]
        %v1362 = vld [vmem:[%s1351 + $0x28] sm:$0xf]
        %v1363 = vld [vmem:[%s1351 + $0x2c] sm:$0xf]
        %v1364 = vld [vmem:[%s1351 + $0x30] sm:$0xf]
        %v1365 = vld [vmem:[%s1351 + $0x34] sm:$0xf]
        %v1366 = vld [vmem:[%s1351 + $0x38] sm:$0xf]
        %v1367 = vld [vmem:[%s1351 + $0x3c] sm:$0xf]
        %v1368 = vld [vmem:[%s1351 + $0x40] sm:$0xf]
        %v1369 = vld [vmem:[%s1351 + $0x44] sm:$0xf]
        %v1370 = vld [vmem:[%s1351 + $0x48] sm:$0xf]
        %v1371 = vld [vmem:[%s1351 + $0x4c] sm:$0xf]
        %v1372 = vld [vmem:[%s1351 + $0x50] sm:$0xf]
        %v1373 = vld [vmem:[%s1351 + $0x54] sm:$0xf]
        %v1374 = vld [vmem:[%s1351 + $0x58] sm:$0xf]
        %v1375 = vld [vmem:[%s1351 + $0x5c] sm:$0xf]
        %v1376 = vld [vmem:[%s1351 + $0x60] sm:$0xf]
        %v1377 = vld [vmem:[%s1351 + $0x64] sm:$0xf]
        %v1378 = vld [vmem:[%s1351 + $0x68] sm:$0xf]
        %v1379 = vld [vmem:[%s1351 + $0x6c] sm:$0xf]
        %v1380 = vld [vmem:[%s1351 + $0x70] sm:$0xf]
        %v1381 = vld [vmem:[%s1351 + $0x74] sm:$0xf]
        %v1382 = vld [vmem:[%s1351 + $0x78] sm:$0xf]
        %v1383 = vld [vmem:[%s1351 + $0x7c] sm:$0xf]
        %v1416 = vunpack.c.l.b16 %v1352
        %v1417 = vunpack.c.l.b16 %v1353
        %v1418 = vunpack.c.l.b16 %v1354
        %v1419 = vunpack.c.l.b16 %v1355
        %v1420 = vunpack.c.l.b16 %v1356
        %v1421 = vunpack.c.l.b16 %v1357
        %v1422 = vunpack.c.l.b16 %v1358
        %v1423 = vunpack.c.l.b16 %v1359
        %v1424 = vunpack.c.l.b16 %v1360
        %v1425 = vunpack.c.l.b16 %v1361
        %v1426 = vunpack.c.l.b16 %v1362
        %v1427 = vunpack.c.l.b16 %v1363
        %v1428 = vunpack.c.l.b16 %v1364
        %v1429 = vunpack.c.l.b16 %v1365
        %v1430 = vunpack.c.l.b16 %v1366
        %v1431 = vunpack.c.l.b16 %v1367
        %v1432 = vunpack.c.l.b16 %v1368
        %v1433 = vunpack.c.l.b16 %v1369
        %v1434 = vunpack.c.l.b16 %v1370
        %v1435 = vunpack.c.l.b16 %v1371
        %v1436 = vunpack.c.l.b16 %v1372
        %v1437 = vunpack.c.l.b16 %v1373
        %v1438 = vunpack.c.l.b16 %v1374
        %v1439 = vunpack.c.l.b16 %v1375
        %v1440 = vunpack.c.l.b16 %v1376
        %v1441 = vunpack.c.l.b16 %v1377
        %v1442 = vunpack.c.l.b16 %v1378
        %v1443 = vunpack.c.l.b16 %v1379
        %v1444 = vunpack.c.l.b16 %v1380
        %v1445 = vunpack.c.l.b16 %v1381
        %v1446 = vunpack.c.l.b16 %v1382
        %v1447 = vunpack.c.l.b16 %v1383
        %v1448 = vpack.c.b16 %v1417, %v1416
        %v1449 = vpack.c.b16 %v1419, %v1418
        %v1450 = vpack.c.b16 %v1421, %v1420
        %v1451 = vpack.c.b16 %v1423, %v1422
        %v1452 = vpack.c.b16 %v1425, %v1424
        %v1453 = vpack.c.b16 %v1427, %v1426
        %v1454 = vpack.c.b16 %v1429, %v1428
        %v1455 = vpack.c.b16 %v1431, %v1430
        %v1456 = vpack.c.b16 %v1433, %v1432
        %v1457 = vpack.c.b16 %v1435, %v1434
        %v1458 = vpack.c.b16 %v1437, %v1436
        %v1459 = vpack.c.b16 %v1439, %v1438
        %v1460 = vpack.c.b16 %v1441, %v1440
        %v1461 = vpack.c.b16 %v1443, %v1442
        %v1462 = vpack.c.b16 %v1445, %v1444
        %v1463 = vpack.c.b16 %v1447, %v1446
        %1480 = vmatprep.subr.bf16.mxu0 0
        %1481 = vmatpush1.bf16.msra.mxu0 %v1448
        %1482 = vmatprep.subr.bf16.mxu0 0
        %1483 = vmatpush1.bf16.msra.mxu0 %v1449
        %1484 = vmatprep.subr.bf16.mxu0 0
        %1485 = vmatpush1.bf16.msra.mxu0 %v1450
        %1486 = vmatprep.subr.bf16.mxu0 0
        %1487 = vmatpush1.bf16.msra.mxu0 %v1451
        %1488 = vmatprep.subr.bf16.mxu0 0
        %1489 = vmatpush1.bf16.msra.mxu0 %v1452
        %1490 = vmatprep.subr.bf16.mxu0 0
        %1491 = vmatpush1.bf16.msra.mxu0 %v1453
        %1492 = vmatprep.subr.bf16.mxu0 0
        %1493 = vmatpush1.bf16.msra.mxu0 %v1454
        %1494 = vmatprep.subr.bf16.mxu0 0
        %1495 = vmatpush1.bf16.msra.mxu0 %v1455
        %1496 = vmatprep.subr.bf16.mxu0 0
        %1497 = vmatpush1.bf16.msra.mxu0 %v1456
        %1498 = vmatprep.subr.bf16.mxu0 0
        %1499 = vmatpush1.bf16.msra.mxu0 %v1457
        %1500 = vmatprep.subr.bf16.mxu0 0
        %1501 = vmatpush1.bf16.msra.mxu0 %v1458
        %1502 = vmatprep.subr.bf16.mxu0 0
        %1503 = vmatpush1.bf16.msra.mxu0 %v1459
        %1504 = vmatprep.subr.bf16.mxu0 0
        %1505 = vmatpush1.bf16.msra.mxu0 %v1460
        %1506 = vmatprep.subr.bf16.mxu0 0
        %1507 = vmatpush1.bf16.msra.mxu0 %v1461
        %1508 = vmatprep.subr.bf16.mxu0 0
        %1509 = vmatpush1.bf16.msra.mxu0 %v1462
        %1510 = vmatprep.subr.bf16.mxu0 0
        %1511 = vmatpush1.bf16.msra.mxu0 %v1463
        %1512 = vmatprep.mubr.bf16.mxu0 %v1344
        %1513 = vmatmul.mubr.bf16.gmra.mrb[0].mxu0 %v1343
        %v1514 = vpop.f32.mrb[0].mxu0
        %v1515 = vadd.f32 0.0, %v1514
        %v1516 = vpop.f32.mrb[0].mxu0
        %v1517 = vpop.f32.mrb[0].mxu0
        %v1518 = vadd.f32 0.0, %v1517
        %v1519 = vpop.f32.mrb[0].mxu0
        %1520 = vmatprep.mubr.bf16.mxu0 %v1346
        %1521 = vmatmul.mubr.bf16.gmra.mrb[0].mxu0 %v1345
        %v1522 = vpop.f32.mrb[0].mxu0
        %v1523 = vadd.f32 0.0, %v1522
        %v1524 = vpop.f32.mrb[0].mxu0
        %v1525 = vpop.f32.mrb[0].mxu0
        %v1526 = vadd.f32 0.0, %v1525
        %v1527 = vpop.f32.mrb[0].mxu0
        %1528 = vmatprep.mubr.bf16.mxu0 %v1348
        %1529 = vmatmul.mubr.bf16.gmra.mrb[0].mxu0 %v1347
        %v1530 = vpop.f32.mrb[0].mxu0
        %v1531 = vadd.f32 0.0, %v1530
        %v1532 = vpop.f32.mrb[0].mxu0
        %v1533 = vpop.f32.mrb[0].mxu0
        %v1534 = vadd.f32 0.0, %v1533
        %v1535 = vpop.f32.mrb[0].mxu0
        %1536 = vmatprep.mubr.bf16.mxu0 %v1350
        %1537 = vmatmul.mubr.bf16.gmra.mrb[0].mxu0 %v1349
        %v1538 = vpop.f32.mrb[0].mxu0
        %v1539 = vadd.f32 0.0, %v1538
        %v1540 = vpop.f32.mrb[0].mxu0
        %v1541 = vpop.f32.mrb[0].mxu0
        %v1542 = vadd.f32 0.0, %v1541
        %v1543 = vpop.f32.mrb[0].mxu0
        %1544 = vdwg.mxu0
        %v1545 = vld [vmem:[#allocation3] sm:$0xff]
        %v1546 = vld [vmem:[#allocation3 + $0x8] sm:$0xff]
        %v1547 = vld [vmem:[#allocation3 + $0x10] sm:$0xff]
        %v1548 = vld [vmem:[#allocation3 + $0x18] sm:$0xff]
        %v1549 = vld [vmem:[#allocation3 + $0x20] sm:$0xff]
        %v1550 = vld [vmem:[#allocation3 + $0x28] sm:$0xff]
        %v1551 = vld [vmem:[#allocation3 + $0x30] sm:$0xff]
        %v1552 = vld [vmem:[#allocation3 + $0x38] sm:$0xff]
        %v1553 = vadd.f32 %v1545, %v1515
        %v1554 = vadd.f32 %v1546, %v1518
        %v1555 = vadd.f32 %v1547, %v1523
        %v1556 = vadd.f32 %v1548, %v1526
        %v1557 = vadd.f32 %v1549, %v1531
        %v1558 = vadd.f32 %v1550, %v1534
        %v1559 = vadd.f32 %v1551, %v1539
        %v1560 = vadd.f32 %v1552, %v1542
        %1561 = vst [vmem:[#allocation3] sm:$0xff] %v1553
        %1562 = vst [vmem:[#allocation3 + $0x8] sm:$0xff] %v1554
        %1563 = vst [vmem:[#allocation3 + $0x10] sm:$0xff] %v1555
        %1564 = vst [vmem:[#allocation3 + $0x18] sm:$0xff] %v1556
        %1565 = vst [vmem:[#allocation3 + $0x20] sm:$0xff] %v1557
        %1566 = vst [vmem:[#allocation3 + $0x28] sm:$0xff] %v1558
        %1567 = vst [vmem:[#allocation3 + $0x30] sm:$0xff] %v1559
        %1568 = vst [vmem:[#allocation3 + $0x38] sm:$0xff] %v1560
        %v1569 = vld [vmem:[#allocation2] sm:$0xf0]
        %v1570 = vld [vmem:[#allocation2 + $0x8] sm:$0xf0]
        %v1571 = vld [vmem:[#allocation2 + $0x10] sm:$0xff]
        %v1572 = vld [vmem:[#allocation2 + $0x18] sm:$0xff]
        %v1573 = vld [vmem:[#allocation2 + $0x20] sm:$0xff]
        %v1574 = vld [vmem:[#allocation2 + $0x28] sm:$0xff]
        %v1575 = vld [vmem:[#allocation2 + $0x30] sm:$0xff]
        %v1576 = vld [vmem:[#allocation2 + $0x38] sm:$0xff]
        %v1577 = vld [vmem:[#allocation2 + $0x40] sm:$0xf]
        %v1578 = vld [vmem:[#allocation2 + $0x48] sm:$0xf]
        %s1579 = scalar_lea.vmem [#allocation4], 384
        %v1580 = vld [vmem:[%s1579] sm:$0xf]
        %v1581 = vld [vmem:[%s1579 + $0x4] sm:$0xf]
        %v1582 = vld [vmem:[%s1579 + $0x8] sm:$0xf]
        %v1583 = vld [vmem:[%s1579 + $0xc] sm:$0xf]
        %v1584 = vld [vmem:[%s1579 + $0x10] sm:$0xf]
        %v1585 = vld [vmem:[%s1579 + $0x14] sm:$0xf]
        %v1586 = vld [vmem:[%s1579 + $0x18] sm:$0xf]
        %v1587 = vld [vmem:[%s1579 + $0x1c] sm:$0xf]
        %v1588 = vld [vmem:[%s1579 + $0x20] sm:$0xf]
        %v1589 = vld [vmem:[%s1579 + $0x24] sm:$0xf]
        %v1590 = vld [vmem:[%s1579 + $0x28] sm:$0xf]
        %v1591 = vld [vmem:[%s1579 + $0x2c] sm:$0xf]
        %v1592 = vld [vmem:[%s1579 + $0x30] sm:$0xf]
        %v1593 = vld [vmem:[%s1579 + $0x34] sm:$0xf]
        %v1594 = vld [vmem:[%s1579 + $0x38] sm:$0xf]
        %v1595 = vld [vmem:[%s1579 + $0x3c] sm:$0xf]
        %v1596 = vld [vmem:[%s1579 + $0x40] sm:$0xf]
        %v1597 = vld [vmem:[%s1579 + $0x44] sm:$0xf]
        %v1598 = vld [vmem:[%s1579 + $0x48] sm:$0xf]
        %v1599 = vld [vmem:[%s1579 + $0x4c] sm:$0xf]
        %v1600 = vld [vmem:[%s1579 + $0x50] sm:$0xf]
        %v1601 = vld [vmem:[%s1579 + $0x54] sm:$0xf]
        %v1602 = vld [vmem:[%s1579 + $0x58] sm:$0xf]
        %v1603 = vld [vmem:[%s1579 + $0x5c] sm:$0xf]
        %v1604 = vld [vmem:[%s1579 + $0x60] sm:$0xf]
        %v1605 = vld [vmem:[%s1579 + $0x64] sm:$0xf]
        %v1606 = vld [vmem:[%s1579 + $0x68] sm:$0xf]
        %v1607 = vld [vmem:[%s1579 + $0x6c] sm:$0xf]
        %v1608 = vld [vmem:[%s1579 + $0x70] sm:$0xf]
        %v1609 = vld [vmem:[%s1579 + $0x74] sm:$0xf]
        %v1610 = vld [vmem:[%s1579 + $0x78] sm:$0xf]
        %v1611 = vld [vmem:[%s1579 + $0x7c] sm:$0xf]
        %vm1622 = vcmask 1043456
        %v1623 = vrot.slane %v1569, 4
        %v1624 = vrot.slane %v1571, 4
        %v1625 = vsel %vm1622, %v1623, %v1624
        %v1626 = vrot.slane %v1570, 4
        %v1627 = vrot.slane %v1572, 4
        %v1628 = vsel %vm1622, %v1626, %v1627
        %v1629 = vrot.slane %v1573, 4
        %v1630 = vsel %vm1622, %v1624, %v1629
        %v1631 = vrot.slane %v1574, 4
        %v1632 = vsel %vm1622, %v1627, %v1631
        %v1633 = vrot.slane %v1575, 4
        %v1634 = vsel %vm1622, %v1629, %v1633
        %v1635 = vrot.slane %v1576, 4
        %v1636 = vsel %vm1622, %v1631, %v1635
        %v1637 = vrot.slane %v1577, 4
        %v1638 = vsel %vm1622, %v1633, %v1637
        %v1639 = vrot.slane %v1578, 4
        %v1640 = vsel %vm1622, %v1635, %v1639
        %v1681 = vunpack.c.l.b16 %v1580
        %v1682 = vunpack.c.l.b16 %v1581
        %v1683 = vunpack.c.l.b16 %v1582
        %v1684 = vunpack.c.l.b16 %v1583
        %v1685 = vunpack.c.l.b16 %v1584
        %v1686 = vunpack.c.l.b16 %v1585
        %v1687 = vunpack.c.l.b16 %v1586
        %v1688 = vunpack.c.l.b16 %v1587
        %v1689 = vunpack.c.l.b16 %v1588
        %v1690 = vunpack.c.l.b16 %v1589
        %v1691 = vunpack.c.l.b16 %v1590
        %v1692 = vunpack.c.l.b16 %v1591
        %v1693 = vunpack.c.l.b16 %v1592
        %v1694 = vunpack.c.l.b16 %v1593
        %v1695 = vunpack.c.l.b16 %v1594
        %v1696 = vunpack.c.l.b16 %v1595
        %v1697 = vunpack.c.l.b16 %v1596
        %v1698 = vunpack.c.l.b16 %v1597
        %v1699 = vunpack.c.l.b16 %v1598
        %v1700 = vunpack.c.l.b16 %v1599
        %v1701 = vunpack.c.l.b16 %v1600
        %v1702 = vunpack.c.l.b16 %v1601
        %v1703 = vunpack.c.l.b16 %v1602
        %v1704 = vunpack.c.l.b16 %v1603
        %v1705 = vunpack.c.l.b16 %v1604
        %v1706 = vunpack.c.l.b16 %v1605
        %v1707 = vunpack.c.l.b16 %v1606
        %v1708 = vunpack.c.l.b16 %v1607
        %v1709 = vunpack.c.l.b16 %v1608
        %v1710 = vunpack.c.l.b16 %v1609
        %v1711 = vunpack.c.l.b16 %v1610
        %v1712 = vunpack.c.l.b16 %v1611
        %v1713 = vpack.c.b16 %v1682, %v1681
        %v1714 = vpack.c.b16 %v1684, %v1683
        %v1715 = vpack.c.b16 %v1686, %v1685
        %v1716 = vpack.c.b16 %v1688, %v1687
        %v1717 = vpack.c.b16 %v1690, %v1689
        %v1718 = vpack.c.b16 %v1692, %v1691
        %v1719 = vpack.c.b16 %v1694, %v1693
        %v1720 = vpack.c.b16 %v1696, %v1695
        %v1721 = vpack.c.b16 %v1698, %v1697
        %v1722 = vpack.c.b16 %v1700, %v1699
        %v1723 = vpack.c.b16 %v1702, %v1701
        %v1724 = vpack.c.b16 %v1704, %v1703
        %v1725 = vpack.c.b16 %v1706, %v1705
        %v1726 = vpack.c.b16 %v1708, %v1707
        %v1727 = vpack.c.b16 %v1710, %v1709
        %v1728 = vpack.c.b16 %v1712, %v1711
        %1745 = vmatprep.subr.bf16.mxu0 0
        %1746 = vmatpush1.bf16.msra.mxu0 %v1713
        %1747 = vmatprep.subr.bf16.mxu0 0
        %1748 = vmatpush1.bf16.msra.mxu0 %v1714
        %1749 = vmatprep.subr.bf16.mxu0 0
        %1750 = vmatpush1.bf16.msra.mxu0 %v1715
        %1751 = vmatprep.subr.bf16.mxu0 0
        %1752 = vmatpush1.bf16.msra.mxu0 %v1716
        %1753 = vmatprep.subr.bf16.mxu0 0
        %1754 = vmatpush1.bf16.msra.mxu0 %v1717
        %1755 = vmatprep.subr.bf16.mxu0 0
        %1756 = vmatpush1.bf16.msra.mxu0 %v1718
        %1757 = vmatprep.subr.bf16.mxu0 0
        %1758 = vmatpush1.bf16.msra.mxu0 %v1719
        %1759 = vmatprep.subr.bf16.mxu0 0
        %1760 = vmatpush1.bf16.msra.mxu0 %v1720
        %1761 = vmatprep.subr.bf16.mxu0 0
        %1762 = vmatpush1.bf16.msra.mxu0 %v1721
        %1763 = vmatprep.subr.bf16.mxu0 0
        %1764 = vmatpush1.bf16.msra.mxu0 %v1722
        %1765 = vmatprep.subr.bf16.mxu0 0
        %1766 = vmatpush1.bf16.msra.mxu0 %v1723
        %1767 = vmatprep.subr.bf16.mxu0 0
        %1768 = vmatpush1.bf16.msra.mxu0 %v1724
        %1769 = vmatprep.subr.bf16.mxu0 0
        %1770 = vmatpush1.bf16.msra.mxu0 %v1725
        %1771 = vmatprep.subr.bf16.mxu0 0
        %1772 = vmatpush1.bf16.msra.mxu0 %v1726
        %1773 = vmatprep.subr.bf16.mxu0 0
        %1774 = vmatpush1.bf16.msra.mxu0 %v1727
        %1775 = vmatprep.subr.bf16.mxu0 0
        %1776 = vmatpush1.bf16.msra.mxu0 %v1728
        %1777 = vmatprep.mubr.bf16.mxu0 %v1628
        %1778 = vmatmul.mubr.bf16.gmra.mrb[0].mxu0 %v1625
        %v1779 = vpop.f32.mrb[0].mxu0
        %v1780 = vadd.f32 0.0, %v1779
        %v1781 = vpop.f32.mrb[0].mxu0
        %v1782 = vpop.f32.mrb[0].mxu0
        %v1783 = vadd.f32 0.0, %v1782
        %v1784 = vpop.f32.mrb[0].mxu0
        %1785 = vmatprep.mubr.bf16.mxu0 %v1632
        %1786 = vmatmul.mubr.bf16.gmra.mrb[0].mxu0 %v1630
        %v1787 = vpop.f32.mrb[0].mxu0
        %v1788 = vadd.f32 0.0, %v1787
        %v1789 = vpop.f32.mrb[0].mxu0
        %v1790 = vpop.f32.mrb[0].mxu0
        %v1791 = vadd.f32 0.0, %v1790
        %v1792 = vpop.f32.mrb[0].mxu0
        %1793 = vmatprep.mubr.bf16.mxu0 %v1636
        %1794 = vmatmul.mubr.bf16.gmra.mrb[0].mxu0 %v1634
        %v1795 = vpop.f32.mrb[0].mxu0
        %v1796 = vadd.f32 0.0, %v1795
        %v1797 = vpop.f32.mrb[0].mxu0
        %v1798 = vpop.f32.mrb[0].mxu0
        %v1799 = vadd.f32 0.0, %v1798
        %v1800 = vpop.f32.mrb[0].mxu0
        %1801 = vmatprep.mubr.bf16.mxu0 %v1640
        %1802 = vmatmul.mubr.bf16.gmra.mrb[0].mxu0 %v1638
        %v1803 = vpop.f32.mrb[0].mxu0
        %v1804 = vadd.f32 0.0, %v1803
        %v1805 = vpop.f32.mrb[0].mxu0
        %v1806 = vpop.f32.mrb[0].mxu0
        %v1807 = vadd.f32 0.0, %v1806
        %v1808 = vpop.f32.mrb[0].mxu0
        %1809 = vdwg.mxu0
        %v1810 = vld [vmem:[#allocation3] sm:$0xff]
        %v1811 = vld [vmem:[#allocation3 + $0x8] sm:$0xff]
        %v1812 = vld [vmem:[#allocation3 + $0x10] sm:$0xff]
        %v1813 = vld [vmem:[#allocation3 + $0x18] sm:$0xff]
        %v1814 = vld [vmem:[#allocation3 + $0x20] sm:$0xff]
        %v1815 = vld [vmem:[#allocation3 + $0x28] sm:$0xff]
        %v1816 = vld [vmem:[#allocation3 + $0x30] sm:$0xff]
        %v1817 = vld [vmem:[#allocation3 + $0x38] sm:$0xff]
        %v1818 = vadd.f32 %v1810, %v1780
        %v1819 = vadd.f32 %v1811, %v1783
        %v1820 = vadd.f32 %v1812, %v1788
        %v1821 = vadd.f32 %v1813, %v1791
        %v1822 = vadd.f32 %v1814, %v1796
        %v1823 = vadd.f32 %v1815, %v1799
        %v1824 = vadd.f32 %v1816, %v1804
        %v1825 = vadd.f32 %v1817, %v1807
        %1826 = vst [vmem:[#allocation3] sm:$0xff] %v1818
        %1827 = vst [vmem:[#allocation3 + $0x8] sm:$0xff] %v1819
        %1828 = vst [vmem:[#allocation3 + $0x10] sm:$0xff] %v1820
        %1829 = vst [vmem:[#allocation3 + $0x18] sm:$0xff] %v1821
        %1830 = vst [vmem:[#allocation3 + $0x20] sm:$0xff] %v1822
        %1831 = vst [vmem:[#allocation3 + $0x28] sm:$0xff] %v1823
        %1832 = vst [vmem:[#allocation3 + $0x30] sm:$0xff] %v1824
        %1833 = vst [vmem:[#allocation3 + $0x38] sm:$0xff] %v1825
        %v1834 = vld [vmem:[%s663] sm:$0xf0]
        %v1835 = vld [vmem:[%s663 + $0x8] sm:$0xf0]
        %v1836 = vld [vmem:[%s663 + $0x10] sm:$0xff]
        %v1837 = vld [vmem:[%s663 + $0x18] sm:$0xff]
        %v1838 = vld [vmem:[%s663 + $0x20] sm:$0xff]
        %v1839 = vld [vmem:[%s663 + $0x28] sm:$0xff]
        %v1840 = vld [vmem:[%s663 + $0x30] sm:$0xff]
        %v1841 = vld [vmem:[%s663 + $0x38] sm:$0xff]
        %v1842 = vld [vmem:[%s663 + $0x40] sm:$0xf]
        %v1843 = vld [vmem:[%s663 + $0x48] sm:$0xf]
        %s1844 = scalar_lea.vmem [#allocation4], 512
        %v1845 = vld [vmem:[%s1844] sm:$0xf]
        %v1846 = vld [vmem:[%s1844 + $0x4] sm:$0xf]
        %v1847 = vld [vmem:[%s1844 + $0x8] sm:$0xf]
        %v1848 = vld [vmem:[%s1844 + $0xc] sm:$0xf]
        %v1849 = vld [vmem:[%s1844 + $0x10] sm:$0xf]
        %v1850 = vld [vmem:[%s1844 + $0x14] sm:$0xf]
        %v1851 = vld [vmem:[%s1844 + $0x18] sm:$0xf]
        %v1852 = vld [vmem:[%s1844 + $0x1c] sm:$0xf]
        %v1853 = vld [vmem:[%s1844 + $0x20] sm:$0xf]
        %v1854 = vld [vmem:[%s1844 + $0x24] sm:$0xf]
        %v1855 = vld [vmem:[%s1844 + $0x28] sm:$0xf]
        %v1856 = vld [vmem:[%s1844 + $0x2c] sm:$0xf]
        %v1857 = vld [vmem:[%s1844 + $0x30] sm:$0xf]
        %v1858 = vld [vmem:[%s1844 + $0x34] sm:$0xf]
        %v1859 = vld [vmem:[%s1844 + $0x38] sm:$0xf]
        %v1860 = vld [vmem:[%s1844 + $0x3c] sm:$0xf]
        %v1861 = vld [vmem:[%s1844 + $0x40] sm:$0xf]
        %v1862 = vld [vmem:[%s1844 + $0x44] sm:$0xf]
        %v1863 = vld [vmem:[%s1844 + $0x48] sm:$0xf]
        %v1864 = vld [vmem:[%s1844 + $0x4c] sm:$0xf]
        %v1865 = vld [vmem:[%s1844 + $0x50] sm:$0xf]
        %v1866 = vld [vmem:[%s1844 + $0x54] sm:$0xf]
        %v1867 = vld [vmem:[%s1844 + $0x58] sm:$0xf]
        %v1868 = vld [vmem:[%s1844 + $0x5c] sm:$0xf]
        %v1869 = vld [vmem:[%s1844 + $0x60] sm:$0xf]
        %v1870 = vld [vmem:[%s1844 + $0x64] sm:$0xf]
        %v1871 = vld [vmem:[%s1844 + $0x68] sm:$0xf]
        %v1872 = vld [vmem:[%s1844 + $0x6c] sm:$0xf]
        %v1873 = vld [vmem:[%s1844 + $0x70] sm:$0xf]
        %v1874 = vld [vmem:[%s1844 + $0x74] sm:$0xf]
        %v1875 = vld [vmem:[%s1844 + $0x78] sm:$0xf]
        %v1876 = vld [vmem:[%s1844 + $0x7c] sm:$0xf]
        %v1887 = vrot.slane %v1834, 4
        %v1888 = vrot.slane %v1836, 4
        %v1889 = vsel %vm1622, %v1887, %v1888
        %v1890 = vrot.slane %v1835, 4
        %v1891 = vrot.slane %v1837, 4
        %v1892 = vsel %vm1622, %v1890, %v1891
        %v1893 = vrot.slane %v1838, 4
        %v1894 = vsel %vm1622, %v1888, %v1893
        %v1895 = vrot.slane %v1839, 4
        %v1896 = vsel %vm1622, %v1891, %v1895
        %v1897 = vrot.slane %v1840, 4
        %v1898 = vsel %vm1622, %v1893, %v1897
        %v1899 = vrot.slane %v1841, 4
        %v1900 = vsel %vm1622, %v1895, %v1899
        %v1901 = vrot.slane %v1842, 4
        %v1902 = vsel %vm1622, %v1897, %v1901
        %v1903 = vrot.slane %v1843, 4
        %v1904 = vsel %vm1622, %v1899, %v1903
        %v1945 = vunpack.c.l.b16 %v1845
        %v1946 = vunpack.c.l.b16 %v1846
        %v1947 = vunpack.c.l.b16 %v1847
        %v1948 = vunpack.c.l.b16 %v1848
        %v1949 = vunpack.c.l.b16 %v1849
        %v1950 = vunpack.c.l.b16 %v1850
        %v1951 = vunpack.c.l.b16 %v1851
        %v1952 = vunpack.c.l.b16 %v1852
        %v1953 = vunpack.c.l.b16 %v1853
        %v1954 = vunpack.c.l.b16 %v1854
        %v1955 = vunpack.c.l.b16 %v1855
        %v1956 = vunpack.c.l.b16 %v1856
        %v1957 = vunpack.c.l.b16 %v1857
        %v1958 = vunpack.c.l.b16 %v1858
        %v1959 = vunpack.c.l.b16 %v1859
        %v1960 = vunpack.c.l.b16 %v1860
        %v1961 = vunpack.c.l.b16 %v1861
        %v1962 = vunpack.c.l.b16 %v1862
        %v1963 = vunpack.c.l.b16 %v1863
        %v1964 = vunpack.c.l.b16 %v1864
        %v1965 = vunpack.c.l.b16 %v1865
        %v1966 = vunpack.c.l.b16 %v1866
        %v1967 = vunpack.c.l.b16 %v1867
        %v1968 = vunpack.c.l.b16 %v1868
        %v1969 = vunpack.c.l.b16 %v1869
        %v1970 = vunpack.c.l.b16 %v1870
        %v1971 = vunpack.c.l.b16 %v1871
        %v1972 = vunpack.c.l.b16 %v1872
        %v1973 = vunpack.c.l.b16 %v1873
        %v1974 = vunpack.c.l.b16 %v1874
        %v1975 = vunpack.c.l.b16 %v1875
        %v1976 = vunpack.c.l.b16 %v1876
        %v1977 = vpack.c.b16 %v1946, %v1945
        %v1978 = vpack.c.b16 %v1948, %v1947
        %v1979 = vpack.c.b16 %v1950, %v1949
        %v1980 = vpack.c.b16 %v1952, %v1951
        %v1981 = vpack.c.b16 %v1954, %v1953
        %v1982 = vpack.c.b16 %v1956, %v1955
        %v1983 = vpack.c.b16 %v1958, %v1957
        %v1984 = vpack.c.b16 %v1960, %v1959
        %v1985 = vpack.c.b16 %v1962, %v1961
        %v1986 = vpack.c.b16 %v1964, %v1963
        %v1987 = vpack.c.b16 %v1966, %v1965
        %v1988 = vpack.c.b16 %v1968, %v1967
        %v1989 = vpack.c.b16 %v1970, %v1969
        %v1990 = vpack.c.b16 %v1972, %v1971
        %v1991 = vpack.c.b16 %v1974, %v1973
        %v1992 = vpack.c.b16 %v1976, %v1975
        %2009 = vmatprep.subr.bf16.mxu0 0
        %2010 = vmatpush1.bf16.msra.mxu0 %v1977
        %2011 = vmatprep.subr.bf16.mxu0 0
        %2012 = vmatpush1.bf16.msra.mxu0 %v1978
        %2013 = vmatprep.subr.bf16.mxu0 0
        %2014 = vmatpush1.bf16.msra.mxu0 %v1979
        %2015 = vmatprep.subr.bf16.mxu0 0
        %2016 = vmatpush1.bf16.msra.mxu0 %v1980
        %2017 = vmatprep.subr.bf16.mxu0 0
        %2018 = vmatpush1.bf16.msra.mxu0 %v1981
        %2019 = vmatprep.subr.bf16.mxu0 0
        %2020 = vmatpush1.bf16.msra.mxu0 %v1982
        %2021 = vmatprep.subr.bf16.mxu0 0
        %2022 = vmatpush1.bf16.msra.mxu0 %v1983
        %2023 = vmatprep.subr.bf16.mxu0 0
        %2024 = vmatpush1.bf16.msra.mxu0 %v1984
        %2025 = vmatprep.subr.bf16.mxu0 0
        %2026 = vmatpush1.bf16.msra.mxu0 %v1985
        %2027 = vmatprep.subr.bf16.mxu0 0
        %2028 = vmatpush1.bf16.msra.mxu0 %v1986
        %2029 = vmatprep.subr.bf16.mxu0 0
        %2030 = vmatpush1.bf16.msra.mxu0 %v1987
        %2031 = vmatprep.subr.bf16.mxu0 0
        %2032 = vmatpush1.bf16.msra.mxu0 %v1988
        %2033 = vmatprep.subr.bf16.mxu0 0
        %2034 = vmatpush1.bf16.msra.mxu0 %v1989
        %2035 = vmatprep.subr.bf16.mxu0 0
        %2036 = vmatpush1.bf16.msra.mxu0 %v1990
        %2037 = vmatprep.subr.bf16.mxu0 0
        %2038 = vmatpush1.bf16.msra.mxu0 %v1991
        %2039 = vmatprep.subr.bf16.mxu0 0
        %2040 = vmatpush1.bf16.msra.mxu0 %v1992
        %2041 = vmatprep.mubr.bf16.mxu0 %v1892
        %2042 = vmatmul.mubr.bf16.gmra.mrb[0].mxu0 %v1889
        %v2043 = vpop.f32.mrb[0].mxu0
        %v2044 = vadd.f32 0.0, %v2043
        %v2045 = vpop.f32.mrb[0].mxu0
        %v2046 = vpop.f32.mrb[0].mxu0
        %v2047 = vadd.f32 0.0, %v2046
        %v2048 = vpop.f32.mrb[0].mxu0
        %2049 = vmatprep.mubr.bf16.mxu0 %v1896
        %2050 = vmatmul.mubr.bf16.gmra.mrb[0].mxu0 %v1894
        %v2051 = vpop.f32.mrb[0].mxu0
        %v2052 = vadd.f32 0.0, %v2051
        %v2053 = vpop.f32.mrb[0].mxu0
        %v2054 = vpop.f32.mrb[0].mxu0
        %v2055 = vadd.f32 0.0, %v2054
        %v2056 = vpop.f32.mrb[0].mxu0
        %2057 = vmatprep.mubr.bf16.mxu0 %v1900
        %2058 = vmatmul.mubr.bf16.gmra.mrb[0].mxu0 %v1898
        %v2059 = vpop.f32.mrb[0].mxu0
        %v2060 = vadd.f32 0.0, %v2059
        %v2061 = vpop.f32.mrb[0].mxu0
        %v2062 = vpop.f32.mrb[0].mxu0
        %v2063 = vadd.f32 0.0, %v2062
        %v2064 = vpop.f32.mrb[0].mxu0
        %2065 = vmatprep.mubr.bf16.mxu0 %v1904
        %2066 = vmatmul.mubr.bf16.gmra.mrb[0].mxu0 %v1902
        %v2067 = vpop.f32.mrb[0].mxu0
        %v2068 = vadd.f32 0.0, %v2067
        %v2069 = vpop.f32.mrb[0].mxu0
        %v2070 = vpop.f32.mrb[0].mxu0
        %v2071 = vadd.f32 0.0, %v2070
        %v2072 = vpop.f32.mrb[0].mxu0
        %2073 = vdwg.mxu0
        %v2074 = vld [vmem:[#allocation3] sm:$0xff]
        %v2075 = vld [vmem:[#allocation3 + $0x8] sm:$0xff]
        %v2076 = vld [vmem:[#allocation3 + $0x10] sm:$0xff]
        %v2077 = vld [vmem:[#allocation3 + $0x18] sm:$0xff]
        %v2078 = vld [vmem:[#allocation3 + $0x20] sm:$0xff]
        %v2079 = vld [vmem:[#allocation3 + $0x28] sm:$0xff]
        %v2080 = vld [vmem:[#allocation3 + $0x30] sm:$0xff]
        %v2081 = vld [vmem:[#allocation3 + $0x38] sm:$0xff]
        %v2082 = vadd.f32 %v2074, %v2044
        %v2083 = vadd.f32 %v2075, %v2047
        %v2084 = vadd.f32 %v2076, %v2052
        %v2085 = vadd.f32 %v2077, %v2055
        %v2086 = vadd.f32 %v2078, %v2060
        %v2087 = vadd.f32 %v2079, %v2063
        %v2088 = vadd.f32 %v2080, %v2068
        %v2089 = vadd.f32 %v2081, %v2071
        %2090 = vst [vmem:[#allocation3] sm:$0xff] %v2082
        %2091 = vst [vmem:[#allocation3 + $0x8] sm:$0xff] %v2083
        %2092 = vst [vmem:[#allocation3 + $0x10] sm:$0xff] %v2084
        %2093 = vst [vmem:[#allocation3 + $0x18] sm:$0xff] %v2085
        %2094 = vst [vmem:[#allocation3 + $0x20] sm:$0xff] %v2086
        %2095 = vst [vmem:[#allocation3 + $0x28] sm:$0xff] %v2087
        %2096 = vst [vmem:[#allocation3 + $0x30] sm:$0xff] %v2088
        %2097 = vst [vmem:[#allocation3 + $0x38] sm:$0xff] %v2089
        %v2098 = vld [vmem:[%s897] sm:$0xf0]
        %v2099 = vld [vmem:[%s897 + $0x8] sm:$0xf0]
        %v2100 = vld [vmem:[%s897 + $0x10] sm:$0xff]
        %v2101 = vld [vmem:[%s897 + $0x18] sm:$0xff]
        %v2102 = vld [vmem:[%s897 + $0x20] sm:$0xff]
        %v2103 = vld [vmem:[%s897 + $0x28] sm:$0xff]
        %v2104 = vld [vmem:[%s897 + $0x30] sm:$0xff]
        %v2105 = vld [vmem:[%s897 + $0x38] sm:$0xff]
        %v2106 = vld [vmem:[%s897 + $0x40] sm:$0xf]
        %v2107 = vld [vmem:[%s897 + $0x48] sm:$0xf]
        %s2108 = scalar_lea.vmem [#allocation4], 640
        %v2109 = vld [vmem:[%s2108] sm:$0xf]
        %v2110 = vld [vmem:[%s2108 + $0x4] sm:$0xf]
        %v2111 = vld [vmem:[%s2108 + $0x8] sm:$0xf]
        %v2112 = vld [vmem:[%s2108 + $0xc] sm:$0xf]
        %v2113 = vld [vmem:[%s2108 + $0x10] sm:$0xf]
        %v2114 = vld [vmem:[%s2108 + $0x14] sm:$0xf]
        %v2115 = vld [vmem:[%s2108 + $0x18] sm:$0xf]
        %v2116 = vld [vmem:[%s2108 + $0x1c] sm:$0xf]
        %v2117 = vld [vmem:[%s2108 + $0x20] sm:$0xf]
        %v2118 = vld [vmem:[%s2108 + $0x24] sm:$0xf]
        %v2119 = vld [vmem:[%s2108 + $0x28] sm:$0xf]
        %v2120 = vld [vmem:[%s2108 + $0x2c] sm:$0xf]
        %v2121 = vld [vmem:[%s2108 + $0x30] sm:$0xf]
        %v2122 = vld [vmem:[%s2108 + $0x34] sm:$0xf]
        %v2123 = vld [vmem:[%s2108 + $0x38] sm:$0xf]
        %v2124 = vld [vmem:[%s2108 + $0x3c] sm:$0xf]
        %v2125 = vld [vmem:[%s2108 + $0x40] sm:$0xf]
        %v2126 = vld [vmem:[%s2108 + $0x44] sm:$0xf]
        %v2127 = vld [vmem:[%s2108 + $0x48] sm:$0xf]
        %v2128 = vld [vmem:[%s2108 + $0x4c] sm:$0xf]
        %v2129 = vld [vmem:[%s2108 + $0x50] sm:$0xf]
        %v2130 = vld [vmem:[%s2108 + $0x54] sm:$0xf]
        %v2131 = vld [vmem:[%s2108 + $0x58] sm:$0xf]
        %v2132 = vld [vmem:[%s2108 + $0x5c] sm:$0xf]
        %v2133 = vld [vmem:[%s2108 + $0x60] sm:$0xf]
        %v2134 = vld [vmem:[%s2108 + $0x64] sm:$0xf]
        %v2135 = vld [vmem:[%s2108 + $0x68] sm:$0xf]
        %v2136 = vld [vmem:[%s2108 + $0x6c] sm:$0xf]
        %v2137 = vld [vmem:[%s2108 + $0x70] sm:$0xf]
        %v2138 = vld [vmem:[%s2108 + $0x74] sm:$0xf]
        %v2139 = vld [vmem:[%s2108 + $0x78] sm:$0xf]
        %v2140 = vld [vmem:[%s2108 + $0x7c] sm:$0xf]
        %v2151 = vrot.slane %v2098, 4
        %v2152 = vrot.slane %v2100, 4
        %v2153 = vsel %vm1622, %v2151, %v2152
        %v2154 = vrot.slane %v2099, 4
        %v2155 = vrot.slane %v2101, 4
        %v2156 = vsel %vm1622, %v2154, %v2155
        %v2157 = vrot.slane %v2102, 4
        %v2158 = vsel %vm1622, %v2152, %v2157
        %v2159 = vrot.slane %v2103, 4
        %v2160 = vsel %vm1622, %v2155, %v2159
        %v2161 = vrot.slane %v2104, 4
        %v2162 = vsel %vm1622, %v2157, %v2161
        %v2163 = vrot.slane %v2105, 4
        %v2164 = vsel %vm1622, %v2159, %v2163
        %v2165 = vrot.slane %v2106, 4
        %v2166 = vsel %vm1622, %v2161, %v2165
        %v2167 = vrot.slane %v2107, 4
        %v2168 = vsel %vm1622, %v2163, %v2167
        %v2209 = vunpack.c.l.b16 %v2109
        %v2210 = vunpack.c.l.b16 %v2110
        %v2211 = vunpack.c.l.b16 %v2111
        %v2212 = vunpack.c.l.b16 %v2112
        %v2213 = vunpack.c.l.b16 %v2113
        %v2214 = vunpack.c.l.b16 %v2114
        %v2215 = vunpack.c.l.b16 %v2115
        %v2216 = vunpack.c.l.b16 %v2116
        %v2217 = vunpack.c.l.b16 %v2117
        %v2218 = vunpack.c.l.b16 %v2118
        %v2219 = vunpack.c.l.b16 %v2119
        %v2220 = vunpack.c.l.b16 %v2120
        %v2221 = vunpack.c.l.b16 %v2121
        %v2222 = vunpack.c.l.b16 %v2122
        %v2223 = vunpack.c.l.b16 %v2123
        %v2224 = vunpack.c.l.b16 %v2124
        %v2225 = vunpack.c.l.b16 %v2125
        %v2226 = vunpack.c.l.b16 %v2126
        %v2227 = vunpack.c.l.b16 %v2127
        %v2228 = vunpack.c.l.b16 %v2128
        %v2229 = vunpack.c.l.b16 %v2129
        %v2230 = vunpack.c.l.b16 %v2130
        %v2231 = vunpack.c.l.b16 %v2131
        %v2232 = vunpack.c.l.b16 %v2132
        %v2233 = vunpack.c.l.b16 %v2133
        %v2234 = vunpack.c.l.b16 %v2134
        %v2235 = vunpack.c.l.b16 %v2135
        %v2236 = vunpack.c.l.b16 %v2136
        %v2237 = vunpack.c.l.b16 %v2137
        %v2238 = vunpack.c.l.b16 %v2138
        %v2239 = vunpack.c.l.b16 %v2139
        %v2240 = vunpack.c.l.b16 %v2140
        %v2241 = vpack.c.b16 %v2210, %v2209
        %v2242 = vpack.c.b16 %v2212, %v2211
        %v2243 = vpack.c.b16 %v2214, %v2213
        %v2244 = vpack.c.b16 %v2216, %v2215
        %v2245 = vpack.c.b16 %v2218, %v2217
        %v2246 = vpack.c.b16 %v2220, %v2219
        %v2247 = vpack.c.b16 %v2222, %v2221
        %v2248 = vpack.c.b16 %v2224, %v2223
        %v2249 = vpack.c.b16 %v2226, %v2225
        %v2250 = vpack.c.b16 %v2228, %v2227
        %v2251 = vpack.c.b16 %v2230, %v2229
        %v2252 = vpack.c.b16 %v2232, %v2231
        %v2253 = vpack.c.b16 %v2234, %v2233
        %v2254 = vpack.c.b16 %v2236, %v2235
        %v2255 = vpack.c.b16 %v2238, %v2237
        %v2256 = vpack.c.b16 %v2240, %v2239
        %2273 = vmatprep.subr.bf16.mxu0 0
        %2274 = vmatpush1.bf16.msra.mxu0 %v2241
        %2275 = vmatprep.subr.bf16.mxu0 0
        %2276 = vmatpush1.bf16.msra.mxu0 %v2242
        %2277 = vmatprep.subr.bf16.mxu0 0
        %2278 = vmatpush1.bf16.msra.mxu0 %v2243
        %2279 = vmatprep.subr.bf16.mxu0 0
        %2280 = vmatpush1.bf16.msra.mxu0 %v2244
        %2281 = vmatprep.subr.bf16.mxu0 0
        %2282 = vmatpush1.bf16.msra.mxu0 %v2245
        %2283 = vmatprep.subr.bf16.mxu0 0
        %2284 = vmatpush1.bf16.msra.mxu0 %v2246
        %2285 = vmatprep.subr.bf16.mxu0 0
        %2286 = vmatpush1.bf16.msra.mxu0 %v2247
        %2287 = vmatprep.subr.bf16.mxu0 0
        %2288 = vmatpush1.bf16.msra.mxu0 %v2248
        %2289 = vmatprep.subr.bf16.mxu0 0
        %2290 = vmatpush1.bf16.msra.mxu0 %v2249
        %2291 = vmatprep.subr.bf16.mxu0 0
        %2292 = vmatpush1.bf16.msra.mxu0 %v2250
        %2293 = vmatprep.subr.bf16.mxu0 0
        %2294 = vmatpush1.bf16.msra.mxu0 %v2251
        %2295 = vmatprep.subr.bf16.mxu0 0
        %2296 = vmatpush1.bf16.msra.mxu0 %v2252
        %2297 = vmatprep.subr.bf16.mxu0 0
        %2298 = vmatpush1.bf16.msra.mxu0 %v2253
        %2299 = vmatprep.subr.bf16.mxu0 0
        %2300 = vmatpush1.bf16.msra.mxu0 %v2254
        %2301 = vmatprep.subr.bf16.mxu0 0
        %2302 = vmatpush1.bf16.msra.mxu0 %v2255
        %2303 = vmatprep.subr.bf16.mxu0 0
        %2304 = vmatpush1.bf16.msra.mxu0 %v2256
        %2305 = vmatprep.mubr.bf16.mxu0 %v2156
        %2306 = vmatmul.mubr.bf16.gmra.mrb[0].mxu0 %v2153
        %v2307 = vpop.f32.mrb[0].mxu0
        %v2308 = vadd.f32 0.0, %v2307
        %v2309 = vpop.f32.mrb[0].mxu0
        %v2310 = vpop.f32.mrb[0].mxu0
        %v2311 = vadd.f32 0.0, %v2310
        %v2312 = vpop.f32.mrb[0].mxu0
        %2313 = vmatprep.mubr.bf16.mxu0 %v2160
        %2314 = vmatmul.mubr.bf16.gmra.mrb[0].mxu0 %v2158
        %v2315 = vpop.f32.mrb[0].mxu0
        %v2316 = vadd.f32 0.0, %v2315
        %v2317 = vpop.f32.mrb[0].mxu0
        %v2318 = vpop.f32.mrb[0].mxu0
        %v2319 = vadd.f32 0.0, %v2318
        %v2320 = vpop.f32.mrb[0].mxu0
        %2321 = vmatprep.mubr.bf16.mxu0 %v2164
        %2322 = vmatmul.mubr.bf16.gmra.mrb[0].mxu0 %v2162
        %v2323 = vpop.f32.mrb[0].mxu0
        %v2324 = vadd.f32 0.0, %v2323
        %v2325 = vpop.f32.mrb[0].mxu0
        %v2326 = vpop.f32.mrb[0].mxu0
        %v2327 = vadd.f32 0.0, %v2326
        %v2328 = vpop.f32.mrb[0].mxu0
        %2329 = vmatprep.mubr.bf16.mxu0 %v2168
        %2330 = vmatmul.mubr.bf16.gmra.mrb[0].mxu0 %v2166
        %v2331 = vpop.f32.mrb[0].mxu0
        %v2332 = vadd.f32 0.0, %v2331
        %v2333 = vpop.f32.mrb[0].mxu0
        %v2334 = vpop.f32.mrb[0].mxu0
        %v2335 = vadd.f32 0.0, %v2334
        %v2336 = vpop.f32.mrb[0].mxu0
        %2337 = vdwg.mxu0
        %v2338 = vld [vmem:[#allocation3] sm:$0xff]
        %v2339 = vld [vmem:[#allocation3 + $0x8] sm:$0xff]
        %v2340 = vld [vmem:[#allocation3 + $0x10] sm:$0xff]
        %v2341 = vld [vmem:[#allocation3 + $0x18] sm:$0xff]
        %v2342 = vld [vmem:[#allocation3 + $0x20] sm:$0xff]
        %v2343 = vld [vmem:[#allocation3 + $0x28] sm:$0xff]
        %v2344 = vld [vmem:[#allocation3 + $0x30] sm:$0xff]
        %v2345 = vld [vmem:[#allocation3 + $0x38] sm:$0xff]
        %v2346 = vadd.f32 %v2338, %v2308
        %v2347 = vadd.f32 %v2339, %v2311
        %v2348 = vadd.f32 %v2340, %v2316
        %v2349 = vadd.f32 %v2341, %v2319
        %v2350 = vadd.f32 %v2342, %v2324
        %v2351 = vadd.f32 %v2343, %v2327
        %v2352 = vadd.f32 %v2344, %v2332
        %v2353 = vadd.f32 %v2345, %v2335
        %2354 = vst [vmem:[#allocation3] sm:$0xff] %v2346
        %2355 = vst [vmem:[#allocation3 + $0x8] sm:$0xff] %v2347
        %2356 = vst [vmem:[#allocation3 + $0x10] sm:$0xff] %v2348
        %2357 = vst [vmem:[#allocation3 + $0x18] sm:$0xff] %v2349
        %2358 = vst [vmem:[#allocation3 + $0x20] sm:$0xff] %v2350
        %2359 = vst [vmem:[#allocation3 + $0x28] sm:$0xff] %v2351
        %2360 = vst [vmem:[#allocation3 + $0x30] sm:$0xff] %v2352
        %2361 = vst [vmem:[#allocation3 + $0x38] sm:$0xff] %v2353
        %v2362 = vld [vmem:[#allocation2 + $0x10] sm:$0xff]
        %v2363 = vld [vmem:[#allocation2 + $0x18] sm:$0xff]
        %v2364 = vld [vmem:[#allocation2 + $0x20] sm:$0xff]
        %v2365 = vld [vmem:[#allocation2 + $0x28] sm:$0xff]
        %v2366 = vld [vmem:[#allocation2 + $0x30] sm:$0xff]
        %v2367 = vld [vmem:[#allocation2 + $0x38] sm:$0xff]
        %v2368 = vld [vmem:[#allocation2 + $0x40] sm:$0xff]
        %v2369 = vld [vmem:[#allocation2 + $0x48] sm:$0xff]
        %s2370 = scalar_lea.vmem [#allocation4], 768
        %v2371 = vld [vmem:[%s2370] sm:$0xf]
        %v2372 = vld [vmem:[%s2370 + $0x4] sm:$0xf]
        %v2373 = vld [vmem:[%s2370 + $0x8] sm:$0xf]
        %v2374 = vld [vmem:[%s2370 + $0xc] sm:$0xf]
        %v2375 = vld [vmem:[%s2370 + $0x10] sm:$0xf]
        %v2376 = vld [vmem:[%s2370 + $0x14] sm:$0xf]
        %v2377 = vld [vmem:[%s2370 + $0x18] sm:$0xf]
        %v2378 = vld [vmem:[%s2370 + $0x1c] sm:$0xf]
        %v2379 = vld [vmem:[%s2370 + $0x20] sm:$0xf]
        %v2380 = vld [vmem:[%s2370 + $0x24] sm:$0xf]
        %v2381 = vld [vmem:[%s2370 + $0x28] sm:$0xf]
        %v2382 = vld [vmem:[%s2370 + $0x2c] sm:$0xf]
        %v2383 = vld [vmem:[%s2370 + $0x30] sm:$0xf]
        %v2384 = vld [vmem:[%s2370 + $0x34] sm:$0xf]
        %v2385 = vld [vmem:[%s2370 + $0x38] sm:$0xf]
        %v2386 = vld [vmem:[%s2370 + $0x3c] sm:$0xf]
        %v2387 = vld [vmem:[%s2370 + $0x40] sm:$0xf]
        %v2388 = vld [vmem:[%s2370 + $0x44] sm:$0xf]
        %v2389 = vld [vmem:[%s2370 + $0x48] sm:$0xf]
        %v2390 = vld [vmem:[%s2370 + $0x4c] sm:$0xf]
        %v2391 = vld [vmem:[%s2370 + $0x50] sm:$0xf]
        %v2392 = vld [vmem:[%s2370 + $0x54] sm:$0xf]
        %v2393 = vld [vmem:[%s2370 + $0x58] sm:$0xf]
        %v2394 = vld [vmem:[%s2370 + $0x5c] sm:$0xf]
        %v2395 = vld [vmem:[%s2370 + $0x60] sm:$0xf]
        %v2396 = vld [vmem:[%s2370 + $0x64] sm:$0xf]
        %v2397 = vld [vmem:[%s2370 + $0x68] sm:$0xf]
        %v2398 = vld [vmem:[%s2370 + $0x6c] sm:$0xf]
        %v2399 = vld [vmem:[%s2370 + $0x70] sm:$0xf]
        %v2400 = vld [vmem:[%s2370 + $0x74] sm:$0xf]
        %v2401 = vld [vmem:[%s2370 + $0x78] sm:$0xf]
        %v2402 = vld [vmem:[%s2370 + $0x7c] sm:$0xf]
        %v2435 = vunpack.c.l.b16 %v2371
        %v2436 = vunpack.c.l.b16 %v2372
        %v2437 = vunpack.c.l.b16 %v2373
        %v2438 = vunpack.c.l.b16 %v2374
        %v2439 = vunpack.c.l.b16 %v2375
        %v2440 = vunpack.c.l.b16 %v2376
        %v2441 = vunpack.c.l.b16 %v2377
        %v2442 = vunpack.c.l.b16 %v2378
        %v2443 = vunpack.c.l.b16 %v2379
        %v2444 = vunpack.c.l.b16 %v2380
        %v2445 = vunpack.c.l.b16 %v2381
        %v2446 = vunpack.c.l.b16 %v2382
        %v2447 = vunpack.c.l.b16 %v2383
        %v2448 = vunpack.c.l.b16 %v2384
        %v2449 = vunpack.c.l.b16 %v2385
        %v2450 = vunpack.c.l.b16 %v2386
        %v2451 = vunpack.c.l.b16 %v2387
        %v2452 = vunpack.c.l.b16 %v2388
        %v2453 = vunpack.c.l.b16 %v2389
        %v2454 = vunpack.c.l.b16 %v2390
        %v2455 = vunpack.c.l.b16 %v2391
        %v2456 = vunpack.c.l.b16 %v2392
        %v2457 = vunpack.c.l.b16 %v2393
        %v2458 = vunpack.c.l.b16 %v2394
        %v2459 = vunpack.c.l.b16 %v2395
        %v2460 = vunpack.c.l.b16 %v2396
        %v2461 = vunpack.c.l.b16 %v2397
        %v2462 = vunpack.c.l.b16 %v2398
        %v2463 = vunpack.c.l.b16 %v2399
        %v2464 = vunpack.c.l.b16 %v2400
        %v2465 = vunpack.c.l.b16 %v2401
        %v2466 = vunpack.c.l.b16 %v2402
        %v2467 = vpack.c.b16 %v2436, %v2435
        %v2468 = vpack.c.b16 %v2438, %v2437
        %v2469 = vpack.c.b16 %v2440, %v2439
        %v2470 = vpack.c.b16 %v2442, %v2441
        %v2471 = vpack.c.b16 %v2444, %v2443
        %v2472 = vpack.c.b16 %v2446, %v2445
        %v2473 = vpack.c.b16 %v2448, %v2447
        %v2474 = vpack.c.b16 %v2450, %v2449
        %v2475 = vpack.c.b16 %v2452, %v2451
        %v2476 = vpack.c.b16 %v2454, %v2453
        %v2477 = vpack.c.b16 %v2456, %v2455
        %v2478 = vpack.c.b16 %v2458, %v2457
        %v2479 = vpack.c.b16 %v2460, %v2459
        %v2480 = vpack.c.b16 %v2462, %v2461
        %v2481 = vpack.c.b16 %v2464, %v2463
        %v2482 = vpack.c.b16 %v2466, %v2465
        %2499 = vmatprep.subr.bf16.mxu0 0
        %2500 = vmatpush1.bf16.msra.mxu0 %v2467
        %2501 = vmatprep.subr.bf16.mxu0 0
        %2502 = vmatpush1.bf16.msra.mxu0 %v2468
        %2503 = vmatprep.subr.bf16.mxu0 0
        %2504 = vmatpush1.bf16.msra.mxu0 %v2469
        %2505 = vmatprep.subr.bf16.mxu0 0
        %2506 = vmatpush1.bf16.msra.mxu0 %v2470
        %2507 = vmatprep.subr.bf16.mxu0 0
        %2508 = vmatpush1.bf16.msra.mxu0 %v2471
        %2509 = vmatprep.subr.bf16.mxu0 0
        %2510 = vmatpush1.bf16.msra.mxu0 %v2472
        %2511 = vmatprep.subr.bf16.mxu0 0
        %2512 = vmatpush1.bf16.msra.mxu0 %v2473
        %2513 = vmatprep.subr.bf16.mxu0 0
        %2514 = vmatpush1.bf16.msra.mxu0 %v2474
        %2515 = vmatprep.subr.bf16.mxu0 0
        %2516 = vmatpush1.bf16.msra.mxu0 %v2475
        %2517 = vmatprep.subr.bf16.mxu0 0
        %2518 = vmatpush1.bf16.msra.mxu0 %v2476
        %2519 = vmatprep.subr.bf16.mxu0 0
        %2520 = vmatpush1.bf16.msra.mxu0 %v2477
        %2521 = vmatprep.subr.bf16.mxu0 0
        %2522 = vmatpush1.bf16.msra.mxu0 %v2478
        %2523 = vmatprep.subr.bf16.mxu0 0
        %2524 = vmatpush1.bf16.msra.mxu0 %v2479
        %2525 = vmatprep.subr.bf16.mxu0 0
        %2526 = vmatpush1.bf16.msra.mxu0 %v2480
        %2527 = vmatprep.subr.bf16.mxu0 0
        %2528 = vmatpush1.bf16.msra.mxu0 %v2481
        %2529 = vmatprep.subr.bf16.mxu0 0
        %2530 = vmatpush1.bf16.msra.mxu0 %v2482
        %2531 = vmatprep.mubr.bf16.mxu0 %v2363
        %2532 = vmatmul.mubr.bf16.gmra.mrb[0].mxu0 %v2362
        %v2533 = vpop.f32.mrb[0].mxu0
        %v2534 = vadd.f32 0.0, %v2533
        %v2535 = vpop.f32.mrb[0].mxu0
        %v2536 = vpop.f32.mrb[0].mxu0
        %v2537 = vadd.f32 0.0, %v2536
        %v2538 = vpop.f32.mrb[0].mxu0
        %2539 = vmatprep.mubr.bf16.mxu0 %v2365
        %2540 = vmatmul.mubr.bf16.gmra.mrb[0].mxu0 %v2364
        %v2541 = vpop.f32.mrb[0].mxu0
        %v2542 = vadd.f32 0.0, %v2541
        %v2543 = vpop.f32.mrb[0].mxu0
        %v2544 = vpop.f32.mrb[0].mxu0
        %v2545 = vadd.f32 0.0, %v2544
        %v2546 = vpop.f32.mrb[0].mxu0
        %2547 = vmatprep.mubr.bf16.mxu0 %v2367
        %2548 = vmatmul.mubr.bf16.gmra.mrb[0].mxu0 %v2366
        %v2549 = vpop.f32.mrb[0].mxu0
        %v2550 = vadd.f32 0.0, %v2549
        %v2551 = vpop.f32.mrb[0].mxu0
        %v2552 = vpop.f32.mrb[0].mxu0
        %v2553 = vadd.f32 0.0, %v2552
        %v2554 = vpop.f32.mrb[0].mxu0
        %2555 = vmatprep.mubr.bf16.mxu0 %v2369
        %2556 = vmatmul.mubr.bf16.gmra.mrb[0].mxu0 %v2368
        %v2557 = vpop.f32.mrb[0].mxu0
        %v2558 = vadd.f32 0.0, %v2557
        %v2559 = vpop.f32.mrb[0].mxu0
        %v2560 = vpop.f32.mrb[0].mxu0
        %v2561 = vadd.f32 0.0, %v2560
        %v2562 = vpop.f32.mrb[0].mxu0
        %2563 = vdwg.mxu0
        %v2564 = vld [vmem:[#allocation3] sm:$0xff]
        %v2565 = vld [vmem:[#allocation3 + $0x8] sm:$0xff]
        %v2566 = vld [vmem:[#allocation3 + $0x10] sm:$0xff]
        %v2567 = vld [vmem:[#allocation3 + $0x18] sm:$0xff]
        %v2568 = vld [vmem:[#allocation3 + $0x20] sm:$0xff]
        %v2569 = vld [vmem:[#allocation3 + $0x28] sm:$0xff]
        %v2570 = vld [vmem:[#allocation3 + $0x30] sm:$0xff]
        %v2571 = vld [vmem:[#allocation3 + $0x38] sm:$0xff]
        %v2572 = vadd.f32 %v2564, %v2534
        %v2573 = vadd.f32 %v2565, %v2537
        %v2574 = vadd.f32 %v2566, %v2542
        %v2575 = vadd.f32 %v2567, %v2545
        %v2576 = vadd.f32 %v2568, %v2550
        %v2577 = vadd.f32 %v2569, %v2553
        %v2578 = vadd.f32 %v2570, %v2558
        %v2579 = vadd.f32 %v2571, %v2561
        %2580 = vst [vmem:[#allocation3] sm:$0xff] %v2572
        %2581 = vst [vmem:[#allocation3 + $0x8] sm:$0xff] %v2573
        %2582 = vst [vmem:[#allocation3 + $0x10] sm:$0xff] %v2574
        %2583 = vst [vmem:[#allocation3 + $0x18] sm:$0xff] %v2575
        %2584 = vst [vmem:[#allocation3 + $0x20] sm:$0xff] %v2576
        %2585 = vst [vmem:[#allocation3 + $0x28] sm:$0xff] %v2577
        %2586 = vst [vmem:[#allocation3 + $0x30] sm:$0xff] %v2578
        %2587 = vst [vmem:[#allocation3 + $0x38] sm:$0xff] %v2579
        %v2588 = vld [vmem:[%s663 + $0x10] sm:$0xff]
        %v2589 = vld [vmem:[%s663 + $0x18] sm:$0xff]
        %v2590 = vld [vmem:[%s663 + $0x20] sm:$0xff]
        %v2591 = vld [vmem:[%s663 + $0x28] sm:$0xff]
        %v2592 = vld [vmem:[%s663 + $0x30] sm:$0xff]
        %v2593 = vld [vmem:[%s663 + $0x38] sm:$0xff]
        %v2594 = vld [vmem:[%s663 + $0x40] sm:$0xff]
        %v2595 = vld [vmem:[%s663 + $0x48] sm:$0xff]
        %s2596 = scalar_lea.vmem [#allocation4], 896
        %v2597 = vld [vmem:[%s2596] sm:$0xf]
        %v2598 = vld [vmem:[%s2596 + $0x4] sm:$0xf]
        %v2599 = vld [vmem:[%s2596 + $0x8] sm:$0xf]
        %v2600 = vld [vmem:[%s2596 + $0xc] sm:$0xf]
        %v2601 = vld [vmem:[%s2596 + $0x10] sm:$0xf]
        %v2602 = vld [vmem:[%s2596 + $0x14] sm:$0xf]
        %v2603 = vld [vmem:[%s2596 + $0x18] sm:$0xf]
        %v2604 = vld [vmem:[%s2596 + $0x1c] sm:$0xf]
        %v2605 = vld [vmem:[%s2596 + $0x20] sm:$0xf]
        %v2606 = vld [vmem:[%s2596 + $0x24] sm:$0xf]
        %v2607 = vld [vmem:[%s2596 + $0x28] sm:$0xf]
        %v2608 = vld [vmem:[%s2596 + $0x2c] sm:$0xf]
        %v2609 = vld [vmem:[%s2596 + $0x30] sm:$0xf]
        %v2610 = vld [vmem:[%s2596 + $0x34] sm:$0xf]
        %v2611 = vld [vmem:[%s2596 + $0x38] sm:$0xf]
        %v2612 = vld [vmem:[%s2596 + $0x3c] sm:$0xf]
        %v2613 = vld [vmem:[%s2596 + $0x40] sm:$0xf]
        %v2614 = vld [vmem:[%s2596 + $0x44] sm:$0xf]
        %v2615 = vld [vmem:[%s2596 + $0x48] sm:$0xf]
        %v2616 = vld [vmem:[%s2596 + $0x4c] sm:$0xf]
        %v2617 = vld [vmem:[%s2596 + $0x50] sm:$0xf]
        %v2618 = vld [vmem:[%s2596 + $0x54] sm:$0xf]
        %v2619 = vld [vmem:[%s2596 + $0x58] sm:$0xf]
        %v2620 = vld [vmem:[%s2596 + $0x5c] sm:$0xf]
        %v2621 = vld [vmem:[%s2596 + $0x60] sm:$0xf]
        %v2622 = vld [vmem:[%s2596 + $0x64] sm:$0xf]
        %v2623 = vld [vmem:[%s2596 + $0x68] sm:$0xf]
        %v2624 = vld [vmem:[%s2596 + $0x6c] sm:$0xf]
        %v2625 = vld [vmem:[%s2596 + $0x70] sm:$0xf]
        %v2626 = vld [vmem:[%s2596 + $0x74] sm:$0xf]
        %v2627 = vld [vmem:[%s2596 + $0x78] sm:$0xf]
        %v2628 = vld [vmem:[%s2596 + $0x7c] sm:$0xf]
        %v2661 = vunpack.c.l.b16 %v2597
        %v2662 = vunpack.c.l.b16 %v2598
        %v2663 = vunpack.c.l.b16 %v2599
        %v2664 = vunpack.c.l.b16 %v2600
        %v2665 = vunpack.c.l.b16 %v2601
        %v2666 = vunpack.c.l.b16 %v2602
        %v2667 = vunpack.c.l.b16 %v2603
        %v2668 = vunpack.c.l.b16 %v2604
        %v2669 = vunpack.c.l.b16 %v2605
        %v2670 = vunpack.c.l.b16 %v2606
        %v2671 = vunpack.c.l.b16 %v2607
        %v2672 = vunpack.c.l.b16 %v2608
        %v2673 = vunpack.c.l.b16 %v2609
        %v2674 = vunpack.c.l.b16 %v2610
        %v2675 = vunpack.c.l.b16 %v2611
        %v2676 = vunpack.c.l.b16 %v2612
        %v2677 = vunpack.c.l.b16 %v2613
        %v2678 = vunpack.c.l.b16 %v2614
        %v2679 = vunpack.c.l.b16 %v2615
        %v2680 = vunpack.c.l.b16 %v2616
        %v2681 = vunpack.c.l.b16 %v2617
        %v2682 = vunpack.c.l.b16 %v2618
        %v2683 = vunpack.c.l.b16 %v2619
        %v2684 = vunpack.c.l.b16 %v2620
        %v2685 = vunpack.c.l.b16 %v2621
        %v2686 = vunpack.c.l.b16 %v2622
        %v2687 = vunpack.c.l.b16 %v2623
        %v2688 = vunpack.c.l.b16 %v2624
        %v2689 = vunpack.c.l.b16 %v2625
        %v2690 = vunpack.c.l.b16 %v2626
        %v2691 = vunpack.c.l.b16 %v2627
        %v2692 = vunpack.c.l.b16 %v2628
        %v2693 = vpack.c.b16 %v2662, %v2661
        %v2694 = vpack.c.b16 %v2664, %v2663
        %v2695 = vpack.c.b16 %v2666, %v2665
        %v2696 = vpack.c.b16 %v2668, %v2667
        %v2697 = vpack.c.b16 %v2670, %v2669
        %v2698 = vpack.c.b16 %v2672, %v2671
        %v2699 = vpack.c.b16 %v2674, %v2673
        %v2700 = vpack.c.b16 %v2676, %v2675
        %v2701 = vpack.c.b16 %v2678, %v2677
        %v2702 = vpack.c.b16 %v2680, %v2679
        %v2703 = vpack.c.b16 %v2682, %v2681
        %v2704 = vpack.c.b16 %v2684, %v2683
        %v2705 = vpack.c.b16 %v2686, %v2685
        %v2706 = vpack.c.b16 %v2688, %v2687
        %v2707 = vpack.c.b16 %v2690, %v2689
        %v2708 = vpack.c.b16 %v2692, %v2691
        %2725 = vmatprep.subr.bf16.mxu0 0
        %2726 = vmatpush1.bf16.msra.mxu0 %v2693
        %2727 = vmatprep.subr.bf16.mxu0 0
        %2728 = vmatpush1.bf16.msra.mxu0 %v2694
        %2729 = vmatprep.subr.bf16.mxu0 0
        %2730 = vmatpush1.bf16.msra.mxu0 %v2695
        %2731 = vmatprep.subr.bf16.mxu0 0
        %2732 = vmatpush1.bf16.msra.mxu0 %v2696
        %2733 = vmatprep.subr.bf16.mxu0 0
        %2734 = vmatpush1.bf16.msra.mxu0 %v2697
        %2735 = vmatprep.subr.bf16.mxu0 0
        %2736 = vmatpush1.bf16.msra.mxu0 %v2698
        %2737 = vmatprep.subr.bf16.mxu0 0
        %2738 = vmatpush1.bf16.msra.mxu0 %v2699
        %2739 = vmatprep.subr.bf16.mxu0 0
        %2740 = vmatpush1.bf16.msra.mxu0 %v2700
        %2741 = vmatprep.subr.bf16.mxu0 0
        %2742 = vmatpush1.bf16.msra.mxu0 %v2701
        %2743 = vmatprep.subr.bf16.mxu0 0
        %2744 = vmatpush1.bf16.msra.mxu0 %v2702
        %2745 = vmatprep.subr.bf16.mxu0 0
        %2746 = vmatpush1.bf16.msra.mxu0 %v2703
        %2747 = vmatprep.subr.bf16.mxu0 0
        %2748 = vmatpush1.bf16.msra.mxu0 %v2704
        %2749 = vmatprep.subr.bf16.mxu0 0
        %2750 = vmatpush1.bf16.msra.mxu0 %v2705
        %2751 = vmatprep.subr.bf16.mxu0 0
        %2752 = vmatpush1.bf16.msra.mxu0 %v2706
        %2753 = vmatprep.subr.bf16.mxu0 0
        %2754 = vmatpush1.bf16.msra.mxu0 %v2707
        %2755 = vmatprep.subr.bf16.mxu0 0
        %2756 = vmatpush1.bf16.msra.mxu0 %v2708
        %2757 = vmatprep.mubr.bf16.mxu0 %v2589
        %2758 = vmatmul.mubr.bf16.gmra.mrb[0].mxu0 %v2588
        %v2759 = vpop.f32.mrb[0].mxu0
        %v2760 = vadd.f32 0.0, %v2759
        %v2761 = vpop.f32.mrb[0].mxu0
        %v2762 = vpop.f32.mrb[0].mxu0
        %v2763 = vadd.f32 0.0, %v2762
        %v2764 = vpop.f32.mrb[0].mxu0
        %2765 = vmatprep.mubr.bf16.mxu0 %v2591
        %2766 = vmatmul.mubr.bf16.gmra.mrb[0].mxu0 %v2590
        %v2767 = vpop.f32.mrb[0].mxu0
        %v2768 = vadd.f32 0.0, %v2767
        %v2769 = vpop.f32.mrb[0].mxu0
        %v2770 = vpop.f32.mrb[0].mxu0
        %v2771 = vadd.f32 0.0, %v2770
        %v2772 = vpop.f32.mrb[0].mxu0
        %2773 = vmatprep.mubr.bf16.mxu0 %v2593
        %2774 = vmatmul.mubr.bf16.gmra.mrb[0].mxu0 %v2592
        %v2775 = vpop.f32.mrb[0].mxu0
        %v2776 = vadd.f32 0.0, %v2775
        %v2777 = vpop.f32.mrb[0].mxu0
        %v2778 = vpop.f32.mrb[0].mxu0
        %v2779 = vadd.f32 0.0, %v2778
        %v2780 = vpop.f32.mrb[0].mxu0
        %2781 = vmatprep.mubr.bf16.mxu0 %v2595
        %2782 = vmatmul.mubr.bf16.gmra.mrb[0].mxu0 %v2594
        %v2783 = vpop.f32.mrb[0].mxu0
        %v2784 = vadd.f32 0.0, %v2783
        %v2785 = vpop.f32.mrb[0].mxu0
        %v2786 = vpop.f32.mrb[0].mxu0
        %v2787 = vadd.f32 0.0, %v2786
        %v2788 = vpop.f32.mrb[0].mxu0
        %2789 = vdwg.mxu0
        %v2790 = vld [vmem:[#allocation3] sm:$0xff]
        %v2791 = vld [vmem:[#allocation3 + $0x8] sm:$0xff]
        %v2792 = vld [vmem:[#allocation3 + $0x10] sm:$0xff]
        %v2793 = vld [vmem:[#allocation3 + $0x18] sm:$0xff]
        %v2794 = vld [vmem:[#allocation3 + $0x20] sm:$0xff]
        %v2795 = vld [vmem:[#allocation3 + $0x28] sm:$0xff]
        %v2796 = vld [vmem:[#allocation3 + $0x30] sm:$0xff]
        %v2797 = vld [vmem:[#allocation3 + $0x38] sm:$0xff]
        %v2798 = vadd.f32 %v2790, %v2760
        %v2799 = vadd.f32 %v2791, %v2763
        %v2800 = vadd.f32 %v2792, %v2768
        %v2801 = vadd.f32 %v2793, %v2771
        %v2802 = vadd.f32 %v2794, %v2776
        %v2803 = vadd.f32 %v2795, %v2779
        %v2804 = vadd.f32 %v2796, %v2784
        %v2805 = vadd.f32 %v2797, %v2787
        %2806 = vst [vmem:[#allocation3] sm:$0xff] %v2798
        %2807 = vst [vmem:[#allocation3 + $0x8] sm:$0xff] %v2799
        %2808 = vst [vmem:[#allocation3 + $0x10] sm:$0xff] %v2800
        %2809 = vst [vmem:[#allocation3 + $0x18] sm:$0xff] %v2801
        %2810 = vst [vmem:[#allocation3 + $0x20] sm:$0xff] %v2802
        %2811 = vst [vmem:[#allocation3 + $0x28] sm:$0xff] %v2803
        %2812 = vst [vmem:[#allocation3 + $0x30] sm:$0xff] %v2804
        %2813 = vst [vmem:[#allocation3 + $0x38] sm:$0xff] %v2805
        %v2814 = vld [vmem:[%s897 + $0x10] sm:$0xff]
        %v2815 = vld [vmem:[%s897 + $0x18] sm:$0xff]
        %v2816 = vld [vmem:[%s897 + $0x20] sm:$0xff]
        %v2817 = vld [vmem:[%s897 + $0x28] sm:$0xff]
        %v2818 = vld [vmem:[%s897 + $0x30] sm:$0xff]
        %v2819 = vld [vmem:[%s897 + $0x38] sm:$0xff]
        %v2820 = vld [vmem:[%s897 + $0x40] sm:$0xff]
        %v2821 = vld [vmem:[%s897 + $0x48] sm:$0xff]
        %s2822 = scalar_lea.vmem [#allocation4], 1024
        %v2823 = vld [vmem:[%s2822] sm:$0xf]
        %v2824 = vld [vmem:[%s2822 + $0x4] sm:$0xf]
        %v2825 = vld [vmem:[%s2822 + $0x8] sm:$0xf]
        %v2826 = vld [vmem:[%s2822 + $0xc] sm:$0xf]
        %v2827 = vld [vmem:[%s2822 + $0x10] sm:$0xf]
        %v2828 = vld [vmem:[%s2822 + $0x14] sm:$0xf]
        %v2829 = vld [vmem:[%s2822 + $0x18] sm:$0xf]
        %v2830 = vld [vmem:[%s2822 + $0x1c] sm:$0xf]
        %v2831 = vld [vmem:[%s2822 + $0x20] sm:$0xf]
        %v2832 = vld [vmem:[%s2822 + $0x24] sm:$0xf]
        %v2833 = vld [vmem:[%s2822 + $0x28] sm:$0xf]
        %v2834 = vld [vmem:[%s2822 + $0x2c] sm:$0xf]
        %v2835 = vld [vmem:[%s2822 + $0x30] sm:$0xf]
        %v2836 = vld [vmem:[%s2822 + $0x34] sm:$0xf]
        %v2837 = vld [vmem:[%s2822 + $0x38] sm:$0xf]
        %v2838 = vld [vmem:[%s2822 + $0x3c] sm:$0xf]
        %v2839 = vld [vmem:[%s2822 + $0x40] sm:$0xf]
        %v2840 = vld [vmem:[%s2822 + $0x44] sm:$0xf]
        %v2841 = vld [vmem:[%s2822 + $0x48] sm:$0xf]
        %v2842 = vld [vmem:[%s2822 + $0x4c] sm:$0xf]
        %v2843 = vld [vmem:[%s2822 + $0x50] sm:$0xf]
        %v2844 = vld [vmem:[%s2822 + $0x54] sm:$0xf]
        %v2845 = vld [vmem:[%s2822 + $0x58] sm:$0xf]
        %v2846 = vld [vmem:[%s2822 + $0x5c] sm:$0xf]
        %v2847 = vld [vmem:[%s2822 + $0x60] sm:$0xf]
        %v2848 = vld [vmem:[%s2822 + $0x64] sm:$0xf]
        %v2849 = vld [vmem:[%s2822 + $0x68] sm:$0xf]
        %v2850 = vld [vmem:[%s2822 + $0x6c] sm:$0xf]
        %v2851 = vld [vmem:[%s2822 + $0x70] sm:$0xf]
        %v2852 = vld [vmem:[%s2822 + $0x74] sm:$0xf]
        %v2853 = vld [vmem:[%s2822 + $0x78] sm:$0xf]
        %v2854 = vld [vmem:[%s2822 + $0x7c] sm:$0xf]
        %v2887 = vunpack.c.l.b16 %v2823
        %v2888 = vunpack.c.l.b16 %v2824
        %v2889 = vunpack.c.l.b16 %v2825
        %v2890 = vunpack.c.l.b16 %v2826
        %v2891 = vunpack.c.l.b16 %v2827
        %v2892 = vunpack.c.l.b16 %v2828
        %v2893 = vunpack.c.l.b16 %v2829
        %v2894 = vunpack.c.l.b16 %v2830
        %v2895 = vunpack.c.l.b16 %v2831
        %v2896 = vunpack.c.l.b16 %v2832
        %v2897 = vunpack.c.l.b16 %v2833
        %v2898 = vunpack.c.l.b16 %v2834
        %v2899 = vunpack.c.l.b16 %v2835
        %v2900 = vunpack.c.l.b16 %v2836
        %v2901 = vunpack.c.l.b16 %v2837
        %v2902 = vunpack.c.l.b16 %v2838
        %v2903 = vunpack.c.l.b16 %v2839
        %v2904 = vunpack.c.l.b16 %v2840
        %v2905 = vunpack.c.l.b16 %v2841
        %v2906 = vunpack.c.l.b16 %v2842
        %v2907 = vunpack.c.l.b16 %v2843
        %v2908 = vunpack.c.l.b16 %v2844
        %v2909 = vunpack.c.l.b16 %v2845
        %v2910 = vunpack.c.l.b16 %v2846
        %v2911 = vunpack.c.l.b16 %v2847
        %v2912 = vunpack.c.l.b16 %v2848
        %v2913 = vunpack.c.l.b16 %v2849
        %v2914 = vunpack.c.l.b16 %v2850
        %v2915 = vunpack.c.l.b16 %v2851
        %v2916 = vunpack.c.l.b16 %v2852
        %v2917 = vunpack.c.l.b16 %v2853
        %v2918 = vunpack.c.l.b16 %v2854
        %v2919 = vpack.c.b16 %v2888, %v2887
        %v2920 = vpack.c.b16 %v2890, %v2889
        %v2921 = vpack.c.b16 %v2892, %v2891
        %v2922 = vpack.c.b16 %v2894, %v2893
        %v2923 = vpack.c.b16 %v2896, %v2895
        %v2924 = vpack.c.b16 %v2898, %v2897
        %v2925 = vpack.c.b16 %v2900, %v2899
        %v2926 = vpack.c.b16 %v2902, %v2901
        %v2927 = vpack.c.b16 %v2904, %v2903
        %v2928 = vpack.c.b16 %v2906, %v2905
        %v2929 = vpack.c.b16 %v2908, %v2907
        %v2930 = vpack.c.b16 %v2910, %v2909
        %v2931 = vpack.c.b16 %v2912, %v2911
        %v2932 = vpack.c.b16 %v2914, %v2913
        %v2933 = vpack.c.b16 %v2916, %v2915
        %v2934 = vpack.c.b16 %v2918, %v2917
        %2951 = vmatprep.subr.bf16.mxu0 0
        %2952 = vmatpush1.bf16.msra.mxu0 %v2919
        %2953 = vmatprep.subr.bf16.mxu0 0
        %2954 = vmatpush1.bf16.msra.mxu0 %v2920
        %2955 = vmatprep.subr.bf16.mxu0 0
        %2956 = vmatpush1.bf16.msra.mxu0 %v2921
        %2957 = vmatprep.subr.bf16.mxu0 0
        %2958 = vmatpush1.bf16.msra.mxu0 %v2922
        %2959 = vmatprep.subr.bf16.mxu0 0
        %2960 = vmatpush1.bf16.msra.mxu0 %v2923
        %2961 = vmatprep.subr.bf16.mxu0 0
        %2962 = vmatpush1.bf16.msra.mxu0 %v2924
        %2963 = vmatprep.subr.bf16.mxu0 0
        %2964 = vmatpush1.bf16.msra.mxu0 %v2925
        %2965 = vmatprep.subr.bf16.mxu0 0
        %2966 = vmatpush1.bf16.msra.mxu0 %v2926
        %2967 = vmatprep.subr.bf16.mxu0 0
        %2968 = vmatpush1.bf16.msra.mxu0 %v2927
        %2969 = vmatprep.subr.bf16.mxu0 0
        %2970 = vmatpush1.bf16.msra.mxu0 %v2928
        %2971 = vmatprep.subr.bf16.mxu0 0
        %2972 = vmatpush1.bf16.msra.mxu0 %v2929
        %2973 = vmatprep.subr.bf16.mxu0 0
        %2974 = vmatpush1.bf16.msra.mxu0 %v2930
        %2975 = vmatprep.subr.bf16.mxu0 0
        %2976 = vmatpush1.bf16.msra.mxu0 %v2931
        %2977 = vmatprep.subr.bf16.mxu0 0
        %2978 = vmatpush1.bf16.msra.mxu0 %v2932
        %2979 = vmatprep.subr.bf16.mxu0 0
        %2980 = vmatpush1.bf16.msra.mxu0 %v2933
        %2981 = vmatprep.subr.bf16.mxu0 0
        %2982 = vmatpush1.bf16.msra.mxu0 %v2934
        %2983 = vmatprep.mubr.bf16.mxu0 %v2815
        %2984 = vmatmul.mubr.bf16.gmra.mrb[0].mxu0 %v2814
        %v2985 = vpop.f32.mrb[0].mxu0
        %v2986 = vadd.f32 0.0, %v2985
        %v2987 = vpop.f32.mrb[0].mxu0
        %v2988 = vpop.f32.mrb[0].mxu0
        %v2989 = vadd.f32 0.0, %v2988
        %v2990 = vpop.f32.mrb[0].mxu0
        %2991 = vmatprep.mubr.bf16.mxu0 %v2817
        %2992 = vmatmul.mubr.bf16.gmra.mrb[0].mxu0 %v2816
        %v2993 = vpop.f32.mrb[0].mxu0
        %v2994 = vadd.f32 0.0, %v2993
        %v2995 = vpop.f32.mrb[0].mxu0
        %v2996 = vpop.f32.mrb[0].mxu0
        %v2997 = vadd.f32 0.0, %v2996
        %v2998 = vpop.f32.mrb[0].mxu0
        %2999 = vmatprep.mubr.bf16.mxu0 %v2819
        %3000 = vmatmul.mubr.bf16.gmra.mrb[0].mxu0 %v2818
        %v3001 = vpop.f32.mrb[0].mxu0
        %v3002 = vadd.f32 0.0, %v3001
        %v3003 = vpop.f32.mrb[0].mxu0
        %v3004 = vpop.f32.mrb[0].mxu0
        %v3005 = vadd.f32 0.0, %v3004
        %v3006 = vpop.f32.mrb[0].mxu0
        %3007 = vmatprep.mubr.bf16.mxu0 %v2821
        %3008 = vmatmul.mubr.bf16.gmra.mrb[0].mxu0 %v2820
        %v3009 = vpop.f32.mrb[0].mxu0
        %v3010 = vadd.f32 0.0, %v3009
        %v3011 = vpop.f32.mrb[0].mxu0
        %v3012 = vpop.f32.mrb[0].mxu0
        %v3013 = vadd.f32 0.0, %v3012
        %v3014 = vpop.f32.mrb[0].mxu0
        %3015 = vdwg.mxu0
        %v3016 = vld [vmem:[#allocation3] sm:$0xff]
        %v3017 = vld [vmem:[#allocation3 + $0x8] sm:$0xff]
        %v3018 = vld [vmem:[#allocation3 + $0x10] sm:$0xff]
        %v3019 = vld [vmem:[#allocation3 + $0x18] sm:$0xff]
        %v3020 = vld [vmem:[#allocation3 + $0x20] sm:$0xff]
        %v3021 = vld [vmem:[#allocation3 + $0x28] sm:$0xff]
        %v3022 = vld [vmem:[#allocation3 + $0x30] sm:$0xff]
        %v3023 = vld [vmem:[#allocation3 + $0x38] sm:$0xff]
        %v3024 = vadd.f32 %v3016, %v2986
        %v3025 = vadd.f32 %v3017, %v2989
        %v3026 = vadd.f32 %v3018, %v2994
        %v3027 = vadd.f32 %v3019, %v2997
        %v3028 = vadd.f32 %v3020, %v3002
        %v3029 = vadd.f32 %v3021, %v3005
        %v3030 = vadd.f32 %v3022, %v3010
        %v3031 = vadd.f32 %v3023, %v3013
        %3032 = vst [vmem:[#allocation3] sm:$0xff] %v3024
        %3033 = vst [vmem:[#allocation3 + $0x8] sm:$0xff] %v3025
        %3034 = vst [vmem:[#allocation3 + $0x10] sm:$0xff] %v3026
        %3035 = vst [vmem:[#allocation3 + $0x18] sm:$0xff] %v3027
        %3036 = vst [vmem:[#allocation3 + $0x20] sm:$0xff] %v3028
        %3037 = vst [vmem:[#allocation3 + $0x28] sm:$0xff] %v3029
        %3038 = vst [vmem:[#allocation3 + $0x30] sm:$0xff] %v3030
        %3039 = vst [vmem:[#allocation3 + $0x38] sm:$0xff] %v3031
        %v3040 = vld [vmem:[#allocation3] sm:$0xff]
        %v3041 = vld [vmem:[#allocation3 + $0x8] sm:$0xff]
        %v3042 = vld [vmem:[#allocation3 + $0x10] sm:$0xff]
        %v3043 = vld [vmem:[#allocation3 + $0x18] sm:$0xff]
        %v3044 = vld [vmem:[#allocation3 + $0x20] sm:$0xff]
        %v3045 = vld [vmem:[#allocation3 + $0x28] sm:$0xff]
        %v3046 = vld [vmem:[#allocation3 + $0x30] sm:$0xff]
        %v3047 = vld [vmem:[#allocation3 + $0x38] sm:$0xff]
        %3048 = vst [vmem:[%s209] sm:$0xff] %v3040
        %3049 = vst [vmem:[%s209 + $0x8] sm:$0xff] %v3041
        %3050 = vst [vmem:[%s209 + $0x10] sm:$0xff] %v3042
        %3051 = vst [vmem:[%s209 + $0x18] sm:$0xff] %v3043
        %3052 = vst [vmem:[%s209 + $0x20] sm:$0xff] %v3044
        %3053 = vst [vmem:[%s209 + $0x28] sm:$0xff] %v3045
        %3054 = vst [vmem:[%s209 + $0x30] sm:$0xff] %v3046
        %3055 = vst [vmem:[%s209 + $0x38] sm:$0xff] %v3047
        %v3056 = vadd.f32 %v3040, %v3041
        %v3057 = vadd.f32 %v3056, %v3042
        %v3058 = vadd.f32 %v3057, %v3043
        %v3059 = vadd.f32 %v3058, %v3044
        %v3060 = vadd.f32 %v3059, %v3045
        %v3061 = vadd.f32 %v3060, %v3046
        %v3062 = vadd.f32 %v3061, %v3047
        %v3063 = vrot.slane %v3062, 4
        %v3064 = vadd.f32 %v3062, %v3063
        %v3065 = vrot.slane %v3064, 2
        %v3066 = vadd.f32 %v3064, %v3065
        %v3067 = vrot.slane %v3066, 1
        %v3068 = vadd.f32 %v3066, %v3067
        %v3069 = vadd.f32 %v3068, 0.0
        %v3070 = vmul.f32 %v3040, %v3040
        %v3071 = vmul.f32 %v3041, %v3041
        %v3072 = vmul.f32 %v3042, %v3042
        %v3073 = vmul.f32 %v3043, %v3043
        %v3074 = vmul.f32 %v3044, %v3044
        %v3075 = vmul.f32 %v3045, %v3045
        %v3076 = vmul.f32 %v3046, %v3046
        %v3077 = vmul.f32 %v3047, %v3047
        %v3078 = vadd.f32 %v3070, %v3071
        %v3079 = vadd.f32 %v3078, %v3072
        %v3080 = vadd.f32 %v3079, %v3073
        %v3081 = vadd.f32 %v3080, %v3074
        %v3082 = vadd.f32 %v3081, %v3075
        %v3083 = vadd.f32 %v3082, %v3076
        %v3084 = vadd.f32 %v3083, %v3077
        %v3085 = vrot.slane %v3084, 4
        %v3086 = vadd.f32 %v3084, %v3085
        %v3087 = vrot.slane %v3086, 2
        %v3088 = vadd.f32 %v3086, %v3087
        %v3089 = vrot.slane %v3088, 1
        %v3090 = vadd.f32 %v3088, %v3089
        %v3091 = vadd.f32 %v3090, 0.0
        %v3092 = vld [vmem:[%s663] sm:$0xff]
        %v3093 = vld [vmem:[%s663 + $0x8] sm:$0xff]
        %v3094 = vld [vmem:[%s663 + $0x10] sm:$0xff]
        %v3095 = vld [vmem:[%s663 + $0x18] sm:$0xff]
        %v3096 = vld [vmem:[%s663 + $0x20] sm:$0xff]
        %v3097 = vld [vmem:[%s663 + $0x28] sm:$0xff]
        %v3098 = vld [vmem:[%s663 + $0x30] sm:$0xff]
        %v3099 = vld [vmem:[%s663 + $0x38] sm:$0xff]
        %s3100 = scalar_lea.vmem [#allocation4], 1152
        %v3101 = vld [vmem:[%s3100] sm:$0xf]
        %v3102 = vld [vmem:[%s3100 + $0x4] sm:$0xf]
        %v3103 = vld [vmem:[%s3100 + $0x8] sm:$0xf]
        %v3104 = vld [vmem:[%s3100 + $0xc] sm:$0xf]
        %v3105 = vld [vmem:[%s3100 + $0x10] sm:$0xf]
        %v3106 = vld [vmem:[%s3100 + $0x14] sm:$0xf]
        %v3107 = vld [vmem:[%s3100 + $0x18] sm:$0xf]
        %v3108 = vld [vmem:[%s3100 + $0x1c] sm:$0xf]
        %v3109 = vld [vmem:[%s3100 + $0x20] sm:$0xf]
        %v3110 = vld [vmem:[%s3100 + $0x24] sm:$0xf]
        %v3111 = vld [vmem:[%s3100 + $0x28] sm:$0xf]
        %v3112 = vld [vmem:[%s3100 + $0x2c] sm:$0xf]
        %v3113 = vld [vmem:[%s3100 + $0x30] sm:$0xf]
        %v3114 = vld [vmem:[%s3100 + $0x34] sm:$0xf]
        %v3115 = vld [vmem:[%s3100 + $0x38] sm:$0xf]
        %v3116 = vld [vmem:[%s3100 + $0x3c] sm:$0xf]
        %v3117 = vld [vmem:[%s3100 + $0x40] sm:$0xf]
        %v3118 = vld [vmem:[%s3100 + $0x44] sm:$0xf]
        %v3119 = vld [vmem:[%s3100 + $0x48] sm:$0xf]
        %v3120 = vld [vmem:[%s3100 + $0x4c] sm:$0xf]
        %v3121 = vld [vmem:[%s3100 + $0x50] sm:$0xf]
        %v3122 = vld [vmem:[%s3100 + $0x54] sm:$0xf]
        %v3123 = vld [vmem:[%s3100 + $0x58] sm:$0xf]
        %v3124 = vld [vmem:[%s3100 + $0x5c] sm:$0xf]
        %v3125 = vld [vmem:[%s3100 + $0x60] sm:$0xf]
        %v3126 = vld [vmem:[%s3100 + $0x64] sm:$0xf]
        %v3127 = vld [vmem:[%s3100 + $0x68] sm:$0xf]
        %v3128 = vld [vmem:[%s3100 + $0x6c] sm:$0xf]
        %v3129 = vld [vmem:[%s3100 + $0x70] sm:$0xf]
        %v3130 = vld [vmem:[%s3100 + $0x74] sm:$0xf]
        %v3131 = vld [vmem:[%s3100 + $0x78] sm:$0xf]
        %v3132 = vld [vmem:[%s3100 + $0x7c] sm:$0xf]
        %v3165 = vunpack.c.l.b16 %v3101
        %v3166 = vunpack.c.l.b16 %v3102
        %v3167 = vunpack.c.l.b16 %v3103
        %v3168 = vunpack.c.l.b16 %v3104
        %v3169 = vunpack.c.l.b16 %v3105
        %v3170 = vunpack.c.l.b16 %v3106
        %v3171 = vunpack.c.l.b16 %v3107
        %v3172 = vunpack.c.l.b16 %v3108
        %v3173 = vunpack.c.l.b16 %v3109
        %v3174 = vunpack.c.l.b16 %v3110
        %v3175 = vunpack.c.l.b16 %v3111
        %v3176 = vunpack.c.l.b16 %v3112
        %v3177 = vunpack.c.l.b16 %v3113
        %v3178 = vunpack.c.l.b16 %v3114
        %v3179 = vunpack.c.l.b16 %v3115
        %v3180 = vunpack.c.l.b16 %v3116
        %v3181 = vunpack.c.l.b16 %v3117
        %v3182 = vunpack.c.l.b16 %v3118
        %v3183 = vunpack.c.l.b16 %v3119
        %v3184 = vunpack.c.l.b16 %v3120
        %v3185 = vunpack.c.l.b16 %v3121
        %v3186 = vunpack.c.l.b16 %v3122
        %v3187 = vunpack.c.l.b16 %v3123
        %v3188 = vunpack.c.l.b16 %v3124
        %v3189 = vunpack.c.l.b16 %v3125
        %v3190 = vunpack.c.l.b16 %v3126
        %v3191 = vunpack.c.l.b16 %v3127
        %v3192 = vunpack.c.l.b16 %v3128
        %v3193 = vunpack.c.l.b16 %v3129
        %v3194 = vunpack.c.l.b16 %v3130
        %v3195 = vunpack.c.l.b16 %v3131
        %v3196 = vunpack.c.l.b16 %v3132
        %v3197 = vpack.c.b16 %v3166, %v3165
        %v3198 = vpack.c.b16 %v3168, %v3167
        %v3199 = vpack.c.b16 %v3170, %v3169
        %v3200 = vpack.c.b16 %v3172, %v3171
        %v3201 = vpack.c.b16 %v3174, %v3173
        %v3202 = vpack.c.b16 %v3176, %v3175
        %v3203 = vpack.c.b16 %v3178, %v3177
        %v3204 = vpack.c.b16 %v3180, %v3179
        %v3205 = vpack.c.b16 %v3182, %v3181
        %v3206 = vpack.c.b16 %v3184, %v3183
        %v3207 = vpack.c.b16 %v3186, %v3185
        %v3208 = vpack.c.b16 %v3188, %v3187
        %v3209 = vpack.c.b16 %v3190, %v3189
        %v3210 = vpack.c.b16 %v3192, %v3191
        %v3211 = vpack.c.b16 %v3194, %v3193
        %v3212 = vpack.c.b16 %v3196, %v3195
        %3229 = vmatprep.subr.bf16.mxu0 0
        %3230 = vmatpush1.bf16.msra.mxu0 %v3197
        %3231 = vmatprep.subr.bf16.mxu0 0
        %3232 = vmatpush1.bf16.msra.mxu0 %v3198
        %3233 = vmatprep.subr.bf16.mxu0 0
        %3234 = vmatpush1.bf16.msra.mxu0 %v3199
        %3235 = vmatprep.subr.bf16.mxu0 0
        %3236 = vmatpush1.bf16.msra.mxu0 %v3200
        %3237 = vmatprep.subr.bf16.mxu0 0
        %3238 = vmatpush1.bf16.msra.mxu0 %v3201
        %3239 = vmatprep.subr.bf16.mxu0 0
        %3240 = vmatpush1.bf16.msra.mxu0 %v3202
        %3241 = vmatprep.subr.bf16.mxu0 0
        %3242 = vmatpush1.bf16.msra.mxu0 %v3203
        %3243 = vmatprep.subr.bf16.mxu0 0
        %3244 = vmatpush1.bf16.msra.mxu0 %v3204
        %3245 = vmatprep.subr.bf16.mxu0 0
        %3246 = vmatpush1.bf16.msra.mxu0 %v3205
        %3247 = vmatprep.subr.bf16.mxu0 0
        %3248 = vmatpush1.bf16.msra.mxu0 %v3206
        %3249 = vmatprep.subr.bf16.mxu0 0
        %3250 = vmatpush1.bf16.msra.mxu0 %v3207
        %3251 = vmatprep.subr.bf16.mxu0 0
        %3252 = vmatpush1.bf16.msra.mxu0 %v3208
        %3253 = vmatprep.subr.bf16.mxu0 0
        %3254 = vmatpush1.bf16.msra.mxu0 %v3209
        %3255 = vmatprep.subr.bf16.mxu0 0
        %3256 = vmatpush1.bf16.msra.mxu0 %v3210
        %3257 = vmatprep.subr.bf16.mxu0 0
        %3258 = vmatpush1.bf16.msra.mxu0 %v3211
        %3259 = vmatprep.subr.bf16.mxu0 0
        %3260 = vmatpush1.bf16.msra.mxu0 %v3212
        %3261 = vmatprep.mubr.bf16.mxu0 %v3093
        %3262 = vmatmul.mubr.bf16.gmra.mrb[0].mxu0 %v3092
        %v3263 = vpop.f32.mrb[0].mxu0
        %v3264 = vadd.f32 0.0, %v3263
        %v3265 = vpop.f32.mrb[0].mxu0
        %v3266 = vpop.f32.mrb[0].mxu0
        %v3267 = vadd.f32 0.0, %v3266
        %v3268 = vpop.f32.mrb[0].mxu0
        %3269 = vmatprep.mubr.bf16.mxu0 %v3095
        %3270 = vmatmul.mubr.bf16.gmra.mrb[0].mxu0 %v3094
        %v3271 = vpop.f32.mrb[0].mxu0
        %v3272 = vadd.f32 0.0, %v3271
        %v3273 = vpop.f32.mrb[0].mxu0
        %v3274 = vpop.f32.mrb[0].mxu0
        %v3275 = vadd.f32 0.0, %v3274
        %v3276 = vpop.f32.mrb[0].mxu0
        %3277 = vmatprep.mubr.bf16.mxu0 %v3097
        %3278 = vmatmul.mubr.bf16.gmra.mrb[0].mxu0 %v3096
        %v3279 = vpop.f32.mrb[0].mxu0
        %v3280 = vadd.f32 0.0, %v3279
        %v3281 = vpop.f32.mrb[0].mxu0
        %v3282 = vpop.f32.mrb[0].mxu0
        %v3283 = vadd.f32 0.0, %v3282
        %v3284 = vpop.f32.mrb[0].mxu0
        %3285 = vmatprep.mubr.bf16.mxu0 %v3099
        %3286 = vmatmul.mubr.bf16.gmra.mrb[0].mxu0 %v3098
        %v3287 = vpop.f32.mrb[0].mxu0
        %v3288 = vadd.f32 0.0, %v3287
        %v3289 = vpop.f32.mrb[0].mxu0
        %v3290 = vpop.f32.mrb[0].mxu0
        %v3291 = vadd.f32 0.0, %v3290
        %v3292 = vpop.f32.mrb[0].mxu0
        %3293 = vdwg.mxu0
        %3294 = vst [vmem:[#allocation3] sm:$0xff] %v3264
        %3295 = vst [vmem:[#allocation3 + $0x8] sm:$0xff] %v3267
        %3296 = vst [vmem:[#allocation3 + $0x10] sm:$0xff] %v3272
        %3297 = vst [vmem:[#allocation3 + $0x18] sm:$0xff] %v3275
        %3298 = vst [vmem:[#allocation3 + $0x20] sm:$0xff] %v3280
        %3299 = vst [vmem:[#allocation3 + $0x28] sm:$0xff] %v3283
        %3300 = vst [vmem:[#allocation3 + $0x30] sm:$0xff] %v3288
        %3301 = vst [vmem:[#allocation3 + $0x38] sm:$0xff] %v3291
        %v3302 = vld [vmem:[%s897] sm:$0xff]
        %v3303 = vld [vmem:[%s897 + $0x8] sm:$0xff]
        %v3304 = vld [vmem:[%s897 + $0x10] sm:$0xff]
        %v3305 = vld [vmem:[%s897 + $0x18] sm:$0xff]
        %v3306 = vld [vmem:[%s897 + $0x20] sm:$0xff]
        %v3307 = vld [vmem:[%s897 + $0x28] sm:$0xff]
        %v3308 = vld [vmem:[%s897 + $0x30] sm:$0xff]
        %v3309 = vld [vmem:[%s897 + $0x38] sm:$0xff]
        %s3310 = scalar_lea.vmem [#allocation4], 1280
        %v3311 = vld [vmem:[%s3310] sm:$0xf]
        %v3312 = vld [vmem:[%s3310 + $0x4] sm:$0xf]
        %v3313 = vld [vmem:[%s3310 + $0x8] sm:$0xf]
        %v3314 = vld [vmem:[%s3310 + $0xc] sm:$0xf]
        %v3315 = vld [vmem:[%s3310 + $0x10] sm:$0xf]
        %v3316 = vld [vmem:[%s3310 + $0x14] sm:$0xf]
        %v3317 = vld [vmem:[%s3310 + $0x18] sm:$0xf]
        %v3318 = vld [vmem:[%s3310 + $0x1c] sm:$0xf]
        %v3319 = vld [vmem:[%s3310 + $0x20] sm:$0xf]
        %v3320 = vld [vmem:[%s3310 + $0x24] sm:$0xf]
        %v3321 = vld [vmem:[%s3310 + $0x28] sm:$0xf]
        %v3322 = vld [vmem:[%s3310 + $0x2c] sm:$0xf]
        %v3323 = vld [vmem:[%s3310 + $0x30] sm:$0xf]
        %v3324 = vld [vmem:[%s3310 + $0x34] sm:$0xf]
        %v3325 = vld [vmem:[%s3310 + $0x38] sm:$0xf]
        %v3326 = vld [vmem:[%s3310 + $0x3c] sm:$0xf]
        %v3327 = vld [vmem:[%s3310 + $0x40] sm:$0xf]
        %v3328 = vld [vmem:[%s3310 + $0x44] sm:$0xf]
        %v3329 = vld [vmem:[%s3310 + $0x48] sm:$0xf]
        %v3330 = vld [vmem:[%s3310 + $0x4c] sm:$0xf]
        %v3331 = vld [vmem:[%s3310 + $0x50] sm:$0xf]
        %v3332 = vld [vmem:[%s3310 + $0x54] sm:$0xf]
        %v3333 = vld [vmem:[%s3310 + $0x58] sm:$0xf]
        %v3334 = vld [vmem:[%s3310 + $0x5c] sm:$0xf]
        %v3335 = vld [vmem:[%s3310 + $0x60] sm:$0xf]
        %v3336 = vld [vmem:[%s3310 + $0x64] sm:$0xf]
        %v3337 = vld [vmem:[%s3310 + $0x68] sm:$0xf]
        %v3338 = vld [vmem:[%s3310 + $0x6c] sm:$0xf]
        %v3339 = vld [vmem:[%s3310 + $0x70] sm:$0xf]
        %v3340 = vld [vmem:[%s3310 + $0x74] sm:$0xf]
        %v3341 = vld [vmem:[%s3310 + $0x78] sm:$0xf]
        %v3342 = vld [vmem:[%s3310 + $0x7c] sm:$0xf]
        %v3375 = vunpack.c.l.b16 %v3311
        %v3376 = vunpack.c.l.b16 %v3312
        %v3377 = vunpack.c.l.b16 %v3313
        %v3378 = vunpack.c.l.b16 %v3314
        %v3379 = vunpack.c.l.b16 %v3315
        %v3380 = vunpack.c.l.b16 %v3316
        %v3381 = vunpack.c.l.b16 %v3317
        %v3382 = vunpack.c.l.b16 %v3318
        %v3383 = vunpack.c.l.b16 %v3319
        %v3384 = vunpack.c.l.b16 %v3320
        %v3385 = vunpack.c.l.b16 %v3321
        %v3386 = vunpack.c.l.b16 %v3322
        %v3387 = vunpack.c.l.b16 %v3323
        %v3388 = vunpack.c.l.b16 %v3324
        %v3389 = vunpack.c.l.b16 %v3325
        %v3390 = vunpack.c.l.b16 %v3326
        %v3391 = vunpack.c.l.b16 %v3327
        %v3392 = vunpack.c.l.b16 %v3328
        %v3393 = vunpack.c.l.b16 %v3329
        %v3394 = vunpack.c.l.b16 %v3330
        %v3395 = vunpack.c.l.b16 %v3331
        %v3396 = vunpack.c.l.b16 %v3332
        %v3397 = vunpack.c.l.b16 %v3333
        %v3398 = vunpack.c.l.b16 %v3334
        %v3399 = vunpack.c.l.b16 %v3335
        %v3400 = vunpack.c.l.b16 %v3336
        %v3401 = vunpack.c.l.b16 %v3337
        %v3402 = vunpack.c.l.b16 %v3338
        %v3403 = vunpack.c.l.b16 %v3339
        %v3404 = vunpack.c.l.b16 %v3340
        %v3405 = vunpack.c.l.b16 %v3341
        %v3406 = vunpack.c.l.b16 %v3342
        %v3407 = vpack.c.b16 %v3376, %v3375
        %v3408 = vpack.c.b16 %v3378, %v3377
        %v3409 = vpack.c.b16 %v3380, %v3379
        %v3410 = vpack.c.b16 %v3382, %v3381
        %v3411 = vpack.c.b16 %v3384, %v3383
        %v3412 = vpack.c.b16 %v3386, %v3385
        %v3413 = vpack.c.b16 %v3388, %v3387
        %v3414 = vpack.c.b16 %v3390, %v3389
        %v3415 = vpack.c.b16 %v3392, %v3391
        %v3416 = vpack.c.b16 %v3394, %v3393
        %v3417 = vpack.c.b16 %v3396, %v3395
        %v3418 = vpack.c.b16 %v3398, %v3397
        %v3419 = vpack.c.b16 %v3400, %v3399
        %v3420 = vpack.c.b16 %v3402, %v3401
        %v3421 = vpack.c.b16 %v3404, %v3403
        %v3422 = vpack.c.b16 %v3406, %v3405
        %3439 = vmatprep.subr.bf16.mxu0 0
        %3440 = vmatpush1.bf16.msra.mxu0 %v3407
        %3441 = vmatprep.subr.bf16.mxu0 0
        %3442 = vmatpush1.bf16.msra.mxu0 %v3408
        %3443 = vmatprep.subr.bf16.mxu0 0
        %3444 = vmatpush1.bf16.msra.mxu0 %v3409
        %3445 = vmatprep.subr.bf16.mxu0 0
        %3446 = vmatpush1.bf16.msra.mxu0 %v3410
        %3447 = vmatprep.subr.bf16.mxu0 0
        %3448 = vmatpush1.bf16.msra.mxu0 %v3411
        %3449 = vmatprep.subr.bf16.mxu0 0
        %3450 = vmatpush1.bf16.msra.mxu0 %v3412
        %3451 = vmatprep.subr.bf16.mxu0 0
        %3452 = vmatpush1.bf16.msra.mxu0 %v3413
        %3453 = vmatprep.subr.bf16.mxu0 0
        %3454 = vmatpush1.bf16.msra.mxu0 %v3414
        %3455 = vmatprep.subr.bf16.mxu0 0
        %3456 = vmatpush1.bf16.msra.mxu0 %v3415
        %3457 = vmatprep.subr.bf16.mxu0 0
        %3458 = vmatpush1.bf16.msra.mxu0 %v3416
        %3459 = vmatprep.subr.bf16.mxu0 0
        %3460 = vmatpush1.bf16.msra.mxu0 %v3417
        %3461 = vmatprep.subr.bf16.mxu0 0
        %3462 = vmatpush1.bf16.msra.mxu0 %v3418
        %3463 = vmatprep.subr.bf16.mxu0 0
        %3464 = vmatpush1.bf16.msra.mxu0 %v3419
        %3465 = vmatprep.subr.bf16.mxu0 0
        %3466 = vmatpush1.bf16.msra.mxu0 %v3420
        %3467 = vmatprep.subr.bf16.mxu0 0
        %3468 = vmatpush1.bf16.msra.mxu0 %v3421
        %3469 = vmatprep.subr.bf16.mxu0 0
        %3470 = vmatpush1.bf16.msra.mxu0 %v3422
        %3471 = vmatprep.mubr.bf16.mxu0 %v3303
        %3472 = vmatmul.mubr.bf16.gmra.mrb[0].mxu0 %v3302
        %v3473 = vpop.f32.mrb[0].mxu0
        %v3474 = vadd.f32 0.0, %v3473
        %v3475 = vpop.f32.mrb[0].mxu0
        %v3476 = vpop.f32.mrb[0].mxu0
        %v3477 = vadd.f32 0.0, %v3476
        %v3478 = vpop.f32.mrb[0].mxu0
        %3479 = vmatprep.mubr.bf16.mxu0 %v3305
        %3480 = vmatmul.mubr.bf16.gmra.mrb[0].mxu0 %v3304
        %v3481 = vpop.f32.mrb[0].mxu0
        %v3482 = vadd.f32 0.0, %v3481
        %v3483 = vpop.f32.mrb[0].mxu0
        %v3484 = vpop.f32.mrb[0].mxu0
        %v3485 = vadd.f32 0.0, %v3484
        %v3486 = vpop.f32.mrb[0].mxu0
        %3487 = vmatprep.mubr.bf16.mxu0 %v3307
        %3488 = vmatmul.mubr.bf16.gmra.mrb[0].mxu0 %v3306
        %v3489 = vpop.f32.mrb[0].mxu0
        %v3490 = vadd.f32 0.0, %v3489
        %v3491 = vpop.f32.mrb[0].mxu0
        %v3492 = vpop.f32.mrb[0].mxu0
        %v3493 = vadd.f32 0.0, %v3492
        %v3494 = vpop.f32.mrb[0].mxu0
        %3495 = vmatprep.mubr.bf16.mxu0 %v3309
        %3496 = vmatmul.mubr.bf16.gmra.mrb[0].mxu0 %v3308
        %v3497 = vpop.f32.mrb[0].mxu0
        %v3498 = vadd.f32 0.0, %v3497
        %v3499 = vpop.f32.mrb[0].mxu0
        %v3500 = vpop.f32.mrb[0].mxu0
        %v3501 = vadd.f32 0.0, %v3500
        %v3502 = vpop.f32.mrb[0].mxu0
        %3503 = vdwg.mxu0
        %v3504 = vld [vmem:[#allocation3] sm:$0xff]
        %v3505 = vld [vmem:[#allocation3 + $0x8] sm:$0xff]
        %v3506 = vld [vmem:[#allocation3 + $0x10] sm:$0xff]
        %v3507 = vld [vmem:[#allocation3 + $0x18] sm:$0xff]
        %v3508 = vld [vmem:[#allocation3 + $0x20] sm:$0xff]
        %v3509 = vld [vmem:[#allocation3 + $0x28] sm:$0xff]
        %v3510 = vld [vmem:[#allocation3 + $0x30] sm:$0xff]
        %v3511 = vld [vmem:[#allocation3 + $0x38] sm:$0xff]
        %v3512 = vadd.f32 %v3504, %v3474
        %v3513 = vadd.f32 %v3505, %v3477
        %v3514 = vadd.f32 %v3506, %v3482
        %v3515 = vadd.f32 %v3507, %v3485
        %v3516 = vadd.f32 %v3508, %v3490
        %v3517 = vadd.f32 %v3509, %v3493
        %v3518 = vadd.f32 %v3510, %v3498
        %v3519 = vadd.f32 %v3511, %v3501
        %3520 = vst [vmem:[#allocation3] sm:$0xff] %v3512
        %3521 = vst [vmem:[#allocation3 + $0x8] sm:$0xff] %v3513
        %3522 = vst [vmem:[#allocation3 + $0x10] sm:$0xff] %v3514
        %3523 = vst [vmem:[#allocation3 + $0x18] sm:$0xff] %v3515
        %3524 = vst [vmem:[#allocation3 + $0x20] sm:$0xff] %v3516
        %3525 = vst [vmem:[#allocation3 + $0x28] sm:$0xff] %v3517
        %3526 = vst [vmem:[#allocation3 + $0x30] sm:$0xff] %v3518
        %3527 = vst [vmem:[#allocation3 + $0x38] sm:$0xff] %v3519
        %v3528 = vld [vmem:[%s663] sm:$0xf0]
        %v3529 = vld [vmem:[%s663 + $0x8] sm:$0xf0]
        %v3530 = vld [vmem:[%s663 + $0x10] sm:$0xff]
        %v3531 = vld [vmem:[%s663 + $0x18] sm:$0xff]
        %v3532 = vld [vmem:[%s663 + $0x20] sm:$0xff]
        %v3533 = vld [vmem:[%s663 + $0x28] sm:$0xff]
        %v3534 = vld [vmem:[%s663 + $0x30] sm:$0xff]
        %v3535 = vld [vmem:[%s663 + $0x38] sm:$0xff]
        %v3536 = vld [vmem:[%s663 + $0x40] sm:$0xf]
        %v3537 = vld [vmem:[%s663 + $0x48] sm:$0xf]
        %s3538 = scalar_lea.vmem [#allocation4], 1408
        %v3539 = vld [vmem:[%s3538] sm:$0xf]
        %v3540 = vld [vmem:[%s3538 + $0x4] sm:$0xf]
        %v3541 = vld [vmem:[%s3538 + $0x8] sm:$0xf]
        %v3542 = vld [vmem:[%s3538 + $0xc] sm:$0xf]
        %v3543 = vld [vmem:[%s3538 + $0x10] sm:$0xf]
        %v3544 = vld [vmem:[%s3538 + $0x14] sm:$0xf]
        %v3545 = vld [vmem:[%s3538 + $0x18] sm:$0xf]
        %v3546 = vld [vmem:[%s3538 + $0x1c] sm:$0xf]
        %v3547 = vld [vmem:[%s3538 + $0x20] sm:$0xf]
        %v3548 = vld [vmem:[%s3538 + $0x24] sm:$0xf]
        %v3549 = vld [vmem:[%s3538 + $0x28] sm:$0xf]
        %v3550 = vld [vmem:[%s3538 + $0x2c] sm:$0xf]
        %v3551 = vld [vmem:[%s3538 + $0x30] sm:$0xf]
        %v3552 = vld [vmem:[%s3538 + $0x34] sm:$0xf]
        %v3553 = vld [vmem:[%s3538 + $0x38] sm:$0xf]
        %v3554 = vld [vmem:[%s3538 + $0x3c] sm:$0xf]
        %v3555 = vld [vmem:[%s3538 + $0x40] sm:$0xf]
        %v3556 = vld [vmem:[%s3538 + $0x44] sm:$0xf]
        %v3557 = vld [vmem:[%s3538 + $0x48] sm:$0xf]
        %v3558 = vld [vmem:[%s3538 + $0x4c] sm:$0xf]
        %v3559 = vld [vmem:[%s3538 + $0x50] sm:$0xf]
        %v3560 = vld [vmem:[%s3538 + $0x54] sm:$0xf]
        %v3561 = vld [vmem:[%s3538 + $0x58] sm:$0xf]
        %v3562 = vld [vmem:[%s3538 + $0x5c] sm:$0xf]
        %v3563 = vld [vmem:[%s3538 + $0x60] sm:$0xf]
        %v3564 = vld [vmem:[%s3538 + $0x64] sm:$0xf]
        %v3565 = vld [vmem:[%s3538 + $0x68] sm:$0xf]
        %v3566 = vld [vmem:[%s3538 + $0x6c] sm:$0xf]
        %v3567 = vld [vmem:[%s3538 + $0x70] sm:$0xf]
        %v3568 = vld [vmem:[%s3538 + $0x74] sm:$0xf]
        %v3569 = vld [vmem:[%s3538 + $0x78] sm:$0xf]
        %v3570 = vld [vmem:[%s3538 + $0x7c] sm:$0xf]
        %v3581 = vrot.slane %v3528, 4
        %v3582 = vrot.slane %v3530, 4
        %v3583 = vsel %vm1622, %v3581, %v3582
        %v3584 = vrot.slane %v3529, 4
        %v3585 = vrot.slane %v3531, 4
        %v3586 = vsel %vm1622, %v3584, %v3585
        %v3587 = vrot.slane %v3532, 4
        %v3588 = vsel %vm1622, %v3582, %v3587
        %v3589 = vrot.slane %v3533, 4
        %v3590 = vsel %vm1622, %v3585, %v3589
        %v3591 = vrot.slane %v3534, 4
        %v3592 = vsel %vm1622, %v3587, %v3591
        %v3593 = vrot.slane %v3535, 4
        %v3594 = vsel %vm1622, %v3589, %v3593
        %v3595 = vrot.slane %v3536, 4
        %v3596 = vsel %vm1622, %v3591, %v3595
        %v3597 = vrot.slane %v3537, 4
        %v3598 = vsel %vm1622, %v3593, %v3597
        %v3639 = vunpack.c.l.b16 %v3539
        %v3640 = vunpack.c.l.b16 %v3540
        %v3641 = vunpack.c.l.b16 %v3541
        %v3642 = vunpack.c.l.b16 %v3542
        %v3643 = vunpack.c.l.b16 %v3543
        %v3644 = vunpack.c.l.b16 %v3544
        %v3645 = vunpack.c.l.b16 %v3545
        %v3646 = vunpack.c.l.b16 %v3546
        %v3647 = vunpack.c.l.b16 %v3547
        %v3648 = vunpack.c.l.b16 %v3548
        %v3649 = vunpack.c.l.b16 %v3549
        %v3650 = vunpack.c.l.b16 %v3550
        %v3651 = vunpack.c.l.b16 %v3551
        %v3652 = vunpack.c.l.b16 %v3552
        %v3653 = vunpack.c.l.b16 %v3553
        %v3654 = vunpack.c.l.b16 %v3554
        %v3655 = vunpack.c.l.b16 %v3555
        %v3656 = vunpack.c.l.b16 %v3556
        %v3657 = vunpack.c.l.b16 %v3557
        %v3658 = vunpack.c.l.b16 %v3558
        %v3659 = vunpack.c.l.b16 %v3559
        %v3660 = vunpack.c.l.b16 %v3560
        %v3661 = vunpack.c.l.b16 %v3561
        %v3662 = vunpack.c.l.b16 %v3562
        %v3663 = vunpack.c.l.b16 %v3563
        %v3664 = vunpack.c.l.b16 %v3564
        %v3665 = vunpack.c.l.b16 %v3565
        %v3666 = vunpack.c.l.b16 %v3566
        %v3667 = vunpack.c.l.b16 %v3567
        %v3668 = vunpack.c.l.b16 %v3568
        %v3669 = vunpack.c.l.b16 %v3569
        %v3670 = vunpack.c.l.b16 %v3570
        %v3671 = vpack.c.b16 %v3640, %v3639
        %v3672 = vpack.c.b16 %v3642, %v3641
        %v3673 = vpack.c.b16 %v3644, %v3643
        %v3674 = vpack.c.b16 %v3646, %v3645
        %v3675 = vpack.c.b16 %v3648, %v3647
        %v3676 = vpack.c.b16 %v3650, %v3649
        %v3677 = vpack.c.b16 %v3652, %v3651
        %v3678 = vpack.c.b16 %v3654, %v3653
        %v3679 = vpack.c.b16 %v3656, %v3655
        %v3680 = vpack.c.b16 %v3658, %v3657
        %v3681 = vpack.c.b16 %v3660, %v3659
        %v3682 = vpack.c.b16 %v3662, %v3661
        %v3683 = vpack.c.b16 %v3664, %v3663
        %v3684 = vpack.c.b16 %v3666, %v3665
        %v3685 = vpack.c.b16 %v3668, %v3667
        %v3686 = vpack.c.b16 %v3670, %v3669
        %3703 = vmatprep.subr.bf16.mxu0 0
        %3704 = vmatpush1.bf16.msra.mxu0 %v3671
        %3705 = vmatprep.subr.bf16.mxu0 0
        %3706 = vmatpush1.bf16.msra.mxu0 %v3672
        %3707 = vmatprep.subr.bf16.mxu0 0
        %3708 = vmatpush1.bf16.msra.mxu0 %v3673
        %3709 = vmatprep.subr.bf16.mxu0 0
        %3710 = vmatpush1.bf16.msra.mxu0 %v3674
        %3711 = vmatprep.subr.bf16.mxu0 0
        %3712 = vmatpush1.bf16.msra.mxu0 %v3675
        %3713 = vmatprep.subr.bf16.mxu0 0
        %3714 = vmatpush1.bf16.msra.mxu0 %v3676
        %3715 = vmatprep.subr.bf16.mxu0 0
        %3716 = vmatpush1.bf16.msra.mxu0 %v3677
        %3717 = vmatprep.subr.bf16.mxu0 0
        %3718 = vmatpush1.bf16.msra.mxu0 %v3678
        %3719 = vmatprep.subr.bf16.mxu0 0
        %3720 = vmatpush1.bf16.msra.mxu0 %v3679
        %3721 = vmatprep.subr.bf16.mxu0 0
        %3722 = vmatpush1.bf16.msra.mxu0 %v3680
        %3723 = vmatprep.subr.bf16.mxu0 0
        %3724 = vmatpush1.bf16.msra.mxu0 %v3681
        %3725 = vmatprep.subr.bf16.mxu0 0
        %3726 = vmatpush1.bf16.msra.mxu0 %v3682
        %3727 = vmatprep.subr.bf16.mxu0 0
        %3728 = vmatpush1.bf16.msra.mxu0 %v3683
        %3729 = vmatprep.subr.bf16.mxu0 0
        %3730 = vmatpush1.bf16.msra.mxu0 %v3684
        %3731 = vmatprep.subr.bf16.mxu0 0
        %3732 = vmatpush1.bf16.msra.mxu0 %v3685
        %3733 = vmatprep.subr.bf16.mxu0 0
        %3734 = vmatpush1.bf16.msra.mxu0 %v3686
        %3735 = vmatprep.mubr.bf16.mxu0 %v3586
        %3736 = vmatmul.mubr.bf16.gmra.mrb[0].mxu0 %v3583
        %v3737 = vpop.f32.mrb[0].mxu0
        %v3738 = vadd.f32 0.0, %v3737
        %v3739 = vpop.f32.mrb[0].mxu0
        %v3740 = vpop.f32.mrb[0].mxu0
        %v3741 = vadd.f32 0.0, %v3740
        %v3742 = vpop.f32.mrb[0].mxu0
        %3743 = vmatprep.mubr.bf16.mxu0 %v3590
        %3744 = vmatmul.mubr.bf16.gmra.mrb[0].mxu0 %v3588
        %v3745 = vpop.f32.mrb[0].mxu0
        %v3746 = vadd.f32 0.0, %v3745
        %v3747 = vpop.f32.mrb[0].mxu0
        %v3748 = vpop.f32.mrb[0].mxu0
        %v3749 = vadd.f32 0.0, %v3748
        %v3750 = vpop.f32.mrb[0].mxu0
        %3751 = vmatprep.mubr.bf16.mxu0 %v3594
        %3752 = vmatmul.mubr.bf16.gmra.mrb[0].mxu0 %v3592
        %v3753 = vpop.f32.mrb[0].mxu0
        %v3754 = vadd.f32 0.0, %v3753
        %v3755 = vpop.f32.mrb[0].mxu0
        %v3756 = vpop.f32.mrb[0].mxu0
        %v3757 = vadd.f32 0.0, %v3756
        %v3758 = vpop.f32.mrb[0].mxu0
        %3759 = vmatprep.mubr.bf16.mxu0 %v3598
        %3760 = vmatmul.mubr.bf16.gmra.mrb[0].mxu0 %v3596
        %v3761 = vpop.f32.mrb[0].mxu0
        %v3762 = vadd.f32 0.0, %v3761
        %v3763 = vpop.f32.mrb[0].mxu0
        %v3764 = vpop.f32.mrb[0].mxu0
        %v3765 = vadd.f32 0.0, %v3764
        %v3766 = vpop.f32.mrb[0].mxu0
        %3767 = vdwg.mxu0
        %v3768 = vld [vmem:[#allocation3] sm:$0xff]
        %v3769 = vld [vmem:[#allocation3 + $0x8] sm:$0xff]
        %v3770 = vld [vmem:[#allocation3 + $0x10] sm:$0xff]
        %v3771 = vld [vmem:[#allocation3 + $0x18] sm:$0xff]
        %v3772 = vld [vmem:[#allocation3 + $0x20] sm:$0xff]
        %v3773 = vld [vmem:[#allocation3 + $0x28] sm:$0xff]
        %v3774 = vld [vmem:[#allocation3 + $0x30] sm:$0xff]
        %v3775 = vld [vmem:[#allocation3 + $0x38] sm:$0xff]
        %v3776 = vadd.f32 %v3768, %v3738
        %v3777 = vadd.f32 %v3769, %v3741
        %v3778 = vadd.f32 %v3770, %v3746
        %v3779 = vadd.f32 %v3771, %v3749
        %v3780 = vadd.f32 %v3772, %v3754
        %v3781 = vadd.f32 %v3773, %v3757
        %v3782 = vadd.f32 %v3774, %v3762
        %v3783 = vadd.f32 %v3775, %v3765
        %3784 = vst [vmem:[#allocation3] sm:$0xff] %v3776
        %3785 = vst [vmem:[#allocation3 + $0x8] sm:$0xff] %v3777
        %3786 = vst [vmem:[#allocation3 + $0x10] sm:$0xff] %v3778
        %3787 = vst [vmem:[#allocation3 + $0x18] sm:$0xff] %v3779
        %3788 = vst [vmem:[#allocation3 + $0x20] sm:$0xff] %v3780
        %3789 = vst [vmem:[#allocation3 + $0x28] sm:$0xff] %v3781
        %3790 = vst [vmem:[#allocation3 + $0x30] sm:$0xff] %v3782
        %3791 = vst [vmem:[#allocation3 + $0x38] sm:$0xff] %v3783
        %v3792 = vld [vmem:[%s897] sm:$0xf0]
        %v3793 = vld [vmem:[%s897 + $0x8] sm:$0xf0]
        %v3794 = vld [vmem:[%s897 + $0x10] sm:$0xff]
        %v3795 = vld [vmem:[%s897 + $0x18] sm:$0xff]
        %v3796 = vld [vmem:[%s897 + $0x20] sm:$0xff]
        %v3797 = vld [vmem:[%s897 + $0x28] sm:$0xff]
        %v3798 = vld [vmem:[%s897 + $0x30] sm:$0xff]
        %v3799 = vld [vmem:[%s897 + $0x38] sm:$0xff]
        %v3800 = vld [vmem:[%s897 + $0x40] sm:$0xf]
        %v3801 = vld [vmem:[%s897 + $0x48] sm:$0xf]
        %s3802 = scalar_lea.vmem [#allocation4], 1536
        %v3803 = vld [vmem:[%s3802] sm:$0xf]
        %v3804 = vld [vmem:[%s3802 + $0x4] sm:$0xf]
        %v3805 = vld [vmem:[%s3802 + $0x8] sm:$0xf]
        %v3806 = vld [vmem:[%s3802 + $0xc] sm:$0xf]
        %v3807 = vld [vmem:[%s3802 + $0x10] sm:$0xf]
        %v3808 = vld [vmem:[%s3802 + $0x14] sm:$0xf]
        %v3809 = vld [vmem:[%s3802 + $0x18] sm:$0xf]
        %v3810 = vld [vmem:[%s3802 + $0x1c] sm:$0xf]
        %v3811 = vld [vmem:[%s3802 + $0x20] sm:$0xf]
        %v3812 = vld [vmem:[%s3802 + $0x24] sm:$0xf]
        %v3813 = vld [vmem:[%s3802 + $0x28] sm:$0xf]
        %v3814 = vld [vmem:[%s3802 + $0x2c] sm:$0xf]
        %v3815 = vld [vmem:[%s3802 + $0x30] sm:$0xf]
        %v3816 = vld [vmem:[%s3802 + $0x34] sm:$0xf]
        %v3817 = vld [vmem:[%s3802 + $0x38] sm:$0xf]
        %v3818 = vld [vmem:[%s3802 + $0x3c] sm:$0xf]
        %v3819 = vld [vmem:[%s3802 + $0x40] sm:$0xf]
        %v3820 = vld [vmem:[%s3802 + $0x44] sm:$0xf]
        %v3821 = vld [vmem:[%s3802 + $0x48] sm:$0xf]
        %v3822 = vld [vmem:[%s3802 + $0x4c] sm:$0xf]
        %v3823 = vld [vmem:[%s3802 + $0x50] sm:$0xf]
        %v3824 = vld [vmem:[%s3802 + $0x54] sm:$0xf]
        %v3825 = vld [vmem:[%s3802 + $0x58] sm:$0xf]
        %v3826 = vld [vmem:[%s3802 + $0x5c] sm:$0xf]
        %v3827 = vld [vmem:[%s3802 + $0x60] sm:$0xf]
        %v3828 = vld [vmem:[%s3802 + $0x64] sm:$0xf]
        %v3829 = vld [vmem:[%s3802 + $0x68] sm:$0xf]
        %v3830 = vld [vmem:[%s3802 + $0x6c] sm:$0xf]
        %v3831 = vld [vmem:[%s3802 + $0x70] sm:$0xf]
        %v3832 = vld [vmem:[%s3802 + $0x74] sm:$0xf]
        %v3833 = vld [vmem:[%s3802 + $0x78] sm:$0xf]
        %v3834 = vld [vmem:[%s3802 + $0x7c] sm:$0xf]
        %v3845 = vrot.slane %v3792, 4
        %v3846 = vrot.slane %v3794, 4
        %v3847 = vsel %vm1622, %v3845, %v3846
        %v3848 = vrot.slane %v3793, 4
        %v3849 = vrot.slane %v3795, 4
        %v3850 = vsel %vm1622, %v3848, %v3849
        %v3851 = vrot.slane %v3796, 4
        %v3852 = vsel %vm1622, %v3846, %v3851
        %v3853 = vrot.slane %v3797, 4
        %v3854 = vsel %vm1622, %v3849, %v3853
        %v3855 = vrot.slane %v3798, 4
        %v3856 = vsel %vm1622, %v3851, %v3855
        %v3857 = vrot.slane %v3799, 4
        %v3858 = vsel %vm1622, %v3853, %v3857
        %v3859 = vrot.slane %v3800, 4
        %v3860 = vsel %vm1622, %v3855, %v3859
        %v3861 = vrot.slane %v3801, 4
        %v3862 = vsel %vm1622, %v3857, %v3861
        %v3903 = vunpack.c.l.b16 %v3803
        %v3904 = vunpack.c.l.b16 %v3804
        %v3905 = vunpack.c.l.b16 %v3805
        %v3906 = vunpack.c.l.b16 %v3806
        %v3907 = vunpack.c.l.b16 %v3807
        %v3908 = vunpack.c.l.b16 %v3808
        %v3909 = vunpack.c.l.b16 %v3809
        %v3910 = vunpack.c.l.b16 %v3810
        %v3911 = vunpack.c.l.b16 %v3811
        %v3912 = vunpack.c.l.b16 %v3812
        %v3913 = vunpack.c.l.b16 %v3813
        %v3914 = vunpack.c.l.b16 %v3814
        %v3915 = vunpack.c.l.b16 %v3815
        %v3916 = vunpack.c.l.b16 %v3816
        %v3917 = vunpack.c.l.b16 %v3817
        %v3918 = vunpack.c.l.b16 %v3818
        %v3919 = vunpack.c.l.b16 %v3819
        %v3920 = vunpack.c.l.b16 %v3820
        %v3921 = vunpack.c.l.b16 %v3821
        %v3922 = vunpack.c.l.b16 %v3822
        %v3923 = vunpack.c.l.b16 %v3823
        %v3924 = vunpack.c.l.b16 %v3824
        %v3925 = vunpack.c.l.b16 %v3825
        %v3926 = vunpack.c.l.b16 %v3826
        %v3927 = vunpack.c.l.b16 %v3827
        %v3928 = vunpack.c.l.b16 %v3828
        %v3929 = vunpack.c.l.b16 %v3829
        %v3930 = vunpack.c.l.b16 %v3830
        %v3931 = vunpack.c.l.b16 %v3831
        %v3932 = vunpack.c.l.b16 %v3832
        %v3933 = vunpack.c.l.b16 %v3833
        %v3934 = vunpack.c.l.b16 %v3834
        %v3935 = vpack.c.b16 %v3904, %v3903
        %v3936 = vpack.c.b16 %v3906, %v3905
        %v3937 = vpack.c.b16 %v3908, %v3907
        %v3938 = vpack.c.b16 %v3910, %v3909
        %v3939 = vpack.c.b16 %v3912, %v3911
        %v3940 = vpack.c.b16 %v3914, %v3913
        %v3941 = vpack.c.b16 %v3916, %v3915
        %v3942 = vpack.c.b16 %v3918, %v3917
        %v3943 = vpack.c.b16 %v3920, %v3919
        %v3944 = vpack.c.b16 %v3922, %v3921
        %v3945 = vpack.c.b16 %v3924, %v3923
        %v3946 = vpack.c.b16 %v3926, %v3925
        %v3947 = vpack.c.b16 %v3928, %v3927
        %v3948 = vpack.c.b16 %v3930, %v3929
        %v3949 = vpack.c.b16 %v3932, %v3931
        %v3950 = vpack.c.b16 %v3934, %v3933
        %3967 = vmatprep.subr.bf16.mxu0 0
        %3968 = vmatpush1.bf16.msra.mxu0 %v3935
        %3969 = vmatprep.subr.bf16.mxu0 0
        %3970 = vmatpush1.bf16.msra.mxu0 %v3936
        %3971 = vmatprep.subr.bf16.mxu0 0
        %3972 = vmatpush1.bf16.msra.mxu0 %v3937
        %3973 = vmatprep.subr.bf16.mxu0 0
        %3974 = vmatpush1.bf16.msra.mxu0 %v3938
        %3975 = vmatprep.subr.bf16.mxu0 0
        %3976 = vmatpush1.bf16.msra.mxu0 %v3939
        %3977 = vmatprep.subr.bf16.mxu0 0
        %3978 = vmatpush1.bf16.msra.mxu0 %v3940
        %3979 = vmatprep.subr.bf16.mxu0 0
        %3980 = vmatpush1.bf16.msra.mxu0 %v3941
        %3981 = vmatprep.subr.bf16.mxu0 0
        %3982 = vmatpush1.bf16.msra.mxu0 %v3942
        %3983 = vmatprep.subr.bf16.mxu0 0
        %3984 = vmatpush1.bf16.msra.mxu0 %v3943
        %3985 = vmatprep.subr.bf16.mxu0 0
        %3986 = vmatpush1.bf16.msra.mxu0 %v3944
        %3987 = vmatprep.subr.bf16.mxu0 0
        %3988 = vmatpush1.bf16.msra.mxu0 %v3945
        %3989 = vmatprep.subr.bf16.mxu0 0
        %3990 = vmatpush1.bf16.msra.mxu0 %v3946
        %3991 = vmatprep.subr.bf16.mxu0 0
        %3992 = vmatpush1.bf16.msra.mxu0 %v3947
        %3993 = vmatprep.subr.bf16.mxu0 0
        %3994 = vmatpush1.bf16.msra.mxu0 %v3948
        %3995 = vmatprep.subr.bf16.mxu0 0
        %3996 = vmatpush1.bf16.msra.mxu0 %v3949
        %3997 = vmatprep.subr.bf16.mxu0 0
        %3998 = vmatpush1.bf16.msra.mxu0 %v3950
        %3999 = vmatprep.mubr.bf16.mxu0 %v3850
        %4000 = vmatmul.mubr.bf16.gmra.mrb[0].mxu0 %v3847
        %v4001 = vpop.f32.mrb[0].mxu0
        %v4002 = vadd.f32 0.0, %v4001
        %v4003 = vpop.f32.mrb[0].mxu0
        %v4004 = vpop.f32.mrb[0].mxu0
        %v4005 = vadd.f32 0.0, %v4004
        %v4006 = vpop.f32.mrb[0].mxu0
        %4007 = vmatprep.mubr.bf16.mxu0 %v3854
        %4008 = vmatmul.mubr.bf16.gmra.mrb[0].mxu0 %v3852
        %v4009 = vpop.f32.mrb[0].mxu0
        %v4010 = vadd.f32 0.0, %v4009
        %v4011 = vpop.f32.mrb[0].mxu0
        %v4012 = vpop.f32.mrb[0].mxu0
        %v4013 = vadd.f32 0.0, %v4012
        %v4014 = vpop.f32.mrb[0].mxu0
        %4015 = vmatprep.mubr.bf16.mxu0 %v3858
        %4016 = vmatmul.mubr.bf16.gmra.mrb[0].mxu0 %v3856
        %v4017 = vpop.f32.mrb[0].mxu0
        %v4018 = vadd.f32 0.0, %v4017
        %v4019 = vpop.f32.mrb[0].mxu0
        %v4020 = vpop.f32.mrb[0].mxu0
        %v4021 = vadd.f32 0.0, %v4020
        %v4022 = vpop.f32.mrb[0].mxu0
        %4023 = vmatprep.mubr.bf16.mxu0 %v3862
        %4024 = vmatmul.mubr.bf16.gmra.mrb[0].mxu0 %v3860
        %v4025 = vpop.f32.mrb[0].mxu0
        %v4026 = vadd.f32 0.0, %v4025
        %v4027 = vpop.f32.mrb[0].mxu0
        %v4028 = vpop.f32.mrb[0].mxu0
        %v4029 = vadd.f32 0.0, %v4028
        %v4030 = vpop.f32.mrb[0].mxu0
        %4031 = vdwg.mxu0
        %v4032 = vld [vmem:[#allocation3] sm:$0xff]
        %v4033 = vld [vmem:[#allocation3 + $0x8] sm:$0xff]
        %v4034 = vld [vmem:[#allocation3 + $0x10] sm:$0xff]
        %v4035 = vld [vmem:[#allocation3 + $0x18] sm:$0xff]
        %v4036 = vld [vmem:[#allocation3 + $0x20] sm:$0xff]
        %v4037 = vld [vmem:[#allocation3 + $0x28] sm:$0xff]
        %v4038 = vld [vmem:[#allocation3 + $0x30] sm:$0xff]
        %v4039 = vld [vmem:[#allocation3 + $0x38] sm:$0xff]
        %v4040 = vadd.f32 %v4032, %v4002
        %v4041 = vadd.f32 %v4033, %v4005
        %v4042 = vadd.f32 %v4034, %v4010
        %v4043 = vadd.f32 %v4035, %v4013
        %v4044 = vadd.f32 %v4036, %v4018
        %v4045 = vadd.f32 %v4037, %v4021
        %v4046 = vadd.f32 %v4038, %v4026
        %v4047 = vadd.f32 %v4039, %v4029
        %4048 = vst [vmem:[#allocation3] sm:$0xff] %v4040
        %4049 = vst [vmem:[#allocation3 + $0x8] sm:$0xff] %v4041
        %4050 = vst [vmem:[#allocation3 + $0x10] sm:$0xff] %v4042
        %4051 = vst [vmem:[#allocation3 + $0x18] sm:$0xff] %v4043
        %4052 = vst [vmem:[#allocation3 + $0x20] sm:$0xff] %v4044
        %4053 = vst [vmem:[#allocation3 + $0x28] sm:$0xff] %v4045
        %4054 = vst [vmem:[#allocation3 + $0x30] sm:$0xff] %v4046
        %4055 = vst [vmem:[#allocation3 + $0x38] sm:$0xff] %v4047
        %v4056 = vld [vmem:[%s663 + $0x10] sm:$0xff]
        %v4057 = vld [vmem:[%s663 + $0x18] sm:$0xff]
        %v4058 = vld [vmem:[%s663 + $0x20] sm:$0xff]
        %v4059 = vld [vmem:[%s663 + $0x28] sm:$0xff]
        %v4060 = vld [vmem:[%s663 + $0x30] sm:$0xff]
        %v4061 = vld [vmem:[%s663 + $0x38] sm:$0xff]
        %v4062 = vld [vmem:[%s663 + $0x40] sm:$0xff]
        %v4063 = vld [vmem:[%s663 + $0x48] sm:$0xff]
        %s4064 = scalar_lea.vmem [#allocation4], 1664
        %v4065 = vld [vmem:[%s4064] sm:$0xf]
        %v4066 = vld [vmem:[%s4064 + $0x4] sm:$0xf]
        %v4067 = vld [vmem:[%s4064 + $0x8] sm:$0xf]
        %v4068 = vld [vmem:[%s4064 + $0xc] sm:$0xf]
        %v4069 = vld [vmem:[%s4064 + $0x10] sm:$0xf]
        %v4070 = vld [vmem:[%s4064 + $0x14] sm:$0xf]
        %v4071 = vld [vmem:[%s4064 + $0x18] sm:$0xf]
        %v4072 = vld [vmem:[%s4064 + $0x1c] sm:$0xf]
        %v4073 = vld [vmem:[%s4064 + $0x20] sm:$0xf]
        %v4074 = vld [vmem:[%s4064 + $0x24] sm:$0xf]
        %v4075 = vld [vmem:[%s4064 + $0x28] sm:$0xf]
        %v4076 = vld [vmem:[%s4064 + $0x2c] sm:$0xf]
        %v4077 = vld [vmem:[%s4064 + $0x30] sm:$0xf]
        %v4078 = vld [vmem:[%s4064 + $0x34] sm:$0xf]
        %v4079 = vld [vmem:[%s4064 + $0x38] sm:$0xf]
        %v4080 = vld [vmem:[%s4064 + $0x3c] sm:$0xf]
        %v4081 = vld [vmem:[%s4064 + $0x40] sm:$0xf]
        %v4082 = vld [vmem:[%s4064 + $0x44] sm:$0xf]
        %v4083 = vld [vmem:[%s4064 + $0x48] sm:$0xf]
        %v4084 = vld [vmem:[%s4064 + $0x4c] sm:$0xf]
        %v4085 = vld [vmem:[%s4064 + $0x50] sm:$0xf]
        %v4086 = vld [vmem:[%s4064 + $0x54] sm:$0xf]
        %v4087 = vld [vmem:[%s4064 + $0x58] sm:$0xf]
        %v4088 = vld [vmem:[%s4064 + $0x5c] sm:$0xf]
        %v4089 = vld [vmem:[%s4064 + $0x60] sm:$0xf]
        %v4090 = vld [vmem:[%s4064 + $0x64] sm:$0xf]
        %v4091 = vld [vmem:[%s4064 + $0x68] sm:$0xf]
        %v4092 = vld [vmem:[%s4064 + $0x6c] sm:$0xf]
        %v4093 = vld [vmem:[%s4064 + $0x70] sm:$0xf]
        %v4094 = vld [vmem:[%s4064 + $0x74] sm:$0xf]
        %v4095 = vld [vmem:[%s4064 + $0x78] sm:$0xf]
        %v4096 = vld [vmem:[%s4064 + $0x7c] sm:$0xf]
        %v4129 = vunpack.c.l.b16 %v4065
        %v4130 = vunpack.c.l.b16 %v4066
        %v4131 = vunpack.c.l.b16 %v4067
        %v4132 = vunpack.c.l.b16 %v4068
        %v4133 = vunpack.c.l.b16 %v4069
        %v4134 = vunpack.c.l.b16 %v4070
        %v4135 = vunpack.c.l.b16 %v4071
        %v4136 = vunpack.c.l.b16 %v4072
        %v4137 = vunpack.c.l.b16 %v4073
        %v4138 = vunpack.c.l.b16 %v4074
        %v4139 = vunpack.c.l.b16 %v4075
        %v4140 = vunpack.c.l.b16 %v4076
        %v4141 = vunpack.c.l.b16 %v4077
        %v4142 = vunpack.c.l.b16 %v4078
        %v4143 = vunpack.c.l.b16 %v4079
        %v4144 = vunpack.c.l.b16 %v4080
        %v4145 = vunpack.c.l.b16 %v4081
        %v4146 = vunpack.c.l.b16 %v4082
        %v4147 = vunpack.c.l.b16 %v4083
        %v4148 = vunpack.c.l.b16 %v4084
        %v4149 = vunpack.c.l.b16 %v4085
        %v4150 = vunpack.c.l.b16 %v4086
        %v4151 = vunpack.c.l.b16 %v4087
        %v4152 = vunpack.c.l.b16 %v4088
        %v4153 = vunpack.c.l.b16 %v4089
        %v4154 = vunpack.c.l.b16 %v4090
        %v4155 = vunpack.c.l.b16 %v4091
        %v4156 = vunpack.c.l.b16 %v4092
        %v4157 = vunpack.c.l.b16 %v4093
        %v4158 = vunpack.c.l.b16 %v4094
        %v4159 = vunpack.c.l.b16 %v4095
        %v4160 = vunpack.c.l.b16 %v4096
        %v4161 = vpack.c.b16 %v4130, %v4129
        %v4162 = vpack.c.b16 %v4132, %v4131
        %v4163 = vpack.c.b16 %v4134, %v4133
        %v4164 = vpack.c.b16 %v4136, %v4135
        %v4165 = vpack.c.b16 %v4138, %v4137
        %v4166 = vpack.c.b16 %v4140, %v4139
        %v4167 = vpack.c.b16 %v4142, %v4141
        %v4168 = vpack.c.b16 %v4144, %v4143
        %v4169 = vpack.c.b16 %v4146, %v4145
        %v4170 = vpack.c.b16 %v4148, %v4147
        %v4171 = vpack.c.b16 %v4150, %v4149
        %v4172 = vpack.c.b16 %v4152, %v4151
        %v4173 = vpack.c.b16 %v4154, %v4153
        %v4174 = vpack.c.b16 %v4156, %v4155
        %v4175 = vpack.c.b16 %v4158, %v4157
        %v4176 = vpack.c.b16 %v4160, %v4159
        %4193 = vmatprep.subr.bf16.mxu0 0
        %4194 = vmatpush1.bf16.msra.mxu0 %v4161
        %4195 = vmatprep.subr.bf16.mxu0 0
        %4196 = vmatpush1.bf16.msra.mxu0 %v4162
        %4197 = vmatprep.subr.bf16.mxu0 0
        %4198 = vmatpush1.bf16.msra.mxu0 %v4163
        %4199 = vmatprep.subr.bf16.mxu0 0
        %4200 = vmatpush1.bf16.msra.mxu0 %v4164
        %4201 = vmatprep.subr.bf16.mxu0 0
        %4202 = vmatpush1.bf16.msra.mxu0 %v4165
        %4203 = vmatprep.subr.bf16.mxu0 0
        %4204 = vmatpush1.bf16.msra.mxu0 %v4166
        %4205 = vmatprep.subr.bf16.mxu0 0
        %4206 = vmatpush1.bf16.msra.mxu0 %v4167
        %4207 = vmatprep.subr.bf16.mxu0 0
        %4208 = vmatpush1.bf16.msra.mxu0 %v4168
        %4209 = vmatprep.subr.bf16.mxu0 0
        %4210 = vmatpush1.bf16.msra.mxu0 %v4169
        %4211 = vmatprep.subr.bf16.mxu0 0
        %4212 = vmatpush1.bf16.msra.mxu0 %v4170
        %4213 = vmatprep.subr.bf16.mxu0 0
        %4214 = vmatpush1.bf16.msra.mxu0 %v4171
        %4215 = vmatprep.subr.bf16.mxu0 0
        %4216 = vmatpush1.bf16.msra.mxu0 %v4172
        %4217 = vmatprep.subr.bf16.mxu0 0
        %4218 = vmatpush1.bf16.msra.mxu0 %v4173
        %4219 = vmatprep.subr.bf16.mxu0 0
        %4220 = vmatpush1.bf16.msra.mxu0 %v4174
        %4221 = vmatprep.subr.bf16.mxu0 0
        %4222 = vmatpush1.bf16.msra.mxu0 %v4175
        %4223 = vmatprep.subr.bf16.mxu0 0
        %4224 = vmatpush1.bf16.msra.mxu0 %v4176
        %4225 = vmatprep.mubr.bf16.mxu0 %v4057
        %4226 = vmatmul.mubr.bf16.gmra.mrb[0].mxu0 %v4056
        %v4227 = vpop.f32.mrb[0].mxu0
        %v4228 = vadd.f32 0.0, %v4227
        %v4229 = vpop.f32.mrb[0].mxu0
        %v4230 = vpop.f32.mrb[0].mxu0
        %v4231 = vadd.f32 0.0, %v4230
        %v4232 = vpop.f32.mrb[0].mxu0
        %4233 = vmatprep.mubr.bf16.mxu0 %v4059
        %4234 = vmatmul.mubr.bf16.gmra.mrb[0].mxu0 %v4058
        %v4235 = vpop.f32.mrb[0].mxu0
        %v4236 = vadd.f32 0.0, %v4235
        %v4237 = vpop.f32.mrb[0].mxu0
        %v4238 = vpop.f32.mrb[0].mxu0
        %v4239 = vadd.f32 0.0, %v4238
        %v4240 = vpop.f32.mrb[0].mxu0
        %4241 = vmatprep.mubr.bf16.mxu0 %v4061
        %4242 = vmatmul.mubr.bf16.gmra.mrb[0].mxu0 %v4060
        %v4243 = vpop.f32.mrb[0].mxu0
        %v4244 = vadd.f32 0.0, %v4243
        %v4245 = vpop.f32.mrb[0].mxu0
        %v4246 = vpop.f32.mrb[0].mxu0
        %v4247 = vadd.f32 0.0, %v4246
        %v4248 = vpop.f32.mrb[0].mxu0
        %4249 = vmatprep.mubr.bf16.mxu0 %v4063
        %4250 = vmatmul.mubr.bf16.gmra.mrb[0].mxu0 %v4062
        %v4251 = vpop.f32.mrb[0].mxu0
        %v4252 = vadd.f32 0.0, %v4251
        %v4253 = vpop.f32.mrb[0].mxu0
        %v4254 = vpop.f32.mrb[0].mxu0
        %v4255 = vadd.f32 0.0, %v4254
        %v4256 = vpop.f32.mrb[0].mxu0
        %4257 = vdwg.mxu0
        %v4258 = vld [vmem:[#allocation3] sm:$0xff]
        %v4259 = vld [vmem:[#allocation3 + $0x8] sm:$0xff]
        %v4260 = vld [vmem:[#allocation3 + $0x10] sm:$0xff]
        %v4261 = vld [vmem:[#allocation3 + $0x18] sm:$0xff]
        %v4262 = vld [vmem:[#allocation3 + $0x20] sm:$0xff]
        %v4263 = vld [vmem:[#allocation3 + $0x28] sm:$0xff]
        %v4264 = vld [vmem:[#allocation3 + $0x30] sm:$0xff]
        %v4265 = vld [vmem:[#allocation3 + $0x38] sm:$0xff]
        %v4266 = vadd.f32 %v4258, %v4228
        %v4267 = vadd.f32 %v4259, %v4231
        %v4268 = vadd.f32 %v4260, %v4236
        %v4269 = vadd.f32 %v4261, %v4239
        %v4270 = vadd.f32 %v4262, %v4244
        %v4271 = vadd.f32 %v4263, %v4247
        %v4272 = vadd.f32 %v4264, %v4252
        %v4273 = vadd.f32 %v4265, %v4255
        %4274 = vst [vmem:[#allocation3] sm:$0xff] %v4266
        %4275 = vst [vmem:[#allocation3 + $0x8] sm:$0xff] %v4267
        %4276 = vst [vmem:[#allocation3 + $0x10] sm:$0xff] %v4268
        %4277 = vst [vmem:[#allocation3 + $0x18] sm:$0xff] %v4269
        %4278 = vst [vmem:[#allocation3 + $0x20] sm:$0xff] %v4270
        %4279 = vst [vmem:[#allocation3 + $0x28] sm:$0xff] %v4271
        %4280 = vst [vmem:[#allocation3 + $0x30] sm:$0xff] %v4272
        %4281 = vst [vmem:[#allocation3 + $0x38] sm:$0xff] %v4273
        %v4282 = vld [vmem:[%s897 + $0x10] sm:$0xff]
        %v4283 = vld [vmem:[%s897 + $0x18] sm:$0xff]
        %v4284 = vld [vmem:[%s897 + $0x20] sm:$0xff]
        %v4285 = vld [vmem:[%s897 + $0x28] sm:$0xff]
        %v4286 = vld [vmem:[%s897 + $0x30] sm:$0xff]
        %v4287 = vld [vmem:[%s897 + $0x38] sm:$0xff]
        %v4288 = vld [vmem:[%s897 + $0x40] sm:$0xff]
        %v4289 = vld [vmem:[%s897 + $0x48] sm:$0xff]
        %s4290 = scalar_lea.vmem [#allocation4], 1792
        %v4291 = vld [vmem:[%s4290] sm:$0xf]
        %v4292 = vld [vmem:[%s4290 + $0x4] sm:$0xf]
        %v4293 = vld [vmem:[%s4290 + $0x8] sm:$0xf]
        %v4294 = vld [vmem:[%s4290 + $0xc] sm:$0xf]
        %v4295 = vld [vmem:[%s4290 + $0x10] sm:$0xf]
        %v4296 = vld [vmem:[%s4290 + $0x14] sm:$0xf]
        %v4297 = vld [vmem:[%s4290 + $0x18] sm:$0xf]
        %v4298 = vld [vmem:[%s4290 + $0x1c] sm:$0xf]
        %v4299 = vld [vmem:[%s4290 + $0x20] sm:$0xf]
        %v4300 = vld [vmem:[%s4290 + $0x24] sm:$0xf]
        %v4301 = vld [vmem:[%s4290 + $0x28] sm:$0xf]
        %v4302 = vld [vmem:[%s4290 + $0x2c] sm:$0xf]
        %v4303 = vld [vmem:[%s4290 + $0x30] sm:$0xf]
        %v4304 = vld [vmem:[%s4290 + $0x34] sm:$0xf]
        %v4305 = vld [vmem:[%s4290 + $0x38] sm:$0xf]
        %v4306 = vld [vmem:[%s4290 + $0x3c] sm:$0xf]
        %v4307 = vld [vmem:[%s4290 + $0x40] sm:$0xf]
        %v4308 = vld [vmem:[%s4290 + $0x44] sm:$0xf]
        %v4309 = vld [vmem:[%s4290 + $0x48] sm:$0xf]
        %v4310 = vld [vmem:[%s4290 + $0x4c] sm:$0xf]
        %v4311 = vld [vmem:[%s4290 + $0x50] sm:$0xf]
        %v4312 = vld [vmem:[%s4290 + $0x54] sm:$0xf]
        %v4313 = vld [vmem:[%s4290 + $0x58] sm:$0xf]
        %v4314 = vld [vmem:[%s4290 + $0x5c] sm:$0xf]
        %v4315 = vld [vmem:[%s4290 + $0x60] sm:$0xf]
        %v4316 = vld [vmem:[%s4290 + $0x64] sm:$0xf]
        %v4317 = vld [vmem:[%s4290 + $0x68] sm:$0xf]
        %v4318 = vld [vmem:[%s4290 + $0x6c] sm:$0xf]
        %v4319 = vld [vmem:[%s4290 + $0x70] sm:$0xf]
        %v4320 = vld [vmem:[%s4290 + $0x74] sm:$0xf]
        %v4321 = vld [vmem:[%s4290 + $0x78] sm:$0xf]
        %v4322 = vld [vmem:[%s4290 + $0x7c] sm:$0xf]
        %v4355 = vunpack.c.l.b16 %v4291
        %v4356 = vunpack.c.l.b16 %v4292
        %v4357 = vunpack.c.l.b16 %v4293
        %v4358 = vunpack.c.l.b16 %v4294
        %v4359 = vunpack.c.l.b16 %v4295
        %v4360 = vunpack.c.l.b16 %v4296
        %v4361 = vunpack.c.l.b16 %v4297
        %v4362 = vunpack.c.l.b16 %v4298
        %v4363 = vunpack.c.l.b16 %v4299
        %v4364 = vunpack.c.l.b16 %v4300
        %v4365 = vunpack.c.l.b16 %v4301
        %v4366 = vunpack.c.l.b16 %v4302
        %v4367 = vunpack.c.l.b16 %v4303
        %v4368 = vunpack.c.l.b16 %v4304
        %v4369 = vunpack.c.l.b16 %v4305
        %v4370 = vunpack.c.l.b16 %v4306
        %v4371 = vunpack.c.l.b16 %v4307
        %v4372 = vunpack.c.l.b16 %v4308
        %v4373 = vunpack.c.l.b16 %v4309
        %v4374 = vunpack.c.l.b16 %v4310
        %v4375 = vunpack.c.l.b16 %v4311
        %v4376 = vunpack.c.l.b16 %v4312
        %v4377 = vunpack.c.l.b16 %v4313
        %v4378 = vunpack.c.l.b16 %v4314
        %v4379 = vunpack.c.l.b16 %v4315
        %v4380 = vunpack.c.l.b16 %v4316
        %v4381 = vunpack.c.l.b16 %v4317
        %v4382 = vunpack.c.l.b16 %v4318
        %v4383 = vunpack.c.l.b16 %v4319
        %v4384 = vunpack.c.l.b16 %v4320
        %v4385 = vunpack.c.l.b16 %v4321
        %v4386 = vunpack.c.l.b16 %v4322
        %v4387 = vpack.c.b16 %v4356, %v4355
        %v4388 = vpack.c.b16 %v4358, %v4357
        %v4389 = vpack.c.b16 %v4360, %v4359
        %v4390 = vpack.c.b16 %v4362, %v4361
        %v4391 = vpack.c.b16 %v4364, %v4363
        %v4392 = vpack.c.b16 %v4366, %v4365
        %v4393 = vpack.c.b16 %v4368, %v4367
        %v4394 = vpack.c.b16 %v4370, %v4369
        %v4395 = vpack.c.b16 %v4372, %v4371
        %v4396 = vpack.c.b16 %v4374, %v4373
        %v4397 = vpack.c.b16 %v4376, %v4375
        %v4398 = vpack.c.b16 %v4378, %v4377
        %v4399 = vpack.c.b16 %v4380, %v4379
        %v4400 = vpack.c.b16 %v4382, %v4381
        %v4401 = vpack.c.b16 %v4384, %v4383
        %v4402 = vpack.c.b16 %v4386, %v4385
        %4419 = vmatprep.subr.bf16.mxu0 0
        %4420 = vmatpush1.bf16.msra.mxu0 %v4387
        %4421 = vmatprep.subr.bf16.mxu0 0
        %4422 = vmatpush1.bf16.msra.mxu0 %v4388
        %4423 = vmatprep.subr.bf16.mxu0 0
        %4424 = vmatpush1.bf16.msra.mxu0 %v4389
        %4425 = vmatprep.subr.bf16.mxu0 0
        %4426 = vmatpush1.bf16.msra.mxu0 %v4390
        %4427 = vmatprep.subr.bf16.mxu0 0
        %4428 = vmatpush1.bf16.msra.mxu0 %v4391
        %4429 = vmatprep.subr.bf16.mxu0 0
        %4430 = vmatpush1.bf16.msra.mxu0 %v4392
        %4431 = vmatprep.subr.bf16.mxu0 0
        %4432 = vmatpush1.bf16.msra.mxu0 %v4393
        %4433 = vmatprep.subr.bf16.mxu0 0
        %4434 = vmatpush1.bf16.msra.mxu0 %v4394
        %4435 = vmatprep.subr.bf16.mxu0 0
        %4436 = vmatpush1.bf16.msra.mxu0 %v4395
        %4437 = vmatprep.subr.bf16.mxu0 0
        %4438 = vmatpush1.bf16.msra.mxu0 %v4396
        %4439 = vmatprep.subr.bf16.mxu0 0
        %4440 = vmatpush1.bf16.msra.mxu0 %v4397
        %4441 = vmatprep.subr.bf16.mxu0 0
        %4442 = vmatpush1.bf16.msra.mxu0 %v4398
        %4443 = vmatprep.subr.bf16.mxu0 0
        %4444 = vmatpush1.bf16.msra.mxu0 %v4399
        %4445 = vmatprep.subr.bf16.mxu0 0
        %4446 = vmatpush1.bf16.msra.mxu0 %v4400
        %4447 = vmatprep.subr.bf16.mxu0 0
        %4448 = vmatpush1.bf16.msra.mxu0 %v4401
        %4449 = vmatprep.subr.bf16.mxu0 0
        %4450 = vmatpush1.bf16.msra.mxu0 %v4402
        %4451 = vmatprep.mubr.bf16.mxu0 %v4283
        %4452 = vmatmul.mubr.bf16.gmra.mrb[0].mxu0 %v4282
        %v4453 = vpop.f32.mrb[0].mxu0
        %v4454 = vadd.f32 0.0, %v4453
        %v4455 = vpop.f32.mrb[0].mxu0
        %v4456 = vpop.f32.mrb[0].mxu0
        %v4457 = vadd.f32 0.0, %v4456
        %v4458 = vpop.f32.mrb[0].mxu0
        %4459 = vmatprep.mubr.bf16.mxu0 %v4285
        %4460 = vmatmul.mubr.bf16.gmra.mrb[0].mxu0 %v4284
        %v4461 = vpop.f32.mrb[0].mxu0
        %v4462 = vadd.f32 0.0, %v4461
        %v4463 = vpop.f32.mrb[0].mxu0
        %v4464 = vpop.f32.mrb[0].mxu0
        %v4465 = vadd.f32 0.0, %v4464
        %v4466 = vpop.f32.mrb[0].mxu0
        %4467 = vmatprep.mubr.bf16.mxu0 %v4287
        %4468 = vmatmul.mubr.bf16.gmra.mrb[0].mxu0 %v4286
        %v4469 = vpop.f32.mrb[0].mxu0
        %v4470 = vadd.f32 0.0, %v4469
        %v4471 = vpop.f32.mrb[0].mxu0
        %v4472 = vpop.f32.mrb[0].mxu0
        %v4473 = vadd.f32 0.0, %v4472
        %v4474 = vpop.f32.mrb[0].mxu0
        %4475 = vmatprep.mubr.bf16.mxu0 %v4289
        %4476 = vmatmul.mubr.bf16.gmra.mrb[0].mxu0 %v4288
        %v4477 = vpop.f32.mrb[0].mxu0
        %v4478 = vadd.f32 0.0, %v4477
        %v4479 = vpop.f32.mrb[0].mxu0
        %v4480 = vpop.f32.mrb[0].mxu0
        %v4481 = vadd.f32 0.0, %v4480
        %v4482 = vpop.f32.mrb[0].mxu0
        %4483 = vdwg.mxu0
        %v4484 = vld [vmem:[#allocation3] sm:$0xff]
        %v4485 = vld [vmem:[#allocation3 + $0x8] sm:$0xff]
        %v4486 = vld [vmem:[#allocation3 + $0x10] sm:$0xff]
        %v4487 = vld [vmem:[#allocation3 + $0x18] sm:$0xff]
        %v4488 = vld [vmem:[#allocation3 + $0x20] sm:$0xff]
        %v4489 = vld [vmem:[#allocation3 + $0x28] sm:$0xff]
        %v4490 = vld [vmem:[#allocation3 + $0x30] sm:$0xff]
        %v4491 = vld [vmem:[#allocation3 + $0x38] sm:$0xff]
        %v4492 = vadd.f32 %v4484, %v4454
        %v4493 = vadd.f32 %v4485, %v4457
        %v4494 = vadd.f32 %v4486, %v4462
        %v4495 = vadd.f32 %v4487, %v4465
        %v4496 = vadd.f32 %v4488, %v4470
        %v4497 = vadd.f32 %v4489, %v4473
        %v4498 = vadd.f32 %v4490, %v4478
        %v4499 = vadd.f32 %v4491, %v4481
        %4500 = vst [vmem:[#allocation3] sm:$0xff] %v4492
        %4501 = vst [vmem:[#allocation3 + $0x8] sm:$0xff] %v4493
        %4502 = vst [vmem:[#allocation3 + $0x10] sm:$0xff] %v4494
        %4503 = vst [vmem:[#allocation3 + $0x18] sm:$0xff] %v4495
        %4504 = vst [vmem:[#allocation3 + $0x20] sm:$0xff] %v4496
        %4505 = vst [vmem:[#allocation3 + $0x28] sm:$0xff] %v4497
        %4506 = vst [vmem:[#allocation3 + $0x30] sm:$0xff] %v4498
        %4507 = vst [vmem:[#allocation3 + $0x38] sm:$0xff] %v4499
        %v4508 = vld [vmem:[#allocation3] sm:$0xff]
        %v4509 = vld [vmem:[#allocation3 + $0x8] sm:$0xff]
        %v4510 = vld [vmem:[#allocation3 + $0x10] sm:$0xff]
        %v4511 = vld [vmem:[#allocation3 + $0x18] sm:$0xff]
        %v4512 = vld [vmem:[#allocation3 + $0x20] sm:$0xff]
        %v4513 = vld [vmem:[#allocation3 + $0x28] sm:$0xff]
        %v4514 = vld [vmem:[#allocation3 + $0x30] sm:$0xff]
        %v4515 = vld [vmem:[#allocation3 + $0x38] sm:$0xff]
        %s4516 = scalar_lea.vmem %s209, 64 [#allocation7]
        %4517 = vst [vmem:[%s4516] sm:$0xff] %v4508
        %4518 = vst [vmem:[%s4516 + $0x8] sm:$0xff] %v4509
        %4519 = vst [vmem:[%s4516 + $0x10] sm:$0xff] %v4510
        %4520 = vst [vmem:[%s4516 + $0x18] sm:$0xff] %v4511
        %4521 = vst [vmem:[%s4516 + $0x20] sm:$0xff] %v4512
        %4522 = vst [vmem:[%s4516 + $0x28] sm:$0xff] %v4513
        %4523 = vst [vmem:[%s4516 + $0x30] sm:$0xff] %v4514
        %4524 = vst [vmem:[%s4516 + $0x38] sm:$0xff] %v4515
        %v4525 = vadd.f32 %v4508, %v4509
        %v4526 = vadd.f32 %v4525, %v4510
        %v4527 = vadd.f32 %v4526, %v4511
        %v4528 = vadd.f32 %v4527, %v4512
        %v4529 = vadd.f32 %v4528, %v4513
        %v4530 = vadd.f32 %v4529, %v4514
        %v4531 = vadd.f32 %v4530, %v4515
        %v4532 = vrot.slane %v4531, 4
        %v4533 = vadd.f32 %v4531, %v4532
        %v4534 = vrot.slane %v4533, 2
        %v4535 = vadd.f32 %v4533, %v4534
        %v4536 = vrot.slane %v4535, 1
        %v4537 = vadd.f32 %v4535, %v4536
        %v4538 = vadd.f32 %v3069, %v4537
        %v4539 = vmul.f32 %v4508, %v4508
        %v4540 = vmul.f32 %v4509, %v4509
        %v4541 = vmul.f32 %v4510, %v4510
        %v4542 = vmul.f32 %v4511, %v4511
        %v4543 = vmul.f32 %v4512, %v4512
        %v4544 = vmul.f32 %v4513, %v4513
        %v4545 = vmul.f32 %v4514, %v4514
        %v4546 = vmul.f32 %v4515, %v4515
        %v4547 = vadd.f32 %v4539, %v4540
        %v4548 = vadd.f32 %v4547, %v4541
        %v4549 = vadd.f32 %v4548, %v4542
        %v4550 = vadd.f32 %v4549, %v4543
        %v4551 = vadd.f32 %v4550, %v4544
        %v4552 = vadd.f32 %v4551, %v4545
        %v4553 = vadd.f32 %v4552, %v4546
        %v4554 = vrot.slane %v4553, 4
        %v4555 = vadd.f32 %v4553, %v4554
        %v4556 = vrot.slane %v4555, 2
        %v4557 = vadd.f32 %v4555, %v4556
        %v4558 = vrot.slane %v4557, 1
        %v4559 = vadd.f32 %v4557, %v4558
        %v4560 = vadd.f32 %v3091, %v4559
        %v4561 = vld [vmem:[#allocation2] sm:$0xf0]
        %v4562 = vld [vmem:[#allocation2 + $0x8] sm:$0xf0]
        %v4563 = vld [vmem:[#allocation2 + $0x10] sm:$0xff]
        %v4564 = vld [vmem:[#allocation2 + $0x18] sm:$0xff]
        %v4565 = vld [vmem:[#allocation2 + $0x20] sm:$0xff]
        %v4566 = vld [vmem:[#allocation2 + $0x28] sm:$0xff]
        %v4567 = vld [vmem:[#allocation2 + $0x30] sm:$0xff]
        %v4568 = vld [vmem:[#allocation2 + $0x38] sm:$0xff]
        %v4569 = vld [vmem:[#allocation2 + $0x40] sm:$0xf]
        %v4570 = vld [vmem:[#allocation2 + $0x48] sm:$0xf]
        %s4571 = scalar_lea.vmem [#allocation4], 1920
        %v4572 = vld [vmem:[%s4571] sm:$0xf]
        %v4573 = vld [vmem:[%s4571 + $0x4] sm:$0xf]
        %v4574 = vld [vmem:[%s4571 + $0x8] sm:$0xf]
        %v4575 = vld [vmem:[%s4571 + $0xc] sm:$0xf]
        %v4576 = vld [vmem:[%s4571 + $0x10] sm:$0xf]
        %v4577 = vld [vmem:[%s4571 + $0x14] sm:$0xf]
        %v4578 = vld [vmem:[%s4571 + $0x18] sm:$0xf]
        %v4579 = vld [vmem:[%s4571 + $0x1c] sm:$0xf]
        %v4580 = vld [vmem:[%s4571 + $0x20] sm:$0xf]
        %v4581 = vld [vmem:[%s4571 + $0x24] sm:$0xf]
        %v4582 = vld [vmem:[%s4571 + $0x28] sm:$0xf]
        %v4583 = vld [vmem:[%s4571 + $0x2c] sm:$0xf]
        %v4584 = vld [vmem:[%s4571 + $0x30] sm:$0xf]
        %v4585 = vld [vmem:[%s4571 + $0x34] sm:$0xf]
        %v4586 = vld [vmem:[%s4571 + $0x38] sm:$0xf]
        %v4587 = vld [vmem:[%s4571 + $0x3c] sm:$0xf]
        %v4588 = vld [vmem:[%s4571 + $0x40] sm:$0xf]
        %v4589 = vld [vmem:[%s4571 + $0x44] sm:$0xf]
        %v4590 = vld [vmem:[%s4571 + $0x48] sm:$0xf]
        %v4591 = vld [vmem:[%s4571 + $0x4c] sm:$0xf]
        %v4592 = vld [vmem:[%s4571 + $0x50] sm:$0xf]
        %v4593 = vld [vmem:[%s4571 + $0x54] sm:$0xf]
        %v4594 = vld [vmem:[%s4571 + $0x58] sm:$0xf]
        %v4595 = vld [vmem:[%s4571 + $0x5c] sm:$0xf]
        %v4596 = vld [vmem:[%s4571 + $0x60] sm:$0xf]
        %v4597 = vld [vmem:[%s4571 + $0x64] sm:$0xf]
        %v4598 = vld [vmem:[%s4571 + $0x68] sm:$0xf]
        %v4599 = vld [vmem:[%s4571 + $0x6c] sm:$0xf]
        %v4600 = vld [vmem:[%s4571 + $0x70] sm:$0xf]
        %v4601 = vld [vmem:[%s4571 + $0x74] sm:$0xf]
        %v4602 = vld [vmem:[%s4571 + $0x78] sm:$0xf]
        %v4603 = vld [vmem:[%s4571 + $0x7c] sm:$0xf]
        %v4614 = vrot.slane %v4561, 4
        %v4615 = vrot.slane %v4563, 4
        %v4616 = vsel %vm1622, %v4614, %v4615
        %v4617 = vrot.slane %v4562, 4
        %v4618 = vrot.slane %v4564, 4
        %v4619 = vsel %vm1622, %v4617, %v4618
        %v4620 = vrot.slane %v4565, 4
        %v4621 = vsel %vm1622, %v4615, %v4620
        %v4622 = vrot.slane %v4566, 4
        %v4623 = vsel %vm1622, %v4618, %v4622
        %v4624 = vrot.slane %v4567, 4
        %v4625 = vsel %vm1622, %v4620, %v4624
        %v4626 = vrot.slane %v4568, 4
        %v4627 = vsel %vm1622, %v4622, %v4626
        %v4628 = vrot.slane %v4569, 4
        %v4629 = vsel %vm1622, %v4624, %v4628
        %v4630 = vrot.slane %v4570, 4
        %v4631 = vsel %vm1622, %v4626, %v4630
        %v4672 = vunpack.c.l.b16 %v4572
        %v4673 = vunpack.c.l.b16 %v4573
        %v4674 = vunpack.c.l.b16 %v4574
        %v4675 = vunpack.c.l.b16 %v4575
        %v4676 = vunpack.c.l.b16 %v4576
        %v4677 = vunpack.c.l.b16 %v4577
        %v4678 = vunpack.c.l.b16 %v4578
        %v4679 = vunpack.c.l.b16 %v4579
        %v4680 = vunpack.c.l.b16 %v4580
        %v4681 = vunpack.c.l.b16 %v4581
        %v4682 = vunpack.c.l.b16 %v4582
        %v4683 = vunpack.c.l.b16 %v4583
        %v4684 = vunpack.c.l.b16 %v4584
        %v4685 = vunpack.c.l.b16 %v4585
        %v4686 = vunpack.c.l.b16 %v4586
        %v4687 = vunpack.c.l.b16 %v4587
        %v4688 = vunpack.c.l.b16 %v4588
        %v4689 = vunpack.c.l.b16 %v4589
        %v4690 = vunpack.c.l.b16 %v4590
        %v4691 = vunpack.c.l.b16 %v4591
        %v4692 = vunpack.c.l.b16 %v4592
        %v4693 = vunpack.c.l.b16 %v4593
        %v4694 = vunpack.c.l.b16 %v4594
        %v4695 = vunpack.c.l.b16 %v4595
        %v4696 = vunpack.c.l.b16 %v4596
        %v4697 = vunpack.c.l.b16 %v4597
        %v4698 = vunpack.c.l.b16 %v4598
        %v4699 = vunpack.c.l.b16 %v4599
        %v4700 = vunpack.c.l.b16 %v4600
        %v4701 = vunpack.c.l.b16 %v4601
        %v4702 = vunpack.c.l.b16 %v4602
        %v4703 = vunpack.c.l.b16 %v4603
        %v4704 = vpack.c.b16 %v4673, %v4672
        %v4705 = vpack.c.b16 %v4675, %v4674
        %v4706 = vpack.c.b16 %v4677, %v4676
        %v4707 = vpack.c.b16 %v4679, %v4678
        %v4708 = vpack.c.b16 %v4681, %v4680
        %v4709 = vpack.c.b16 %v4683, %v4682
        %v4710 = vpack.c.b16 %v4685, %v4684
        %v4711 = vpack.c.b16 %v4687, %v4686
        %v4712 = vpack.c.b16 %v4689, %v4688
        %v4713 = vpack.c.b16 %v4691, %v4690
        %v4714 = vpack.c.b16 %v4693, %v4692
        %v4715 = vpack.c.b16 %v4695, %v4694
        %v4716 = vpack.c.b16 %v4697, %v4696
        %v4717 = vpack.c.b16 %v4699, %v4698
        %v4718 = vpack.c.b16 %v4701, %v4700
        %v4719 = vpack.c.b16 %v4703, %v4702
        %4736 = vmatprep.subr.bf16.mxu0 0
        %4737 = vmatpush1.bf16.msra.mxu0 %v4704
        %4738 = vmatprep.subr.bf16.mxu0 0
        %4739 = vmatpush1.bf16.msra.mxu0 %v4705
        %4740 = vmatprep.subr.bf16.mxu0 0
        %4741 = vmatpush1.bf16.msra.mxu0 %v4706
        %4742 = vmatprep.subr.bf16.mxu0 0
        %4743 = vmatpush1.bf16.msra.mxu0 %v4707
        %4744 = vmatprep.subr.bf16.mxu0 0
        %4745 = vmatpush1.bf16.msra.mxu0 %v4708
        %4746 = vmatprep.subr.bf16.mxu0 0
        %4747 = vmatpush1.bf16.msra.mxu0 %v4709
        %4748 = vmatprep.subr.bf16.mxu0 0
        %4749 = vmatpush1.bf16.msra.mxu0 %v4710
        %4750 = vmatprep.subr.bf16.mxu0 0
        %4751 = vmatpush1.bf16.msra.mxu0 %v4711
        %4752 = vmatprep.subr.bf16.mxu0 0
        %4753 = vmatpush1.bf16.msra.mxu0 %v4712
        %4754 = vmatprep.subr.bf16.mxu0 0
        %4755 = vmatpush1.bf16.msra.mxu0 %v4713
        %4756 = vmatprep.subr.bf16.mxu0 0
        %4757 = vmatpush1.bf16.msra.mxu0 %v4714
        %4758 = vmatprep.subr.bf16.mxu0 0
        %4759 = vmatpush1.bf16.msra.mxu0 %v4715
        %4760 = vmatprep.subr.bf16.mxu0 0
        %4761 = vmatpush1.bf16.msra.mxu0 %v4716
        %4762 = vmatprep.subr.bf16.mxu0 0
        %4763 = vmatpush1.bf16.msra.mxu0 %v4717
        %4764 = vmatprep.subr.bf16.mxu0 0
        %4765 = vmatpush1.bf16.msra.mxu0 %v4718
        %4766 = vmatprep.subr.bf16.mxu0 0
        %4767 = vmatpush1.bf16.msra.mxu0 %v4719
        %4768 = vmatprep.mubr.bf16.mxu0 %v4619
        %4769 = vmatmul.mubr.bf16.gmra.mrb[0].mxu0 %v4616
        %v4770 = vpop.f32.mrb[0].mxu0
        %v4771 = vadd.f32 0.0, %v4770
        %v4772 = vpop.f32.mrb[0].mxu0
        %v4773 = vpop.f32.mrb[0].mxu0
        %v4774 = vadd.f32 0.0, %v4773
        %v4775 = vpop.f32.mrb[0].mxu0
        %4776 = vmatprep.mubr.bf16.mxu0 %v4623
        %4777 = vmatmul.mubr.bf16.gmra.mrb[0].mxu0 %v4621
        %v4778 = vpop.f32.mrb[0].mxu0
        %v4779 = vadd.f32 0.0, %v4778
        %v4780 = vpop.f32.mrb[0].mxu0
        %v4781 = vpop.f32.mrb[0].mxu0
        %v4782 = vadd.f32 0.0, %v4781
        %v4783 = vpop.f32.mrb[0].mxu0
        %4784 = vmatprep.mubr.bf16.mxu0 %v4627
        %4785 = vmatmul.mubr.bf16.gmra.mrb[0].mxu0 %v4625
        %v4786 = vpop.f32.mrb[0].mxu0
        %v4787 = vadd.f32 0.0, %v4786
        %v4788 = vpop.f32.mrb[0].mxu0
        %v4789 = vpop.f32.mrb[0].mxu0
        %v4790 = vadd.f32 0.0, %v4789
        %v4791 = vpop.f32.mrb[0].mxu0
        %4792 = vmatprep.mubr.bf16.mxu0 %v4631
        %4793 = vmatmul.mubr.bf16.gmra.mrb[0].mxu0 %v4629
        %v4794 = vpop.f32.mrb[0].mxu0
        %v4795 = vadd.f32 0.0, %v4794
        %v4796 = vpop.f32.mrb[0].mxu0
        %v4797 = vpop.f32.mrb[0].mxu0
        %v4798 = vadd.f32 0.0, %v4797
        %v4799 = vpop.f32.mrb[0].mxu0
        %4800 = vdwg.mxu0
        %4801 = vst [vmem:[#allocation3] sm:$0xff] %v4771
        %4802 = vst [vmem:[#allocation3 + $0x8] sm:$0xff] %v4774
        %4803 = vst [vmem:[#allocation3 + $0x10] sm:$0xff] %v4779
        %4804 = vst [vmem:[#allocation3 + $0x18] sm:$0xff] %v4782
        %4805 = vst [vmem:[#allocation3 + $0x20] sm:$0xff] %v4787
        %4806 = vst [vmem:[#allocation3 + $0x28] sm:$0xff] %v4790
        %4807 = vst [vmem:[#allocation3 + $0x30] sm:$0xff] %v4795
        %4808 = vst [vmem:[#allocation3 + $0x38] sm:$0xff] %v4798
        %v4809 = vld [vmem:[%s663] sm:$0xf0]
        %v4810 = vld [vmem:[%s663 + $0x8] sm:$0xf0]
        %v4811 = vld [vmem:[%s663 + $0x10] sm:$0xff]
        %v4812 = vld [vmem:[%s663 + $0x18] sm:$0xff]
        %v4813 = vld [vmem:[%s663 + $0x20] sm:$0xff]
        %v4814 = vld [vmem:[%s663 + $0x28] sm:$0xff]
        %v4815 = vld [vmem:[%s663 + $0x30] sm:$0xff]
        %v4816 = vld [vmem:[%s663 + $0x38] sm:$0xff]
        %v4817 = vld [vmem:[%s663 + $0x40] sm:$0xf]
        %v4818 = vld [vmem:[%s663 + $0x48] sm:$0xf]
        %s4819 = scalar_lea.vmem [#allocation4], 2048
        %v4820 = vld [vmem:[%s4819] sm:$0xf]
        %v4821 = vld [vmem:[%s4819 + $0x4] sm:$0xf]
        %v4822 = vld [vmem:[%s4819 + $0x8] sm:$0xf]
        %v4823 = vld [vmem:[%s4819 + $0xc] sm:$0xf]
        %v4824 = vld [vmem:[%s4819 + $0x10] sm:$0xf]
        %v4825 = vld [vmem:[%s4819 + $0x14] sm:$0xf]
        %v4826 = vld [vmem:[%s4819 + $0x18] sm:$0xf]
        %v4827 = vld [vmem:[%s4819 + $0x1c] sm:$0xf]
        %v4828 = vld [vmem:[%s4819 + $0x20] sm:$0xf]
        %v4829 = vld [vmem:[%s4819 + $0x24] sm:$0xf]
        %v4830 = vld [vmem:[%s4819 + $0x28] sm:$0xf]
        %v4831 = vld [vmem:[%s4819 + $0x2c] sm:$0xf]
        %v4832 = vld [vmem:[%s4819 + $0x30] sm:$0xf]
        %v4833 = vld [vmem:[%s4819 + $0x34] sm:$0xf]
        %v4834 = vld [vmem:[%s4819 + $0x38] sm:$0xf]
        %v4835 = vld [vmem:[%s4819 + $0x3c] sm:$0xf]
        %v4836 = vld [vmem:[%s4819 + $0x40] sm:$0xf]
        %v4837 = vld [vmem:[%s4819 + $0x44] sm:$0xf]
        %v4838 = vld [vmem:[%s4819 + $0x48] sm:$0xf]
        %v4839 = vld [vmem:[%s4819 + $0x4c] sm:$0xf]
        %v4840 = vld [vmem:[%s4819 + $0x50] sm:$0xf]
        %v4841 = vld [vmem:[%s4819 + $0x54] sm:$0xf]
        %v4842 = vld [vmem:[%s4819 + $0x58] sm:$0xf]
        %v4843 = vld [vmem:[%s4819 + $0x5c] sm:$0xf]
        %v4844 = vld [vmem:[%s4819 + $0x60] sm:$0xf]
        %v4845 = vld [vmem:[%s4819 + $0x64] sm:$0xf]
        %v4846 = vld [vmem:[%s4819 + $0x68] sm:$0xf]
        %v4847 = vld [vmem:[%s4819 + $0x6c] sm:$0xf]
        %v4848 = vld [vmem:[%s4819 + $0x70] sm:$0xf]
        %v4849 = vld [vmem:[%s4819 + $0x74] sm:$0xf]
        %v4850 = vld [vmem:[%s4819 + $0x78] sm:$0xf]
        %v4851 = vld [vmem:[%s4819 + $0x7c] sm:$0xf]
        %v4862 = vrot.slane %v4809, 4
        %v4863 = vrot.slane %v4811, 4
        %v4864 = vsel %vm1622, %v4862, %v4863
        %v4865 = vrot.slane %v4810, 4
        %v4866 = vrot.slane %v4812, 4
        %v4867 = vsel %vm1622, %v4865, %v4866
        %v4868 = vrot.slane %v4813, 4
        %v4869 = vsel %vm1622, %v4863, %v4868
        %v4870 = vrot.slane %v4814, 4
        %v4871 = vsel %vm1622, %v4866, %v4870
        %v4872 = vrot.slane %v4815, 4
        %v4873 = vsel %vm1622, %v4868, %v4872
        %v4874 = vrot.slane %v4816, 4
        %v4875 = vsel %vm1622, %v4870, %v4874
        %v4876 = vrot.slane %v4817, 4
        %v4877 = vsel %vm1622, %v4872, %v4876
        %v4878 = vrot.slane %v4818, 4
        %v4879 = vsel %vm1622, %v4874, %v4878
        %v4920 = vunpack.c.l.b16 %v4820
        %v4921 = vunpack.c.l.b16 %v4821
        %v4922 = vunpack.c.l.b16 %v4822
        %v4923 = vunpack.c.l.b16 %v4823
        %v4924 = vunpack.c.l.b16 %v4824
        %v4925 = vunpack.c.l.b16 %v4825
        %v4926 = vunpack.c.l.b16 %v4826
        %v4927 = vunpack.c.l.b16 %v4827
        %v4928 = vunpack.c.l.b16 %v4828
        %v4929 = vunpack.c.l.b16 %v4829
        %v4930 = vunpack.c.l.b16 %v4830
        %v4931 = vunpack.c.l.b16 %v4831
        %v4932 = vunpack.c.l.b16 %v4832
        %v4933 = vunpack.c.l.b16 %v4833
        %v4934 = vunpack.c.l.b16 %v4834
        %v4935 = vunpack.c.l.b16 %v4835
        %v4936 = vunpack.c.l.b16 %v4836
        %v4937 = vunpack.c.l.b16 %v4837
        %v4938 = vunpack.c.l.b16 %v4838
        %v4939 = vunpack.c.l.b16 %v4839
        %v4940 = vunpack.c.l.b16 %v4840
        %v4941 = vunpack.c.l.b16 %v4841
        %v4942 = vunpack.c.l.b16 %v4842
        %v4943 = vunpack.c.l.b16 %v4843
        %v4944 = vunpack.c.l.b16 %v4844
        %v4945 = vunpack.c.l.b16 %v4845
        %v4946 = vunpack.c.l.b16 %v4846
        %v4947 = vunpack.c.l.b16 %v4847
        %v4948 = vunpack.c.l.b16 %v4848
        %v4949 = vunpack.c.l.b16 %v4849
        %v4950 = vunpack.c.l.b16 %v4850
        %v4951 = vunpack.c.l.b16 %v4851
        %v4952 = vpack.c.b16 %v4921, %v4920
        %v4953 = vpack.c.b16 %v4923, %v4922
        %v4954 = vpack.c.b16 %v4925, %v4924
        %v4955 = vpack.c.b16 %v4927, %v4926
        %v4956 = vpack.c.b16 %v4929, %v4928
        %v4957 = vpack.c.b16 %v4931, %v4930
        %v4958 = vpack.c.b16 %v4933, %v4932
        %v4959 = vpack.c.b16 %v4935, %v4934
        %v4960 = vpack.c.b16 %v4937, %v4936
        %v4961 = vpack.c.b16 %v4939, %v4938
        %v4962 = vpack.c.b16 %v4941, %v4940
        %v4963 = vpack.c.b16 %v4943, %v4942
        %v4964 = vpack.c.b16 %v4945, %v4944
        %v4965 = vpack.c.b16 %v4947, %v4946
        %v4966 = vpack.c.b16 %v4949, %v4948
        %v4967 = vpack.c.b16 %v4951, %v4950
        %4984 = vmatprep.subr.bf16.mxu0 0
        %4985 = vmatpush1.bf16.msra.mxu0 %v4952
        %4986 = vmatprep.subr.bf16.mxu0 0
        %4987 = vmatpush1.bf16.msra.mxu0 %v4953
        %4988 = vmatprep.subr.bf16.mxu0 0
        %4989 = vmatpush1.bf16.msra.mxu0 %v4954
        %4990 = vmatprep.subr.bf16.mxu0 0
        %4991 = vmatpush1.bf16.msra.mxu0 %v4955
        %4992 = vmatprep.subr.bf16.mxu0 0
        %4993 = vmatpush1.bf16.msra.mxu0 %v4956
        %4994 = vmatprep.subr.bf16.mxu0 0
        %4995 = vmatpush1.bf16.msra.mxu0 %v4957
        %4996 = vmatprep.subr.bf16.mxu0 0
        %4997 = vmatpush1.bf16.msra.mxu0 %v4958
        %4998 = vmatprep.subr.bf16.mxu0 0
        %4999 = vmatpush1.bf16.msra.mxu0 %v4959
        %5000 = vmatprep.subr.bf16.mxu0 0
        %5001 = vmatpush1.bf16.msra.mxu0 %v4960
        %5002 = vmatprep.subr.bf16.mxu0 0
        %5003 = vmatpush1.bf16.msra.mxu0 %v4961
        %5004 = vmatprep.subr.bf16.mxu0 0
        %5005 = vmatpush1.bf16.msra.mxu0 %v4962
        %5006 = vmatprep.subr.bf16.mxu0 0
        %5007 = vmatpush1.bf16.msra.mxu0 %v4963
        %5008 = vmatprep.subr.bf16.mxu0 0
        %5009 = vmatpush1.bf16.msra.mxu0 %v4964
        %5010 = vmatprep.subr.bf16.mxu0 0
        %5011 = vmatpush1.bf16.msra.mxu0 %v4965
        %5012 = vmatprep.subr.bf16.mxu0 0
        %5013 = vmatpush1.bf16.msra.mxu0 %v4966
        %5014 = vmatprep.subr.bf16.mxu0 0
        %5015 = vmatpush1.bf16.msra.mxu0 %v4967
        %5016 = vmatprep.mubr.bf16.mxu0 %v4867
        %5017 = vmatmul.mubr.bf16.gmra.mrb[0].mxu0 %v4864
        %v5018 = vpop.f32.mrb[0].mxu0
        %v5019 = vadd.f32 0.0, %v5018
        %v5020 = vpop.f32.mrb[0].mxu0
        %v5021 = vpop.f32.mrb[0].mxu0
        %v5022 = vadd.f32 0.0, %v5021
        %v5023 = vpop.f32.mrb[0].mxu0
        %5024 = vmatprep.mubr.bf16.mxu0 %v4871
        %5025 = vmatmul.mubr.bf16.gmra.mrb[0].mxu0 %v4869
        %v5026 = vpop.f32.mrb[0].mxu0
        %v5027 = vadd.f32 0.0, %v5026
        %v5028 = vpop.f32.mrb[0].mxu0
        %v5029 = vpop.f32.mrb[0].mxu0
        %v5030 = vadd.f32 0.0, %v5029
        %v5031 = vpop.f32.mrb[0].mxu0
        %5032 = vmatprep.mubr.bf16.mxu0 %v4875
        %5033 = vmatmul.mubr.bf16.gmra.mrb[0].mxu0 %v4873
        %v5034 = vpop.f32.mrb[0].mxu0
        %v5035 = vadd.f32 0.0, %v5034
        %v5036 = vpop.f32.mrb[0].mxu0
        %v5037 = vpop.f32.mrb[0].mxu0
        %v5038 = vadd.f32 0.0, %v5037
        %v5039 = vpop.f32.mrb[0].mxu0
        %5040 = vmatprep.mubr.bf16.mxu0 %v4879
        %5041 = vmatmul.mubr.bf16.gmra.mrb[0].mxu0 %v4877
        %v5042 = vpop.f32.mrb[0].mxu0
        %v5043 = vadd.f32 0.0, %v5042
        %v5044 = vpop.f32.mrb[0].mxu0
        %v5045 = vpop.f32.mrb[0].mxu0
        %v5046 = vadd.f32 0.0, %v5045
        %v5047 = vpop.f32.mrb[0].mxu0
        %5048 = vdwg.mxu0
        %v5049 = vld [vmem:[#allocation3] sm:$0xff]
        %v5050 = vld [vmem:[#allocation3 + $0x8] sm:$0xff]
        %v5051 = vld [vmem:[#allocation3 + $0x10] sm:$0xff]
        %v5052 = vld [vmem:[#allocation3 + $0x18] sm:$0xff]
        %v5053 = vld [vmem:[#allocation3 + $0x20] sm:$0xff]
        %v5054 = vld [vmem:[#allocation3 + $0x28] sm:$0xff]
        %v5055 = vld [vmem:[#allocation3 + $0x30] sm:$0xff]
        %v5056 = vld [vmem:[#allocation3 + $0x38] sm:$0xff]
        %v5057 = vadd.f32 %v5049, %v5019
        %v5058 = vadd.f32 %v5050, %v5022
        %v5059 = vadd.f32 %v5051, %v5027
        %v5060 = vadd.f32 %v5052, %v5030
        %v5061 = vadd.f32 %v5053, %v5035
        %v5062 = vadd.f32 %v5054, %v5038
        %v5063 = vadd.f32 %v5055, %v5043
        %v5064 = vadd.f32 %v5056, %v5046
        %5065 = vst [vmem:[#allocation3] sm:$0xff] %v5057
        %5066 = vst [vmem:[#allocation3 + $0x8] sm:$0xff] %v5058
        %5067 = vst [vmem:[#allocation3 + $0x10] sm:$0xff] %v5059
        %5068 = vst [vmem:[#allocation3 + $0x18] sm:$0xff] %v5060
        %5069 = vst [vmem:[#allocation3 + $0x20] sm:$0xff] %v5061
        %5070 = vst [vmem:[#allocation3 + $0x28] sm:$0xff] %v5062
        %5071 = vst [vmem:[#allocation3 + $0x30] sm:$0xff] %v5063
        %5072 = vst [vmem:[#allocation3 + $0x38] sm:$0xff] %v5064
        %v5073 = vld [vmem:[%s897] sm:$0xf0]
        %v5074 = vld [vmem:[%s897 + $0x8] sm:$0xf0]
        %v5075 = vld [vmem:[%s897 + $0x10] sm:$0xff]
        %v5076 = vld [vmem:[%s897 + $0x18] sm:$0xff]
        %v5077 = vld [vmem:[%s897 + $0x20] sm:$0xff]
        %v5078 = vld [vmem:[%s897 + $0x28] sm:$0xff]
        %v5079 = vld [vmem:[%s897 + $0x30] sm:$0xff]
        %v5080 = vld [vmem:[%s897 + $0x38] sm:$0xff]
        %v5081 = vld [vmem:[%s897 + $0x40] sm:$0xf]
        %v5082 = vld [vmem:[%s897 + $0x48] sm:$0xf]
        %s5083 = scalar_lea.vmem [#allocation4], 2176
        %v5084 = vld [vmem:[%s5083] sm:$0xf]
        %v5085 = vld [vmem:[%s5083 + $0x4] sm:$0xf]
        %v5086 = vld [vmem:[%s5083 + $0x8] sm:$0xf]
        %v5087 = vld [vmem:[%s5083 + $0xc] sm:$0xf]
        %v5088 = vld [vmem:[%s5083 + $0x10] sm:$0xf]
        %v5089 = vld [vmem:[%s5083 + $0x14] sm:$0xf]
        %v5090 = vld [vmem:[%s5083 + $0x18] sm:$0xf]
        %v5091 = vld [vmem:[%s5083 + $0x1c] sm:$0xf]
        %v5092 = vld [vmem:[%s5083 + $0x20] sm:$0xf]
        %v5093 = vld [vmem:[%s5083 + $0x24] sm:$0xf]
        %v5094 = vld [vmem:[%s5083 + $0x28] sm:$0xf]
        %v5095 = vld [vmem:[%s5083 + $0x2c] sm:$0xf]
        %v5096 = vld [vmem:[%s5083 + $0x30] sm:$0xf]
        %v5097 = vld [vmem:[%s5083 + $0x34] sm:$0xf]
        %v5098 = vld [vmem:[%s5083 + $0x38] sm:$0xf]
        %v5099 = vld [vmem:[%s5083 + $0x3c] sm:$0xf]
        %v5100 = vld [vmem:[%s5083 + $0x40] sm:$0xf]
        %v5101 = vld [vmem:[%s5083 + $0x44] sm:$0xf]
        %v5102 = vld [vmem:[%s5083 + $0x48] sm:$0xf]
        %v5103 = vld [vmem:[%s5083 + $0x4c] sm:$0xf]
        %v5104 = vld [vmem:[%s5083 + $0x50] sm:$0xf]
        %v5105 = vld [vmem:[%s5083 + $0x54] sm:$0xf]
        %v5106 = vld [vmem:[%s5083 + $0x58] sm:$0xf]
        %v5107 = vld [vmem:[%s5083 + $0x5c] sm:$0xf]
        %v5108 = vld [vmem:[%s5083 + $0x60] sm:$0xf]
        %v5109 = vld [vmem:[%s5083 + $0x64] sm:$0xf]
        %v5110 = vld [vmem:[%s5083 + $0x68] sm:$0xf]
        %v5111 = vld [vmem:[%s5083 + $0x6c] sm:$0xf]
        %v5112 = vld [vmem:[%s5083 + $0x70] sm:$0xf]
        %v5113 = vld [vmem:[%s5083 + $0x74] sm:$0xf]
        %v5114 = vld [vmem:[%s5083 + $0x78] sm:$0xf]
        %v5115 = vld [vmem:[%s5083 + $0x7c] sm:$0xf]
        %v5126 = vrot.slane %v5073, 4
        %v5127 = vrot.slane %v5075, 4
        %v5128 = vsel %vm1622, %v5126, %v5127
        %v5129 = vrot.slane %v5074, 4
        %v5130 = vrot.slane %v5076, 4
        %v5131 = vsel %vm1622, %v5129, %v5130
        %v5132 = vrot.slane %v5077, 4
        %v5133 = vsel %vm1622, %v5127, %v5132
        %v5134 = vrot.slane %v5078, 4
        %v5135 = vsel %vm1622, %v5130, %v5134
        %v5136 = vrot.slane %v5079, 4
        %v5137 = vsel %vm1622, %v5132, %v5136
        %v5138 = vrot.slane %v5080, 4
        %v5139 = vsel %vm1622, %v5134, %v5138
        %v5140 = vrot.slane %v5081, 4
        %v5141 = vsel %vm1622, %v5136, %v5140
        %v5142 = vrot.slane %v5082, 4
        %v5143 = vsel %vm1622, %v5138, %v5142
        %v5184 = vunpack.c.l.b16 %v5084
        %v5185 = vunpack.c.l.b16 %v5085
        %v5186 = vunpack.c.l.b16 %v5086
        %v5187 = vunpack.c.l.b16 %v5087
        %v5188 = vunpack.c.l.b16 %v5088
        %v5189 = vunpack.c.l.b16 %v5089
        %v5190 = vunpack.c.l.b16 %v5090
        %v5191 = vunpack.c.l.b16 %v5091
        %v5192 = vunpack.c.l.b16 %v5092
        %v5193 = vunpack.c.l.b16 %v5093
        %v5194 = vunpack.c.l.b16 %v5094
        %v5195 = vunpack.c.l.b16 %v5095
        %v5196 = vunpack.c.l.b16 %v5096
        %v5197 = vunpack.c.l.b16 %v5097
        %v5198 = vunpack.c.l.b16 %v5098
        %v5199 = vunpack.c.l.b16 %v5099
        %v5200 = vunpack.c.l.b16 %v5100
        %v5201 = vunpack.c.l.b16 %v5101
        %v5202 = vunpack.c.l.b16 %v5102
        %v5203 = vunpack.c.l.b16 %v5103
        %v5204 = vunpack.c.l.b16 %v5104
        %v5205 = vunpack.c.l.b16 %v5105
        %v5206 = vunpack.c.l.b16 %v5106
        %v5207 = vunpack.c.l.b16 %v5107
        %v5208 = vunpack.c.l.b16 %v5108
        %v5209 = vunpack.c.l.b16 %v5109
        %v5210 = vunpack.c.l.b16 %v5110
        %v5211 = vunpack.c.l.b16 %v5111
        %v5212 = vunpack.c.l.b16 %v5112
        %v5213 = vunpack.c.l.b16 %v5113
        %v5214 = vunpack.c.l.b16 %v5114
        %v5215 = vunpack.c.l.b16 %v5115
        %v5216 = vpack.c.b16 %v5185, %v5184
        %v5217 = vpack.c.b16 %v5187, %v5186
        %v5218 = vpack.c.b16 %v5189, %v5188
        %v5219 = vpack.c.b16 %v5191, %v5190
        %v5220 = vpack.c.b16 %v5193, %v5192
        %v5221 = vpack.c.b16 %v5195, %v5194
        %v5222 = vpack.c.b16 %v5197, %v5196
        %v5223 = vpack.c.b16 %v5199, %v5198
        %v5224 = vpack.c.b16 %v5201, %v5200
        %v5225 = vpack.c.b16 %v5203, %v5202
        %v5226 = vpack.c.b16 %v5205, %v5204
        %v5227 = vpack.c.b16 %v5207, %v5206
        %v5228 = vpack.c.b16 %v5209, %v5208
        %v5229 = vpack.c.b16 %v5211, %v5210
        %v5230 = vpack.c.b16 %v5213, %v5212
        %v5231 = vpack.c.b16 %v5215, %v5214
        %5248 = vmatprep.subr.bf16.mxu0 0
        %5249 = vmatpush1.bf16.msra.mxu0 %v5216
        %5250 = vmatprep.subr.bf16.mxu0 0
        %5251 = vmatpush1.bf16.msra.mxu0 %v5217
        %5252 = vmatprep.subr.bf16.mxu0 0
        %5253 = vmatpush1.bf16.msra.mxu0 %v5218
        %5254 = vmatprep.subr.bf16.mxu0 0
        %5255 = vmatpush1.bf16.msra.mxu0 %v5219
        %5256 = vmatprep.subr.bf16.mxu0 0
        %5257 = vmatpush1.bf16.msra.mxu0 %v5220
        %5258 = vmatprep.subr.bf16.mxu0 0
        %5259 = vmatpush1.bf16.msra.mxu0 %v5221
        %5260 = vmatprep.subr.bf16.mxu0 0
        %5261 = vmatpush1.bf16.msra.mxu0 %v5222
        %5262 = vmatprep.subr.bf16.mxu0 0
        %5263 = vmatpush1.bf16.msra.mxu0 %v5223
        %5264 = vmatprep.subr.bf16.mxu0 0
        %5265 = vmatpush1.bf16.msra.mxu0 %v5224
        %5266 = vmatprep.subr.bf16.mxu0 0
        %5267 = vmatpush1.bf16.msra.mxu0 %v5225
        %5268 = vmatprep.subr.bf16.mxu0 0
        %5269 = vmatpush1.bf16.msra.mxu0 %v5226
        %5270 = vmatprep.subr.bf16.mxu0 0
        %5271 = vmatpush1.bf16.msra.mxu0 %v5227
        %5272 = vmatprep.subr.bf16.mxu0 0
        %5273 = vmatpush1.bf16.msra.mxu0 %v5228
        %5274 = vmatprep.subr.bf16.mxu0 0
        %5275 = vmatpush1.bf16.msra.mxu0 %v5229
        %5276 = vmatprep.subr.bf16.mxu0 0
        %5277 = vmatpush1.bf16.msra.mxu0 %v5230
        %5278 = vmatprep.subr.bf16.mxu0 0
        %5279 = vmatpush1.bf16.msra.mxu0 %v5231
        %5280 = vmatprep.mubr.bf16.mxu0 %v5131
        %5281 = vmatmul.mubr.bf16.gmra.mrb[0].mxu0 %v5128
        %v5282 = vpop.f32.mrb[0].mxu0
        %v5283 = vadd.f32 0.0, %v5282
        %v5284 = vpop.f32.mrb[0].mxu0
        %v5285 = vpop.f32.mrb[0].mxu0
        %v5286 = vadd.f32 0.0, %v5285
        %v5287 = vpop.f32.mrb[0].mxu0
        %5288 = vmatprep.mubr.bf16.mxu0 %v5135
        %5289 = vmatmul.mubr.bf16.gmra.mrb[0].mxu0 %v5133
        %v5290 = vpop.f32.mrb[0].mxu0
        %v5291 = vadd.f32 0.0, %v5290
        %v5292 = vpop.f32.mrb[0].mxu0
        %v5293 = vpop.f32.mrb[0].mxu0
        %v5294 = vadd.f32 0.0, %v5293
        %v5295 = vpop.f32.mrb[0].mxu0
        %5296 = vmatprep.mubr.bf16.mxu0 %v5139
        %5297 = vmatmul.mubr.bf16.gmra.mrb[0].mxu0 %v5137
        %v5298 = vpop.f32.mrb[0].mxu0
        %v5299 = vadd.f32 0.0, %v5298
        %v5300 = vpop.f32.mrb[0].mxu0
        %v5301 = vpop.f32.mrb[0].mxu0
        %v5302 = vadd.f32 0.0, %v5301
        %v5303 = vpop.f32.mrb[0].mxu0
        %5304 = vmatprep.mubr.bf16.mxu0 %v5143
        %5305 = vmatmul.mubr.bf16.gmra.mrb[0].mxu0 %v5141
        %v5306 = vpop.f32.mrb[0].mxu0
        %v5307 = vadd.f32 0.0, %v5306
        %v5308 = vpop.f32.mrb[0].mxu0
        %v5309 = vpop.f32.mrb[0].mxu0
        %v5310 = vadd.f32 0.0, %v5309
        %v5311 = vpop.f32.mrb[0].mxu0
        %5312 = vdwg.mxu0
        %v5313 = vld [vmem:[#allocation3] sm:$0xff]
        %v5314 = vld [vmem:[#allocation3 + $0x8] sm:$0xff]
        %v5315 = vld [vmem:[#allocation3 + $0x10] sm:$0xff]
        %v5316 = vld [vmem:[#allocation3 + $0x18] sm:$0xff]
        %v5317 = vld [vmem:[#allocation3 + $0x20] sm:$0xff]
        %v5318 = vld [vmem:[#allocation3 + $0x28] sm:$0xff]
        %v5319 = vld [vmem:[#allocation3 + $0x30] sm:$0xff]
        %v5320 = vld [vmem:[#allocation3 + $0x38] sm:$0xff]
        %v5321 = vadd.f32 %v5313, %v5283
        %v5322 = vadd.f32 %v5314, %v5286
        %v5323 = vadd.f32 %v5315, %v5291
        %v5324 = vadd.f32 %v5316, %v5294
        %v5325 = vadd.f32 %v5317, %v5299
        %v5326 = vadd.f32 %v5318, %v5302
        %v5327 = vadd.f32 %v5319, %v5307
        %v5328 = vadd.f32 %v5320, %v5310
        %5329 = vst [vmem:[#allocation3] sm:$0xff] %v5321
        %5330 = vst [vmem:[#allocation3 + $0x8] sm:$0xff] %v5322
        %5331 = vst [vmem:[#allocation3 + $0x10] sm:$0xff] %v5323
        %5332 = vst [vmem:[#allocation3 + $0x18] sm:$0xff] %v5324
        %5333 = vst [vmem:[#allocation3 + $0x20] sm:$0xff] %v5325
        %5334 = vst [vmem:[#allocation3 + $0x28] sm:$0xff] %v5326
        %5335 = vst [vmem:[#allocation3 + $0x30] sm:$0xff] %v5327
        %5336 = vst [vmem:[#allocation3 + $0x38] sm:$0xff] %v5328
        %v5337 = vld [vmem:[#allocation2 + $0x10] sm:$0xff]
        %v5338 = vld [vmem:[#allocation2 + $0x18] sm:$0xff]
        %v5339 = vld [vmem:[#allocation2 + $0x20] sm:$0xff]
        %v5340 = vld [vmem:[#allocation2 + $0x28] sm:$0xff]
        %v5341 = vld [vmem:[#allocation2 + $0x30] sm:$0xff]
        %v5342 = vld [vmem:[#allocation2 + $0x38] sm:$0xff]
        %v5343 = vld [vmem:[#allocation2 + $0x40] sm:$0xff]
        %v5344 = vld [vmem:[#allocation2 + $0x48] sm:$0xff]
        %s5345 = scalar_lea.vmem [#allocation4], 2304
        %v5346 = vld [vmem:[%s5345] sm:$0xf]
        %v5347 = vld [vmem:[%s5345 + $0x4] sm:$0xf]
        %v5348 = vld [vmem:[%s5345 + $0x8] sm:$0xf]
        %v5349 = vld [vmem:[%s5345 + $0xc] sm:$0xf]
        %v5350 = vld [vmem:[%s5345 + $0x10] sm:$0xf]
        %v5351 = vld [vmem:[%s5345 + $0x14] sm:$0xf]
        %v5352 = vld [vmem:[%s5345 + $0x18] sm:$0xf]
        %v5353 = vld [vmem:[%s5345 + $0x1c] sm:$0xf]
        %v5354 = vld [vmem:[%s5345 + $0x20] sm:$0xf]
        %v5355 = vld [vmem:[%s5345 + $0x24] sm:$0xf]
        %v5356 = vld [vmem:[%s5345 + $0x28] sm:$0xf]
        %v5357 = vld [vmem:[%s5345 + $0x2c] sm:$0xf]
        %v5358 = vld [vmem:[%s5345 + $0x30] sm:$0xf]
        %v5359 = vld [vmem:[%s5345 + $0x34] sm:$0xf]
        %v5360 = vld [vmem:[%s5345 + $0x38] sm:$0xf]
        %v5361 = vld [vmem:[%s5345 + $0x3c] sm:$0xf]
        %v5362 = vld [vmem:[%s5345 + $0x40] sm:$0xf]
        %v5363 = vld [vmem:[%s5345 + $0x44] sm:$0xf]
        %v5364 = vld [vmem:[%s5345 + $0x48] sm:$0xf]
        %v5365 = vld [vmem:[%s5345 + $0x4c] sm:$0xf]
        %v5366 = vld [vmem:[%s5345 + $0x50] sm:$0xf]
        %v5367 = vld [vmem:[%s5345 + $0x54] sm:$0xf]
        %v5368 = vld [vmem:[%s5345 + $0x58] sm:$0xf]
        %v5369 = vld [vmem:[%s5345 + $0x5c] sm:$0xf]
        %v5370 = vld [vmem:[%s5345 + $0x60] sm:$0xf]
        %v5371 = vld [vmem:[%s5345 + $0x64] sm:$0xf]
        %v5372 = vld [vmem:[%s5345 + $0x68] sm:$0xf]
        %v5373 = vld [vmem:[%s5345 + $0x6c] sm:$0xf]
        %v5374 = vld [vmem:[%s5345 + $0x70] sm:$0xf]
        %v5375 = vld [vmem:[%s5345 + $0x74] sm:$0xf]
        %v5376 = vld [vmem:[%s5345 + $0x78] sm:$0xf]
        %v5377 = vld [vmem:[%s5345 + $0x7c] sm:$0xf]
        %v5410 = vunpack.c.l.b16 %v5346
        %v5411 = vunpack.c.l.b16 %v5347
        %v5412 = vunpack.c.l.b16 %v5348
        %v5413 = vunpack.c.l.b16 %v5349
        %v5414 = vunpack.c.l.b16 %v5350
        %v5415 = vunpack.c.l.b16 %v5351
        %v5416 = vunpack.c.l.b16 %v5352
        %v5417 = vunpack.c.l.b16 %v5353
        %v5418 = vunpack.c.l.b16 %v5354
        %v5419 = vunpack.c.l.b16 %v5355
        %v5420 = vunpack.c.l.b16 %v5356
        %v5421 = vunpack.c.l.b16 %v5357
        %v5422 = vunpack.c.l.b16 %v5358
        %v5423 = vunpack.c.l.b16 %v5359
        %v5424 = vunpack.c.l.b16 %v5360
        %v5425 = vunpack.c.l.b16 %v5361
        %v5426 = vunpack.c.l.b16 %v5362
        %v5427 = vunpack.c.l.b16 %v5363
        %v5428 = vunpack.c.l.b16 %v5364
        %v5429 = vunpack.c.l.b16 %v5365
        %v5430 = vunpack.c.l.b16 %v5366
        %v5431 = vunpack.c.l.b16 %v5367
        %v5432 = vunpack.c.l.b16 %v5368
        %v5433 = vunpack.c.l.b16 %v5369
        %v5434 = vunpack.c.l.b16 %v5370
        %v5435 = vunpack.c.l.b16 %v5371
        %v5436 = vunpack.c.l.b16 %v5372
        %v5437 = vunpack.c.l.b16 %v5373
        %v5438 = vunpack.c.l.b16 %v5374
        %v5439 = vunpack.c.l.b16 %v5375
        %v5440 = vunpack.c.l.b16 %v5376
        %v5441 = vunpack.c.l.b16 %v5377
        %v5442 = vpack.c.b16 %v5411, %v5410
        %v5443 = vpack.c.b16 %v5413, %v5412
        %v5444 = vpack.c.b16 %v5415, %v5414
        %v5445 = vpack.c.b16 %v5417, %v5416
        %v5446 = vpack.c.b16 %v5419, %v5418
        %v5447 = vpack.c.b16 %v5421, %v5420
        %v5448 = vpack.c.b16 %v5423, %v5422
        %v5449 = vpack.c.b16 %v5425, %v5424
        %v5450 = vpack.c.b16 %v5427, %v5426
        %v5451 = vpack.c.b16 %v5429, %v5428
        %v5452 = vpack.c.b16 %v5431, %v5430
        %v5453 = vpack.c.b16 %v5433, %v5432
        %v5454 = vpack.c.b16 %v5435, %v5434
        %v5455 = vpack.c.b16 %v5437, %v5436
        %v5456 = vpack.c.b16 %v5439, %v5438
        %v5457 = vpack.c.b16 %v5441, %v5440
        %5474 = vmatprep.subr.bf16.mxu0 0
        %5475 = vmatpush1.bf16.msra.mxu0 %v5442
        %5476 = vmatprep.subr.bf16.mxu0 0
        %5477 = vmatpush1.bf16.msra.mxu0 %v5443
        %5478 = vmatprep.subr.bf16.mxu0 0
        %5479 = vmatpush1.bf16.msra.mxu0 %v5444
        %5480 = vmatprep.subr.bf16.mxu0 0
        %5481 = vmatpush1.bf16.msra.mxu0 %v5445
        %5482 = vmatprep.subr.bf16.mxu0 0
        %5483 = vmatpush1.bf16.msra.mxu0 %v5446
        %5484 = vmatprep.subr.bf16.mxu0 0
        %5485 = vmatpush1.bf16.msra.mxu0 %v5447
        %5486 = vmatprep.subr.bf16.mxu0 0
        %5487 = vmatpush1.bf16.msra.mxu0 %v5448
        %5488 = vmatprep.subr.bf16.mxu0 0
        %5489 = vmatpush1.bf16.msra.mxu0 %v5449
        %5490 = vmatprep.subr.bf16.mxu0 0
        %5491 = vmatpush1.bf16.msra.mxu0 %v5450
        %5492 = vmatprep.subr.bf16.mxu0 0
        %5493 = vmatpush1.bf16.msra.mxu0 %v5451
        %5494 = vmatprep.subr.bf16.mxu0 0
        %5495 = vmatpush1.bf16.msra.mxu0 %v5452
        %5496 = vmatprep.subr.bf16.mxu0 0
        %5497 = vmatpush1.bf16.msra.mxu0 %v5453
        %5498 = vmatprep.subr.bf16.mxu0 0
        %5499 = vmatpush1.bf16.msra.mxu0 %v5454
        %5500 = vmatprep.subr.bf16.mxu0 0
        %5501 = vmatpush1.bf16.msra.mxu0 %v5455
        %5502 = vmatprep.subr.bf16.mxu0 0
        %5503 = vmatpush1.bf16.msra.mxu0 %v5456
        %5504 = vmatprep.subr.bf16.mxu0 0
        %5505 = vmatpush1.bf16.msra.mxu0 %v5457
        %5506 = vmatprep.mubr.bf16.mxu0 %v5338
        %5507 = vmatmul.mubr.bf16.gmra.mrb[0].mxu0 %v5337
        %v5508 = vpop.f32.mrb[0].mxu0
        %v5509 = vadd.f32 0.0, %v5508
        %v5510 = vpop.f32.mrb[0].mxu0
        %v5511 = vpop.f32.mrb[0].mxu0
        %v5512 = vadd.f32 0.0, %v5511
        %v5513 = vpop.f32.mrb[0].mxu0
        %5514 = vmatprep.mubr.bf16.mxu0 %v5340
        %5515 = vmatmul.mubr.bf16.gmra.mrb[0].mxu0 %v5339
        %v5516 = vpop.f32.mrb[0].mxu0
        %v5517 = vadd.f32 0.0, %v5516
        %v5518 = vpop.f32.mrb[0].mxu0
        %v5519 = vpop.f32.mrb[0].mxu0
        %v5520 = vadd.f32 0.0, %v5519
        %v5521 = vpop.f32.mrb[0].mxu0
        %5522 = vmatprep.mubr.bf16.mxu0 %v5342
        %5523 = vmatmul.mubr.bf16.gmra.mrb[0].mxu0 %v5341
        %v5524 = vpop.f32.mrb[0].mxu0
        %v5525 = vadd.f32 0.0, %v5524
        %v5526 = vpop.f32.mrb[0].mxu0
        %v5527 = vpop.f32.mrb[0].mxu0
        %v5528 = vadd.f32 0.0, %v5527
        %v5529 = vpop.f32.mrb[0].mxu0
        %5530 = vmatprep.mubr.bf16.mxu0 %v5344
        %5531 = vmatmul.mubr.bf16.gmra.mrb[0].mxu0 %v5343
        %v5532 = vpop.f32.mrb[0].mxu0
        %v5533 = vadd.f32 0.0, %v5532
        %v5534 = vpop.f32.mrb[0].mxu0
        %v5535 = vpop.f32.mrb[0].mxu0
        %v5536 = vadd.f32 0.0, %v5535
        %v5537 = vpop.f32.mrb[0].mxu0
        %5538 = vdwg.mxu0
        %v5539 = vld [vmem:[#allocation3] sm:$0xff]
        %v5540 = vld [vmem:[#allocation3 + $0x8] sm:$0xff]
        %v5541 = vld [vmem:[#allocation3 + $0x10] sm:$0xff]
        %v5542 = vld [vmem:[#allocation3 + $0x18] sm:$0xff]
        %v5543 = vld [vmem:[#allocation3 + $0x20] sm:$0xff]
        %v5544 = vld [vmem:[#allocation3 + $0x28] sm:$0xff]
        %v5545 = vld [vmem:[#allocation3 + $0x30] sm:$0xff]
        %v5546 = vld [vmem:[#allocation3 + $0x38] sm:$0xff]
        %v5547 = vadd.f32 %v5539, %v5509
        %v5548 = vadd.f32 %v5540, %v5512
        %v5549 = vadd.f32 %v5541, %v5517
        %v5550 = vadd.f32 %v5542, %v5520
        %v5551 = vadd.f32 %v5543, %v5525
        %v5552 = vadd.f32 %v5544, %v5528
        %v5553 = vadd.f32 %v5545, %v5533
        %v5554 = vadd.f32 %v5546, %v5536
        %5555 = vst [vmem:[#allocation3] sm:$0xff] %v5547
        %5556 = vst [vmem:[#allocation3 + $0x8] sm:$0xff] %v5548
        %5557 = vst [vmem:[#allocation3 + $0x10] sm:$0xff] %v5549
        %5558 = vst [vmem:[#allocation3 + $0x18] sm:$0xff] %v5550
        %5559 = vst [vmem:[#allocation3 + $0x20] sm:$0xff] %v5551
        %5560 = vst [vmem:[#allocation3 + $0x28] sm:$0xff] %v5552
        %5561 = vst [vmem:[#allocation3 + $0x30] sm:$0xff] %v5553
        %5562 = vst [vmem:[#allocation3 + $0x38] sm:$0xff] %v5554
        %v5563 = vld [vmem:[%s663 + $0x10] sm:$0xff]
        %v5564 = vld [vmem:[%s663 + $0x18] sm:$0xff]
        %v5565 = vld [vmem:[%s663 + $0x20] sm:$0xff]
        %v5566 = vld [vmem:[%s663 + $0x28] sm:$0xff]
        %v5567 = vld [vmem:[%s663 + $0x30] sm:$0xff]
        %v5568 = vld [vmem:[%s663 + $0x38] sm:$0xff]
        %v5569 = vld [vmem:[%s663 + $0x40] sm:$0xff]
        %v5570 = vld [vmem:[%s663 + $0x48] sm:$0xff]
        %s5571 = scalar_lea.vmem [#allocation4], 2432
        %v5572 = vld [vmem:[%s5571] sm:$0xf]
        %v5573 = vld [vmem:[%s5571 + $0x4] sm:$0xf]
        %v5574 = vld [vmem:[%s5571 + $0x8] sm:$0xf]
        %v5575 = vld [vmem:[%s5571 + $0xc] sm:$0xf]
        %v5576 = vld [vmem:[%s5571 + $0x10] sm:$0xf]
        %v5577 = vld [vmem:[%s5571 + $0x14] sm:$0xf]
        %v5578 = vld [vmem:[%s5571 + $0x18] sm:$0xf]
        %v5579 = vld [vmem:[%s5571 + $0x1c] sm:$0xf]
        %v5580 = vld [vmem:[%s5571 + $0x20] sm:$0xf]
        %v5581 = vld [vmem:[%s5571 + $0x24] sm:$0xf]
        %v5582 = vld [vmem:[%s5571 + $0x28] sm:$0xf]
        %v5583 = vld [vmem:[%s5571 + $0x2c] sm:$0xf]
        %v5584 = vld [vmem:[%s5571 + $0x30] sm:$0xf]
        %v5585 = vld [vmem:[%s5571 + $0x34] sm:$0xf]
        %v5586 = vld [vmem:[%s5571 + $0x38] sm:$0xf]
        %v5587 = vld [vmem:[%s5571 + $0x3c] sm:$0xf]
        %v5588 = vld [vmem:[%s5571 + $0x40] sm:$0xf]
        %v5589 = vld [vmem:[%s5571 + $0x44] sm:$0xf]
        %v5590 = vld [vmem:[%s5571 + $0x48] sm:$0xf]
        %v5591 = vld [vmem:[%s5571 + $0x4c] sm:$0xf]
        %v5592 = vld [vmem:[%s5571 + $0x50] sm:$0xf]
        %v5593 = vld [vmem:[%s5571 + $0x54] sm:$0xf]
        %v5594 = vld [vmem:[%s5571 + $0x58] sm:$0xf]
        %v5595 = vld [vmem:[%s5571 + $0x5c] sm:$0xf]
        %v5596 = vld [vmem:[%s5571 + $0x60] sm:$0xf]
        %v5597 = vld [vmem:[%s5571 + $0x64] sm:$0xf]
        %v5598 = vld [vmem:[%s5571 + $0x68] sm:$0xf]
        %v5599 = vld [vmem:[%s5571 + $0x6c] sm:$0xf]
        %v5600 = vld [vmem:[%s5571 + $0x70] sm:$0xf]
        %v5601 = vld [vmem:[%s5571 + $0x74] sm:$0xf]
        %v5602 = vld [vmem:[%s5571 + $0x78] sm:$0xf]
        %v5603 = vld [vmem:[%s5571 + $0x7c] sm:$0xf]
        %v5636 = vunpack.c.l.b16 %v5572
        %v5637 = vunpack.c.l.b16 %v5573
        %v5638 = vunpack.c.l.b16 %v5574
        %v5639 = vunpack.c.l.b16 %v5575
        %v5640 = vunpack.c.l.b16 %v5576
        %v5641 = vunpack.c.l.b16 %v5577
        %v5642 = vunpack.c.l.b16 %v5578
        %v5643 = vunpack.c.l.b16 %v5579
        %v5644 = vunpack.c.l.b16 %v5580
        %v5645 = vunpack.c.l.b16 %v5581
        %v5646 = vunpack.c.l.b16 %v5582
        %v5647 = vunpack.c.l.b16 %v5583
        %v5648 = vunpack.c.l.b16 %v5584
        %v5649 = vunpack.c.l.b16 %v5585
        %v5650 = vunpack.c.l.b16 %v5586
        %v5651 = vunpack.c.l.b16 %v5587
        %v5652 = vunpack.c.l.b16 %v5588
        %v5653 = vunpack.c.l.b16 %v5589
        %v5654 = vunpack.c.l.b16 %v5590
        %v5655 = vunpack.c.l.b16 %v5591
        %v5656 = vunpack.c.l.b16 %v5592
        %v5657 = vunpack.c.l.b16 %v5593
        %v5658 = vunpack.c.l.b16 %v5594
        %v5659 = vunpack.c.l.b16 %v5595
        %v5660 = vunpack.c.l.b16 %v5596
        %v5661 = vunpack.c.l.b16 %v5597
        %v5662 = vunpack.c.l.b16 %v5598
        %v5663 = vunpack.c.l.b16 %v5599
        %v5664 = vunpack.c.l.b16 %v5600
        %v5665 = vunpack.c.l.b16 %v5601
        %v5666 = vunpack.c.l.b16 %v5602
        %v5667 = vunpack.c.l.b16 %v5603
        %v5668 = vpack.c.b16 %v5637, %v5636
        %v5669 = vpack.c.b16 %v5639, %v5638
        %v5670 = vpack.c.b16 %v5641, %v5640
        %v5671 = vpack.c.b16 %v5643, %v5642
        %v5672 = vpack.c.b16 %v5645, %v5644
        %v5673 = vpack.c.b16 %v5647, %v5646
        %v5674 = vpack.c.b16 %v5649, %v5648
        %v5675 = vpack.c.b16 %v5651, %v5650
        %v5676 = vpack.c.b16 %v5653, %v5652
        %v5677 = vpack.c.b16 %v5655, %v5654
        %v5678 = vpack.c.b16 %v5657, %v5656
        %v5679 = vpack.c.b16 %v5659, %v5658
        %v5680 = vpack.c.b16 %v5661, %v5660
        %v5681 = vpack.c.b16 %v5663, %v5662
        %v5682 = vpack.c.b16 %v5665, %v5664
        %v5683 = vpack.c.b16 %v5667, %v5666
        %5700 = vmatprep.subr.bf16.mxu0 0
        %5701 = vmatpush1.bf16.msra.mxu0 %v5668
        %5702 = vmatprep.subr.bf16.mxu0 0
        %5703 = vmatpush1.bf16.msra.mxu0 %v5669
        %5704 = vmatprep.subr.bf16.mxu0 0
        %5705 = vmatpush1.bf16.msra.mxu0 %v5670
        %5706 = vmatprep.subr.bf16.mxu0 0
        %5707 = vmatpush1.bf16.msra.mxu0 %v5671
        %5708 = vmatprep.subr.bf16.mxu0 0
        %5709 = vmatpush1.bf16.msra.mxu0 %v5672
        %5710 = vmatprep.subr.bf16.mxu0 0
        %5711 = vmatpush1.bf16.msra.mxu0 %v5673
        %5712 = vmatprep.subr.bf16.mxu0 0
        %5713 = vmatpush1.bf16.msra.mxu0 %v5674
        %5714 = vmatprep.subr.bf16.mxu0 0
        %5715 = vmatpush1.bf16.msra.mxu0 %v5675
        %5716 = vmatprep.subr.bf16.mxu0 0
        %5717 = vmatpush1.bf16.msra.mxu0 %v5676
        %5718 = vmatprep.subr.bf16.mxu0 0
        %5719 = vmatpush1.bf16.msra.mxu0 %v5677
        %5720 = vmatprep.subr.bf16.mxu0 0
        %5721 = vmatpush1.bf16.msra.mxu0 %v5678
        %5722 = vmatprep.subr.bf16.mxu0 0
        %5723 = vmatpush1.bf16.msra.mxu0 %v5679
        %5724 = vmatprep.subr.bf16.mxu0 0
        %5725 = vmatpush1.bf16.msra.mxu0 %v5680
        %5726 = vmatprep.subr.bf16.mxu0 0
        %5727 = vmatpush1.bf16.msra.mxu0 %v5681
        %5728 = vmatprep.subr.bf16.mxu0 0
        %5729 = vmatpush1.bf16.msra.mxu0 %v5682
        %5730 = vmatprep.subr.bf16.mxu0 0
        %5731 = vmatpush1.bf16.msra.mxu0 %v5683
        %5732 = vmatprep.mubr.bf16.mxu0 %v5564
        %5733 = vmatmul.mubr.bf16.gmra.mrb[0].mxu0 %v5563
        %v5734 = vpop.f32.mrb[0].mxu0
        %v5735 = vadd.f32 0.0, %v5734
        %v5736 = vpop.f32.mrb[0].mxu0
        %v5737 = vpop.f32.mrb[0].mxu0
        %v5738 = vadd.f32 0.0, %v5737
        %v5739 = vpop.f32.mrb[0].mxu0
        %5740 = vmatprep.mubr.bf16.mxu0 %v5566
        %5741 = vmatmul.mubr.bf16.gmra.mrb[0].mxu0 %v5565
        %v5742 = vpop.f32.mrb[0].mxu0
        %v5743 = vadd.f32 0.0, %v5742
        %v5744 = vpop.f32.mrb[0].mxu0
        %v5745 = vpop.f32.mrb[0].mxu0
        %v5746 = vadd.f32 0.0, %v5745
        %v5747 = vpop.f32.mrb[0].mxu0
        %5748 = vmatprep.mubr.bf16.mxu0 %v5568
        %5749 = vmatmul.mubr.bf16.gmra.mrb[0].mxu0 %v5567
        %v5750 = vpop.f32.mrb[0].mxu0
        %v5751 = vadd.f32 0.0, %v5750
        %v5752 = vpop.f32.mrb[0].mxu0
        %v5753 = vpop.f32.mrb[0].mxu0
        %v5754 = vadd.f32 0.0, %v5753
        %v5755 = vpop.f32.mrb[0].mxu0
        %5756 = vmatprep.mubr.bf16.mxu0 %v5570
        %5757 = vmatmul.mubr.bf16.gmra.mrb[0].mxu0 %v5569
        %v5758 = vpop.f32.mrb[0].mxu0
        %v5759 = vadd.f32 0.0, %v5758
        %v5760 = vpop.f32.mrb[0].mxu0
        %v5761 = vpop.f32.mrb[0].mxu0
        %v5762 = vadd.f32 0.0, %v5761
        %v5763 = vpop.f32.mrb[0].mxu0
        %5764 = vdwg.mxu0
        %v5765 = vld [vmem:[#allocation3] sm:$0xff]
        %v5766 = vld [vmem:[#allocation3 + $0x8] sm:$0xff]
        %v5767 = vld [vmem:[#allocation3 + $0x10] sm:$0xff]
        %v5768 = vld [vmem:[#allocation3 + $0x18] sm:$0xff]
        %v5769 = vld [vmem:[#allocation3 + $0x20] sm:$0xff]
        %v5770 = vld [vmem:[#allocation3 + $0x28] sm:$0xff]
        %v5771 = vld [vmem:[#allocation3 + $0x30] sm:$0xff]
        %v5772 = vld [vmem:[#allocation3 + $0x38] sm:$0xff]
        %v5773 = vadd.f32 %v5765, %v5735
        %v5774 = vadd.f32 %v5766, %v5738
        %v5775 = vadd.f32 %v5767, %v5743
        %v5776 = vadd.f32 %v5768, %v5746
        %v5777 = vadd.f32 %v5769, %v5751
        %v5778 = vadd.f32 %v5770, %v5754
        %v5779 = vadd.f32 %v5771, %v5759
        %v5780 = vadd.f32 %v5772, %v5762
        %5781 = vst [vmem:[#allocation3] sm:$0xff] %v5773
        %5782 = vst [vmem:[#allocation3 + $0x8] sm:$0xff] %v5774
        %5783 = vst [vmem:[#allocation3 + $0x10] sm:$0xff] %v5775
        %5784 = vst [vmem:[#allocation3 + $0x18] sm:$0xff] %v5776
        %5785 = vst [vmem:[#allocation3 + $0x20] sm:$0xff] %v5777
        %5786 = vst [vmem:[#allocation3 + $0x28] sm:$0xff] %v5778
        %5787 = vst [vmem:[#allocation3 + $0x30] sm:$0xff] %v5779
        %5788 = vst [vmem:[#allocation3 + $0x38] sm:$0xff] %v5780
        %v5789 = vld [vmem:[%s897 + $0x10] sm:$0xff]
        %v5790 = vld [vmem:[%s897 + $0x18] sm:$0xff]
        %v5791 = vld [vmem:[%s897 + $0x20] sm:$0xff]
        %v5792 = vld [vmem:[%s897 + $0x28] sm:$0xff]
        %v5793 = vld [vmem:[%s897 + $0x30] sm:$0xff]
        %v5794 = vld [vmem:[%s897 + $0x38] sm:$0xff]
        %v5795 = vld [vmem:[%s897 + $0x40] sm:$0xff]
        %v5796 = vld [vmem:[%s897 + $0x48] sm:$0xff]
        %s5797 = scalar_lea.vmem [#allocation4], 2560
        %v5798 = vld [vmem:[%s5797] sm:$0xf]
        %v5799 = vld [vmem:[%s5797 + $0x4] sm:$0xf]
        %v5800 = vld [vmem:[%s5797 + $0x8] sm:$0xf]
        %v5801 = vld [vmem:[%s5797 + $0xc] sm:$0xf]
        %v5802 = vld [vmem:[%s5797 + $0x10] sm:$0xf]
        %v5803 = vld [vmem:[%s5797 + $0x14] sm:$0xf]
        %v5804 = vld [vmem:[%s5797 + $0x18] sm:$0xf]
        %v5805 = vld [vmem:[%s5797 + $0x1c] sm:$0xf]
        %v5806 = vld [vmem:[%s5797 + $0x20] sm:$0xf]
        %v5807 = vld [vmem:[%s5797 + $0x24] sm:$0xf]
        %v5808 = vld [vmem:[%s5797 + $0x28] sm:$0xf]
        %v5809 = vld [vmem:[%s5797 + $0x2c] sm:$0xf]
        %v5810 = vld [vmem:[%s5797 + $0x30] sm:$0xf]
        %v5811 = vld [vmem:[%s5797 + $0x34] sm:$0xf]
        %v5812 = vld [vmem:[%s5797 + $0x38] sm:$0xf]
        %v5813 = vld [vmem:[%s5797 + $0x3c] sm:$0xf]
        %v5814 = vld [vmem:[%s5797 + $0x40] sm:$0xf]
        %v5815 = vld [vmem:[%s5797 + $0x44] sm:$0xf]
        %v5816 = vld [vmem:[%s5797 + $0x48] sm:$0xf]
        %v5817 = vld [vmem:[%s5797 + $0x4c] sm:$0xf]
        %v5818 = vld [vmem:[%s5797 + $0x50] sm:$0xf]
        %v5819 = vld [vmem:[%s5797 + $0x54] sm:$0xf]
        %v5820 = vld [vmem:[%s5797 + $0x58] sm:$0xf]
        %v5821 = vld [vmem:[%s5797 + $0x5c] sm:$0xf]
        %v5822 = vld [vmem:[%s5797 + $0x60] sm:$0xf]
        %v5823 = vld [vmem:[%s5797 + $0x64] sm:$0xf]
        %v5824 = vld [vmem:[%s5797 + $0x68] sm:$0xf]
        %v5825 = vld [vmem:[%s5797 + $0x6c] sm:$0xf]
        %v5826 = vld [vmem:[%s5797 + $0x70] sm:$0xf]
        %v5827 = vld [vmem:[%s5797 + $0x74] sm:$0xf]
        %v5828 = vld [vmem:[%s5797 + $0x78] sm:$0xf]
        %v5829 = vld [vmem:[%s5797 + $0x7c] sm:$0xf]
        %v5862 = vunpack.c.l.b16 %v5798
        %v5863 = vunpack.c.l.b16 %v5799
        %v5864 = vunpack.c.l.b16 %v5800
        %v5865 = vunpack.c.l.b16 %v5801
        %v5866 = vunpack.c.l.b16 %v5802
        %v5867 = vunpack.c.l.b16 %v5803
        %v5868 = vunpack.c.l.b16 %v5804
        %v5869 = vunpack.c.l.b16 %v5805
        %v5870 = vunpack.c.l.b16 %v5806
        %v5871 = vunpack.c.l.b16 %v5807
        %v5872 = vunpack.c.l.b16 %v5808
        %v5873 = vunpack.c.l.b16 %v5809
        %v5874 = vunpack.c.l.b16 %v5810
        %v5875 = vunpack.c.l.b16 %v5811
        %v5876 = vunpack.c.l.b16 %v5812
        %v5877 = vunpack.c.l.b16 %v5813
        %v5878 = vunpack.c.l.b16 %v5814
        %v5879 = vunpack.c.l.b16 %v5815
        %v5880 = vunpack.c.l.b16 %v5816
        %v5881 = vunpack.c.l.b16 %v5817
        %v5882 = vunpack.c.l.b16 %v5818
        %v5883 = vunpack.c.l.b16 %v5819
        %v5884 = vunpack.c.l.b16 %v5820
        %v5885 = vunpack.c.l.b16 %v5821
        %v5886 = vunpack.c.l.b16 %v5822
        %v5887 = vunpack.c.l.b16 %v5823
        %v5888 = vunpack.c.l.b16 %v5824
        %v5889 = vunpack.c.l.b16 %v5825
        %v5890 = vunpack.c.l.b16 %v5826
        %v5891 = vunpack.c.l.b16 %v5827
        %v5892 = vunpack.c.l.b16 %v5828
        %v5893 = vunpack.c.l.b16 %v5829
        %v5894 = vpack.c.b16 %v5863, %v5862
        %v5895 = vpack.c.b16 %v5865, %v5864
        %v5896 = vpack.c.b16 %v5867, %v5866
        %v5897 = vpack.c.b16 %v5869, %v5868
        %v5898 = vpack.c.b16 %v5871, %v5870
        %v5899 = vpack.c.b16 %v5873, %v5872
        %v5900 = vpack.c.b16 %v5875, %v5874
        %v5901 = vpack.c.b16 %v5877, %v5876
        %v5902 = vpack.c.b16 %v5879, %v5878
        %v5903 = vpack.c.b16 %v5881, %v5880
        %v5904 = vpack.c.b16 %v5883, %v5882
        %v5905 = vpack.c.b16 %v5885, %v5884
        %v5906 = vpack.c.b16 %v5887, %v5886
        %v5907 = vpack.c.b16 %v5889, %v5888
        %v5908 = vpack.c.b16 %v5891, %v5890
        %v5909 = vpack.c.b16 %v5893, %v5892
        %5926 = vmatprep.subr.bf16.mxu0 0
        %5927 = vmatpush1.bf16.msra.mxu0 %v5894
        %5928 = vmatprep.subr.bf16.mxu0 0
        %5929 = vmatpush1.bf16.msra.mxu0 %v5895
        %5930 = vmatprep.subr.bf16.mxu0 0
        %5931 = vmatpush1.bf16.msra.mxu0 %v5896
        %5932 = vmatprep.subr.bf16.mxu0 0
        %5933 = vmatpush1.bf16.msra.mxu0 %v5897
        %5934 = vmatprep.subr.bf16.mxu0 0
        %5935 = vmatpush1.bf16.msra.mxu0 %v5898
        %5936 = vmatprep.subr.bf16.mxu0 0
        %5937 = vmatpush1.bf16.msra.mxu0 %v5899
        %5938 = vmatprep.subr.bf16.mxu0 0
        %5939 = vmatpush1.bf16.msra.mxu0 %v5900
        %5940 = vmatprep.subr.bf16.mxu0 0
        %5941 = vmatpush1.bf16.msra.mxu0 %v5901
        %5942 = vmatprep.subr.bf16.mxu0 0
        %5943 = vmatpush1.bf16.msra.mxu0 %v5902
        %5944 = vmatprep.subr.bf16.mxu0 0
        %5945 = vmatpush1.bf16.msra.mxu0 %v5903
        %5946 = vmatprep.subr.bf16.mxu0 0
        %5947 = vmatpush1.bf16.msra.mxu0 %v5904
        %5948 = vmatprep.subr.bf16.mxu0 0
        %5949 = vmatpush1.bf16.msra.mxu0 %v5905
        %5950 = vmatprep.subr.bf16.mxu0 0
        %5951 = vmatpush1.bf16.msra.mxu0 %v5906
        %5952 = vmatprep.subr.bf16.mxu0 0
        %5953 = vmatpush1.bf16.msra.mxu0 %v5907
        %5954 = vmatprep.subr.bf16.mxu0 0
        %5955 = vmatpush1.bf16.msra.mxu0 %v5908
        %5956 = vmatprep.subr.bf16.mxu0 0
        %5957 = vmatpush1.bf16.msra.mxu0 %v5909
        %5958 = vmatprep.mubr.bf16.mxu0 %v5790
        %5959 = vmatmul.mubr.bf16.gmra.mrb[0].mxu0 %v5789
        %v5960 = vpop.f32.mrb[0].mxu0
        %v5961 = vadd.f32 0.0, %v5960
        %v5962 = vpop.f32.mrb[0].mxu0
        %v5963 = vpop.f32.mrb[0].mxu0
        %v5964 = vadd.f32 0.0, %v5963
        %v5965 = vpop.f32.mrb[0].mxu0
        %5966 = vmatprep.mubr.bf16.mxu0 %v5792
        %5967 = vmatmul.mubr.bf16.gmra.mrb[0].mxu0 %v5791
        %v5968 = vpop.f32.mrb[0].mxu0
        %v5969 = vadd.f32 0.0, %v5968
        %v5970 = vpop.f32.mrb[0].mxu0
        %v5971 = vpop.f32.mrb[0].mxu0
        %v5972 = vadd.f32 0.0, %v5971
        %v5973 = vpop.f32.mrb[0].mxu0
        %5974 = vmatprep.mubr.bf16.mxu0 %v5794
        %5975 = vmatmul.mubr.bf16.gmra.mrb[0].mxu0 %v5793
        %v5976 = vpop.f32.mrb[0].mxu0
        %v5977 = vadd.f32 0.0, %v5976
        %v5978 = vpop.f32.mrb[0].mxu0
        %v5979 = vpop.f32.mrb[0].mxu0
        %v5980 = vadd.f32 0.0, %v5979
        %v5981 = vpop.f32.mrb[0].mxu0
        %5982 = vmatprep.mubr.bf16.mxu0 %v5796
        %5983 = vmatmul.mubr.bf16.gmra.mrb[0].mxu0 %v5795
        %v5984 = vpop.f32.mrb[0].mxu0
        %v5985 = vadd.f32 0.0, %v5984
        %v5986 = vpop.f32.mrb[0].mxu0
        %v5987 = vpop.f32.mrb[0].mxu0
        %v5988 = vadd.f32 0.0, %v5987
        %v5989 = vpop.f32.mrb[0].mxu0
        %5990 = vdwg.mxu0
        %v5991 = vld [vmem:[#allocation3] sm:$0xff]
        %v5992 = vld [vmem:[#allocation3 + $0x8] sm:$0xff]
        %v5993 = vld [vmem:[#allocation3 + $0x10] sm:$0xff]
        %v5994 = vld [vmem:[#allocation3 + $0x18] sm:$0xff]
        %v5995 = vld [vmem:[#allocation3 + $0x20] sm:$0xff]
        %v5996 = vld [vmem:[#allocation3 + $0x28] sm:$0xff]
        %v5997 = vld [vmem:[#allocation3 + $0x30] sm:$0xff]
        %v5998 = vld [vmem:[#allocation3 + $0x38] sm:$0xff]
        %v5999 = vadd.f32 %v5991, %v5961
        %v6000 = vadd.f32 %v5992, %v5964
        %v6001 = vadd.f32 %v5993, %v5969
        %v6002 = vadd.f32 %v5994, %v5972
        %v6003 = vadd.f32 %v5995, %v5977
        %v6004 = vadd.f32 %v5996, %v5980
        %v6005 = vadd.f32 %v5997, %v5985
        %v6006 = vadd.f32 %v5998, %v5988
        %6007 = vst [vmem:[#allocation3] sm:$0xff] %v5999
        %6008 = vst [vmem:[#allocation3 + $0x8] sm:$0xff] %v6000
        %6009 = vst [vmem:[#allocation3 + $0x10] sm:$0xff] %v6001
        %6010 = vst [vmem:[#allocation3 + $0x18] sm:$0xff] %v6002
        %6011 = vst [vmem:[#allocation3 + $0x20] sm:$0xff] %v6003
        %6012 = vst [vmem:[#allocation3 + $0x28] sm:$0xff] %v6004
        %6013 = vst [vmem:[#allocation3 + $0x30] sm:$0xff] %v6005
        %6014 = vst [vmem:[#allocation3 + $0x38] sm:$0xff] %v6006
        %v6015 = vld [vmem:[#allocation3] sm:$0xff]
        %v6016 = vld [vmem:[#allocation3 + $0x8] sm:$0xff]
        %v6017 = vld [vmem:[#allocation3 + $0x10] sm:$0xff]
        %v6018 = vld [vmem:[#allocation3 + $0x18] sm:$0xff]
        %v6019 = vld [vmem:[#allocation3 + $0x20] sm:$0xff]
        %v6020 = vld [vmem:[#allocation3 + $0x28] sm:$0xff]
        %v6021 = vld [vmem:[#allocation3 + $0x30] sm:$0xff]
        %v6022 = vld [vmem:[#allocation3 + $0x38] sm:$0xff]
        %s6023 = scalar_lea.vmem %s209, 128 [#allocation7]
        %6024 = vst [vmem:[%s6023] sm:$0xff] %v6015
        %6025 = vst [vmem:[%s6023 + $0x8] sm:$0xff] %v6016
        %6026 = vst [vmem:[%s6023 + $0x10] sm:$0xff] %v6017
        %6027 = vst [vmem:[%s6023 + $0x18] sm:$0xff] %v6018
        %6028 = vst [vmem:[%s6023 + $0x20] sm:$0xff] %v6019
        %6029 = vst [vmem:[%s6023 + $0x28] sm:$0xff] %v6020
        %6030 = vst [vmem:[%s6023 + $0x30] sm:$0xff] %v6021
        %6031 = vst [vmem:[%s6023 + $0x38] sm:$0xff] %v6022
        %v6032 = vadd.f32 %v6015, %v6016
        %v6033 = vadd.f32 %v6032, %v6017
        %v6034 = vadd.f32 %v6033, %v6018
        %v6035 = vadd.f32 %v6034, %v6019
        %v6036 = vadd.f32 %v6035, %v6020
        %v6037 = vadd.f32 %v6036, %v6021
        %v6038 = vadd.f32 %v6037, %v6022
        %v6039 = vrot.slane %v6038, 4
        %v6040 = vadd.f32 %v6038, %v6039
        %v6041 = vrot.slane %v6040, 2
        %v6042 = vadd.f32 %v6040, %v6041
        %v6043 = vrot.slane %v6042, 1
        %v6044 = vadd.f32 %v6042, %v6043
        %v6045 = vadd.f32 %v4538, %v6044
        %v6046 = vmul.f32 %v6015, %v6015
        %v6047 = vmul.f32 %v6016, %v6016
        %v6048 = vmul.f32 %v6017, %v6017
        %v6049 = vmul.f32 %v6018, %v6018
        %v6050 = vmul.f32 %v6019, %v6019
        %v6051 = vmul.f32 %v6020, %v6020
        %v6052 = vmul.f32 %v6021, %v6021
        %v6053 = vmul.f32 %v6022, %v6022
        %v6054 = vadd.f32 %v6046, %v6047
        %v6055 = vadd.f32 %v6054, %v6048
        %v6056 = vadd.f32 %v6055, %v6049
        %v6057 = vadd.f32 %v6056, %v6050
        %v6058 = vadd.f32 %v6057, %v6051
        %v6059 = vadd.f32 %v6058, %v6052
        %v6060 = vadd.f32 %v6059, %v6053
        %v6061 = vrot.slane %v6060, 4
        %v6062 = vadd.f32 %v6060, %v6061
        %v6063 = vrot.slane %v6062, 2
        %v6064 = vadd.f32 %v6062, %v6063
        %v6065 = vrot.slane %v6064, 1
        %v6066 = vadd.f32 %v6064, %v6065
        %v6067 = vadd.f32 %v4560, %v6066
        %v6068 = vld [vmem:[%s663] sm:$0xf0]
        %v6069 = vld [vmem:[%s663 + $0x8] sm:$0xf0]
        %v6070 = vld [vmem:[%s663 + $0x10] sm:$0xff]
        %v6071 = vld [vmem:[%s663 + $0x18] sm:$0xff]
        %v6072 = vld [vmem:[%s663 + $0x20] sm:$0xff]
        %v6073 = vld [vmem:[%s663 + $0x28] sm:$0xff]
        %v6074 = vld [vmem:[%s663 + $0x30] sm:$0xff]
        %v6075 = vld [vmem:[%s663 + $0x38] sm:$0xff]
        %v6076 = vld [vmem:[%s663 + $0x40] sm:$0xf]
        %v6077 = vld [vmem:[%s663 + $0x48] sm:$0xf]
        %s6078 = scalar_lea.vmem [#allocation4], 2688
        %v6079 = vld [vmem:[%s6078] sm:$0xf]
        %v6080 = vld [vmem:[%s6078 + $0x4] sm:$0xf]
        %v6081 = vld [vmem:[%s6078 + $0x8] sm:$0xf]
        %v6082 = vld [vmem:[%s6078 + $0xc] sm:$0xf]
        %v6083 = vld [vmem:[%s6078 + $0x10] sm:$0xf]
        %v6084 = vld [vmem:[%s6078 + $0x14] sm:$0xf]
        %v6085 = vld [vmem:[%s6078 + $0x18] sm:$0xf]
        %v6086 = vld [vmem:[%s6078 + $0x1c] sm:$0xf]
        %v6087 = vld [vmem:[%s6078 + $0x20] sm:$0xf]
        %v6088 = vld [vmem:[%s6078 + $0x24] sm:$0xf]
        %v6089 = vld [vmem:[%s6078 + $0x28] sm:$0xf]
        %v6090 = vld [vmem:[%s6078 + $0x2c] sm:$0xf]
        %v6091 = vld [vmem:[%s6078 + $0x30] sm:$0xf]
        %v6092 = vld [vmem:[%s6078 + $0x34] sm:$0xf]
        %v6093 = vld [vmem:[%s6078 + $0x38] sm:$0xf]
        %v6094 = vld [vmem:[%s6078 + $0x3c] sm:$0xf]
        %v6095 = vld [vmem:[%s6078 + $0x40] sm:$0xf]
        %v6096 = vld [vmem:[%s6078 + $0x44] sm:$0xf]
        %v6097 = vld [vmem:[%s6078 + $0x48] sm:$0xf]
        %v6098 = vld [vmem:[%s6078 + $0x4c] sm:$0xf]
        %v6099 = vld [vmem:[%s6078 + $0x50] sm:$0xf]
        %v6100 = vld [vmem:[%s6078 + $0x54] sm:$0xf]
        %v6101 = vld [vmem:[%s6078 + $0x58] sm:$0xf]
        %v6102 = vld [vmem:[%s6078 + $0x5c] sm:$0xf]
        %v6103 = vld [vmem:[%s6078 + $0x60] sm:$0xf]
        %v6104 = vld [vmem:[%s6078 + $0x64] sm:$0xf]
        %v6105 = vld [vmem:[%s6078 + $0x68] sm:$0xf]
        %v6106 = vld [vmem:[%s6078 + $0x6c] sm:$0xf]
        %v6107 = vld [vmem:[%s6078 + $0x70] sm:$0xf]
        %v6108 = vld [vmem:[%s6078 + $0x74] sm:$0xf]
        %v6109 = vld [vmem:[%s6078 + $0x78] sm:$0xf]
        %v6110 = vld [vmem:[%s6078 + $0x7c] sm:$0xf]
        %v6121 = vrot.slane %v6068, 4
        %v6122 = vrot.slane %v6070, 4
        %v6123 = vsel %vm1622, %v6121, %v6122
        %v6124 = vrot.slane %v6069, 4
        %v6125 = vrot.slane %v6071, 4
        %v6126 = vsel %vm1622, %v6124, %v6125
        %v6127 = vrot.slane %v6072, 4
        %v6128 = vsel %vm1622, %v6122, %v6127
        %v6129 = vrot.slane %v6073, 4
        %v6130 = vsel %vm1622, %v6125, %v6129
        %v6131 = vrot.slane %v6074, 4
        %v6132 = vsel %vm1622, %v6127, %v6131
        %v6133 = vrot.slane %v6075, 4
        %v6134 = vsel %vm1622, %v6129, %v6133
        %v6135 = vrot.slane %v6076, 4
        %v6136 = vsel %vm1622, %v6131, %v6135
        %v6137 = vrot.slane %v6077, 4
        %v6138 = vsel %vm1622, %v6133, %v6137
        %v6179 = vunpack.c.l.b16 %v6079
        %v6180 = vunpack.c.l.b16 %v6080
        %v6181 = vunpack.c.l.b16 %v6081
        %v6182 = vunpack.c.l.b16 %v6082
        %v6183 = vunpack.c.l.b16 %v6083
        %v6184 = vunpack.c.l.b16 %v6084
        %v6185 = vunpack.c.l.b16 %v6085
        %v6186 = vunpack.c.l.b16 %v6086
        %v6187 = vunpack.c.l.b16 %v6087
        %v6188 = vunpack.c.l.b16 %v6088
        %v6189 = vunpack.c.l.b16 %v6089
        %v6190 = vunpack.c.l.b16 %v6090
        %v6191 = vunpack.c.l.b16 %v6091
        %v6192 = vunpack.c.l.b16 %v6092
        %v6193 = vunpack.c.l.b16 %v6093
        %v6194 = vunpack.c.l.b16 %v6094
        %v6195 = vunpack.c.l.b16 %v6095
        %v6196 = vunpack.c.l.b16 %v6096
        %v6197 = vunpack.c.l.b16 %v6097
        %v6198 = vunpack.c.l.b16 %v6098
        %v6199 = vunpack.c.l.b16 %v6099
        %v6200 = vunpack.c.l.b16 %v6100
        %v6201 = vunpack.c.l.b16 %v6101
        %v6202 = vunpack.c.l.b16 %v6102
        %v6203 = vunpack.c.l.b16 %v6103
        %v6204 = vunpack.c.l.b16 %v6104
        %v6205 = vunpack.c.l.b16 %v6105
        %v6206 = vunpack.c.l.b16 %v6106
        %v6207 = vunpack.c.l.b16 %v6107
        %v6208 = vunpack.c.l.b16 %v6108
        %v6209 = vunpack.c.l.b16 %v6109
        %v6210 = vunpack.c.l.b16 %v6110
        %v6211 = vpack.c.b16 %v6180, %v6179
        %v6212 = vpack.c.b16 %v6182, %v6181
        %v6213 = vpack.c.b16 %v6184, %v6183
        %v6214 = vpack.c.b16 %v6186, %v6185
        %v6215 = vpack.c.b16 %v6188, %v6187
        %v6216 = vpack.c.b16 %v6190, %v6189
        %v6217 = vpack.c.b16 %v6192, %v6191
        %v6218 = vpack.c.b16 %v6194, %v6193
        %v6219 = vpack.c.b16 %v6196, %v6195
        %v6220 = vpack.c.b16 %v6198, %v6197
        %v6221 = vpack.c.b16 %v6200, %v6199
        %v6222 = vpack.c.b16 %v6202, %v6201
        %v6223 = vpack.c.b16 %v6204, %v6203
        %v6224 = vpack.c.b16 %v6206, %v6205
        %v6225 = vpack.c.b16 %v6208, %v6207
        %v6226 = vpack.c.b16 %v6210, %v6209
        %6243 = vmatprep.subr.bf16.mxu0 0
        %6244 = vmatpush1.bf16.msra.mxu0 %v6211
        %6245 = vmatprep.subr.bf16.mxu0 0
        %6246 = vmatpush1.bf16.msra.mxu0 %v6212
        %6247 = vmatprep.subr.bf16.mxu0 0
        %6248 = vmatpush1.bf16.msra.mxu0 %v6213
        %6249 = vmatprep.subr.bf16.mxu0 0
        %6250 = vmatpush1.bf16.msra.mxu0 %v6214
        %6251 = vmatprep.subr.bf16.mxu0 0
        %6252 = vmatpush1.bf16.msra.mxu0 %v6215
        %6253 = vmatprep.subr.bf16.mxu0 0
        %6254 = vmatpush1.bf16.msra.mxu0 %v6216
        %6255 = vmatprep.subr.bf16.mxu0 0
        %6256 = vmatpush1.bf16.msra.mxu0 %v6217
        %6257 = vmatprep.subr.bf16.mxu0 0
        %6258 = vmatpush1.bf16.msra.mxu0 %v6218
        %6259 = vmatprep.subr.bf16.mxu0 0
        %6260 = vmatpush1.bf16.msra.mxu0 %v6219
        %6261 = vmatprep.subr.bf16.mxu0 0
        %6262 = vmatpush1.bf16.msra.mxu0 %v6220
        %6263 = vmatprep.subr.bf16.mxu0 0
        %6264 = vmatpush1.bf16.msra.mxu0 %v6221
        %6265 = vmatprep.subr.bf16.mxu0 0
        %6266 = vmatpush1.bf16.msra.mxu0 %v6222
        %6267 = vmatprep.subr.bf16.mxu0 0
        %6268 = vmatpush1.bf16.msra.mxu0 %v6223
        %6269 = vmatprep.subr.bf16.mxu0 0
        %6270 = vmatpush1.bf16.msra.mxu0 %v6224
        %6271 = vmatprep.subr.bf16.mxu0 0
        %6272 = vmatpush1.bf16.msra.mxu0 %v6225
        %6273 = vmatprep.subr.bf16.mxu0 0
        %6274 = vmatpush1.bf16.msra.mxu0 %v6226
        %6275 = vmatprep.mubr.bf16.mxu0 %v6126
        %6276 = vmatmul.mubr.bf16.gmra.mrb[0].mxu0 %v6123
        %v6277 = vpop.f32.mrb[0].mxu0
        %v6278 = vadd.f32 0.0, %v6277
        %v6279 = vpop.f32.mrb[0].mxu0
        %v6280 = vpop.f32.mrb[0].mxu0
        %v6281 = vadd.f32 0.0, %v6280
        %v6282 = vpop.f32.mrb[0].mxu0
        %6283 = vmatprep.mubr.bf16.mxu0 %v6130
        %6284 = vmatmul.mubr.bf16.gmra.mrb[0].mxu0 %v6128
        %v6285 = vpop.f32.mrb[0].mxu0
        %v6286 = vadd.f32 0.0, %v6285
        %v6287 = vpop.f32.mrb[0].mxu0
        %v6288 = vpop.f32.mrb[0].mxu0
        %v6289 = vadd.f32 0.0, %v6288
        %v6290 = vpop.f32.mrb[0].mxu0
        %6291 = vmatprep.mubr.bf16.mxu0 %v6134
        %6292 = vmatmul.mubr.bf16.gmra.mrb[0].mxu0 %v6132
        %v6293 = vpop.f32.mrb[0].mxu0
        %v6294 = vadd.f32 0.0, %v6293
        %v6295 = vpop.f32.mrb[0].mxu0
        %v6296 = vpop.f32.mrb[0].mxu0
        %v6297 = vadd.f32 0.0, %v6296
        %v6298 = vpop.f32.mrb[0].mxu0
        %6299 = vmatprep.mubr.bf16.mxu0 %v6138
        %6300 = vmatmul.mubr.bf16.gmra.mrb[0].mxu0 %v6136
        %v6301 = vpop.f32.mrb[0].mxu0
        %v6302 = vadd.f32 0.0, %v6301
        %v6303 = vpop.f32.mrb[0].mxu0
        %v6304 = vpop.f32.mrb[0].mxu0
        %v6305 = vadd.f32 0.0, %v6304
        %v6306 = vpop.f32.mrb[0].mxu0
        %6307 = vdwg.mxu0
        %6308 = vst [vmem:[#allocation3] sm:$0xff] %v6278
        %6309 = vst [vmem:[#allocation3 + $0x8] sm:$0xff] %v6281
        %6310 = vst [vmem:[#allocation3 + $0x10] sm:$0xff] %v6286
        %6311 = vst [vmem:[#allocation3 + $0x18] sm:$0xff] %v6289
        %6312 = vst [vmem:[#allocation3 + $0x20] sm:$0xff] %v6294
        %6313 = vst [vmem:[#allocation3 + $0x28] sm:$0xff] %v6297
        %6314 = vst [vmem:[#allocation3 + $0x30] sm:$0xff] %v6302
        %6315 = vst [vmem:[#allocation3 + $0x38] sm:$0xff] %v6305
        %v6316 = vld [vmem:[%s897] sm:$0xf0]
        %v6317 = vld [vmem:[%s897 + $0x8] sm:$0xf0]
        %v6318 = vld [vmem:[%s897 + $0x10] sm:$0xff]
        %v6319 = vld [vmem:[%s897 + $0x18] sm:$0xff]
        %v6320 = vld [vmem:[%s897 + $0x20] sm:$0xff]
        %v6321 = vld [vmem:[%s897 + $0x28] sm:$0xff]
        %v6322 = vld [vmem:[%s897 + $0x30] sm:$0xff]
        %v6323 = vld [vmem:[%s897 + $0x38] sm:$0xff]
        %v6324 = vld [vmem:[%s897 + $0x40] sm:$0xf]
        %v6325 = vld [vmem:[%s897 + $0x48] sm:$0xf]
        %s6326 = scalar_lea.vmem [#allocation4], 2816
        %v6327 = vld [vmem:[%s6326] sm:$0xf]
        %v6328 = vld [vmem:[%s6326 + $0x4] sm:$0xf]
        %v6329 = vld [vmem:[%s6326 + $0x8] sm:$0xf]
        %v6330 = vld [vmem:[%s6326 + $0xc] sm:$0xf]
        %v6331 = vld [vmem:[%s6326 + $0x10] sm:$0xf]
        %v6332 = vld [vmem:[%s6326 + $0x14] sm:$0xf]
        %v6333 = vld [vmem:[%s6326 + $0x18] sm:$0xf]
        %v6334 = vld [vmem:[%s6326 + $0x1c] sm:$0xf]
        %v6335 = vld [vmem:[%s6326 + $0x20] sm:$0xf]
        %v6336 = vld [vmem:[%s6326 + $0x24] sm:$0xf]
        %v6337 = vld [vmem:[%s6326 + $0x28] sm:$0xf]
        %v6338 = vld [vmem:[%s6326 + $0x2c] sm:$0xf]
        %v6339 = vld [vmem:[%s6326 + $0x30] sm:$0xf]
        %v6340 = vld [vmem:[%s6326 + $0x34] sm:$0xf]
        %v6341 = vld [vmem:[%s6326 + $0x38] sm:$0xf]
        %v6342 = vld [vmem:[%s6326 + $0x3c] sm:$0xf]
        %v6343 = vld [vmem:[%s6326 + $0x40] sm:$0xf]
        %v6344 = vld [vmem:[%s6326 + $0x44] sm:$0xf]
        %v6345 = vld [vmem:[%s6326 + $0x48] sm:$0xf]
        %v6346 = vld [vmem:[%s6326 + $0x4c] sm:$0xf]
        %v6347 = vld [vmem:[%s6326 + $0x50] sm:$0xf]
        %v6348 = vld [vmem:[%s6326 + $0x54] sm:$0xf]
        %v6349 = vld [vmem:[%s6326 + $0x58] sm:$0xf]
        %v6350 = vld [vmem:[%s6326 + $0x5c] sm:$0xf]
        %v6351 = vld [vmem:[%s6326 + $0x60] sm:$0xf]
        %v6352 = vld [vmem:[%s6326 + $0x64] sm:$0xf]
        %v6353 = vld [vmem:[%s6326 + $0x68] sm:$0xf]
        %v6354 = vld [vmem:[%s6326 + $0x6c] sm:$0xf]
        %v6355 = vld [vmem:[%s6326 + $0x70] sm:$0xf]
        %v6356 = vld [vmem:[%s6326 + $0x74] sm:$0xf]
        %v6357 = vld [vmem:[%s6326 + $0x78] sm:$0xf]
        %v6358 = vld [vmem:[%s6326 + $0x7c] sm:$0xf]
        %v6369 = vrot.slane %v6316, 4
        %v6370 = vrot.slane %v6318, 4
        %v6371 = vsel %vm1622, %v6369, %v6370
        %v6372 = vrot.slane %v6317, 4
        %v6373 = vrot.slane %v6319, 4
        %v6374 = vsel %vm1622, %v6372, %v6373
        %v6375 = vrot.slane %v6320, 4
        %v6376 = vsel %vm1622, %v6370, %v6375
        %v6377 = vrot.slane %v6321, 4
        %v6378 = vsel %vm1622, %v6373, %v6377
        %v6379 = vrot.slane %v6322, 4
        %v6380 = vsel %vm1622, %v6375, %v6379
        %v6381 = vrot.slane %v6323, 4
        %v6382 = vsel %vm1622, %v6377, %v6381
        %v6383 = vrot.slane %v6324, 4
        %v6384 = vsel %vm1622, %v6379, %v6383
        %v6385 = vrot.slane %v6325, 4
        %v6386 = vsel %vm1622, %v6381, %v6385
        %v6427 = vunpack.c.l.b16 %v6327
        %v6428 = vunpack.c.l.b16 %v6328
        %v6429 = vunpack.c.l.b16 %v6329
        %v6430 = vunpack.c.l.b16 %v6330
        %v6431 = vunpack.c.l.b16 %v6331
        %v6432 = vunpack.c.l.b16 %v6332
        %v6433 = vunpack.c.l.b16 %v6333
        %v6434 = vunpack.c.l.b16 %v6334
        %v6435 = vunpack.c.l.b16 %v6335
        %v6436 = vunpack.c.l.b16 %v6336
        %v6437 = vunpack.c.l.b16 %v6337
        %v6438 = vunpack.c.l.b16 %v6338
        %v6439 = vunpack.c.l.b16 %v6339
        %v6440 = vunpack.c.l.b16 %v6340
        %v6441 = vunpack.c.l.b16 %v6341
        %v6442 = vunpack.c.l.b16 %v6342
        %v6443 = vunpack.c.l.b16 %v6343
        %v6444 = vunpack.c.l.b16 %v6344
        %v6445 = vunpack.c.l.b16 %v6345
        %v6446 = vunpack.c.l.b16 %v6346
        %v6447 = vunpack.c.l.b16 %v6347
        %v6448 = vunpack.c.l.b16 %v6348
        %v6449 = vunpack.c.l.b16 %v6349
        %v6450 = vunpack.c.l.b16 %v6350
        %v6451 = vunpack.c.l.b16 %v6351
        %v6452 = vunpack.c.l.b16 %v6352
        %v6453 = vunpack.c.l.b16 %v6353
        %v6454 = vunpack.c.l.b16 %v6354
        %v6455 = vunpack.c.l.b16 %v6355
        %v6456 = vunpack.c.l.b16 %v6356
        %v6457 = vunpack.c.l.b16 %v6357
        %v6458 = vunpack.c.l.b16 %v6358
        %v6459 = vpack.c.b16 %v6428, %v6427
        %v6460 = vpack.c.b16 %v6430, %v6429
        %v6461 = vpack.c.b16 %v6432, %v6431
        %v6462 = vpack.c.b16 %v6434, %v6433
        %v6463 = vpack.c.b16 %v6436, %v6435
        %v6464 = vpack.c.b16 %v6438, %v6437
        %v6465 = vpack.c.b16 %v6440, %v6439
        %v6466 = vpack.c.b16 %v6442, %v6441
        %v6467 = vpack.c.b16 %v6444, %v6443
        %v6468 = vpack.c.b16 %v6446, %v6445
        %v6469 = vpack.c.b16 %v6448, %v6447
        %v6470 = vpack.c.b16 %v6450, %v6449
        %v6471 = vpack.c.b16 %v6452, %v6451
        %v6472 = vpack.c.b16 %v6454, %v6453
        %v6473 = vpack.c.b16 %v6456, %v6455
        %v6474 = vpack.c.b16 %v6458, %v6457
        %6491 = vmatprep.subr.bf16.mxu0 0
        %6492 = vmatpush1.bf16.msra.mxu0 %v6459
        %6493 = vmatprep.subr.bf16.mxu0 0
        %6494 = vmatpush1.bf16.msra.mxu0 %v6460
        %6495 = vmatprep.subr.bf16.mxu0 0
        %6496 = vmatpush1.bf16.msra.mxu0 %v6461
        %6497 = vmatprep.subr.bf16.mxu0 0
        %6498 = vmatpush1.bf16.msra.mxu0 %v6462
        %6499 = vmatprep.subr.bf16.mxu0 0
        %6500 = vmatpush1.bf16.msra.mxu0 %v6463
        %6501 = vmatprep.subr.bf16.mxu0 0
        %6502 = vmatpush1.bf16.msra.mxu0 %v6464
        %6503 = vmatprep.subr.bf16.mxu0 0
        %6504 = vmatpush1.bf16.msra.mxu0 %v6465
        %6505 = vmatprep.subr.bf16.mxu0 0
        %6506 = vmatpush1.bf16.msra.mxu0 %v6466
        %6507 = vmatprep.subr.bf16.mxu0 0
        %6508 = vmatpush1.bf16.msra.mxu0 %v6467
        %6509 = vmatprep.subr.bf16.mxu0 0
        %6510 = vmatpush1.bf16.msra.mxu0 %v6468
        %6511 = vmatprep.subr.bf16.mxu0 0
        %6512 = vmatpush1.bf16.msra.mxu0 %v6469
        %6513 = vmatprep.subr.bf16.mxu0 0
        %6514 = vmatpush1.bf16.msra.mxu0 %v6470
        %6515 = vmatprep.subr.bf16.mxu0 0
        %6516 = vmatpush1.bf16.msra.mxu0 %v6471
        %6517 = vmatprep.subr.bf16.mxu0 0
        %6518 = vmatpush1.bf16.msra.mxu0 %v6472
        %6519 = vmatprep.subr.bf16.mxu0 0
        %6520 = vmatpush1.bf16.msra.mxu0 %v6473
        %6521 = vmatprep.subr.bf16.mxu0 0
        %6522 = vmatpush1.bf16.msra.mxu0 %v6474
        %6523 = vmatprep.mubr.bf16.mxu0 %v6374
        %6524 = vmatmul.mubr.bf16.gmra.mrb[0].mxu0 %v6371
        %v6525 = vpop.f32.mrb[0].mxu0
        %v6526 = vadd.f32 0.0, %v6525
        %v6527 = vpop.f32.mrb[0].mxu0
        %v6528 = vpop.f32.mrb[0].mxu0
        %v6529 = vadd.f32 0.0, %v6528
        %v6530 = vpop.f32.mrb[0].mxu0
        %6531 = vmatprep.mubr.bf16.mxu0 %v6378
        %6532 = vmatmul.mubr.bf16.gmra.mrb[0].mxu0 %v6376
        %v6533 = vpop.f32.mrb[0].mxu0
        %v6534 = vadd.f32 0.0, %v6533
        %v6535 = vpop.f32.mrb[0].mxu0
        %v6536 = vpop.f32.mrb[0].mxu0
        %v6537 = vadd.f32 0.0, %v6536
        %v6538 = vpop.f32.mrb[0].mxu0
        %6539 = vmatprep.mubr.bf16.mxu0 %v6382
        %6540 = vmatmul.mubr.bf16.gmra.mrb[0].mxu0 %v6380
        %v6541 = vpop.f32.mrb[0].mxu0
        %v6542 = vadd.f32 0.0, %v6541
        %v6543 = vpop.f32.mrb[0].mxu0
        %v6544 = vpop.f32.mrb[0].mxu0
        %v6545 = vadd.f32 0.0, %v6544
        %v6546 = vpop.f32.mrb[0].mxu0
        %6547 = vmatprep.mubr.bf16.mxu0 %v6386
        %6548 = vmatmul.mubr.bf16.gmra.mrb[0].mxu0 %v6384
        %v6549 = vpop.f32.mrb[0].mxu0
        %v6550 = vadd.f32 0.0, %v6549
        %v6551 = vpop.f32.mrb[0].mxu0
        %v6552 = vpop.f32.mrb[0].mxu0
        %v6553 = vadd.f32 0.0, %v6552
        %v6554 = vpop.f32.mrb[0].mxu0
        %6555 = vdwg.mxu0
        %v6556 = vld [vmem:[#allocation3] sm:$0xff]
        %v6557 = vld [vmem:[#allocation3 + $0x8] sm:$0xff]
        %v6558 = vld [vmem:[#allocation3 + $0x10] sm:$0xff]
        %v6559 = vld [vmem:[#allocation3 + $0x18] sm:$0xff]
        %v6560 = vld [vmem:[#allocation3 + $0x20] sm:$0xff]
        %v6561 = vld [vmem:[#allocation3 + $0x28] sm:$0xff]
        %v6562 = vld [vmem:[#allocation3 + $0x30] sm:$0xff]
        %v6563 = vld [vmem:[#allocation3 + $0x38] sm:$0xff]
        %v6564 = vadd.f32 %v6556, %v6526
        %v6565 = vadd.f32 %v6557, %v6529
        %v6566 = vadd.f32 %v6558, %v6534
        %v6567 = vadd.f32 %v6559, %v6537
        %v6568 = vadd.f32 %v6560, %v6542
        %v6569 = vadd.f32 %v6561, %v6545
        %v6570 = vadd.f32 %v6562, %v6550
        %v6571 = vadd.f32 %v6563, %v6553
        %6572 = vst [vmem:[#allocation3] sm:$0xff] %v6564
        %6573 = vst [vmem:[#allocation3 + $0x8] sm:$0xff] %v6565
        %6574 = vst [vmem:[#allocation3 + $0x10] sm:$0xff] %v6566
        %6575 = vst [vmem:[#allocation3 + $0x18] sm:$0xff] %v6567
        %6576 = vst [vmem:[#allocation3 + $0x20] sm:$0xff] %v6568
        %6577 = vst [vmem:[#allocation3 + $0x28] sm:$0xff] %v6569
        %6578 = vst [vmem:[#allocation3 + $0x30] sm:$0xff] %v6570
        %6579 = vst [vmem:[#allocation3 + $0x38] sm:$0xff] %v6571
        %v6580 = vld [vmem:[%s663 + $0x10] sm:$0xff]
        %v6581 = vld [vmem:[%s663 + $0x18] sm:$0xff]
        %v6582 = vld [vmem:[%s663 + $0x20] sm:$0xff]
        %v6583 = vld [vmem:[%s663 + $0x28] sm:$0xff]
        %v6584 = vld [vmem:[%s663 + $0x30] sm:$0xff]
        %v6585 = vld [vmem:[%s663 + $0x38] sm:$0xff]
        %v6586 = vld [vmem:[%s663 + $0x40] sm:$0xff]
        %v6587 = vld [vmem:[%s663 + $0x48] sm:$0xff]
        %s6588 = scalar_lea.vmem [#allocation4], 2944
        %v6589 = vld [vmem:[%s6588] sm:$0xf]
        %v6590 = vld [vmem:[%s6588 + $0x4] sm:$0xf]
        %v6591 = vld [vmem:[%s6588 + $0x8] sm:$0xf]
        %v6592 = vld [vmem:[%s6588 + $0xc] sm:$0xf]
        %v6593 = vld [vmem:[%s6588 + $0x10] sm:$0xf]
        %v6594 = vld [vmem:[%s6588 + $0x14] sm:$0xf]
        %v6595 = vld [vmem:[%s6588 + $0x18] sm:$0xf]
        %v6596 = vld [vmem:[%s6588 + $0x1c] sm:$0xf]
        %v6597 = vld [vmem:[%s6588 + $0x20] sm:$0xf]
        %v6598 = vld [vmem:[%s6588 + $0x24] sm:$0xf]
        %v6599 = vld [vmem:[%s6588 + $0x28] sm:$0xf]
        %v6600 = vld [vmem:[%s6588 + $0x2c] sm:$0xf]
        %v6601 = vld [vmem:[%s6588 + $0x30] sm:$0xf]
        %v6602 = vld [vmem:[%s6588 + $0x34] sm:$0xf]
        %v6603 = vld [vmem:[%s6588 + $0x38] sm:$0xf]
        %v6604 = vld [vmem:[%s6588 + $0x3c] sm:$0xf]
        %v6605 = vld [vmem:[%s6588 + $0x40] sm:$0xf]
        %v6606 = vld [vmem:[%s6588 + $0x44] sm:$0xf]
        %v6607 = vld [vmem:[%s6588 + $0x48] sm:$0xf]
        %v6608 = vld [vmem:[%s6588 + $0x4c] sm:$0xf]
        %v6609 = vld [vmem:[%s6588 + $0x50] sm:$0xf]
        %v6610 = vld [vmem:[%s6588 + $0x54] sm:$0xf]
        %v6611 = vld [vmem:[%s6588 + $0x58] sm:$0xf]
        %v6612 = vld [vmem:[%s6588 + $0x5c] sm:$0xf]
        %v6613 = vld [vmem:[%s6588 + $0x60] sm:$0xf]
        %v6614 = vld [vmem:[%s6588 + $0x64] sm:$0xf]
        %v6615 = vld [vmem:[%s6588 + $0x68] sm:$0xf]
        %v6616 = vld [vmem:[%s6588 + $0x6c] sm:$0xf]
        %v6617 = vld [vmem:[%s6588 + $0x70] sm:$0xf]
        %v6618 = vld [vmem:[%s6588 + $0x74] sm:$0xf]
        %v6619 = vld [vmem:[%s6588 + $0x78] sm:$0xf]
        %v6620 = vld [vmem:[%s6588 + $0x7c] sm:$0xf]
        %v6653 = vunpack.c.l.b16 %v6589
        %v6654 = vunpack.c.l.b16 %v6590
        %v6655 = vunpack.c.l.b16 %v6591
        %v6656 = vunpack.c.l.b16 %v6592
        %v6657 = vunpack.c.l.b16 %v6593
        %v6658 = vunpack.c.l.b16 %v6594
        %v6659 = vunpack.c.l.b16 %v6595
        %v6660 = vunpack.c.l.b16 %v6596
        %v6661 = vunpack.c.l.b16 %v6597
        %v6662 = vunpack.c.l.b16 %v6598
        %v6663 = vunpack.c.l.b16 %v6599
        %v6664 = vunpack.c.l.b16 %v6600
        %v6665 = vunpack.c.l.b16 %v6601
        %v6666 = vunpack.c.l.b16 %v6602
        %v6667 = vunpack.c.l.b16 %v6603
        %v6668 = vunpack.c.l.b16 %v6604
        %v6669 = vunpack.c.l.b16 %v6605
        %v6670 = vunpack.c.l.b16 %v6606
        %v6671 = vunpack.c.l.b16 %v6607
        %v6672 = vunpack.c.l.b16 %v6608
        %v6673 = vunpack.c.l.b16 %v6609
        %v6674 = vunpack.c.l.b16 %v6610
        %v6675 = vunpack.c.l.b16 %v6611
        %v6676 = vunpack.c.l.b16 %v6612
        %v6677 = vunpack.c.l.b16 %v6613
        %v6678 = vunpack.c.l.b16 %v6614
        %v6679 = vunpack.c.l.b16 %v6615
        %v6680 = vunpack.c.l.b16 %v6616
        %v6681 = vunpack.c.l.b16 %v6617
        %v6682 = vunpack.c.l.b16 %v6618
        %v6683 = vunpack.c.l.b16 %v6619
        %v6684 = vunpack.c.l.b16 %v6620
        %v6685 = vpack.c.b16 %v6654, %v6653
        %v6686 = vpack.c.b16 %v6656, %v6655
        %v6687 = vpack.c.b16 %v6658, %v6657
        %v6688 = vpack.c.b16 %v6660, %v6659
        %v6689 = vpack.c.b16 %v6662, %v6661
        %v6690 = vpack.c.b16 %v6664, %v6663
        %v6691 = vpack.c.b16 %v6666, %v6665
        %v6692 = vpack.c.b16 %v6668, %v6667
        %v6693 = vpack.c.b16 %v6670, %v6669
        %v6694 = vpack.c.b16 %v6672, %v6671
        %v6695 = vpack.c.b16 %v6674, %v6673
        %v6696 = vpack.c.b16 %v6676, %v6675
        %v6697 = vpack.c.b16 %v6678, %v6677
        %v6698 = vpack.c.b16 %v6680, %v6679
        %v6699 = vpack.c.b16 %v6682, %v6681
        %v6700 = vpack.c.b16 %v6684, %v6683
        %6717 = vmatprep.subr.bf16.mxu0 0
        %6718 = vmatpush1.bf16.msra.mxu0 %v6685
        %6719 = vmatprep.subr.bf16.mxu0 0
        %6720 = vmatpush1.bf16.msra.mxu0 %v6686
        %6721 = vmatprep.subr.bf16.mxu0 0
        %6722 = vmatpush1.bf16.msra.mxu0 %v6687
        %6723 = vmatprep.subr.bf16.mxu0 0
        %6724 = vmatpush1.bf16.msra.mxu0 %v6688
        %6725 = vmatprep.subr.bf16.mxu0 0
        %6726 = vmatpush1.bf16.msra.mxu0 %v6689
        %6727 = vmatprep.subr.bf16.mxu0 0
        %6728 = vmatpush1.bf16.msra.mxu0 %v6690
        %6729 = vmatprep.subr.bf16.mxu0 0
        %6730 = vmatpush1.bf16.msra.mxu0 %v6691
        %6731 = vmatprep.subr.bf16.mxu0 0
        %6732 = vmatpush1.bf16.msra.mxu0 %v6692
        %6733 = vmatprep.subr.bf16.mxu0 0
        %6734 = vmatpush1.bf16.msra.mxu0 %v6693
        %6735 = vmatprep.subr.bf16.mxu0 0
        %6736 = vmatpush1.bf16.msra.mxu0 %v6694
        %6737 = vmatprep.subr.bf16.mxu0 0
        %6738 = vmatpush1.bf16.msra.mxu0 %v6695
        %6739 = vmatprep.subr.bf16.mxu0 0
        %6740 = vmatpush1.bf16.msra.mxu0 %v6696
        %6741 = vmatprep.subr.bf16.mxu0 0
        %6742 = vmatpush1.bf16.msra.mxu0 %v6697
        %6743 = vmatprep.subr.bf16.mxu0 0
        %6744 = vmatpush1.bf16.msra.mxu0 %v6698
        %6745 = vmatprep.subr.bf16.mxu0 0
        %6746 = vmatpush1.bf16.msra.mxu0 %v6699
        %6747 = vmatprep.subr.bf16.mxu0 0
        %6748 = vmatpush1.bf16.msra.mxu0 %v6700
        %6749 = vmatprep.mubr.bf16.mxu0 %v6581
        %6750 = vmatmul.mubr.bf16.gmra.mrb[0].mxu0 %v6580
        %v6751 = vpop.f32.mrb[0].mxu0
        %v6752 = vadd.f32 0.0, %v6751
        %v6753 = vpop.f32.mrb[0].mxu0
        %v6754 = vpop.f32.mrb[0].mxu0
        %v6755 = vadd.f32 0.0, %v6754
        %v6756 = vpop.f32.mrb[0].mxu0
        %6757 = vmatprep.mubr.bf16.mxu0 %v6583
        %6758 = vmatmul.mubr.bf16.gmra.mrb[0].mxu0 %v6582
        %v6759 = vpop.f32.mrb[0].mxu0
        %v6760 = vadd.f32 0.0, %v6759
        %v6761 = vpop.f32.mrb[0].mxu0
        %v6762 = vpop.f32.mrb[0].mxu0
        %v6763 = vadd.f32 0.0, %v6762
        %v6764 = vpop.f32.mrb[0].mxu0
        %6765 = vmatprep.mubr.bf16.mxu0 %v6585
        %6766 = vmatmul.mubr.bf16.gmra.mrb[0].mxu0 %v6584
        %v6767 = vpop.f32.mrb[0].mxu0
        %v6768 = vadd.f32 0.0, %v6767
        %v6769 = vpop.f32.mrb[0].mxu0
        %v6770 = vpop.f32.mrb[0].mxu0
        %v6771 = vadd.f32 0.0, %v6770
        %v6772 = vpop.f32.mrb[0].mxu0
        %6773 = vmatprep.mubr.bf16.mxu0 %v6587
        %6774 = vmatmul.mubr.bf16.gmra.mrb[0].mxu0 %v6586
        %v6775 = vpop.f32.mrb[0].mxu0
        %v6776 = vadd.f32 0.0, %v6775
        %v6777 = vpop.f32.mrb[0].mxu0
        %v6778 = vpop.f32.mrb[0].mxu0
        %v6779 = vadd.f32 0.0, %v6778
        %v6780 = vpop.f32.mrb[0].mxu0
        %6781 = vdwg.mxu0
        %v6782 = vld [vmem:[#allocation3] sm:$0xff]
        %v6783 = vld [vmem:[#allocation3 + $0x8] sm:$0xff]
        %v6784 = vld [vmem:[#allocation3 + $0x10] sm:$0xff]
        %v6785 = vld [vmem:[#allocation3 + $0x18] sm:$0xff]
        %v6786 = vld [vmem:[#allocation3 + $0x20] sm:$0xff]
        %v6787 = vld [vmem:[#allocation3 + $0x28] sm:$0xff]
        %v6788 = vld [vmem:[#allocation3 + $0x30] sm:$0xff]
        %v6789 = vld [vmem:[#allocation3 + $0x38] sm:$0xff]
        %v6790 = vadd.f32 %v6782, %v6752
        %v6791 = vadd.f32 %v6783, %v6755
        %v6792 = vadd.f32 %v6784, %v6760
        %v6793 = vadd.f32 %v6785, %v6763
        %v6794 = vadd.f32 %v6786, %v6768
        %v6795 = vadd.f32 %v6787, %v6771
        %v6796 = vadd.f32 %v6788, %v6776
        %v6797 = vadd.f32 %v6789, %v6779
        %6798 = vst [vmem:[#allocation3] sm:$0xff] %v6790
        %6799 = vst [vmem:[#allocation3 + $0x8] sm:$0xff] %v6791
        %6800 = vst [vmem:[#allocation3 + $0x10] sm:$0xff] %v6792
        %6801 = vst [vmem:[#allocation3 + $0x18] sm:$0xff] %v6793
        %6802 = vst [vmem:[#allocation3 + $0x20] sm:$0xff] %v6794
        %6803 = vst [vmem:[#allocation3 + $0x28] sm:$0xff] %v6795
        %6804 = vst [vmem:[#allocation3 + $0x30] sm:$0xff] %v6796
        %6805 = vst [vmem:[#allocation3 + $0x38] sm:$0xff] %v6797
        %v6806 = vld [vmem:[%s897 + $0x10] sm:$0xff]
        %v6807 = vld [vmem:[%s897 + $0x18] sm:$0xff]
        %v6808 = vld [vmem:[%s897 + $0x20] sm:$0xff]
        %v6809 = vld [vmem:[%s897 + $0x28] sm:$0xff]
        %v6810 = vld [vmem:[%s897 + $0x30] sm:$0xff]
        %v6811 = vld [vmem:[%s897 + $0x38] sm:$0xff]
        %v6812 = vld [vmem:[%s897 + $0x40] sm:$0xff]
        %v6813 = vld [vmem:[%s897 + $0x48] sm:$0xff]
        %s6814 = scalar_lea.vmem [#allocation4], 3072
        %v6815 = vld [vmem:[%s6814] sm:$0xf]
        %v6816 = vld [vmem:[%s6814 + $0x4] sm:$0xf]
        %v6817 = vld [vmem:[%s6814 + $0x8] sm:$0xf]
        %v6818 = vld [vmem:[%s6814 + $0xc] sm:$0xf]
        %v6819 = vld [vmem:[%s6814 + $0x10] sm:$0xf]
        %v6820 = vld [vmem:[%s6814 + $0x14] sm:$0xf]
        %v6821 = vld [vmem:[%s6814 + $0x18] sm:$0xf]
        %v6822 = vld [vmem:[%s6814 + $0x1c] sm:$0xf]
        %v6823 = vld [vmem:[%s6814 + $0x20] sm:$0xf]
        %v6824 = vld [vmem:[%s6814 + $0x24] sm:$0xf]
        %v6825 = vld [vmem:[%s6814 + $0x28] sm:$0xf]
        %v6826 = vld [vmem:[%s6814 + $0x2c] sm:$0xf]
        %v6827 = vld [vmem:[%s6814 + $0x30] sm:$0xf]
        %v6828 = vld [vmem:[%s6814 + $0x34] sm:$0xf]
        %v6829 = vld [vmem:[%s6814 + $0x38] sm:$0xf]
        %v6830 = vld [vmem:[%s6814 + $0x3c] sm:$0xf]
        %v6831 = vld [vmem:[%s6814 + $0x40] sm:$0xf]
        %v6832 = vld [vmem:[%s6814 + $0x44] sm:$0xf]
        %v6833 = vld [vmem:[%s6814 + $0x48] sm:$0xf]
        %v6834 = vld [vmem:[%s6814 + $0x4c] sm:$0xf]
        %v6835 = vld [vmem:[%s6814 + $0x50] sm:$0xf]
        %v6836 = vld [vmem:[%s6814 + $0x54] sm:$0xf]
        %v6837 = vld [vmem:[%s6814 + $0x58] sm:$0xf]
        %v6838 = vld [vmem:[%s6814 + $0x5c] sm:$0xf]
        %v6839 = vld [vmem:[%s6814 + $0x60] sm:$0xf]
        %v6840 = vld [vmem:[%s6814 + $0x64] sm:$0xf]
        %v6841 = vld [vmem:[%s6814 + $0x68] sm:$0xf]
        %v6842 = vld [vmem:[%s6814 + $0x6c] sm:$0xf]
        %v6843 = vld [vmem:[%s6814 + $0x70] sm:$0xf]
        %v6844 = vld [vmem:[%s6814 + $0x74] sm:$0xf]
        %v6845 = vld [vmem:[%s6814 + $0x78] sm:$0xf]
        %v6846 = vld [vmem:[%s6814 + $0x7c] sm:$0xf]
        %v6879 = vunpack.c.l.b16 %v6815
        %v6880 = vunpack.c.l.b16 %v6816
        %v6881 = vunpack.c.l.b16 %v6817
        %v6882 = vunpack.c.l.b16 %v6818
        %v6883 = vunpack.c.l.b16 %v6819
        %v6884 = vunpack.c.l.b16 %v6820
        %v6885 = vunpack.c.l.b16 %v6821
        %v6886 = vunpack.c.l.b16 %v6822
        %v6887 = vunpack.c.l.b16 %v6823
        %v6888 = vunpack.c.l.b16 %v6824
        %v6889 = vunpack.c.l.b16 %v6825
        %v6890 = vunpack.c.l.b16 %v6826
        %v6891 = vunpack.c.l.b16 %v6827
        %v6892 = vunpack.c.l.b16 %v6828
        %v6893 = vunpack.c.l.b16 %v6829
        %v6894 = vunpack.c.l.b16 %v6830
        %v6895 = vunpack.c.l.b16 %v6831
        %v6896 = vunpack.c.l.b16 %v6832
        %v6897 = vunpack.c.l.b16 %v6833
        %v6898 = vunpack.c.l.b16 %v6834
        %v6899 = vunpack.c.l.b16 %v6835
        %v6900 = vunpack.c.l.b16 %v6836
        %v6901 = vunpack.c.l.b16 %v6837
        %v6902 = vunpack.c.l.b16 %v6838
        %v6903 = vunpack.c.l.b16 %v6839
        %v6904 = vunpack.c.l.b16 %v6840
        %v6905 = vunpack.c.l.b16 %v6841
        %v6906 = vunpack.c.l.b16 %v6842
        %v6907 = vunpack.c.l.b16 %v6843
        %v6908 = vunpack.c.l.b16 %v6844
        %v6909 = vunpack.c.l.b16 %v6845
        %v6910 = vunpack.c.l.b16 %v6846
        %v6911 = vpack.c.b16 %v6880, %v6879
        %v6912 = vpack.c.b16 %v6882, %v6881
        %v6913 = vpack.c.b16 %v6884, %v6883
        %v6914 = vpack.c.b16 %v6886, %v6885
        %v6915 = vpack.c.b16 %v6888, %v6887
        %v6916 = vpack.c.b16 %v6890, %v6889
        %v6917 = vpack.c.b16 %v6892, %v6891
        %v6918 = vpack.c.b16 %v6894, %v6893
        %v6919 = vpack.c.b16 %v6896, %v6895
        %v6920 = vpack.c.b16 %v6898, %v6897
        %v6921 = vpack.c.b16 %v6900, %v6899
        %v6922 = vpack.c.b16 %v6902, %v6901
        %v6923 = vpack.c.b16 %v6904, %v6903
        %v6924 = vpack.c.b16 %v6906, %v6905
        %v6925 = vpack.c.b16 %v6908, %v6907
        %v6926 = vpack.c.b16 %v6910, %v6909
        %6943 = vmatprep.subr.bf16.mxu0 0
        %6944 = vmatpush1.bf16.msra.mxu0 %v6911
        %6945 = vmatprep.subr.bf16.mxu0 0
        %6946 = vmatpush1.bf16.msra.mxu0 %v6912
        %6947 = vmatprep.subr.bf16.mxu0 0
        %6948 = vmatpush1.bf16.msra.mxu0 %v6913
        %6949 = vmatprep.subr.bf16.mxu0 0
        %6950 = vmatpush1.bf16.msra.mxu0 %v6914
        %6951 = vmatprep.subr.bf16.mxu0 0
        %6952 = vmatpush1.bf16.msra.mxu0 %v6915
        %6953 = vmatprep.subr.bf16.mxu0 0
        %6954 = vmatpush1.bf16.msra.mxu0 %v6916
        %6955 = vmatprep.subr.bf16.mxu0 0
        %6956 = vmatpush1.bf16.msra.mxu0 %v6917
        %6957 = vmatprep.subr.bf16.mxu0 0
        %6958 = vmatpush1.bf16.msra.mxu0 %v6918
        %6959 = vmatprep.subr.bf16.mxu0 0
        %6960 = vmatpush1.bf16.msra.mxu0 %v6919
        %6961 = vmatprep.subr.bf16.mxu0 0
        %6962 = vmatpush1.bf16.msra.mxu0 %v6920
        %6963 = vmatprep.subr.bf16.mxu0 0
        %6964 = vmatpush1.bf16.msra.mxu0 %v6921
        %6965 = vmatprep.subr.bf16.mxu0 0
        %6966 = vmatpush1.bf16.msra.mxu0 %v6922
        %6967 = vmatprep.subr.bf16.mxu0 0
        %6968 = vmatpush1.bf16.msra.mxu0 %v6923
        %6969 = vmatprep.subr.bf16.mxu0 0
        %6970 = vmatpush1.bf16.msra.mxu0 %v6924
        %6971 = vmatprep.subr.bf16.mxu0 0
        %6972 = vmatpush1.bf16.msra.mxu0 %v6925
        %6973 = vmatprep.subr.bf16.mxu0 0
        %6974 = vmatpush1.bf16.msra.mxu0 %v6926
        %6975 = vmatprep.mubr.bf16.mxu0 %v6807
        %6976 = vmatmul.mubr.bf16.gmra.mrb[0].mxu0 %v6806
        %v6977 = vpop.f32.mrb[0].mxu0
        %v6978 = vadd.f32 0.0, %v6977
        %v6979 = vpop.f32.mrb[0].mxu0
        %v6980 = vpop.f32.mrb[0].mxu0
        %v6981 = vadd.f32 0.0, %v6980
        %v6982 = vpop.f32.mrb[0].mxu0
        %6983 = vmatprep.mubr.bf16.mxu0 %v6809
        %6984 = vmatmul.mubr.bf16.gmra.mrb[0].mxu0 %v6808
        %v6985 = vpop.f32.mrb[0].mxu0
        %v6986 = vadd.f32 0.0, %v6985
        %v6987 = vpop.f32.mrb[0].mxu0
        %v6988 = vpop.f32.mrb[0].mxu0
        %v6989 = vadd.f32 0.0, %v6988
        %v6990 = vpop.f32.mrb[0].mxu0
        %6991 = vmatprep.mubr.bf16.mxu0 %v6811
        %6992 = vmatmul.mubr.bf16.gmra.mrb[0].mxu0 %v6810
        %v6993 = vpop.f32.mrb[0].mxu0
        %v6994 = vadd.f32 0.0, %v6993
        %v6995 = vpop.f32.mrb[0].mxu0
        %v6996 = vpop.f32.mrb[0].mxu0
        %v6997 = vadd.f32 0.0, %v6996
        %v6998 = vpop.f32.mrb[0].mxu0
        %6999 = vmatprep.mubr.bf16.mxu0 %v6813
        %7000 = vmatmul.mubr.bf16.gmra.mrb[0].mxu0 %v6812
        %v7001 = vpop.f32.mrb[0].mxu0
        %v7002 = vadd.f32 0.0, %v7001
        %v7003 = vpop.f32.mrb[0].mxu0
        %v7004 = vpop.f32.mrb[0].mxu0
        %v7005 = vadd.f32 0.0, %v7004
        %v7006 = vpop.f32.mrb[0].mxu0
        %7007 = vdwg.mxu0
        %v7008 = vld [vmem:[#allocation3] sm:$0xff]
        %v7009 = vld [vmem:[#allocation3 + $0x8] sm:$0xff]
        %v7010 = vld [vmem:[#allocation3 + $0x10] sm:$0xff]
        %v7011 = vld [vmem:[#allocation3 + $0x18] sm:$0xff]
        %v7012 = vld [vmem:[#allocation3 + $0x20] sm:$0xff]
        %v7013 = vld [vmem:[#allocation3 + $0x28] sm:$0xff]
        %v7014 = vld [vmem:[#allocation3 + $0x30] sm:$0xff]
        %v7015 = vld [vmem:[#allocation3 + $0x38] sm:$0xff]
        %v7016 = vadd.f32 %v7008, %v6978
        %v7017 = vadd.f32 %v7009, %v6981
        %v7018 = vadd.f32 %v7010, %v6986
        %v7019 = vadd.f32 %v7011, %v6989
        %v7020 = vadd.f32 %v7012, %v6994
        %v7021 = vadd.f32 %v7013, %v6997
        %v7022 = vadd.f32 %v7014, %v7002
        %v7023 = vadd.f32 %v7015, %v7005
        %7024 = vst [vmem:[#allocation3] sm:$0xff] %v7016
        %7025 = vst [vmem:[#allocation3 + $0x8] sm:$0xff] %v7017
        %7026 = vst [vmem:[#allocation3 + $0x10] sm:$0xff] %v7018
        %7027 = vst [vmem:[#allocation3 + $0x18] sm:$0xff] %v7019
        %7028 = vst [vmem:[#allocation3 + $0x20] sm:$0xff] %v7020
        %7029 = vst [vmem:[#allocation3 + $0x28] sm:$0xff] %v7021
        %7030 = vst [vmem:[#allocation3 + $0x30] sm:$0xff] %v7022
        %7031 = vst [vmem:[#allocation3 + $0x38] sm:$0xff] %v7023
        %v7032 = vld [vmem:[#allocation3] sm:$0xff]
        %v7033 = vld [vmem:[#allocation3 + $0x8] sm:$0xff]
        %v7034 = vld [vmem:[#allocation3 + $0x10] sm:$0xff]
        %v7035 = vld [vmem:[#allocation3 + $0x18] sm:$0xff]
        %v7036 = vld [vmem:[#allocation3 + $0x20] sm:$0xff]
        %v7037 = vld [vmem:[#allocation3 + $0x28] sm:$0xff]
        %v7038 = vld [vmem:[#allocation3 + $0x30] sm:$0xff]
        %v7039 = vld [vmem:[#allocation3 + $0x38] sm:$0xff]
        %s7040 = scalar_lea.vmem %s209, 192 [#allocation7]
        %7041 = vst [vmem:[%s7040] sm:$0xff] %v7032
        %7042 = vst [vmem:[%s7040 + $0x8] sm:$0xff] %v7033
        %7043 = vst [vmem:[%s7040 + $0x10] sm:$0xff] %v7034
        %7044 = vst [vmem:[%s7040 + $0x18] sm:$0xff] %v7035
        %7045 = vst [vmem:[%s7040 + $0x20] sm:$0xff] %v7036
        %7046 = vst [vmem:[%s7040 + $0x28] sm:$0xff] %v7037
        %7047 = vst [vmem:[%s7040 + $0x30] sm:$0xff] %v7038
        %7048 = vst [vmem:[%s7040 + $0x38] sm:$0xff] %v7039
        %v7049 = vadd.f32 %v7032, %v7033
        %v7050 = vadd.f32 %v7049, %v7034
        %v7051 = vadd.f32 %v7050, %v7035
        %v7052 = vadd.f32 %v7051, %v7036
        %v7053 = vadd.f32 %v7052, %v7037
        %v7054 = vadd.f32 %v7053, %v7038
        %v7055 = vadd.f32 %v7054, %v7039
        %v7056 = vrot.slane %v7055, 4
        %v7057 = vadd.f32 %v7055, %v7056
        %v7058 = vrot.slane %v7057, 2
        %v7059 = vadd.f32 %v7057, %v7058
        %v7060 = vrot.slane %v7059, 1
        %v7061 = vadd.f32 %v7059, %v7060
        %v7062 = vadd.f32 %v6045, %v7061
        %v7063 = vmul.f32 %v7032, %v7032
        %v7064 = vmul.f32 %v7033, %v7033
        %v7065 = vmul.f32 %v7034, %v7034
        %v7066 = vmul.f32 %v7035, %v7035
        %v7067 = vmul.f32 %v7036, %v7036
        %v7068 = vmul.f32 %v7037, %v7037
        %v7069 = vmul.f32 %v7038, %v7038
        %v7070 = vmul.f32 %v7039, %v7039
        %v7071 = vadd.f32 %v7063, %v7064
        %v7072 = vadd.f32 %v7071, %v7065
        %v7073 = vadd.f32 %v7072, %v7066
        %v7074 = vadd.f32 %v7073, %v7067
        %v7075 = vadd.f32 %v7074, %v7068
        %v7076 = vadd.f32 %v7075, %v7069
        %v7077 = vadd.f32 %v7076, %v7070
        %v7078 = vrot.slane %v7077, 4
        %v7079 = vadd.f32 %v7077, %v7078
        %v7080 = vrot.slane %v7079, 2
        %v7081 = vadd.f32 %v7079, %v7080
        %v7082 = vrot.slane %v7081, 1
        %v7083 = vadd.f32 %v7081, %v7082
        %v7084 = vadd.f32 %v6067, %v7083
        %7085 = vst [vmem:[%s216] sm:$0xff] %v7062
        %7086 = vst [vmem:[%s223] sm:$0xff] %v7084
        %s7087 = sand.u32 %s78, 1
        %s7088 = scalar_lea.sflag [#allocation6], %s7087
        %s7089 = sand.u32 %s78, 1
        %s7090 = smul.addr %s7089, 256
        %s7091 = scalar_lea.vmem [#allocation7], %s7090
        %s7092 = sand.u32 %s23, 1
        %s7093 = scalar_lea.sflag [#allocation9], %s7092
        %s7094 = sand.u32 %s104, 1
        %s7095 = smul.addr %s7094, 8
        %s7096 = scalar_lea.vmem [#allocation8], %s7095
        %s7097 = sand.u32 %s23, 1
        %s7098 = scalar_lea.sflag [#allocation9], %s7097
        %s7099 = sand.u32 %s130, 1
        %s7100 = smul.addr %s7099, 8
        %s7101 = scalar_lea.vmem [#allocation10], %s7100
        // Predicated region
        $region33: #{tpu_custom_call.1} parent=27 // pred_check
          %p7102 = pneg %p88
        $region34: #{tpu_custom_call.1} parent=27 // pred_check_branch
          %7104 = sbr.rel (%p7102) target = $region36
        $region35: #{tpu_custom_call.1} parent=27 // pred_region
          %s7106 = ssub.s32 4096, 4096
          %7107 = vsyncadd %s7088, %s7106
          %s7108 = smul.addr %s23, 32
          %s7109 = smul.addr %s7108, 128
          %s7110 = scalar_lea.hbm %s2, %s7109
          %s7111 = sshll.u32 %s7091, 4
          %s7112 = int_to_ptr.vmem [resolvable:$true] %s7111
          %7117 = dma.vmem_to_hbm [thread:$0]  %s7112, 4096, %s7110, %s7088, 128, 128, 8
        $region36: #{tpu_custom_call.1} parent=27 // pred_fallthru
          _
        // Predicated region
        $region37: #{tpu_custom_call.1} parent=27 // pred_check
          %p7118 = pneg %p114
        $region38: #{tpu_custom_call.1} parent=27 // pred_check_branch
          %7120 = sbr.rel (%p7118) target = $region40
        $region39: #{tpu_custom_call.1} parent=27 // pred_region
          %s7122 = ssub.s32 128, 128
          %7123 = vsyncadd %s7093, %s7122
          %s7124 = smul.addr %s23, 128
          %s7125 = scalar_lea.hbm %s3, %s7124
          %s7127 = sshll.u32 %s7096, 4
          %s7128 = int_to_ptr.vmem [resolvable:$true] %s7127
          %7130 = dma.vmem_to_hbm [thread:$0]  %s7128, 128, %s7125, %s7093
        $region40: #{tpu_custom_call.1} parent=27 // pred_fallthru
          _
        // Predicated region
        $region41: #{tpu_custom_call.1} parent=27 // pred_check
          %p7131 = pneg %p140
        $region42: #{tpu_custom_call.1} parent=27 // pred_check_branch
          %7133 = sbr.rel (%p7131) target = $region44
        $region43: #{tpu_custom_call.1} parent=27 // pred_region
          %s7135 = ssub.s32 128, 128
          %7136 = vsyncadd %s7098, %s7135
          %s7137 = smul.addr %s23, 128
          %s7138 = scalar_lea.hbm %s4, %s7137
          %s7140 = sshll.u32 %s7101, 4
          %s7141 = int_to_ptr.vmem [resolvable:$true] %s7140
          %7143 = dma.vmem_to_hbm [thread:$0]  %s7141, 128, %s7138, %s7098
        $region44: #{tpu_custom_call.1} parent=27 // pred_fallthru
          _
      $region28: #{tpu_custom_call.1} parent=5 // pred_fallthru
        _
      %p7144 = scmp.le.s32.totalorder 2, %s18
      // Predicated region
      $region45: #{tpu_custom_call.1} parent=5 // pred_check
        %p7145 = pneg %p7144
      $region46: #{tpu_custom_call.1} parent=5 // pred_check_branch
        %7147 = sbr.rel (%p7145) target = $region48
      $region47: #{tpu_custom_call.1} parent=5 // pred_region
        %s7148 = ssub.s32 %s18, 2
        // Predicated region
        $region49: #{tpu_custom_call.1} parent=47 // pred_check
          %p7149 = pneg %p94
        $region50: #{tpu_custom_call.1} parent=47 // pred_check_branch
          %7151 = sbr.rel (%p7149) target = $region52
        $region51: #{tpu_custom_call.1} parent=47 // pred_region
          %s7152 = sand.u32 %s79, 1
          %s7153 = scalar_lea.sflag [#allocation6], %s7152
          %s7154 = sand.u32 %s79, 1
          %s7155 = smul.addr %s7154, 256
          %s7156 = scalar_lea.vmem [#allocation7], %s7155
          %7157 = dma.done %s7153, 4096
        $region52: #{tpu_custom_call.1} parent=47 // pred_fallthru
          _
        // Predicated region
        $region53: #{tpu_custom_call.1} parent=47 // pred_check
          %p7158 = pneg %p120
        $region54: #{tpu_custom_call.1} parent=47 // pred_check_branch
          %7160 = sbr.rel (%p7158) target = $region56
        $region55: #{tpu_custom_call.1} parent=47 // pred_region
          %s7161 = sand.u32 %s24, 1
          %s7162 = scalar_lea.sflag [#allocation9], %s7161
          %s7163 = sand.u32 %s105, 1
          %s7164 = smul.addr %s7163, 8
          %s7165 = scalar_lea.vmem [#allocation8], %s7164
          %7166 = dma.done %s7162, 128
        $region56: #{tpu_custom_call.1} parent=47 // pred_fallthru
          _
        // Predicated region
        $region57: #{tpu_custom_call.1} parent=47 // pred_check
          %p7167 = pneg %p146
        $region58: #{tpu_custom_call.1} parent=47 // pred_check_branch
          %7169 = sbr.rel (%p7167) target = $region60
        $region59: #{tpu_custom_call.1} parent=47 // pred_region
          %s7170 = sand.u32 %s24, 1
          %s7171 = scalar_lea.sflag [#allocation9], %s7170
          %s7172 = sand.u32 %s131, 1
          %s7173 = smul.addr %s7172, 8
          %s7174 = scalar_lea.vmem [#allocation10], %s7173
          %7175 = dma.done %s7171, 128
        $region60: #{tpu_custom_call.1} parent=47 // pred_fallthru
          _
      $region48: #{tpu_custom_call.1} parent=5 // pred_fallthru
        _
    $region6: #{tpu_custom_call.1} parent=1 // loop_footer
      %s22 = sadd.s32 1, %s18
    $region7: #{tpu_custom_call.1} parent=1 // loop_footer_branch
      %17 = sbr.rel target = $region3
    $region8: #{tpu_custom_call.1} parent=1 // loop_exit
      _
    %7176 = vsyncpa [#allocation5], 1
    %s7177 = scalar_lea.sflag [#allocation5], 1
    %7178 = vsyncpa %s7177, 1
    %7179 = vsyncpa [#allocation6], 1
    %s7180 = scalar_lea.sflag [#allocation6], 1
    %7181 = vsyncpa %s7180, 1
    %7182 = vsyncpa [#allocation9], 1
    %s7183 = scalar_lea.sflag [#allocation9], 1
    %7184 = vsyncpa %s7183, 1

</llo_original>
